<compile_context>
chip_gen: v7x
topology: tpu7x:2x2x1
jax: 0.10.0
libtpu: 0.0.40
codegen_flags: <defaults>
</compile_context>

<pallas_src>
import jax
import jax.numpy as jnp
from jax.experimental import pallas as pl
from jax.experimental.pallas import tpu as pltpu

LANE = 128


def _round_up(v, m):
    return ((v + m - 1) // m) * m


def _pad2(a, rows, cols):
    return jnp.pad(a, ((0, rows - a.shape[0]), (0, cols - a.shape[1])))


# ---------------------------------------------------------------------------
# Kernel 1: layer-1 for BOTH branches with a fused [x | x_SC] RHS.
#   acc  = A @ [x | xs]                      (bf16 MXU, f32 accumulate)
#   h    = relu(acc[:, :C]@W1  + b1 ) + relu(x @We  + be )
#   hs   = relu(acc[:, C:]@W1s + b1s) + relu(xs@Wes + bes)
#   emits hcat = [h | hs] in bf16 for the second A pass.
# ---------------------------------------------------------------------------
def _layer1_kernel(a_ref, xcat_k_ref, xcat_i_ref,
                   w1_ref, b1_ref, we_ref, be_ref,
                   w1s_ref, b1s_ref, wes_ref, bes_ref,
                   hcat_ref, acc_ref):
    k = pl.program_id(1)

    @pl.when(k == 0)
    def _():
        acc_ref[...] = jnp.zeros_like(acc_ref)

    # Single 256-wide bf16 matmul covers both branches.
    acc_ref[...] += jnp.dot(a_ref[...], xcat_k_ref[...],
                            preferred_element_type=jnp.float32)

    @pl.when(k == pl.num_programs(1) - 1)
    def _():
        c_pad = w1_ref.shape[0]
        h_pad = w1_ref.shape[1]
        relu = lambda v: jnp.maximum(v, 0.0)
        acc = acc_ref[...]
        xc = xcat_i_ref[...]                      # bf16 [x | xs] row tile
        # branch 1
        h = relu(jnp.dot(acc[:, :c_pad].astype(jnp.bfloat16), w1_ref[...],
                         preferred_element_type=jnp.float32) + b1_ref[...]) \
            + relu(jnp.dot(xc[:, :c_pad], we_ref[...],
                           preferred_element_type=jnp.float32) + be_ref[...])
        hcat_ref[:, :h_pad] = h.astype(jnp.bfloat16)
        # branch 2 (SC) -- written separately so h's f32 registers retire first
        hs = relu(jnp.dot(acc[:, c_pad:].astype(jnp.bfloat16), w1s_ref[...],
                          preferred_element_type=jnp.float32) + b1s_ref[...]) \
            + relu(jnp.dot(xc[:, c_pad:], wes_ref[...],
                           preferred_element_type=jnp.float32) + bes_ref[...])
        hcat_ref[:, h_pad:] = hs.astype(jnp.bfloat16)


# ---------------------------------------------------------------------------
# Kernel 2: layer-2 for both branches, conv2 reassociated to (A@h)@W2.
#   acc = A @ [h | hs]
#   m   = (relu(acc[:, :H]@W2 + b2) + h) + (relu(acc[:, H:]@W2s + b2s) + hs)
# ---------------------------------------------------------------------------
def _layer2_kernel(a_ref, hcat_k_ref, hcat_i_ref,
                   w2_ref, b2_ref, w2s_ref, b2s_ref,
                   m_ref, acc_ref):
    k = pl.program_id(1)

    @pl.when(k == 0)
    def _():
        acc_ref[...] = jnp.zeros_like(acc_ref)

    acc_ref[...] += jnp.dot(a_ref[...], hcat_k_ref[...],
                            preferred_element_type=jnp.float32)

    @pl.when(k == pl.num_programs(1) - 1)
    def _():
        h_pad = w2_ref.shape[0]
        relu = lambda v: jnp.maximum(v, 0.0)
        acc = acc_ref[...]
        hc = hcat_i_ref[...].astype(jnp.float32)  # residual, upcast from bf16
        h2 = relu(jnp.dot(acc[:, :h_pad].astype(jnp.bfloat16), w2_ref[...],
                          preferred_element_type=jnp.float32)
                  + b2_ref[...]) + hc[:, :h_pad]
        h2s = relu(jnp.dot(acc[:, h_pad:].astype(jnp.bfloat16), w2s_ref[...],
                           preferred_element_type=jnp.float32)
                   + b2s_ref[...]) + hc[:, h_pad:]
        m_ref[...] = (h2 + h2s).astype(jnp.bfloat16)


# ---------------------------------------------------------------------------
# Kernel 3: global mean pool (P @ m, bf16 MXU) + final fc as VPU multiply-reduce.
# ---------------------------------------------------------------------------
def _pool_fc_kernel(p_ref, m_ref, wf_ref, bf_ref, out_ref, acc_ref):
    k = pl.program_id(0)

    @pl.when(k == 0)
    def _():
        acc_ref[...] = jnp.zeros_like(acc_ref)

    acc_ref[...] += jnp.dot(p_ref[...], m_ref[...],
                            preferred_element_type=jnp.float32)

    @pl.when(k == pl.num_programs(0) - 1)
    def _():
        out_ref[...] = jnp.sum(acc_ref[...] * wf_ref[...], axis=-1,
                               keepdims=True) + bf_ref[...]


# ---------------------------------------------------------------------------
# Host wrapper: pad to lane-dense shapes, launch the three Pallas passes.
# ---------------------------------------------------------------------------
@jax.jit
def gin_forward(a_hat, pool_mat, x, x_sc, params):
    n, c = x.shape
    h_dim = params["w1"].shape[1]
    g = pool_mat.shape[0]

    c_pad = _round_up(c, LANE)
    h_pad = _round_up(h_dim, LANE)
    g_pad = _round_up(max(g, 16), 16)        # bf16-friendly sublane packing

    tile_k = 512
    n_pad = _round_up(n, tile_k)
    # Rectangular A blocks for n_pad == 512 so the parallel row axis has >= 2
    # tiles (v7x dual TensorCore); square 512 blocks otherwise (DMA efficiency
    # on the HBM-bound v5e/v6e).
    tile_r = 512 if n_pad >= 1024 else 256

    # --- host-side padding / dtype prep (zero padding is mathematically inert)
    a_bf = _pad2(a_hat, n_pad, n_pad).astype(jnp.bfloat16)
    p_bf = _pad2(pool_mat, g_pad, n_pad).astype(jnp.bfloat16)
    xcat = jnp.concatenate(
        [_pad2(x, n_pad, c_pad), _pad2(x_sc, n_pad, c_pad)],
        axis=-1).astype(jnp.bfloat16)                        # [N, 2*C] bf16

    pw_ch = lambda w: _pad2(w, c_pad, h_pad).astype(jnp.bfloat16)
    pw_hh = lambda w: _pad2(w, h_pad, h_pad).astype(jnp.bfloat16)
    pb = lambda b: _pad2(b, 1, h_pad)                        # biases stay f32

    w1, b1 = pw_ch(params["w1"]), pb(params["b1"])
    w2, b2 = pw_hh(params["w2"]), pb(params["b2"])
    we, be = pw_ch(params["we"]), pb(params["be"])
    w1s, b1s = pw_ch(params["w1s"]), pb(params["b1s"])
    w2s, b2s = pw_hh(params["w2s"]), pb(params["b2s"])
    wes, bes = pw_ch(params["wes"]), pb(params["bes"])
    wf_row = _pad2(params["wf"].T, 1, h_pad)                 # [1, H_pad] f32
    bf = params["bf"]                                        # [1, 1] f32

    grid = (n_pad // tile_r, n_pad // tile_k)
    cparams = pltpu.CompilerParams(
        dimension_semantics=("parallel", "arbitrary"),
        vmem_limit_bytes=48 << 20)

    a_spec = pl.BlockSpec((tile_r, tile_k), lambda i, k: (i, k))
    b_h = pl.BlockSpec((1, h_pad), lambda i, k: (0, 0))
    w_ch = pl.BlockSpec((c_pad, h_pad), lambda i, k: (0, 0))
    w_hh = pl.BlockSpec((h_pad, h_pad), lambda i, k: (0, 0))
    xcat_k = pl.BlockSpec((tile_k, 2 * c_pad), lambda i, k: (k, 0))
    xcat_i = pl.BlockSpec((tile_r, 2 * c_pad), lambda i, k: (i, 0))
    hcat_k = pl.BlockSpec((tile_k, 2 * h_pad), lambda i, k: (k, 0))
    hcat_i = pl.BlockSpec((tile_r, 2 * h_pad), lambda i, k: (i, 0))
    m_i = pl.BlockSpec((tile_r, h_pad), lambda i, k: (i, 0))

    # ---- pass 1 over A: conv1 + fc_encode for both branches (fused RHS) ----
    hcat = pl.pallas_call(
        _layer1_kernel,
        grid=grid,
        in_specs=[a_spec, xcat_k, xcat_i,
                  w_ch, b_h, w_ch, b_h,
                  w_ch, b_h, w_ch, b_h],
        out_specs=hcat_i,
        out_shape=jax.ShapeDtypeStruct((n_pad, 2 * h_pad), jnp.bfloat16),
        scratch_shapes=[pltpu.VMEM((tile_r, 2 * c_pad), jnp.float32)],
        compiler_params=cparams,
    )(a_bf, xcat, xcat,
      w1, b1, we, be,
      w1s, b1s, wes, bes)

    # ---- pass 2 over A: conv2 (reassociated) + residual + branch merge -----
    m = pl.pallas_call(
        _layer2_kernel,
        grid=grid,
        in_specs=[a_spec, hcat_k, hcat_i, w_hh, b_h, w_hh, b_h],
        out_specs=m_i,
        out_shape=jax.ShapeDtypeStruct((n_pad, h_pad), jnp.bfloat16),
        scratch_shapes=[pltpu.VMEM((tile_r, 2 * h_pad), jnp.float32)],
        compiler_params=cparams,
    )(a_bf, hcat, hcat, w2, b2, w2s, b2s)

    # ---- pass 3: pool + final fc --------------------------------------------
    out = pl.pallas_call(
        _pool_fc_kernel,
        grid=(n_pad // tile_k,),
        in_specs=[pl.BlockSpec((g_pad, tile_k), lambda k: (0, k)),
                  pl.BlockSpec((tile_k, h_pad), lambda k: (k, 0)),
                  pl.BlockSpec((1, h_pad), lambda k: (0, 0)),
                  pl.BlockSpec((1, 1), lambda k: (0, 0))],
        out_specs=pl.BlockSpec((g_pad, 1), lambda k: (0, 0)),
        out_shape=jax.ShapeDtypeStruct((g_pad, 1), jnp.float32),
        scratch_shapes=[pltpu.VMEM((g_pad, h_pad), jnp.float32)],
        compiler_params=pltpu.CompilerParams(
            dimension_semantics=("arbitrary",),
            vmem_limit_bytes=48 << 20),
    )(p_bf, m, wf_row, bf)

    return out[:g]


# ---------------------------------------------------------------------------
# Glue: dense normalized adjacency + pooling matrix (plain JAX, host-side)
# ---------------------------------------------------------------------------
def build_gcn_adjacency(edge_index, num_nodes):
    """D^-1/2 (A + I) D^-1/2 with A[target, source] = 1 per edge (GCNConv default)."""
    src, dst = edge_index[0], edge_index[1]
    a = jnp.zeros((num_nodes, num_nodes), jnp.float32)
    a = a.at[dst, src].add(1.0)
    a = a + jnp.eye(num_nodes, dtype=jnp.float32)
    deg = a.sum(axis=1)
    dinv = jnp.where(deg > 0, 1.0 / jnp.sqrt(deg), 0.0)
    return dinv[:, None] * a * dinv[None, :]


def build_pool_matrix(batch, num_graphs):
    """P[g, n] = 1/count_g if batch[n] == g (global_mean_pool as matmul)."""
    onehot = (batch[None, :] == jnp.arange(num_graphs)[:, None]).astype(jnp.float32)
    counts = onehot.sum(axis=1, keepdims=True)
    return onehot / jnp.maximum(counts, 1.0)


def init_params(key, in_channels, hidden_channels):
    keys = jax.random.split(key, 9)
    s_in = 1.0 / jnp.sqrt(jnp.float32(in_channels))
    s_h = 1.0 / jnp.sqrt(jnp.float32(hidden_channels))

    def w(k, shape, scale):
        return (jax.random.normal(k, shape, jnp.float32) * scale).astype(jnp.float32)

    return {
        # GCNConv conv1 / conv2  (stored as [in, out] so the math is x @ W)
        "w1": w(keys[0], (in_channels, hidden_channels), s_in),
        "b1": jnp.zeros((1, hidden_channels), jnp.float32),
        "w2": w(keys[1], (hidden_channels, hidden_channels), s_h),
        "b2": jnp.zeros((1, hidden_channels), jnp.float32),
        # fc_encode
        "we": w(keys[2], (in_channels, hidden_channels), s_in),
        "be": w(keys[3], (1, hidden_channels), s_in),
        # SC branch
        "w1s": w(keys[4], (in_channels, hidden_channels), s_in),
        "b1s": jnp.zeros((1, hidden_channels), jnp.float32),
        "w2s": w(keys[5], (hidden_channels, hidden_channels), s_h),
        "b2s": jnp.zeros((1, hidden_channels), jnp.float32),
        "wes": w(keys[6], (in_channels, hidden_channels), s_in),
        "bes": w(keys[7], (1, hidden_channels), s_in),
        # final fc: hidden -> 1
        "wf": w(keys[8], (hidden_channels, 1), s_h),
        "bf": jnp.zeros((1, 1), jnp.float32),
    }


# ---------------------------------------------------------------------------
# Pure-JAX f32 reference (mirrors the PyTorch forward, inference mode)
# ---------------------------------------------------------------------------
def reference_forward(a_hat, pool_mat, x, x_sc, p):
    relu = lambda t: jnp.maximum(t, 0.0)
    gcn = lambda h, w, b: a_hat @ (h @ w) + b
    h = relu(gcn(x, p["w1"], p["b1"])) + relu(x @ p["we"] + p["be"])
    h = relu(gcn(h, p["w2"], p["b2"])) + h
    hs = relu(gcn(x_sc, p["w1s"], p["b1s"])) + relu(x_sc @ p["wes"] + p["bes"])
    hs = relu(gcn(hs, p["w2s"], p["b2s"])) + hs
    h = h + hs
    return (pool_mat @ h) @ p["wf"] + p["bf"]


if __name__ == "__main__":
    key = jax.random.PRNGKey(0)
    k_x, k_xsc, k_par = jax.random.split(key, 3)

    # Small graph batch: 2 graphs, 8 nodes each -> 16 nodes total.
    num_nodes = 16
    num_graphs = 2
    in_channels = 4
    hidden_channels = 32

    x = jax.random.normal(k_x, (num_nodes, in_channels), jnp.float32)
    x_sc = jax.random.normal(k_xsc, (num_nodes, in_channels), jnp.float32)

    batch = jnp.concatenate([jnp.zeros(8, jnp.int32), jnp.ones(8, jnp.int32)])

    # Undirected ring inside each graph (both directions listed)
    edges = []
    for gi in range(num_graphs):
        base = gi * 8
        for i in range(8):
            s, d = base + i, base + (i + 1) % 8
            edges.append((s, d))
            edges.append((d, s))
    edge_index = jnp.array(edges, jnp.int32).T  # [2, E]

    a_hat = build_gcn_adjacency(edge_index, num_nodes)
    pool_mat = build_pool_matrix(batch, num_graphs)
    params = init_params(k_par, in_channels, hidden_channels)

    out = gin_forward(a_hat, pool_mat, x, x_sc, params)
    out = jax.block_until_ready(out)

    ref = reference_forward(a_hat, pool_mat, x, x_sc, params)
    assert out.shape == (num_graphs, 1)
    # bf16 MXU operands and bf16 inter-pass tensors change rounding vs f32 ref.
    assert jnp.allclose(out, ref, atol=1e-1, rtol=1e-1), (out, ref)

    print("KERNEL_OK")
</pallas_src>

<mosaic_0001>
module attributes {stable_mosaic.version = 11 : i64} {
  func.func @_layer1_kernel(%arg0: i32, %arg1: i32, %arg2: memref<256x512xbf16, #tpu.memory_space<vmem>>, %arg3: memref<512x256xbf16, #tpu.memory_space<vmem>>, %arg4: memref<256x256xbf16, #tpu.memory_space<vmem>>, %arg5: memref<128x128xbf16, #tpu.memory_space<vmem>>, %arg6: memref<1x128xf32, #tpu.memory_space<vmem>>, %arg7: memref<128x128xbf16, #tpu.memory_space<vmem>>, %arg8: memref<1x128xf32, #tpu.memory_space<vmem>>, %arg9: memref<128x128xbf16, #tpu.memory_space<vmem>>, %arg10: memref<1x128xf32, #tpu.memory_space<vmem>>, %arg11: memref<128x128xbf16, #tpu.memory_space<vmem>>, %arg12: memref<1x128xf32, #tpu.memory_space<vmem>>, %arg13: memref<256x256xbf16, #tpu.memory_space<vmem>>, %arg14: memref<256x256xf32, #tpu.memory_space<vmem>>) attributes {dimension_semantics = [#tpu.dimension_semantics<parallel>, #tpu.dimension_semantics<arbitrary>], iteration_bounds = array<i64: 2, 1>, scalar_prefetch = 0 : i64, scratch_operands = 1 : i64, tpu.core_type = #tpu.core_type<tc>, window_params = [{transform_indices = @transform_0, window_bounds = array<i64: 256, 512>}, {transform_indices = @transform_1, window_bounds = array<i64: 512, 256>}, {transform_indices = @transform_2, window_bounds = array<i64: 256, 256>}, {pipeline_mode = #tpu.pipeline_mode<synchronous>, transform_indices = @transform_3, window_bounds = array<i64: 128, 128>}, {pipeline_mode = #tpu.pipeline_mode<synchronous>, transform_indices = @transform_4, window_bounds = array<i64: 1, 128>}, {pipeline_mode = #tpu.pipeline_mode<synchronous>, transform_indices = @transform_5, window_bounds = array<i64: 128, 128>}, {pipeline_mode = #tpu.pipeline_mode<synchronous>, transform_indices = @transform_6, window_bounds = array<i64: 1, 128>}, {pipeline_mode = #tpu.pipeline_mode<synchronous>, transform_indices = @transform_7, window_bounds = array<i64: 128, 128>}, {pipeline_mode = #tpu.pipeline_mode<synchronous>, transform_indices = @transform_8, window_bounds = array<i64: 1, 128>}, {pipeline_mode = #tpu.pipeline_mode<synchronous>, transform_indices = @transform_9, window_bounds = array<i64: 128, 128>}, {pipeline_mode = #tpu.pipeline_mode<synchronous>, transform_indices = @transform_10, window_bounds = array<i64: 1, 128>}, {transform_indices = @transform_11, window_bounds = array<i64: 256, 256>}]} {
    %c0_i32 = arith.constant 0 : i32
    %0 = arith.cmpi eq, %arg1, %c0_i32 : i32
    %1 = arith.extui %0 : i1 to i32
    %c0_i32_0 = arith.constant 0 : i32
    %2 = arith.cmpi ne, %1, %c0_i32_0 : i32
    scf.if %2 {
      %cst_10 = arith.constant 0.000000e+00 : f32
      %12 = vector.broadcast %cst_10 : f32 to vector<256x256xf32>
      %c0_11 = arith.constant 0 : index
      %c0_12 = arith.constant 0 : index
      %13 = vector.load %arg14[%c0_11, %c0_12] : memref<256x256xf32, #tpu.memory_space<vmem>>, vector<256x256xf32>
      tpu.vector_store %arg14[%c0_11, %c0_12], %12 {strides = array<i32>} : memref<256x256xf32, #tpu.memory_space<vmem>>, vector<256x256xf32>,
    } else {
    }
    %c0 = arith.constant 0 : index
    %c0_1 = arith.constant 0 : index
    %3 = vector.load %arg14[%c0, %c0_1] : memref<256x256xf32, #tpu.memory_space<vmem>>, vector<256x256xf32>
    %c0_2 = arith.constant 0 : index
    %c0_3 = arith.constant 0 : index
    %4 = vector.load %arg2[%c0_2, %c0_3] : memref<256x512xbf16, #tpu.memory_space<vmem>>, vector<256x512xbf16>
    %c0_4 = arith.constant 0 : index
    %c0_5 = arith.constant 0 : index
    %5 = vector.load %arg3[%c0_4, %c0_5] : memref<512x256xbf16, #tpu.memory_space<vmem>>, vector<512x256xbf16>
    %cst = arith.constant dense<0.000000e+00> : vector<256x256xf32>
    %6 = tpu.matmul %4, %5, %cst {dimension_numbers = #tpu.dot_dimension_numbers<[1], [0], [0], [1], [0, 0, 1, 1], [], []>} : vector<256x512xbf16>, vector<512x256xbf16>, vector<256x256xf32> -> vector<256x256xf32>
    %7 = arith.addf %3, %6 : vector<256x256xf32>
    %c0_6 = arith.constant 0 : index
    %c0_7 = arith.constant 0 : index
    %8 = vector.load %arg14[%c0_6, %c0_7] : memref<256x256xf32, #tpu.memory_space<vmem>>, vector<256x256xf32>
    tpu.vector_store %arg14[%c0_6, %c0_7], %7 {strides = array<i32>} : memref<256x256xf32, #tpu.memory_space<vmem>>, vector<256x256xf32>,
    %c0_i32_8 = arith.constant 0 : i32
    %9 = arith.cmpi eq, %arg1, %c0_i32_8 : i32
    %10 = arith.extui %9 : i1 to i32
    %c0_i32_9 = arith.constant 0 : i32
    %11 = arith.cmpi ne, %10, %c0_i32_9 : i32
    scf.if %11 {
      %c0_10 = arith.constant 0 : index
      %c0_11 = arith.constant 0 : index
      %12 = vector.load %arg14[%c0_10, %c0_11] : memref<256x256xf32, #tpu.memory_space<vmem>>, vector<256x256xf32>
      %c0_12 = arith.constant 0 : index
      %c0_13 = arith.constant 0 : index
      %13 = vector.load %arg4[%c0_12, %c0_13] : memref<256x256xbf16, #tpu.memory_space<vmem>>, vector<256x256xbf16>
      %14 = vector.extract_strided_slice %12 {offsets = [0, 0], sizes = [256, 128], strides = [1, 1]} : vector<256x256xf32> to vector<256x128xf32>
      %15 = arith.truncf %14 : vector<256x128xf32> to vector<256x128xbf16>
      %c0_14 = arith.constant 0 : index
      %c0_15 = arith.constant 0 : index
      %16 = vector.load %arg5[%c0_14, %c0_15] : memref<128x128xbf16, #tpu.memory_space<vmem>>, vector<128x128xbf16>
      %cst_16 = arith.constant dense<0.000000e+00> : vector<256x128xf32>
      %17 = tpu.matmul %15, %16, %cst_16 {dimension_numbers = #tpu.dot_dimension_numbers<[1], [0], [0], [1], [0, 0, 1, 1], [], []>} : vector<256x128xbf16>, vector<128x128xbf16>, vector<256x128xf32> -> vector<256x128xf32>
      %c0_17 = arith.constant 0 : index
      %c0_18 = arith.constant 0 : index
      %18 = vector.load %arg6[%c0_17, %c0_18] : memref<1x128xf32, #tpu.memory_space<vmem>>, vector<1x128xf32>
      %19 = vector.broadcast %18 : vector<1x128xf32> to vector<256x128xf32>
      %20 = arith.addf %17, %19 : vector<256x128xf32>
      %cst_19 = arith.constant 0.000000e+00 : f32
      %21 = vector.broadcast %cst_19 : f32 to vector<256x128xf32>
      %22 = arith.maximumf %20, %21 : vector<256x128xf32>
      %23 = vector.extract_strided_slice %13 {offsets = [0, 0], sizes = [256, 128], strides = [1, 1]} : vector<256x256xbf16> to vector<256x128xbf16>
      %c0_20 = arith.constant 0 : index
      %c0_21 = arith.constant 0 : index
      %24 = vector.load %arg7[%c0_20, %c0_21] : memref<128x128xbf16, #tpu.memory_space<vmem>>, vector<128x128xbf16>
      %cst_22 = arith.constant dense<0.000000e+00> : vector<256x128xf32>
      %25 = tpu.matmul %23, %24, %cst_22 {dimension_numbers = #tpu.dot_dimension_numbers<[1], [0], [0], [1], [0, 0, 1, 1], [], []>} : vector<256x128xbf16>, vector<128x128xbf16>, vector<256x128xf32> -> vector<256x128xf32>
      %c0_23 = arith.constant 0 : index
      %c0_24 = arith.constant 0 : index
      %26 = vector.load %arg8[%c0_23, %c0_24] : memref<1x128xf32, #tpu.memory_space<vmem>>, vector<1x128xf32>
      %27 = vector.broadcast %26 : vector<1x128xf32> to vector<256x128xf32>
      %28 = arith.addf %25, %27 : vector<256x128xf32>
      %cst_25 = arith.constant 0.000000e+00 : f32
      %29 = vector.broadcast %cst_25 : f32 to vector<256x128xf32>
      %30 = arith.maximumf %28, %29 : vector<256x128xf32>
      %31 = arith.addf %22, %30 : vector<256x128xf32>
      %32 = arith.truncf %31 : vector<256x128xf32> to vector<256x128xbf16>
      %c0_26 = arith.constant 0 : index
      %c0_27 = arith.constant 0 : index
      %33 = vector.load %arg13[%c0_26, %c0_27] : memref<256x256xbf16, #tpu.memory_space<vmem>>, vector<256x128xbf16>
      tpu.vector_store %arg13[%c0_26, %c0_27], %32 {strides = array<i32>} : memref<256x256xbf16, #tpu.memory_space<vmem>>, vector<256x128xbf16>,
      %34 = vector.extract_strided_slice %12 {offsets = [0, 128], sizes = [256, 128], strides = [1, 1]} : vector<256x256xf32> to vector<256x128xf32>
      %35 = arith.truncf %34 : vector<256x128xf32> to vector<256x128xbf16>
      %c0_28 = arith.constant 0 : index
      %c0_29 = arith.constant 0 : index
      %36 = vector.load %arg9[%c0_28, %c0_29] : memref<128x128xbf16, #tpu.memory_space<vmem>>, vector<128x128xbf16>
      %cst_30 = arith.constant dense<0.000000e+00> : vector<256x128xf32>
      %37 = tpu.matmul %35, %36, %cst_30 {dimension_numbers = #tpu.dot_dimension_numbers<[1], [0], [0], [1], [0, 0, 1, 1], [], []>} : vector<256x128xbf16>, vector<128x128xbf16>, vector<256x128xf32> -> vector<256x128xf32>
      %c0_31 = arith.constant 0 : index
      %c0_32 = arith.constant 0 : index
      %38 = vector.load %arg10[%c0_31, %c0_32] : memref<1x128xf32, #tpu.memory_space<vmem>>, vector<1x128xf32>
      %39 = vector.broadcast %38 : vector<1x128xf32> to vector<256x128xf32>
      %40 = arith.addf %37, %39 : vector<256x128xf32>
      %cst_33 = arith.constant 0.000000e+00 : f32
      %41 = vector.broadcast %cst_33 : f32 to vector<256x128xf32>
      %42 = arith.maximumf %40, %41 : vector<256x128xf32>
      %43 = vector.extract_strided_slice %13 {offsets = [0, 128], sizes = [256, 128], strides = [1, 1]} : vector<256x256xbf16> to vector<256x128xbf16>
      %c0_34 = arith.constant 0 : index
      %c0_35 = arith.constant 0 : index
      %44 = vector.load %arg11[%c0_34, %c0_35] : memref<128x128xbf16, #tpu.memory_space<vmem>>, vector<128x128xbf16>
      %cst_36 = arith.constant dense<0.000000e+00> : vector<256x128xf32>
      %45 = tpu.matmul %43, %44, %cst_36 {dimension_numbers = #tpu.dot_dimension_numbers<[1], [0], [0], [1], [0, 0, 1, 1], [], []>} : vector<256x128xbf16>, vector<128x128xbf16>, vector<256x128xf32> -> vector<256x128xf32>
      %c0_37 = arith.constant 0 : index
      %c0_38 = arith.constant 0 : index
      %46 = vector.load %arg12[%c0_37, %c0_38] : memref<1x128xf32, #tpu.memory_space<vmem>>, vector<1x128xf32>
      %47 = vector.broadcast %46 : vector<1x128xf32> to vector<256x128xf32>
      %48 = arith.addf %45, %47 : vector<256x128xf32>
      %cst_39 = arith.constant 0.000000e+00 : f32
      %49 = vector.broadcast %cst_39 : f32 to vector<256x128xf32>
      %50 = arith.maximumf %48, %49 : vector<256x128xf32>
      %51 = arith.addf %42, %50 : vector<256x128xf32>
      %52 = arith.truncf %51 : vector<256x128xf32> to vector<256x128xbf16>
      %c0_40 = arith.constant 0 : index
      %c128 = arith.constant 128 : index
      %53 = vector.load %arg13[%c0_40, %c128] : memref<256x256xbf16, #tpu.memory_space<vmem>>, vector<256x128xbf16>
      tpu.vector_store %arg13[%c0_40, %c128], %52 {strides = array<i32>} : memref<256x256xbf16, #tpu.memory_space<vmem>>, vector<256x128xbf16>,
    } else {
    }
    return
  }
  func.func @transform_0(%arg0: i32, %arg1: i32) -> (i32, i32) {
    %c0_i32 = arith.constant 0 : i32
    return %arg0, %arg1 : i32, i32
  }
  func.func @transform_1(%arg0: i32, %arg1: i32) -> (i32, i32) {
    %c0_i32 = arith.constant 0 : i32
    %c0_i32_0 = arith.constant 0 : i32
    return %arg1, %c0_i32 : i32, i32
  }
  func.func @transform_2(%arg0: i32, %arg1: i32) -> (i32, i32) {
    %c0_i32 = arith.constant 0 : i32
    %c0_i32_0 = arith.constant 0 : i32
    return %arg0, %c0_i32 : i32, i32
  }
  func.func @transform_3(%arg0: i32, %arg1: i32) -> (i32, i32) {
    %c0_i32 = arith.constant 0 : i32
    %c0_i32_0 = arith.constant 0 : i32
    %c0_i32_1 = arith.constant 0 : i32
    return %c0_i32, %c0_i32_0 : i32, i32
  }
  func.func @transform_4(%arg0: i32, %arg1: i32) -> (i32, i32) {
    %c0_i32 = arith.constant 0 : i32
    %c0_i32_0 = arith.constant 0 : i32
    %c0_i32_1 = arith.constant 0 : i32
    return %c0_i32, %c0_i32_0 : i32, i32
  }
  func.func @transform_5(%arg0: i32, %arg1: i32) -> (i32, i32) {
    %c0_i32 = arith.constant 0 : i32
    %c0_i32_0 = arith.constant 0 : i32
    %c0_i32_1 = arith.constant 0 : i32
    return %c0_i32, %c0_i32_0 : i32, i32
  }
  func.func @transform_6(%arg0: i32, %arg1: i32) -> (i32, i32) {
    %c0_i32 = arith.constant 0 : i32
    %c0_i32_0 = arith.constant 0 : i32
    %c0_i32_1 = arith.constant 0 : i32
    return %c0_i32, %c0_i32_0 : i32, i32
  }
  func.func @transform_7(%arg0: i32, %arg1: i32) -> (i32, i32) {
    %c0_i32 = arith.constant 0 : i32
    %c0_i32_0 = arith.constant 0 : i32
    %c0_i32_1 = arith.constant 0 : i32
    return %c0_i32, %c0_i32_0 : i32, i32
  }
  func.func @transform_8(%arg0: i32, %arg1: i32) -> (i32, i32) {
    %c0_i32 = arith.constant 0 : i32
    %c0_i32_0 = arith.constant 0 : i32
    %c0_i32_1 = arith.constant 0 : i32
    return %c0_i32, %c0_i32_0 : i32, i32
  }
  func.func @transform_9(%arg0: i32, %arg1: i32) -> (i32, i32) {
    %c0_i32 = arith.constant 0 : i32
    %c0_i32_0 = arith.constant 0 : i32
    %c0_i32_1 = arith.constant 0 : i32
    return %c0_i32, %c0_i32_0 : i32, i32
  }
  func.func @transform_10(%arg0: i32, %arg1: i32) -> (i32, i32) {
    %c0_i32 = arith.constant 0 : i32
    %c0_i32_0 = arith.constant 0 : i32
    %c0_i32_1 = arith.constant 0 : i32
    return %c0_i32, %c0_i32_0 : i32, i32
  }
  func.func @transform_11(%arg0: i32, %arg1: i32) -> (i32, i32) {
    %c0_i32 = arith.constant 0 : i32
    %c0_i32_0 = arith.constant 0 : i32
    return %arg0, %c0_i32 : i32, i32
  }
}

module attributes {stable_mosaic.version = 11 : i64} {
  func.func @_layer2_kernel(%arg0: i32, %arg1: i32, %arg2: memref<256x512xbf16, #tpu.memory_space<vmem>>, %arg3: memref<512x256xbf16, #tpu.memory_space<vmem>>, %arg4: memref<256x256xbf16, #tpu.memory_space<vmem>>, %arg5: memref<128x128xbf16, #tpu.memory_space<vmem>>, %arg6: memref<1x128xf32, #tpu.memory_space<vmem>>, %arg7: memref<128x128xbf16, #tpu.memory_space<vmem>>, %arg8: memref<1x128xf32, #tpu.memory_space<vmem>>, %arg9: memref<256x128xbf16, #tpu.memory_space<vmem>>, %arg10: memref<256x256xf32, #tpu.memory_space<vmem>>) attributes {dimension_semantics = [#tpu.dimension_semantics<parallel>, #tpu.dimension_semantics<arbitrary>], iteration_bounds = array<i64: 2, 1>, scalar_prefetch = 0 : i64, scratch_operands = 1 : i64, tpu.core_type = #tpu.core_type<tc>, window_params = [{transform_indices = @transform_0, window_bounds = array<i64: 256, 512>}, {transform_indices = @transform_1, window_bounds = array<i64: 512, 256>}, {transform_indices = @transform_2, window_bounds = array<i64: 256, 256>}, {pipeline_mode = #tpu.pipeline_mode<synchronous>, transform_indices = @transform_3, window_bounds = array<i64: 128, 128>}, {pipeline_mode = #tpu.pipeline_mode<synchronous>, transform_indices = @transform_4, window_bounds = array<i64: 1, 128>}, {pipeline_mode = #tpu.pipeline_mode<synchronous>, transform_indices = @transform_5, window_bounds = array<i64: 128, 128>}, {pipeline_mode = #tpu.pipeline_mode<synchronous>, transform_indices = @transform_6, window_bounds = array<i64: 1, 128>}, {transform_indices = @transform_7, window_bounds = array<i64: 256, 128>}]} {
    %c0_i32 = arith.constant 0 : i32
    %0 = arith.cmpi eq, %arg1, %c0_i32 : i32
    %1 = arith.extui %0 : i1 to i32
    %c0_i32_0 = arith.constant 0 : i32
    %2 = arith.cmpi ne, %1, %c0_i32_0 : i32
    scf.if %2 {
      %cst_10 = arith.constant 0.000000e+00 : f32
      %12 = vector.broadcast %cst_10 : f32 to vector<256x256xf32>
      %c0_11 = arith.constant 0 : index
      %c0_12 = arith.constant 0 : index
      %13 = vector.load %arg10[%c0_11, %c0_12] : memref<256x256xf32, #tpu.memory_space<vmem>>, vector<256x256xf32>
      tpu.vector_store %arg10[%c0_11, %c0_12], %12 {strides = array<i32>} : memref<256x256xf32, #tpu.memory_space<vmem>>, vector<256x256xf32>,
    } else {
    }
    %c0 = arith.constant 0 : index
    %c0_1 = arith.constant 0 : index
    %3 = vector.load %arg10[%c0, %c0_1] : memref<256x256xf32, #tpu.memory_space<vmem>>, vector<256x256xf32>
    %c0_2 = arith.constant 0 : index
    %c0_3 = arith.constant 0 : index
    %4 = vector.load %arg2[%c0_2, %c0_3] : memref<256x512xbf16, #tpu.memory_space<vmem>>, vector<256x512xbf16>
    %c0_4 = arith.constant 0 : index
    %c0_5 = arith.constant 0 : index
    %5 = vector.load %arg3[%c0_4, %c0_5] : memref<512x256xbf16, #tpu.memory_space<vmem>>, vector<512x256xbf16>
    %cst = arith.constant dense<0.000000e+00> : vector<256x256xf32>
    %6 = tpu.matmul %4, %5, %cst {dimension_numbers = #tpu.dot_dimension_numbers<[1], [0], [0], [1], [0, 0, 1, 1], [], []>} : vector<256x512xbf16>, vector<512x256xbf16>, vector<256x256xf32> -> vector<256x256xf32>
    %7 = arith.addf %3, %6 : vector<256x256xf32>
    %c0_6 = arith.constant 0 : index
    %c0_7 = arith.constant 0 : index
    %8 = vector.load %arg10[%c0_6, %c0_7] : memref<256x256xf32, #tpu.memory_space<vmem>>, vector<256x256xf32>
    tpu.vector_store %arg10[%c0_6, %c0_7], %7 {strides = array<i32>} : memref<256x256xf32, #tpu.memory_space<vmem>>, vector<256x256xf32>,
    %c0_i32_8 = arith.constant 0 : i32
    %9 = arith.cmpi eq, %arg1, %c0_i32_8 : i32
    %10 = arith.extui %9 : i1 to i32
    %c0_i32_9 = arith.constant 0 : i32
    %11 = arith.cmpi ne, %10, %c0_i32_9 : i32
    scf.if %11 {
      %c0_10 = arith.constant 0 : index
      %c0_11 = arith.constant 0 : index
      %12 = vector.load %arg10[%c0_10, %c0_11] : memref<256x256xf32, #tpu.memory_space<vmem>>, vector<256x256xf32>
      %c0_12 = arith.constant 0 : index
      %c0_13 = arith.constant 0 : index
      %13 = vector.load %arg4[%c0_12, %c0_13] : memref<256x256xbf16, #tpu.memory_space<vmem>>, vector<256x256xbf16>
      %14 = arith.extf %13 : vector<256x256xbf16> to vector<256x256xf32>
      %15 = vector.extract_strided_slice %12 {offsets = [0, 0], sizes = [256, 128], strides = [1, 1]} : vector<256x256xf32> to vector<256x128xf32>
      %16 = arith.truncf %15 : vector<256x128xf32> to vector<256x128xbf16>
      %c0_14 = arith.constant 0 : index
      %c0_15 = arith.constant 0 : index
      %17 = vector.load %arg5[%c0_14, %c0_15] : memref<128x128xbf16, #tpu.memory_space<vmem>>, vector<128x128xbf16>
      %cst_16 = arith.constant dense<0.000000e+00> : vector<256x128xf32>
      %18 = tpu.matmul %16, %17, %cst_16 {dimension_numbers = #tpu.dot_dimension_numbers<[1], [0], [0], [1], [0, 0, 1, 1], [], []>} : vector<256x128xbf16>, vector<128x128xbf16>, vector<256x128xf32> -> vector<256x128xf32>
      %c0_17 = arith.constant 0 : index
      %c0_18 = arith.constant 0 : index
      %19 = vector.load %arg6[%c0_17, %c0_18] : memref<1x128xf32, #tpu.memory_space<vmem>>, vector<1x128xf32>
      %20 = vector.broadcast %19 : vector<1x128xf32> to vector<256x128xf32>
      %21 = arith.addf %18, %20 : vector<256x128xf32>
      %cst_19 = arith.constant 0.000000e+00 : f32
      %22 = vector.broadcast %cst_19 : f32 to vector<256x128xf32>
      %23 = arith.maximumf %21, %22 : vector<256x128xf32>
      %24 = vector.extract_strided_slice %14 {offsets = [0, 0], sizes = [256, 128], strides = [1, 1]} : vector<256x256xf32> to vector<256x128xf32>
      %25 = arith.addf %23, %24 : vector<256x128xf32>
      %26 = vector.extract_strided_slice %12 {offsets = [0, 128], sizes = [256, 128], strides = [1, 1]} : vector<256x256xf32> to vector<256x128xf32>
      %27 = arith.truncf %26 : vector<256x128xf32> to vector<256x128xbf16>
      %c0_20 = arith.constant 0 : index
      %c0_21 = arith.constant 0 : index
      %28 = vector.load %arg7[%c0_20, %c0_21] : memref<128x128xbf16, #tpu.memory_space<vmem>>, vector<128x128xbf16>
      %cst_22 = arith.constant dense<0.000000e+00> : vector<256x128xf32>
      %29 = tpu.matmul %27, %28, %cst_22 {dimension_numbers = #tpu.dot_dimension_numbers<[1], [0], [0], [1], [0, 0, 1, 1], [], []>} : vector<256x128xbf16>, vector<128x128xbf16>, vector<256x128xf32> -> vector<256x128xf32>
      %c0_23 = arith.constant 0 : index
      %c0_24 = arith.constant 0 : index
      %30 = vector.load %arg8[%c0_23, %c0_24] : memref<1x128xf32, #tpu.memory_space<vmem>>, vector<1x128xf32>
      %31 = vector.broadcast %30 : vector<1x128xf32> to vector<256x128xf32>
      %32 = arith.addf %29, %31 : vector<256x128xf32>
      %cst_25 = arith.constant 0.000000e+00 : f32
      %33 = vector.broadcast %cst_25 : f32 to vector<256x128xf32>
      %34 = arith.maximumf %32, %33 : vector<256x128xf32>
      %35 = vector.extract_strided_slice %14 {offsets = [0, 128], sizes = [256, 128], strides = [1, 1]} : vector<256x256xf32> to vector<256x128xf32>
      %36 = arith.addf %34, %35 : vector<256x128xf32>
      %37 = arith.addf %25, %36 : vector<256x128xf32>
      %38 = arith.truncf %37 : vector<256x128xf32> to vector<256x128xbf16>
      %c0_26 = arith.constant 0 : index
      %c0_27 = arith.constant 0 : index
      %39 = vector.load %arg9[%c0_26, %c0_27] : memref<256x128xbf16, #tpu.memory_space<vmem>>, vector<256x128xbf16>
      tpu.vector_store %arg9[%c0_26, %c0_27], %38 {strides = array<i32>} : memref<256x128xbf16, #tpu.memory_space<vmem>>, vector<256x128xbf16>,
    } else {
    }
    return
  }
  func.func @transform_0(%arg0: i32, %arg1: i32) -> (i32, i32) {
    %c0_i32 = arith.constant 0 : i32
    return %arg0, %arg1 : i32, i32
  }
  func.func @transform_1(%arg0: i32, %arg1: i32) -> (i32, i32) {
    %c0_i32 = arith.constant 0 : i32
    %c0_i32_0 = arith.constant 0 : i32
    return %arg1, %c0_i32 : i32, i32
  }
  func.func @transform_2(%arg0: i32, %arg1: i32) -> (i32, i32) {
    %c0_i32 = arith.constant 0 : i32
    %c0_i32_0 = arith.constant 0 : i32
    return %arg0, %c0_i32 : i32, i32
  }
  func.func @transform_3(%arg0: i32, %arg1: i32) -> (i32, i32) {
    %c0_i32 = arith.constant 0 : i32
    %c0_i32_0 = arith.constant 0 : i32
    %c0_i32_1 = arith.constant 0 : i32
    return %c0_i32, %c0_i32_0 : i32, i32
  }
  func.func @transform_4(%arg0: i32, %arg1: i32) -> (i32, i32) {
    %c0_i32 = arith.constant 0 : i32
    %c0_i32_0 = arith.constant 0 : i32
    %c0_i32_1 = arith.constant 0 : i32
    return %c0_i32, %c0_i32_0 : i32, i32
  }
  func.func @transform_5(%arg0: i32, %arg1: i32) -> (i32, i32) {
    %c0_i32 = arith.constant 0 : i32
    %c0_i32_0 = arith.constant 0 : i32
    %c0_i32_1 = arith.constant 0 : i32
    return %c0_i32, %c0_i32_0 : i32, i32
  }
  func.func @transform_6(%arg0: i32, %arg1: i32) -> (i32, i32) {
    %c0_i32 = arith.constant 0 : i32
    %c0_i32_0 = arith.constant 0 : i32
    %c0_i32_1 = arith.constant 0 : i32
    return %c0_i32, %c0_i32_0 : i32, i32
  }
  func.func @transform_7(%arg0: i32, %arg1: i32) -> (i32, i32) {
    %c0_i32 = arith.constant 0 : i32
    %c0_i32_0 = arith.constant 0 : i32
    return %arg0, %c0_i32 : i32, i32
  }
}

module attributes {stable_mosaic.version = 11 : i64} {
  func.func @_pool_fc_kernel(%arg0: i32, %arg1: memref<16x512xbf16, #tpu.memory_space<vmem>>, %arg2: memref<512x128xbf16, #tpu.memory_space<vmem>>, %arg3: memref<1x128xf32, #tpu.memory_space<vmem>>, %arg4: memref<1x1xf32, #tpu.memory_space<vmem>>, %arg5: memref<16x1xf32, #tpu.memory_space<vmem>>, %arg6: memref<16x128xf32, #tpu.memory_space<vmem>>) attributes {dimension_semantics = [#tpu.dimension_semantics<arbitrary>], iteration_bounds = array<i64: 1>, scalar_prefetch = 0 : i64, scratch_operands = 1 : i64, tpu.core_type = #tpu.core_type<tc>, window_params = [{transform_indices = @transform_0, window_bounds = array<i64: 16, 512>}, {transform_indices = @transform_1, window_bounds = array<i64: 512, 128>}, {pipeline_mode = #tpu.pipeline_mode<synchronous>, transform_indices = @transform_2, window_bounds = array<i64: 1, 128>}, {pipeline_mode = #tpu.pipeline_mode<synchronous>, transform_indices = @transform_3, window_bounds = array<i64: 1, 1>}, {pipeline_mode = #tpu.pipeline_mode<synchronous>, transform_indices = @transform_4, window_bounds = array<i64: 16, 1>}]} {
    %c0_i32 = arith.constant 0 : i32
    %0 = arith.cmpi eq, %arg0, %c0_i32 : i32
    %1 = arith.extui %0 : i1 to i32
    %c0_i32_0 = arith.constant 0 : i32
    %2 = arith.cmpi ne, %1, %c0_i32_0 : i32
    scf.if %2 {
      %cst_10 = arith.constant 0.000000e+00 : f32
      %12 = vector.broadcast %cst_10 : f32 to vector<16x128xf32>
      %c0_11 = arith.constant 0 : index
      %c0_12 = arith.constant 0 : index
      %13 = vector.load %arg6[%c0_11, %c0_12] : memref<16x128xf32, #tpu.memory_space<vmem>>, vector<16x128xf32>
      tpu.vector_store %arg6[%c0_11, %c0_12], %12 {strides = array<i32>} : memref<16x128xf32, #tpu.memory_space<vmem>>, vector<16x128xf32>,
    } else {
    }
    %c0 = arith.constant 0 : index
    %c0_1 = arith.constant 0 : index
    %3 = vector.load %arg6[%c0, %c0_1] : memref<16x128xf32, #tpu.memory_space<vmem>>, vector<16x128xf32>
    %c0_2 = arith.constant 0 : index
    %c0_3 = arith.constant 0 : index
    %4 = vector.load %arg1[%c0_2, %c0_3] : memref<16x512xbf16, #tpu.memory_space<vmem>>, vector<16x512xbf16>
    %c0_4 = arith.constant 0 : index
    %c0_5 = arith.constant 0 : index
    %5 = vector.load %arg2[%c0_4, %c0_5] : memref<512x128xbf16, #tpu.memory_space<vmem>>, vector<512x128xbf16>
    %cst = arith.constant dense<0.000000e+00> : vector<16x128xf32>
    %6 = tpu.matmul %4, %5, %cst {dimension_numbers = #tpu.dot_dimension_numbers<[1], [0], [0], [1], [0, 0, 1, 1], [], []>} : vector<16x512xbf16>, vector<512x128xbf16>, vector<16x128xf32> -> vector<16x128xf32>
    %7 = arith.addf %3, %6 : vector<16x128xf32>
    %c0_6 = arith.constant 0 : index
    %c0_7 = arith.constant 0 : index
    %8 = vector.load %arg6[%c0_6, %c0_7] : memref<16x128xf32, #tpu.memory_space<vmem>>, vector<16x128xf32>
    tpu.vector_store %arg6[%c0_6, %c0_7], %7 {strides = array<i32>} : memref<16x128xf32, #tpu.memory_space<vmem>>, vector<16x128xf32>,
    %c0_i32_8 = arith.constant 0 : i32
    %9 = arith.cmpi eq, %arg0, %c0_i32_8 : i32
    %10 = arith.extui %9 : i1 to i32
    %c0_i32_9 = arith.constant 0 : i32
    %11 = arith.cmpi ne, %10, %c0_i32_9 : i32
    scf.if %11 {
      %c0_10 = arith.constant 0 : index
      %c0_11 = arith.constant 0 : index
      %12 = vector.load %arg6[%c0_10, %c0_11] : memref<16x128xf32, #tpu.memory_space<vmem>>, vector<16x128xf32>
      %c0_12 = arith.constant 0 : index
      %c0_13 = arith.constant 0 : index
      %13 = vector.load %arg3[%c0_12, %c0_13] : memref<1x128xf32, #tpu.memory_space<vmem>>, vector<1x128xf32>
      %14 = vector.broadcast %13 : vector<1x128xf32> to vector<16x128xf32>
      %15 = arith.mulf %12, %14 : vector<16x128xf32>
      %cst_14 = arith.constant dense<0.000000e+00> : vector<16xf32>
      %16 = vector.multi_reduction <add>, %15, %cst_14 [1] : vector<16x128xf32> to vector<16xf32>
      %17 = vector.shape_cast %16 : vector<16xf32> to vector<16x1xf32>
      %c0_15 = arith.constant 0 : index
      %c0_16 = arith.constant 0 : index
      %18 = vector.load %arg4[%c0_15, %c0_16] : memref<1x1xf32, #tpu.memory_space<vmem>>, vector<1x1xf32>
      %19 = vector.broadcast %18 : vector<1x1xf32> to vector<16x1xf32>
      %20 = arith.addf %17, %19 : vector<16x1xf32>
      %c0_17 = arith.constant 0 : index
      %c0_18 = arith.constant 0 : index
      %21 = vector.load %arg5[%c0_17, %c0_18] : memref<16x1xf32, #tpu.memory_space<vmem>>, vector<16x1xf32>
      tpu.vector_store %arg5[%c0_17, %c0_18], %20 {strides = array<i32>} : memref<16x1xf32, #tpu.memory_space<vmem>>, vector<16x1xf32>,
    } else {
    }
    return
  }
  func.func @transform_0(%arg0: i32) -> (i32, i32) {
    %c0_i32 = arith.constant 0 : i32
    %c0_i32_0 = arith.constant 0 : i32
    return %c0_i32, %arg0 : i32, i32
  }
  func.func @transform_1(%arg0: i32) -> (i32, i32) {
    %c0_i32 = arith.constant 0 : i32
    %c0_i32_0 = arith.constant 0 : i32
    return %arg0, %c0_i32 : i32, i32
  }
  func.func @transform_2(%arg0: i32) -> (i32, i32) {
    %c0_i32 = arith.constant 0 : i32
    %c0_i32_0 = arith.constant 0 : i32
    %c0_i32_1 = arith.constant 0 : i32
    return %c0_i32, %c0_i32_0 : i32, i32
  }
  func.func @transform_3(%arg0: i32) -> (i32, i32) {
    %c0_i32 = arith.constant 0 : i32
    %c0_i32_0 = arith.constant 0 : i32
    %c0_i32_1 = arith.constant 0 : i32
    return %c0_i32, %c0_i32_0 : i32, i32
  }
  func.func @transform_4(%arg0: i32) -> (i32, i32) {
    %c0_i32 = arith.constant 0 : i32
    %c0_i32_0 = arith.constant 0 : i32
    %c0_i32_1 = arith.constant 0 : i32
    return %c0_i32, %c0_i32_0 : i32, i32
  }
}

</mosaic_0001>

<llo_original>
// kernel: gin_forward.5
$region0: #{gin_forward.5}
  #allocation0 [shape = 'u32[]', space=smem, size = 0x4, offset = 0x4, fixed_abs, tag = 'smem constant byte address 0x4 - core index']
  #allocation1 [shape = 'u32[144,128]{1,0:T(1,128)}', space=vmem, size = 0x12000, scoped, tag = 'internal scratch']
  #allocation2 [shape = 'f32[16,128]{1,0:T(8,128)}', space=vmem, size = 0x2000, scoped, tag = 'scratch operand']
  #allocation3 [shape = 'f32[1,1]{1,0:T(1,128)S(1)}', space=vmem, size = 0x200, scoped, tag = 'scoped memory for gin_forward.5']
  %s0 = inlined_call_operand.vmem [shape: bf16[16,512], index: 0, kind: input, shape index: {}]
  %s1 = inlined_call_operand.vmem [shape: bf16[512,128], index: 1, kind: input, shape index: {}]
  %s2 = inlined_call_operand.vmem [shape: f32[1,128], index: 2, kind: input, shape index: {}]
  %s3 = inlined_call_operand.<no memory space> [shape: f32[1,1], index: 3, kind: input, shape index: {}]
  %s4 = inlined_call_operand.vmem [shape: f32[16,1], index: 4, kind: output, shape index: {}]
  %s5 = sld [smem:[#allocation0]]
  $region34: #{gin_forward.5} parent=0
    _
  %s7 = ssub.s32 1, %s5
  %s8 = scalar_select 0, %s7, %s5
  %v9 = vstv %s3
  %10 = vst [vmem:[#allocation3] sm:$0x1] %v9
  // Predicated region
  $region2: #{gin_forward.5} parent=0 // pred_check
    _
  $region3: #{gin_forward.5} parent=0 // pred_check_branch
    %12 = sbr.rel (0) target = $region5
  $region4: #{gin_forward.5} parent=0 // pred_region
    _
  $region5: #{gin_forward.5} parent=0 // pred_fallthru
    _
  // Predicated region
  $region6: #{gin_forward.5} parent=0 // pred_check
    _
  $region7: #{gin_forward.5} parent=0 // pred_check_branch
    %14 = sbr.rel (0) target = $region9
  $region8: #{gin_forward.5} parent=0 // pred_region
    _
  $region9: #{gin_forward.5} parent=0 // pred_fallthru
    _
  // Predicated region
  $region10: #{gin_forward.5} parent=0 // pred_check
    _
  $region11: #{gin_forward.5} parent=0 // pred_check_branch
    %16 = sbr.rel (0) target = $region13
  $region12: #{gin_forward.5} parent=0 // pred_region
    _
  $region13: #{gin_forward.5} parent=0 // pred_fallthru
    _
  // Predicated region
  $region14: #{gin_forward.5} parent=0 // pred_check
    _
  $region15: #{gin_forward.5} parent=0 // pred_check_branch
    %18 = sbr.rel (0) target = $region17
  $region16: #{gin_forward.5} parent=0 // pred_region
    _
  $region17: #{gin_forward.5} parent=0 // pred_fallthru
    _
  %p20 = scmp.eq.s32.totalorder 0, 0
  // Predicated region
  $region18: #{gin_forward.5} parent=0 // pred_check
    %p21 = pneg %p20
  $region19: #{gin_forward.5} parent=0 // pred_check_branch
    %23 = sbr.rel (%p21) target = $region21
  $region20: #{gin_forward.5} parent=0 // pred_region
    %24 = vst [vmem:[#allocation2] sm:$0xff] 0.0
    %25 = vst [vmem:[#allocation2 + $0x8] sm:$0xff] 0.0
  $region21: #{gin_forward.5} parent=0 // pred_fallthru
    _
  %v26 = vld [vmem:[#allocation2] sm:$0xff]
  %v27 = vld [vmem:[#allocation2 + $0x8] sm:$0xff]
  %v28 = vld [vmem:[%s0] sm:$0xff]
  %v29 = vld [vmem:[%s0 + $0x8] sm:$0xff]
  %v30 = vld [vmem:[%s0 + $0x10] sm:$0xff]
  %v31 = vld [vmem:[%s0 + $0x18] sm:$0xff]
  %v32 = vld [vmem:[%s1] sm:$0xf]
  %v33 = vld [vmem:[%s1 + $0x4] sm:$0xf]
  %v34 = vld [vmem:[%s1 + $0x8] sm:$0xf]
  %v35 = vld [vmem:[%s1 + $0xc] sm:$0xf]
  %v36 = vld [vmem:[%s1 + $0x10] sm:$0xf]
  %v37 = vld [vmem:[%s1 + $0x14] sm:$0xf]
  %v38 = vld [vmem:[%s1 + $0x18] sm:$0xf]
  %v39 = vld [vmem:[%s1 + $0x1c] sm:$0xf]
  %v40 = vld [vmem:[%s1 + $0x20] sm:$0xf]
  %v41 = vld [vmem:[%s1 + $0x24] sm:$0xf]
  %v42 = vld [vmem:[%s1 + $0x28] sm:$0xf]
  %v43 = vld [vmem:[%s1 + $0x2c] sm:$0xf]
  %v44 = vld [vmem:[%s1 + $0x30] sm:$0xf]
  %v45 = vld [vmem:[%s1 + $0x34] sm:$0xf]
  %v46 = vld [vmem:[%s1 + $0x38] sm:$0xf]
  %v47 = vld [vmem:[%s1 + $0x3c] sm:$0xf]
  %v48 = vld [vmem:[%s1 + $0x40] sm:$0xf]
  %v49 = vld [vmem:[%s1 + $0x44] sm:$0xf]
  %v50 = vld [vmem:[%s1 + $0x48] sm:$0xf]
  %v51 = vld [vmem:[%s1 + $0x4c] sm:$0xf]
  %v52 = vld [vmem:[%s1 + $0x50] sm:$0xf]
  %v53 = vld [vmem:[%s1 + $0x54] sm:$0xf]
  %v54 = vld [vmem:[%s1 + $0x58] sm:$0xf]
  %v55 = vld [vmem:[%s1 + $0x5c] sm:$0xf]
  %v56 = vld [vmem:[%s1 + $0x60] sm:$0xf]
  %v57 = vld [vmem:[%s1 + $0x64] sm:$0xf]
  %v58 = vld [vmem:[%s1 + $0x68] sm:$0xf]
  %v59 = vld [vmem:[%s1 + $0x6c] sm:$0xf]
  %v60 = vld [vmem:[%s1 + $0x70] sm:$0xf]
  %v61 = vld [vmem:[%s1 + $0x74] sm:$0xf]
  %v62 = vld [vmem:[%s1 + $0x78] sm:$0xf]
  %v63 = vld [vmem:[%s1 + $0x7c] sm:$0xf]
  %v64 = vld [vmem:[%s1 + $0x80] sm:$0xf]
  %v65 = vld [vmem:[%s1 + $0x84] sm:$0xf]
  %v66 = vld [vmem:[%s1 + $0x88] sm:$0xf]
  %v67 = vld [vmem:[%s1 + $0x8c] sm:$0xf]
  %v68 = vld [vmem:[%s1 + $0x90] sm:$0xf]
  %v69 = vld [vmem:[%s1 + $0x94] sm:$0xf]
  %v70 = vld [vmem:[%s1 + $0x98] sm:$0xf]
  %v71 = vld [vmem:[%s1 + $0x9c] sm:$0xf]
  %v72 = vld [vmem:[%s1 + $0xa0] sm:$0xf]
  %v73 = vld [vmem:[%s1 + $0xa4] sm:$0xf]
  %v74 = vld [vmem:[%s1 + $0xa8] sm:$0xf]
  %v75 = vld [vmem:[%s1 + $0xac] sm:$0xf]
  %v76 = vld [vmem:[%s1 + $0xb0] sm:$0xf]
  %v77 = vld [vmem:[%s1 + $0xb4] sm:$0xf]
  %v78 = vld [vmem:[%s1 + $0xb8] sm:$0xf]
  %v79 = vld [vmem:[%s1 + $0xbc] sm:$0xf]
  %v80 = vld [vmem:[%s1 + $0xc0] sm:$0xf]
  %v81 = vld [vmem:[%s1 + $0xc4] sm:$0xf]
  %v82 = vld [vmem:[%s1 + $0xc8] sm:$0xf]
  %v83 = vld [vmem:[%s1 + $0xcc] sm:$0xf]
  %v84 = vld [vmem:[%s1 + $0xd0] sm:$0xf]
  %v85 = vld [vmem:[%s1 + $0xd4] sm:$0xf]
  %v86 = vld [vmem:[%s1 + $0xd8] sm:$0xf]
  %v87 = vld [vmem:[%s1 + $0xdc] sm:$0xf]
  %v88 = vld [vmem:[%s1 + $0xe0] sm:$0xf]
  %v89 = vld [vmem:[%s1 + $0xe4] sm:$0xf]
  %v90 = vld [vmem:[%s1 + $0xe8] sm:$0xf]
  %v91 = vld [vmem:[%s1 + $0xec] sm:$0xf]
  %v92 = vld [vmem:[%s1 + $0xf0] sm:$0xf]
  %v93 = vld [vmem:[%s1 + $0xf4] sm:$0xf]
  %v94 = vld [vmem:[%s1 + $0xf8] sm:$0xf]
  %v95 = vld [vmem:[%s1 + $0xfc] sm:$0xf]
  %v100 = vunpack.c.l.b16 %v28
  %v101 = vunpack.c.h.b16 %v28
  %v102 = vunpack.c.l.b16 %v29
  %v103 = vunpack.c.h.b16 %v29
  %v104 = vunpack.c.l.b16 %v30
  %v105 = vunpack.c.h.b16 %v30
  %v106 = vunpack.c.l.b16 %v31
  %v107 = vunpack.c.h.b16 %v31
  %v108 = vpack.c.b16 %v104, %v100
  %v109 = vpack.c.b16 %v105, %v101
  %v110 = vpack.c.b16 %v106, %v102
  %v111 = vpack.c.b16 %v107, %v103
  %v180 = vunpack.c.l.b16 %v32
  %v181 = vunpack.c.l.b16 %v33
  %v182 = vunpack.c.l.b16 %v34
  %v183 = vunpack.c.l.b16 %v35
  %v184 = vunpack.c.l.b16 %v36
  %v185 = vunpack.c.l.b16 %v37
  %v186 = vunpack.c.l.b16 %v38
  %v187 = vunpack.c.l.b16 %v39
  %v188 = vunpack.c.l.b16 %v40
  %v189 = vunpack.c.l.b16 %v41
  %v190 = vunpack.c.l.b16 %v42
  %v191 = vunpack.c.l.b16 %v43
  %v192 = vunpack.c.l.b16 %v44
  %v193 = vunpack.c.l.b16 %v45
  %v194 = vunpack.c.l.b16 %v46
  %v195 = vunpack.c.l.b16 %v47
  %v196 = vunpack.c.l.b16 %v48
  %v197 = vunpack.c.l.b16 %v49
  %v198 = vunpack.c.l.b16 %v50
  %v199 = vunpack.c.l.b16 %v51
  %v200 = vunpack.c.l.b16 %v52
  %v201 = vunpack.c.l.b16 %v53
  %v202 = vunpack.c.l.b16 %v54
  %v203 = vunpack.c.l.b16 %v55
  %v204 = vunpack.c.l.b16 %v56
  %v205 = vunpack.c.l.b16 %v57
  %v206 = vunpack.c.l.b16 %v58
  %v207 = vunpack.c.l.b16 %v59
  %v208 = vunpack.c.l.b16 %v60
  %v209 = vunpack.c.l.b16 %v61
  %v210 = vunpack.c.l.b16 %v62
  %v211 = vunpack.c.l.b16 %v63
  %v212 = vunpack.c.l.b16 %v64
  %v213 = vunpack.c.l.b16 %v65
  %v214 = vunpack.c.l.b16 %v66
  %v215 = vunpack.c.l.b16 %v67
  %v216 = vunpack.c.l.b16 %v68
  %v217 = vunpack.c.l.b16 %v69
  %v218 = vunpack.c.l.b16 %v70
  %v219 = vunpack.c.l.b16 %v71
  %v220 = vunpack.c.l.b16 %v72
  %v221 = vunpack.c.l.b16 %v73
  %v222 = vunpack.c.l.b16 %v74
  %v223 = vunpack.c.l.b16 %v75
  %v224 = vunpack.c.l.b16 %v76
  %v225 = vunpack.c.l.b16 %v77
  %v226 = vunpack.c.l.b16 %v78
  %v227 = vunpack.c.l.b16 %v79
  %v228 = vunpack.c.l.b16 %v80
  %v229 = vunpack.c.l.b16 %v81
  %v230 = vunpack.c.l.b16 %v82
  %v231 = vunpack.c.l.b16 %v83
  %v232 = vunpack.c.l.b16 %v84
  %v233 = vunpack.c.l.b16 %v85
  %v234 = vunpack.c.l.b16 %v86
  %v235 = vunpack.c.l.b16 %v87
  %v236 = vunpack.c.l.b16 %v88
  %v237 = vunpack.c.l.b16 %v89
  %v238 = vunpack.c.l.b16 %v90
  %v239 = vunpack.c.l.b16 %v91
  %v240 = vunpack.c.l.b16 %v92
  %v241 = vunpack.c.l.b16 %v93
  %v242 = vunpack.c.l.b16 %v94
  %v243 = vunpack.c.l.b16 %v95
  %v244 = vpack.c.b16 %v181, %v180
  %v245 = vpack.c.b16 %v183, %v182
  %v246 = vpack.c.b16 %v185, %v184
  %v247 = vpack.c.b16 %v187, %v186
  %v248 = vpack.c.b16 %v189, %v188
  %v249 = vpack.c.b16 %v191, %v190
  %v250 = vpack.c.b16 %v193, %v192
  %v251 = vpack.c.b16 %v195, %v194
  %v252 = vpack.c.b16 %v197, %v196
  %v253 = vpack.c.b16 %v199, %v198
  %v254 = vpack.c.b16 %v201, %v200
  %v255 = vpack.c.b16 %v203, %v202
  %v256 = vpack.c.b16 %v205, %v204
  %v257 = vpack.c.b16 %v207, %v206
  %v258 = vpack.c.b16 %v209, %v208
  %v259 = vpack.c.b16 %v211, %v210
  %v260 = vpack.c.b16 %v213, %v212
  %v261 = vpack.c.b16 %v215, %v214
  %v262 = vpack.c.b16 %v217, %v216
  %v263 = vpack.c.b16 %v219, %v218
  %v264 = vpack.c.b16 %v221, %v220
  %v265 = vpack.c.b16 %v223, %v222
  %v266 = vpack.c.b16 %v225, %v224
  %v267 = vpack.c.b16 %v227, %v226
  %v268 = vpack.c.b16 %v229, %v228
  %v269 = vpack.c.b16 %v231, %v230
  %v270 = vpack.c.b16 %v233, %v232
  %v271 = vpack.c.b16 %v235, %v234
  %v272 = vpack.c.b16 %v237, %v236
  %v273 = vpack.c.b16 %v239, %v238
  %v274 = vpack.c.b16 %v241, %v240
  %v275 = vpack.c.b16 %v243, %v242
  %308 = vmatprep.subr.bf16.mxu0 0
  %309 = vmatpush1.bf16.msra.mxu0 %v244
  %310 = vmatprep.subr.bf16.mxu0 0
  %311 = vmatpush1.bf16.msra.mxu0 %v245
  %312 = vmatprep.subr.bf16.mxu0 0
  %313 = vmatpush1.bf16.msra.mxu0 %v246
  %314 = vmatprep.subr.bf16.mxu0 0
  %315 = vmatpush1.bf16.msra.mxu0 %v247
  %316 = vmatprep.subr.bf16.mxu0 0
  %317 = vmatpush1.bf16.msra.mxu0 %v248
  %318 = vmatprep.subr.bf16.mxu0 0
  %319 = vmatpush1.bf16.msra.mxu0 %v249
  %320 = vmatprep.subr.bf16.mxu0 0
  %321 = vmatpush1.bf16.msra.mxu0 %v250
  %322 = vmatprep.subr.bf16.mxu0 0
  %323 = vmatpush1.bf16.msra.mxu0 %v251
  %324 = vmatprep.subr.bf16.mxu0 0
  %325 = vmatpush1.bf16.msra.mxu0 %v252
  %326 = vmatprep.subr.bf16.mxu0 0
  %327 = vmatpush1.bf16.msra.mxu0 %v253
  %328 = vmatprep.subr.bf16.mxu0 0
  %329 = vmatpush1.bf16.msra.mxu0 %v254
  %330 = vmatprep.subr.bf16.mxu0 0
  %331 = vmatpush1.bf16.msra.mxu0 %v255
  %332 = vmatprep.subr.bf16.mxu0 0
  %333 = vmatpush1.bf16.msra.mxu0 %v256
  %334 = vmatprep.subr.bf16.mxu0 0
  %335 = vmatpush1.bf16.msra.mxu0 %v257
  %336 = vmatprep.subr.bf16.mxu0 0
  %337 = vmatpush1.bf16.msra.mxu0 %v258
  %338 = vmatprep.subr.bf16.mxu0 0
  %339 = vmatpush1.bf16.msra.mxu0 %v259
  %340 = vmatprep.mubr.bf16.mxu0 %v109
  %341 = vmatmul.mubr.bf16.gmra.mrb[0].mxu0 %v108
  %v342 = vpop.f32.mrb[0].mxu0
  %v343 = vadd.f32 0.0, %v342
  %v344 = vpop.f32.mrb[0].mxu0
  %v345 = vpop.f32.mrb[0].mxu0
  %v346 = vadd.f32 0.0, %v345
  %v347 = vpop.f32.mrb[0].mxu0
  %348 = vdwg.mxu0
  %349 = vmatprep.subr.bf16.mxu0 0
  %350 = vmatpush1.bf16.msra.mxu0 %v260
  %351 = vmatprep.subr.bf16.mxu0 0
  %352 = vmatpush1.bf16.msra.mxu0 %v261
  %353 = vmatprep.subr.bf16.mxu0 0
  %354 = vmatpush1.bf16.msra.mxu0 %v262
  %355 = vmatprep.subr.bf16.mxu0 0
  %356 = vmatpush1.bf16.msra.mxu0 %v263
  %357 = vmatprep.subr.bf16.mxu0 0
  %358 = vmatpush1.bf16.msra.mxu0 %v264
  %359 = vmatprep.subr.bf16.mxu0 0
  %360 = vmatpush1.bf16.msra.mxu0 %v265
  %361 = vmatprep.subr.bf16.mxu0 0
  %362 = vmatpush1.bf16.msra.mxu0 %v266
  %363 = vmatprep.subr.bf16.mxu0 0
  %364 = vmatpush1.bf16.msra.mxu0 %v267
  %365 = vmatprep.subr.bf16.mxu0 0
  %366 = vmatpush1.bf16.msra.mxu0 %v268
  %367 = vmatprep.subr.bf16.mxu0 0
  %368 = vmatpush1.bf16.msra.mxu0 %v269
  %369 = vmatprep.subr.bf16.mxu0 0
  %370 = vmatpush1.bf16.msra.mxu0 %v270
  %371 = vmatprep.subr.bf16.mxu0 0
  %372 = vmatpush1.bf16.msra.mxu0 %v271
  %373 = vmatprep.subr.bf16.mxu0 0
  %374 = vmatpush1.bf16.msra.mxu0 %v272
  %375 = vmatprep.subr.bf16.mxu0 0
  %376 = vmatpush1.bf16.msra.mxu0 %v273
  %377 = vmatprep.subr.bf16.mxu0 0
  %378 = vmatpush1.bf16.msra.mxu0 %v274
  %379 = vmatprep.subr.bf16.mxu0 0
  %380 = vmatpush1.bf16.msra.mxu0 %v275
  %381 = vmatprep.mubr.bf16.mxu0 %v111
  %382 = vmatmul.mubr.bf16.gmra.mrb[0].mxu0 %v110
  %v383 = vpop.f32.mrb[0].mxu0
  %v384 = vadd.f32 %v343, %v383
  %v385 = vpop.f32.mrb[0].mxu0
  %v386 = vpop.f32.mrb[0].mxu0
  %v387 = vadd.f32 %v346, %v386
  %v388 = vpop.f32.mrb[0].mxu0
  %389 = vdwg.mxu0
  %v390 = vadd.f32 %v26, %v384
  %v391 = vadd.f32 %v27, %v387
  %392 = vst [vmem:[#allocation2] sm:$0xff] %v390
  %393 = vst [vmem:[#allocation2 + $0x8] sm:$0xff] %v391
  // Predicated region
  $region22: #{gin_forward.5} parent=0 // pred_check
    %p394 = pneg %p20
  $region23: #{gin_forward.5} parent=0 // pred_check_branch
    %396 = sbr.rel (%p394) target = $region25
  $region24: #{gin_forward.5} parent=0 // pred_region
    %v397 = vld [vmem:[#allocation2] sm:$0xff]
    %v398 = vld [vmem:[#allocation2 + $0x8] sm:$0xff]
    %v399 = vld [vmem:[%s2] sm:$0x1]
    %v401 = vlaneseq
    %v402 = vshrl.u32 %v401, 7
    %v403 = vsub.s32 0, %v402
    %v404 = vrot.slane %v399, %v403
    %v406 = vmul.f32 %v397, %v404
    %v407 = vmul.f32 %v398, %v404
    %408 = vadd.xlane.f32.xlu0 %v406
    %v409 = vpop.xlane.xlu0 %408
    %410 = vadd.xlane.f32.xlu0 %v407
    %v411 = vpop.xlane.xlu0 %410
    %v412 = vld [vmem:[#allocation3] sm:$0x1]
    %v414 = vlaneseq
    %v415 = vshrl.u32 %v414, 7
    %v416 = vsub.s32 0, %v415
    %v417 = vrot.slane %v412, %v416
    %v419 = vadd.f32 %v409, %v417
    %v420 = vadd.f32 %v411, %v417
    %vm421 = vcmask 7168
    %422 = vst.msk [vmem:[%s4] sm:$0xff] %vm421, %v419
    %423 = vst.msk [vmem:[%s4 + $0x8] sm:$0xff] %vm421, %v420
  $region25: #{gin_forward.5} parent=0 // pred_fallthru
    _
  // Predicated region
  $region26: #{gin_forward.5} parent=0 // pred_check
    _
  $region27: #{gin_forward.5} parent=0 // pred_check_branch
    %425 = sbr.rel (0) target = $region29
  $region28: #{gin_forward.5} parent=0 // pred_region
    _
  $region29: #{gin_forward.5} parent=0 // pred_fallthru
    _
  // Predicated region
  $region30: #{gin_forward.5} parent=0 // pred_check
    _
  $region31: #{gin_forward.5} parent=0 // pred_check_branch
    %427 = sbr.rel (0) target = $region33
  $region32: #{gin_forward.5} parent=0 // pred_region
    _
  $region33: #{gin_forward.5} parent=0 // pred_fallthru
    _

// kernel: gin_forward.4
$region0: #{gin_forward.4}
  #allocation0 [shape = 'u32[]', space=smem, size = 0x4, offset = 0x4, fixed_abs, tag = 'smem constant byte address 0x4 - core index']
  #allocation1 [shape = 'u32[144,128]{1,0:T(1,128)}', space=vmem, size = 0x12000, scoped, tag = 'internal scratch']
  #allocation2 [shape = 'f32[256,256]{1,0:T(8,128)}', space=vmem, size = 0x40000, scoped, tag = 'scratch operand']
  %s0 = inlined_call_operand.vmem [shape: bf16[512,512], index: 0, kind: input, shape index: {}]
  %s1 = inlined_call_operand.vmem [shape: bf16[512,256], index: 1, kind: input, shape index: {}, may-alias: {1,2}]
  %s2 = inlined_call_operand.vmem [shape: bf16[512,256], index: 2, kind: input, shape index: {}, may-alias: {1,2}]
  %s3 = inlined_call_operand.vmem [shape: bf16[128,128], index: 3, kind: input, shape index: {}]
  %s4 = inlined_call_operand.vmem [shape: f32[1,128], index: 4, kind: input, shape index: {}]
  %s5 = inlined_call_operand.vmem [shape: bf16[128,128], index: 5, kind: input, shape index: {}]
  %s6 = inlined_call_operand.vmem [shape: f32[1,128], index: 6, kind: input, shape index: {}]
  %s7 = inlined_call_operand.vmem [shape: bf16[512,128], index: 7, kind: output, shape index: {}]
  %s8 = sld [smem:[#allocation0]]
  $region69: #{gin_forward.4} parent=0
    _
  %s10 = ssub.s32 1, %s8
  %s11 = scalar_select 0, %s10, %s8
  loop: start=0, step=1, limit=4
  $region2: #{gin_forward.4} parent=0 // loop_pre_header
    _
  $region3: #{gin_forward.4} parent=0 // loop_header
    %s13 = sphi 0, %s17
    %p14 = scmp.ge.s32.totalorder %s13, 4
    %s20 = sphi 0, %s32
    %s21 = sphi 0, %s28
    %s22 = sphi 0, %s20
    %s23 = sphi 0, %s21
    %s24 = sphi 0, %s22
    %s25 = sphi 0, %s23
    %s37 = sphi 0, %s39
    %s40 = sphi 0, %s37
    %s41 = sphi 0, %s40
    %s57 = sphi 0, %s41
    %s63 = sphi 0, %s65
    %s66 = sphi 0, %s63
    %s67 = sphi 0, %s66
    %s83 = sphi 0, %s67
    %s89 = sphi 0, %s91
    %s92 = sphi 0, %s89
    %s93 = sphi 0, %s92
    %s109 = sphi 0, %s93
    %s113 = sphi 0, %s113
    %s115 = sphi 0, %s113
    %s116 = sphi 0, %s115
    %s130 = sphi 0, %s116
    %s134 = sphi 0, %s134
    %s136 = sphi 0, %s134
    %s137 = sphi 0, %s136
    %s151 = sphi 0, %s137
    %s155 = sphi 0, %s155
    %s157 = sphi 0, %s155
    %s158 = sphi 0, %s157
    %s172 = sphi 0, %s158
    %s176 = sphi 0, %s176
    %s178 = sphi 0, %s176
    %s179 = sphi 0, %s178
    %s193 = sphi 0, %s179
    %s199 = sphi 0, %s201
    %s202 = sphi 0, %s199
    %s203 = sphi 0, %s202
    %s219 = sphi 0, %s203
  $region4: #{gin_forward.4} parent=0 // loop_header_branch
    %16 = sbr.rel (%p14) target = $region8
  $region5: #{gin_forward.4} parent=0 // loop_body
    %s18 = ssub.s32 %s13, 1
    %s19 = ssub.s32 %s13, 2
    %s26 = sadd.s32 1, %s21
    %p27 = scmp.ge.s32.totalorder %s26, 1
    %s28 = scalar_select %p27, 0, %s26
    %s29 = sadd.s32 1, %s20
    %s30 = scalar_select %p27, %s29, %s20
    %p31 = scmp.ge.s32.totalorder %s30, 2
    %s32 = scalar_select %p31, 0, %s30
    %s33 = ssub.s32 %s20, %s32
    %s34 = ssub.s32 %s21, %s28
    %s35 = sor.u32 %s33, %s34
    %p36 = scmp.eq.s32.totalorder %s35, 0
    %s38 = sadd.s32 %s37, 1
    %s39 = scalar_select %p36, %s37, %s38
    %p42 = pneg %p36
    %p43 = scmp.eq.s32.totalorder %s13, 1
    %p44 = por %p42, %p43
    %p45 = scmp.ne.s32.totalorder %s37, %s40
    %p46 = scmp.eq.s32.totalorder %s13, 0
    %p47 = por %p45, %p46
    %p48 = scmp.ne.s32.totalorder %s37, %s40
    %p49 = scmp.eq.s32.totalorder %s18, 1
    %p50 = por %p48, %p49
    %p51 = scmp.ne.s32.totalorder %s40, %s41
    %p52 = scmp.eq.s32.totalorder %s18, 0
    %p53 = por %p51, %p52
    %p54 = scmp.ne.s32.totalorder %s40, %s41
    %p55 = scmp.eq.s32.totalorder %s19, 1
    %p56 = por %p54, %p55
    %p58 = scmp.ne.s32.totalorder %s41, %s57
    %p59 = scmp.eq.s32.totalorder %s19, 0
    %p60 = por %p58, %p59
    %s61 = ssub.s32 %s21, %s28
    %p62 = scmp.eq.s32.totalorder %s61, 0
    %s64 = sadd.s32 %s63, 1
    %s65 = scalar_select %p62, %s63, %s64
    %p68 = pneg %p62
    %p69 = scmp.eq.s32.totalorder %s13, 1
    %p70 = por %p68, %p69
    %p71 = scmp.ne.s32.totalorder %s63, %s66
    %p72 = scmp.eq.s32.totalorder %s13, 0
    %p73 = por %p71, %p72
    %p74 = scmp.ne.s32.totalorder %s63, %s66
    %p75 = scmp.eq.s32.totalorder %s18, 1
    %p76 = por %p74, %p75
    %p77 = scmp.ne.s32.totalorder %s66, %s67
    %p78 = scmp.eq.s32.totalorder %s18, 0
    %p79 = por %p77, %p78
    %p80 = scmp.ne.s32.totalorder %s66, %s67
    %p81 = scmp.eq.s32.totalorder %s19, 1
    %p82 = por %p80, %p81
    %p84 = scmp.ne.s32.totalorder %s67, %s83
    %p85 = scmp.eq.s32.totalorder %s19, 0
    %p86 = por %p84, %p85
    %s87 = ssub.s32 %s20, %s32
    %p88 = scmp.eq.s32.totalorder %s87, 0
    %s90 = sadd.s32 %s89, 1
    %s91 = scalar_select %p88, %s89, %s90
    %p94 = pneg %p88
    %p95 = scmp.eq.s32.totalorder %s13, 1
    %p96 = por %p94, %p95
    %p97 = scmp.ne.s32.totalorder %s89, %s92
    %p98 = scmp.eq.s32.totalorder %s13, 0
    %p99 = por %p97, %p98
    %p100 = scmp.ne.s32.totalorder %s89, %s92
    %p101 = scmp.eq.s32.totalorder %s18, 1
    %p102 = por %p100, %p101
    %p103 = scmp.ne.s32.totalorder %s92, %s93
    %p104 = scmp.eq.s32.totalorder %s18, 0
    %p105 = por %p103, %p104
    %p106 = scmp.ne.s32.totalorder %s92, %s93
    %p107 = scmp.eq.s32.totalorder %s19, 1
    %p108 = por %p106, %p107
    %p110 = scmp.ne.s32.totalorder %s93, %s109
    %p111 = scmp.eq.s32.totalorder %s19, 0
    %p112 = por %p110, %p111
    %s114 = sadd.s32 %s113, 1
    %p117 = scmp.eq.s32.totalorder %s13, 1
    %p118 = scmp.ne.s32.totalorder %s113, %s115
    %p119 = scmp.eq.s32.totalorder %s13, 0
    %p120 = por %p118, %p119
    %p121 = scmp.ne.s32.totalorder %s113, %s115
    %p122 = scmp.eq.s32.totalorder %s18, 1
    %p123 = por %p121, %p122
    %p124 = scmp.ne.s32.totalorder %s115, %s116
    %p125 = scmp.eq.s32.totalorder %s18, 0
    %p126 = por %p124, %p125
    %p127 = scmp.ne.s32.totalorder %s115, %s116
    %p128 = scmp.eq.s32.totalorder %s19, 1
    %p129 = por %p127, %p128
    %p131 = scmp.ne.s32.totalorder %s116, %s130
    %p132 = scmp.eq.s32.totalorder %s19, 0
    %p133 = por %p131, %p132
    %s135 = sadd.s32 %s134, 1
    %p138 = scmp.eq.s32.totalorder %s13, 1
    %p139 = scmp.ne.s32.totalorder %s134, %s136
    %p140 = scmp.eq.s32.totalorder %s13, 0
    %p141 = por %p139, %p140
    %p142 = scmp.ne.s32.totalorder %s134, %s136
    %p143 = scmp.eq.s32.totalorder %s18, 1
    %p144 = por %p142, %p143
    %p145 = scmp.ne.s32.totalorder %s136, %s137
    %p146 = scmp.eq.s32.totalorder %s18, 0
    %p147 = por %p145, %p146
    %p148 = scmp.ne.s32.totalorder %s136, %s137
    %p149 = scmp.eq.s32.totalorder %s19, 1
    %p150 = por %p148, %p149
    %p152 = scmp.ne.s32.totalorder %s137, %s151
    %p153 = scmp.eq.s32.totalorder %s19, 0
    %p154 = por %p152, %p153
    %s156 = sadd.s32 %s155, 1
    %p159 = scmp.eq.s32.totalorder %s13, 1
    %p160 = scmp.ne.s32.totalorder %s155, %s157
    %p161 = scmp.eq.s32.totalorder %s13, 0
    %p162 = por %p160, %p161
    %p163 = scmp.ne.s32.totalorder %s155, %s157
    %p164 = scmp.eq.s32.totalorder %s18, 1
    %p165 = por %p163, %p164
    %p166 = scmp.ne.s32.totalorder %s157, %s158
    %p167 = scmp.eq.s32.totalorder %s18, 0
    %p168 = por %p166, %p167
    %p169 = scmp.ne.s32.totalorder %s157, %s158
    %p170 = scmp.eq.s32.totalorder %s19, 1
    %p171 = por %p169, %p170
    %p173 = scmp.ne.s32.totalorder %s158, %s172
    %p174 = scmp.eq.s32.totalorder %s19, 0
    %p175 = por %p173, %p174
    %s177 = sadd.s32 %s176, 1
    %p180 = scmp.eq.s32.totalorder %s13, 1
    %p181 = scmp.ne.s32.totalorder %s176, %s178
    %p182 = scmp.eq.s32.totalorder %s13, 0
    %p183 = por %p181, %p182
    %p184 = scmp.ne.s32.totalorder %s176, %s178
    %p185 = scmp.eq.s32.totalorder %s18, 1
    %p186 = por %p184, %p185
    %p187 = scmp.ne.s32.totalorder %s178, %s179
    %p188 = scmp.eq.s32.totalorder %s18, 0
    %p189 = por %p187, %p188
    %p190 = scmp.ne.s32.totalorder %s178, %s179
    %p191 = scmp.eq.s32.totalorder %s19, 1
    %p192 = por %p190, %p191
    %p194 = scmp.ne.s32.totalorder %s179, %s193
    %p195 = scmp.eq.s32.totalorder %s19, 0
    %p196 = por %p194, %p195
    %s197 = ssub.s32 %s20, %s32
    %p198 = scmp.eq.s32.totalorder %s197, 0
    %s200 = sadd.s32 %s199, 1
    %s201 = scalar_select %p198, %s199, %s200
    %p204 = pneg %p198
    %p205 = scmp.eq.s32.totalorder %s13, 1
    %p206 = por %p204, %p205
    %p207 = scmp.ne.s32.totalorder %s199, %s202
    %p208 = scmp.eq.s32.totalorder %s13, 0
    %p209 = por %p207, %p208
    %p210 = scmp.ne.s32.totalorder %s199, %s202
    %p211 = scmp.eq.s32.totalorder %s18, 1
    %p212 = por %p210, %p211
    %p213 = scmp.ne.s32.totalorder %s202, %s203
    %p214 = scmp.eq.s32.totalorder %s18, 0
    %p215 = por %p213, %p214
    %p216 = scmp.ne.s32.totalorder %s202, %s203
    %p217 = scmp.eq.s32.totalorder %s19, 1
    %p218 = por %p216, %p217
    %p220 = scmp.ne.s32.totalorder %s203, %s219
    %p221 = scmp.eq.s32.totalorder %s19, 0
    %p222 = por %p220, %p221
    %p223 = scmp.le.s32.totalorder 1, %s13
    %p224 = scmp.lt.s32.totalorder %s13, 3
    %p225 = pnand %p223, %p224
    %p226 = pneg %p225
    // Predicated region
    $region9: #{gin_forward.4} parent=5 // pred_check
      _
    $region10: #{gin_forward.4} parent=5 // pred_check_branch
      %228 = sbr.rel (%p225) target = $region12
    $region11: #{gin_forward.4} parent=5 // pred_region
      %s229 = ssub.s32 %s13, 1
      // Predicated region
      $region13: #{gin_forward.4} parent=11 // pred_check
        %p230 = pneg %p79
      $region14: #{gin_forward.4} parent=11 // pred_check_branch
        %232 = sbr.rel (%p230) target = $region16
      $region15: #{gin_forward.4} parent=11 // pred_region
        %s233 = smul.u32 64, %s23
        %p234 = scmp.lt.s32.totalorder %s233, 63
        %s235 = scalar_select %p234, %s233, 63
        %s236 = smul.addr %s235, 2
        %s237 = smul.addr %s236, 4
        %s238 = scalar_lea.vmem %s1, %s237
        %s239 = smul.u32 64, %s23
      $region16: #{gin_forward.4} parent=11 // pred_fallthru
        _
      // Predicated region
      $region17: #{gin_forward.4} parent=11 // pred_check
        %p240 = pneg %p126
      $region18: #{gin_forward.4} parent=11 // pred_check_branch
        %242 = sbr.rel (%p240) target = $region20
      $region19: #{gin_forward.4} parent=11 // pred_region
        _
      $region20: #{gin_forward.4} parent=11 // pred_fallthru
        _
      // Predicated region
      $region21: #{gin_forward.4} parent=11 // pred_check
        %p243 = pneg %p147
      $region22: #{gin_forward.4} parent=11 // pred_check_branch
        %245 = sbr.rel (%p243) target = $region24
      $region23: #{gin_forward.4} parent=11 // pred_region
        _
      $region24: #{gin_forward.4} parent=11 // pred_fallthru
        _
      // Predicated region
      $region25: #{gin_forward.4} parent=11 // pred_check
        %p246 = pneg %p168
      $region26: #{gin_forward.4} parent=11 // pred_check_branch
        %248 = sbr.rel (%p246) target = $region28
      $region27: #{gin_forward.4} parent=11 // pred_region
        _
      $region28: #{gin_forward.4} parent=11 // pred_fallthru
        _
      // Predicated region
      $region29: #{gin_forward.4} parent=11 // pred_check
        %p249 = pneg %p189
      $region30: #{gin_forward.4} parent=11 // pred_check_branch
        %251 = sbr.rel (%p249) target = $region32
      $region31: #{gin_forward.4} parent=11 // pred_region
        _
      $region32: #{gin_forward.4} parent=11 // pred_fallthru
        _
    $region12: #{gin_forward.4} parent=5 // pred_fallthru
      _
    %p252 = scmp.lt.s32.totalorder %s13, 2
    // Predicated region
    $region33: #{gin_forward.4} parent=5 // pred_check
      %p253 = pneg %p252
    $region34: #{gin_forward.4} parent=5 // pred_check_branch
      %255 = sbr.rel (%p253) target = $region36
    $region35: #{gin_forward.4} parent=5 // pred_region
      // Predicated region
      $region37: #{gin_forward.4} parent=35 // pred_check
        %p256 = pneg %p47
      $region38: #{gin_forward.4} parent=35 // pred_check_branch
        %258 = sbr.rel (%p256) target = $region40
      $region39: #{gin_forward.4} parent=35 // pred_region
        %s259 = smul.u32 32, %s20
        %s260 = smul.u32 4, %s21
        %p261 = scmp.lt.s32.totalorder %s259, 63
        %s262 = scalar_select %p261, %s259, 63
        %p263 = scmp.lt.s32.totalorder %s260, 3
        %s264 = scalar_select %p263, %s260, 3
        %s265 = smul.addr %s262, 4
        %s266 = sadd.s32 %s264, %s265
        %s267 = smul.addr %s266, 4
        %s268 = scalar_lea.vmem %s0, %s267
        %s269 = smul.u32 32, %s20
        %s270 = smul.u32 4, %s21
      $region40: #{gin_forward.4} parent=35 // pred_fallthru
        _
      // Predicated region
      $region41: #{gin_forward.4} parent=35 // pred_check
        %p271 = pneg %p99
      $region42: #{gin_forward.4} parent=35 // pred_check_branch
        %273 = sbr.rel (%p271) target = $region44
      $region43: #{gin_forward.4} parent=35 // pred_region
        %s274 = smul.u32 32, %s20
        %p275 = scmp.lt.s32.totalorder %s274, 63
        %s276 = scalar_select %p275, %s274, 63
        %s277 = smul.addr %s276, 2
        %s278 = smul.addr %s277, 4
        %s279 = scalar_lea.vmem %s2, %s278
        %s280 = smul.u32 32, %s20
      $region44: #{gin_forward.4} parent=35 // pred_fallthru
        _
    $region36: #{gin_forward.4} parent=5 // pred_fallthru
      _
    %p281 = scmp.le.s32.totalorder 1, %s13
    %p282 = scmp.lt.s32.totalorder %s13, 3
    %p283 = pnand %p281, %p282
    %p284 = pneg %p283
    // Predicated region
    $region45: #{gin_forward.4} parent=5 // pred_check
      _
    $region46: #{gin_forward.4} parent=5 // pred_check_branch
      %286 = sbr.rel (%p283) target = $region48
    $region47: #{gin_forward.4} parent=5 // pred_region
      %s287 = ssub.s32 %s13, 1
      %s288 = smul.u32 32, %s22
      %s289 = smul.u32 4, %s23
      %p290 = scmp.lt.s32.totalorder %s288, 63
      %s291 = scalar_select %p290, %s288, 63
      %p292 = scmp.lt.s32.totalorder %s289, 3
      %s293 = scalar_select %p292, %s289, 3
      %s294 = smul.addr %s291, 4
      %s295 = sadd.s32 %s293, %s294
      %s296 = smul.addr %s295, 4
      %s297 = scalar_lea.vmem %s0, %s296
      %p298 = pneg %p53
      %p299 = pneg %p50
      %s300 = smul.u32 64, %s23
      %p301 = scmp.lt.s32.totalorder %s300, 63
      %s302 = scalar_select %p301, %s300, 63
      %s303 = smul.addr %s302, 2
      %s304 = smul.addr %s303, 4
      %s305 = scalar_lea.vmem %s1, %s304
      %p306 = pneg %p79
      %p307 = pneg %p76
      %s308 = smul.u32 32, %s22
      %p309 = scmp.lt.s32.totalorder %s308, 63
      %s310 = scalar_select %p309, %s308, 63
      %s311 = smul.addr %s310, 2
      %s312 = smul.addr %s311, 4
      %s313 = scalar_lea.vmem %s2, %s312
      %p314 = pneg %p105
      %p315 = pneg %p102
      %p316 = pneg %p126
      %p317 = pneg %p123
      %p318 = pneg %p147
      %p319 = pneg %p144
      %p320 = pneg %p168
      %p321 = pneg %p165
      %p322 = pneg %p189
      %p323 = pneg %p186
      %p324 = pneg %p215
      %p325 = pneg %p212
      %s326 = smul.u32 32, %s22
      %p327 = scmp.lt.s32.totalorder %s326, 63
      %s328 = scalar_select %p327, %s326, 63
      %s329 = smul.addr %s328, 4
      %s330 = scalar_lea.vmem %s7, %s329
      %s331 = smul.u32 32, %s22
      %s332 = smul.u32 4, %s23
      %p333 = scmp.lt.s32.totalorder %s331, 63
      %s334 = scalar_select %p333, %s331, 63
      %p335 = scmp.lt.s32.totalorder %s332, 3
      %s336 = scalar_select %p335, %s332, 3
      %s337 = smul.addr %s334, 4
      %s338 = sadd.s32 %s336, %s337
      %s339 = smul.addr %s338, 4
      %s340 = scalar_lea.vmem %s0, %s339
      %s341 = smul.u32 32, %s22
      %s342 = smul.u32 4, %s23
      %s343 = smul.u32 64, %s23
      %p344 = scmp.lt.s32.totalorder %s343, 63
      %s345 = scalar_select %p344, %s343, 63
      %s346 = smul.addr %s345, 2
      %s347 = smul.addr %s346, 4
      %s348 = scalar_lea.vmem %s1, %s347
      %s349 = smul.u32 64, %s23
      %s350 = smul.u32 32, %s22
      %p351 = scmp.lt.s32.totalorder %s350, 63
      %s352 = scalar_select %p351, %s350, 63
      %s353 = smul.addr %s352, 2
      %s354 = smul.addr %s353, 4
      %s355 = scalar_lea.vmem %s2, %s354
      %s356 = smul.u32 32, %s22
      %s357 = smul.u32 32, %s22
      %p358 = scmp.lt.s32.totalorder %s357, 63
      %s359 = scalar_select %p358, %s357, 63
      %s360 = smul.addr %s359, 4
      %s361 = scalar_lea.vmem %s7, %s360
      %s362 = smul.u32 32, %s22
      %p364 = scmp.eq.s32.totalorder %s23, 0
      // Predicated region
      $region49: #{gin_forward.4} parent=47 // pred_check
        %p365 = pneg %p364
      $region50: #{gin_forward.4} parent=47 // pred_check_branch
        %367 = sbr.rel (%p365) target = $region52
      $region51: #{gin_forward.4} parent=47 // pred_region
        %368 = vst [vmem:[#allocation2] sm:$0xff] 0.0
        %369 = vst [vmem:[#allocation2 + $0x8] sm:$0xff] 0.0
        %370 = vst [vmem:[#allocation2 + $0x10] sm:$0xff] 0.0
        %371 = vst [vmem:[#allocation2 + $0x18] sm:$0xff] 0.0
        %372 = vst [vmem:[#allocation2 + $0x20] sm:$0xff] 0.0
        %373 = vst [vmem:[#allocation2 + $0x28] sm:$0xff] 0.0
        %374 = vst [vmem:[#allocation2 + $0x30] sm:$0xff] 0.0
        %375 = vst [vmem:[#allocation2 + $0x38] sm:$0xff] 0.0
        %376 = vst [vmem:[#allocation2 + $0x40] sm:$0xff] 0.0
        %377 = vst [vmem:[#allocation2 + $0x48] sm:$0xff] 0.0
        %378 = vst [vmem:[#allocation2 + $0x50] sm:$0xff] 0.0
        %379 = vst [vmem:[#allocation2 + $0x58] sm:$0xff] 0.0
        %380 = vst [vmem:[#allocation2 + $0x60] sm:$0xff] 0.0
        %381 = vst [vmem:[#allocation2 + $0x68] sm:$0xff] 0.0
        %382 = vst [vmem:[#allocation2 + $0x70] sm:$0xff] 0.0
        %383 = vst [vmem:[#allocation2 + $0x78] sm:$0xff] 0.0
        %384 = vst [vmem:[#allocation2 + $0x80] sm:$0xff] 0.0
        %385 = vst [vmem:[#allocation2 + $0x88] sm:$0xff] 0.0
        %386 = vst [vmem:[#allocation2 + $0x90] sm:$0xff] 0.0
        %387 = vst [vmem:[#allocation2 + $0x98] sm:$0xff] 0.0
        %388 = vst [vmem:[#allocation2 + $0xa0] sm:$0xff] 0.0
        %389 = vst [vmem:[#allocation2 + $0xa8] sm:$0xff] 0.0
        %390 = vst [vmem:[#allocation2 + $0xb0] sm:$0xff] 0.0
        %391 = vst [vmem:[#allocation2 + $0xb8] sm:$0xff] 0.0
        %392 = vst [vmem:[#allocation2 + $0xc0] sm:$0xff] 0.0
        %393 = vst [vmem:[#allocation2 + $0xc8] sm:$0xff] 0.0
        %394 = vst [vmem:[#allocation2 + $0xd0] sm:$0xff] 0.0
        %395 = vst [vmem:[#allocation2 + $0xd8] sm:$0xff] 0.0
        %396 = vst [vmem:[#allocation2 + $0xe0] sm:$0xff] 0.0
        %397 = vst [vmem:[#allocation2 + $0xe8] sm:$0xff] 0.0
        %398 = vst [vmem:[#allocation2 + $0xf0] sm:$0xff] 0.0
        %399 = vst [vmem:[#allocation2 + $0xf8] sm:$0xff] 0.0
        %400 = vst [vmem:[#allocation2 + $0x100] sm:$0xff] 0.0
        %401 = vst [vmem:[#allocation2 + $0x108] sm:$0xff] 0.0
        %402 = vst [vmem:[#allocation2 + $0x110] sm:$0xff] 0.0
        %403 = vst [vmem:[#allocation2 + $0x118] sm:$0xff] 0.0
        %404 = vst [vmem:[#allocation2 + $0x120] sm:$0xff] 0.0
        %405 = vst [vmem:[#allocation2 + $0x128] sm:$0xff] 0.0
        %406 = vst [vmem:[#allocation2 + $0x130] sm:$0xff] 0.0
        %407 = vst [vmem:[#allocation2 + $0x138] sm:$0xff] 0.0
        %408 = vst [vmem:[#allocation2 + $0x140] sm:$0xff] 0.0
        %409 = vst [vmem:[#allocation2 + $0x148] sm:$0xff] 0.0
        %410 = vst [vmem:[#allocation2 + $0x150] sm:$0xff] 0.0
        %411 = vst [vmem:[#allocation2 + $0x158] sm:$0xff] 0.0
        %412 = vst [vmem:[#allocation2 + $0x160] sm:$0xff] 0.0
        %413 = vst [vmem:[#allocation2 + $0x168] sm:$0xff] 0.0
        %414 = vst [vmem:[#allocation2 + $0x170] sm:$0xff] 0.0
        %415 = vst [vmem:[#allocation2 + $0x178] sm:$0xff] 0.0
        %416 = vst [vmem:[#allocation2 + $0x180] sm:$0xff] 0.0
        %417 = vst [vmem:[#allocation2 + $0x188] sm:$0xff] 0.0
        %418 = vst [vmem:[#allocation2 + $0x190] sm:$0xff] 0.0
        %419 = vst [vmem:[#allocation2 + $0x198] sm:$0xff] 0.0
        %420 = vst [vmem:[#allocation2 + $0x1a0] sm:$0xff] 0.0
        %421 = vst [vmem:[#allocation2 + $0x1a8] sm:$0xff] 0.0
        %422 = vst [vmem:[#allocation2 + $0x1b0] sm:$0xff] 0.0
        %423 = vst [vmem:[#allocation2 + $0x1b8] sm:$0xff] 0.0
        %424 = vst [vmem:[#allocation2 + $0x1c0] sm:$0xff] 0.0
        %425 = vst [vmem:[#allocation2 + $0x1c8] sm:$0xff] 0.0
        %426 = vst [vmem:[#allocation2 + $0x1d0] sm:$0xff] 0.0
        %427 = vst [vmem:[#allocation2 + $0x1d8] sm:$0xff] 0.0
        %428 = vst [vmem:[#allocation2 + $0x1e0] sm:$0xff] 0.0
        %429 = vst [vmem:[#allocation2 + $0x1e8] sm:$0xff] 0.0
        %430 = vst [vmem:[#allocation2 + $0x1f0] sm:$0xff] 0.0
        %431 = vst [vmem:[#allocation2 + $0x1f8] sm:$0xff] 0.0
      $region52: #{gin_forward.4} parent=47 // pred_fallthru
        _
      %v432 = vld [vmem:[#allocation2] sm:$0xff]
      %v433 = vld [vmem:[#allocation2 + $0x8] sm:$0xff]
      %v434 = vld [vmem:[#allocation2 + $0x10] sm:$0xff]
      %v435 = vld [vmem:[#allocation2 + $0x18] sm:$0xff]
      %v436 = vld [vmem:[#allocation2 + $0x20] sm:$0xff]
      %v437 = vld [vmem:[#allocation2 + $0x28] sm:$0xff]
      %v438 = vld [vmem:[#allocation2 + $0x30] sm:$0xff]
      %v439 = vld [vmem:[#allocation2 + $0x38] sm:$0xff]
      %v440 = vld [vmem:[#allocation2 + $0x40] sm:$0xff]
      %v441 = vld [vmem:[#allocation2 + $0x48] sm:$0xff]
      %v442 = vld [vmem:[#allocation2 + $0x50] sm:$0xff]
      %v443 = vld [vmem:[#allocation2 + $0x58] sm:$0xff]
      %v444 = vld [vmem:[#allocation2 + $0x60] sm:$0xff]
      %v445 = vld [vmem:[#allocation2 + $0x68] sm:$0xff]
      %v446 = vld [vmem:[#allocation2 + $0x70] sm:$0xff]
      %v447 = vld [vmem:[#allocation2 + $0x78] sm:$0xff]
      %v448 = vld [vmem:[#allocation2 + $0x80] sm:$0xff]
      %v449 = vld [vmem:[#allocation2 + $0x88] sm:$0xff]
      %v450 = vld [vmem:[#allocation2 + $0x90] sm:$0xff]
      %v451 = vld [vmem:[#allocation2 + $0x98] sm:$0xff]
      %v452 = vld [vmem:[#allocation2 + $0xa0] sm:$0xff]
      %v453 = vld [vmem:[#allocation2 + $0xa8] sm:$0xff]
      %v454 = vld [vmem:[#allocation2 + $0xb0] sm:$0xff]
      %v455 = vld [vmem:[#allocation2 + $0xb8] sm:$0xff]
      %v456 = vld [vmem:[#allocation2 + $0xc0] sm:$0xff]
      %v457 = vld [vmem:[#allocation2 + $0xc8] sm:$0xff]
      %v458 = vld [vmem:[#allocation2 + $0xd0] sm:$0xff]
      %v459 = vld [vmem:[#allocation2 + $0xd8] sm:$0xff]
      %v460 = vld [vmem:[#allocation2 + $0xe0] sm:$0xff]
      %v461 = vld [vmem:[#allocation2 + $0xe8] sm:$0xff]
      %v462 = vld [vmem:[#allocation2 + $0xf0] sm:$0xff]
      %v463 = vld [vmem:[#allocation2 + $0xf8] sm:$0xff]
      %v464 = vld [vmem:[#allocation2 + $0x100] sm:$0xff]
      %v465 = vld [vmem:[#allocation2 + $0x108] sm:$0xff]
      %v466 = vld [vmem:[#allocation2 + $0x110] sm:$0xff]
      %v467 = vld [vmem:[#allocation2 + $0x118] sm:$0xff]
      %v468 = vld [vmem:[#allocation2 + $0x120] sm:$0xff]
      %v469 = vld [vmem:[#allocation2 + $0x128] sm:$0xff]
      %v470 = vld [vmem:[#allocation2 + $0x130] sm:$0xff]
      %v471 = vld [vmem:[#allocation2 + $0x138] sm:$0xff]
      %v472 = vld [vmem:[#allocation2 + $0x140] sm:$0xff]
      %v473 = vld [vmem:[#allocation2 + $0x148] sm:$0xff]
      %v474 = vld [vmem:[#allocation2 + $0x150] sm:$0xff]
      %v475 = vld [vmem:[#allocation2 + $0x158] sm:$0xff]
      %v476 = vld [vmem:[#allocation2 + $0x160] sm:$0xff]
      %v477 = vld [vmem:[#allocation2 + $0x168] sm:$0xff]
      %v478 = vld [vmem:[#allocation2 + $0x170] sm:$0xff]
      %v479 = vld [vmem:[#allocation2 + $0x178] sm:$0xff]
      %v480 = vld [vmem:[#allocation2 + $0x180] sm:$0xff]
      %v481 = vld [vmem:[#allocation2 + $0x188] sm:$0xff]
      %v482 = vld [vmem:[#allocation2 + $0x190] sm:$0xff]
      %v483 = vld [vmem:[#allocation2 + $0x198] sm:$0xff]
      %v484 = vld [vmem:[#allocation2 + $0x1a0] sm:$0xff]
      %v485 = vld [vmem:[#allocation2 + $0x1a8] sm:$0xff]
      %v486 = vld [vmem:[#allocation2 + $0x1b0] sm:$0xff]
      %v487 = vld [vmem:[#allocation2 + $0x1b8] sm:$0xff]
      %v488 = vld [vmem:[#allocation2 + $0x1c0] sm:$0xff]
      %v489 = vld [vmem:[#allocation2 + $0x1c8] sm:$0xff]
      %v490 = vld [vmem:[#allocation2 + $0x1d0] sm:$0xff]
      %v491 = vld [vmem:[#allocation2 + $0x1d8] sm:$0xff]
      %v492 = vld [vmem:[#allocation2 + $0x1e0] sm:$0xff]
      %v493 = vld [vmem:[#allocation2 + $0x1e8] sm:$0xff]
      %v494 = vld [vmem:[#allocation2 + $0x1f0] sm:$0xff]
      %v495 = vld [vmem:[#allocation2 + $0x1f8] sm:$0xff]
      %v496 = vld [vmem:[%s340] sm:$0xff]
      %v497 = vld [vmem:[%s340 + $0x8] sm:$0xff]
      %v498 = vld [vmem:[%s340 + $0x10] sm:$0xff]
      %v499 = vld [vmem:[%s340 + $0x18] sm:$0xff]
      %v500 = vld [vmem:[%s340 + $0x20] sm:$0xff]
      %v501 = vld [vmem:[%s340 + $0x28] sm:$0xff]
      %v502 = vld [vmem:[%s340 + $0x30] sm:$0xff]
      %v503 = vld [vmem:[%s340 + $0x38] sm:$0xff]
      %v504 = vld [vmem:[%s340 + $0x40] sm:$0xff]
      %v505 = vld [vmem:[%s340 + $0x48] sm:$0xff]
      %v506 = vld [vmem:[%s340 + $0x50] sm:$0xff]
      %v507 = vld [vmem:[%s340 + $0x58] sm:$0xff]
      %v508 = vld [vmem:[%s340 + $0x60] sm:$0xff]
      %v509 = vld [vmem:[%s340 + $0x68] sm:$0xff]
      %v510 = vld [vmem:[%s340 + $0x70] sm:$0xff]
      %v511 = vld [vmem:[%s340 + $0x78] sm:$0xff]
      %v512 = vld [vmem:[%s340 + $0x80] sm:$0xff]
      %v513 = vld [vmem:[%s340 + $0x88] sm:$0xff]
      %v514 = vld [vmem:[%s340 + $0x90] sm:$0xff]
      %v515 = vld [vmem:[%s340 + $0x98] sm:$0xff]
      %v516 = vld [vmem:[%s340 + $0xa0] sm:$0xff]
      %v517 = vld [vmem:[%s340 + $0xa8] sm:$0xff]
      %v518 = vld [vmem:[%s340 + $0xb0] sm:$0xff]
      %v519 = vld [vmem:[%s340 + $0xb8] sm:$0xff]
      %v520 = vld [vmem:[%s340 + $0xc0] sm:$0xff]
      %v521 = vld [vmem:[%s340 + $0xc8] sm:$0xff]
      %v522 = vld [vmem:[%s340 + $0xd0] sm:$0xff]
      %v523 = vld [vmem:[%s340 + $0xd8] sm:$0xff]
      %v524 = vld [vmem:[%s340 + $0xe0] sm:$0xff]
      %v525 = vld [vmem:[%s340 + $0xe8] sm:$0xff]
      %v526 = vld [vmem:[%s340 + $0xf0] sm:$0xff]
      %v527 = vld [vmem:[%s340 + $0xf8] sm:$0xff]
      %v528 = vld [vmem:[%s340 + $0x100] sm:$0xff]
      %v529 = vld [vmem:[%s340 + $0x108] sm:$0xff]
      %v530 = vld [vmem:[%s340 + $0x110] sm:$0xff]
      %v531 = vld [vmem:[%s340 + $0x118] sm:$0xff]
      %v532 = vld [vmem:[%s340 + $0x120] sm:$0xff]
      %v533 = vld [vmem:[%s340 + $0x128] sm:$0xff]
      %v534 = vld [vmem:[%s340 + $0x130] sm:$0xff]
      %v535 = vld [vmem:[%s340 + $0x138] sm:$0xff]
      %v536 = vld [vmem:[%s340 + $0x140] sm:$0xff]
      %v537 = vld [vmem:[%s340 + $0x148] sm:$0xff]
      %v538 = vld [vmem:[%s340 + $0x150] sm:$0xff]
      %v539 = vld [vmem:[%s340 + $0x158] sm:$0xff]
      %v540 = vld [vmem:[%s340 + $0x160] sm:$0xff]
      %v541 = vld [vmem:[%s340 + $0x168] sm:$0xff]
      %v542 = vld [vmem:[%s340 + $0x170] sm:$0xff]
      %v543 = vld [vmem:[%s340 + $0x178] sm:$0xff]
      %v544 = vld [vmem:[%s340 + $0x180] sm:$0xff]
      %v545 = vld [vmem:[%s340 + $0x188] sm:$0xff]
      %v546 = vld [vmem:[%s340 + $0x190] sm:$0xff]
      %v547 = vld [vmem:[%s340 + $0x198] sm:$0xff]
      %v548 = vld [vmem:[%s340 + $0x1a0] sm:$0xff]
      %v549 = vld [vmem:[%s340 + $0x1a8] sm:$0xff]
      %v550 = vld [vmem:[%s340 + $0x1b0] sm:$0xff]
      %v551 = vld [vmem:[%s340 + $0x1b8] sm:$0xff]
      %v552 = vld [vmem:[%s340 + $0x1c0] sm:$0xff]
      %v553 = vld [vmem:[%s340 + $0x1c8] sm:$0xff]
      %v554 = vld [vmem:[%s340 + $0x1d0] sm:$0xff]
      %v555 = vld [vmem:[%s340 + $0x1d8] sm:$0xff]
      %v556 = vld [vmem:[%s340 + $0x1e0] sm:$0xff]
      %v557 = vld [vmem:[%s340 + $0x1e8] sm:$0xff]
      %v558 = vld [vmem:[%s340 + $0x1f0] sm:$0xff]
      %v559 = vld [vmem:[%s340 + $0x1f8] sm:$0xff]
      %v560 = vld [vmem:[%s348] sm:$0xff]
      %v561 = vld [vmem:[%s348 + $0x8] sm:$0xff]
      %v562 = vld [vmem:[%s348 + $0x10] sm:$0xff]
      %v563 = vld [vmem:[%s348 + $0x18] sm:$0xff]
      %v564 = vld [vmem:[%s348 + $0x20] sm:$0xff]
      %v565 = vld [vmem:[%s348 + $0x28] sm:$0xff]
      %v566 = vld [vmem:[%s348 + $0x30] sm:$0xff]
      %v567 = vld [vmem:[%s348 + $0x38] sm:$0xff]
      %v568 = vld [vmem:[%s348 + $0x40] sm:$0xff]
      %v569 = vld [vmem:[%s348 + $0x48] sm:$0xff]
      %v570 = vld [vmem:[%s348 + $0x50] sm:$0xff]
      %v571 = vld [vmem:[%s348 + $0x58] sm:$0xff]
      %v572 = vld [vmem:[%s348 + $0x60] sm:$0xff]
      %v573 = vld [vmem:[%s348 + $0x68] sm:$0xff]
      %v574 = vld [vmem:[%s348 + $0x70] sm:$0xff]
      %v575 = vld [vmem:[%s348 + $0x78] sm:$0xff]
      %v576 = vld [vmem:[%s348 + $0x80] sm:$0xff]
      %v577 = vld [vmem:[%s348 + $0x88] sm:$0xff]
      %v578 = vld [vmem:[%s348 + $0x90] sm:$0xff]
      %v579 = vld [vmem:[%s348 + $0x98] sm:$0xff]
      %v580 = vld [vmem:[%s348 + $0xa0] sm:$0xff]
      %v581 = vld [vmem:[%s348 + $0xa8] sm:$0xff]
      %v582 = vld [vmem:[%s348 + $0xb0] sm:$0xff]
      %v583 = vld [vmem:[%s348 + $0xb8] sm:$0xff]
      %v584 = vld [vmem:[%s348 + $0xc0] sm:$0xff]
      %v585 = vld [vmem:[%s348 + $0xc8] sm:$0xff]
      %v586 = vld [vmem:[%s348 + $0xd0] sm:$0xff]
      %v587 = vld [vmem:[%s348 + $0xd8] sm:$0xff]
      %v588 = vld [vmem:[%s348 + $0xe0] sm:$0xff]
      %v589 = vld [vmem:[%s348 + $0xe8] sm:$0xff]
      %v590 = vld [vmem:[%s348 + $0xf0] sm:$0xff]
      %v591 = vld [vmem:[%s348 + $0xf8] sm:$0xff]
      %v592 = vld [vmem:[%s348 + $0x100] sm:$0xff]
      %v593 = vld [vmem:[%s348 + $0x108] sm:$0xff]
      %v594 = vld [vmem:[%s348 + $0x110] sm:$0xff]
      %v595 = vld [vmem:[%s348 + $0x118] sm:$0xff]
      %v596 = vld [vmem:[%s348 + $0x120] sm:$0xff]
      %v597 = vld [vmem:[%s348 + $0x128] sm:$0xff]
      %v598 = vld [vmem:[%s348 + $0x130] sm:$0xff]
      %v599 = vld [vmem:[%s348 + $0x138] sm:$0xff]
      %v600 = vld [vmem:[%s348 + $0x140] sm:$0xff]
      %v601 = vld [vmem:[%s348 + $0x148] sm:$0xff]
      %v602 = vld [vmem:[%s348 + $0x150] sm:$0xff]
      %v603 = vld [vmem:[%s348 + $0x158] sm:$0xff]
      %v604 = vld [vmem:[%s348 + $0x160] sm:$0xff]
      %v605 = vld [vmem:[%s348 + $0x168] sm:$0xff]
      %v606 = vld [vmem:[%s348 + $0x170] sm:$0xff]
      %v607 = vld [vmem:[%s348 + $0x178] sm:$0xff]
      %v608 = vld [vmem:[%s348 + $0x180] sm:$0xff]
      %v609 = vld [vmem:[%s348 + $0x188] sm:$0xff]
      %v610 = vld [vmem:[%s348 + $0x190] sm:$0xff]
      %v611 = vld [vmem:[%s348 + $0x198] sm:$0xff]
      %v612 = vld [vmem:[%s348 + $0x1a0] sm:$0xff]
      %v613 = vld [vmem:[%s348 + $0x1a8] sm:$0xff]
      %v614 = vld [vmem:[%s348 + $0x1b0] sm:$0xff]
      %v615 = vld [vmem:[%s348 + $0x1b8] sm:$0xff]
      %v616 = vld [vmem:[%s348 + $0x1c0] sm:$0xff]
      %v617 = vld [vmem:[%s348 + $0x1c8] sm:$0xff]
      %v618 = vld [vmem:[%s348 + $0x1d0] sm:$0xff]
      %v619 = vld [vmem:[%s348 + $0x1d8] sm:$0xff]
      %v620 = vld [vmem:[%s348 + $0x1e0] sm:$0xff]
      %v621 = vld [vmem:[%s348 + $0x1e8] sm:$0xff]
      %v622 = vld [vmem:[%s348 + $0x1f0] sm:$0xff]
      %v623 = vld [vmem:[%s348 + $0x1f8] sm:$0xff]
      %v688 = vunpack.c.l.b16 %v496
      %v689 = vunpack.c.h.b16 %v496
      %v690 = vunpack.c.l.b16 %v497
      %v691 = vunpack.c.h.b16 %v497
      %v692 = vunpack.c.l.b16 %v498
      %v693 = vunpack.c.h.b16 %v498
      %v694 = vunpack.c.l.b16 %v499
      %v695 = vunpack.c.h.b16 %v499
      %v696 = vunpack.c.l.b16 %v500
      %v697 = vunpack.c.h.b16 %v500
      %v698 = vunpack.c.l.b16 %v501
      %v699 = vunpack.c.h.b16 %v501
      %v700 = vunpack.c.l.b16 %v502
      %v701 = vunpack.c.h.b16 %v502
      %v702 = vunpack.c.l.b16 %v503
      %v703 = vunpack.c.h.b16 %v503
      %v704 = vunpack.c.l.b16 %v504
      %v705 = vunpack.c.h.b16 %v504
      %v706 = vunpack.c.l.b16 %v505
      %v707 = vunpack.c.h.b16 %v505
      %v708 = vunpack.c.l.b16 %v506
      %v709 = vunpack.c.h.b16 %v506
      %v710 = vunpack.c.l.b16 %v507
      %v711 = vunpack.c.h.b16 %v507
      %v712 = vunpack.c.l.b16 %v508
      %v713 = vunpack.c.h.b16 %v508
      %v714 = vunpack.c.l.b16 %v509
      %v715 = vunpack.c.h.b16 %v509
      %v716 = vunpack.c.l.b16 %v510
      %v717 = vunpack.c.h.b16 %v510
      %v718 = vunpack.c.l.b16 %v511
      %v719 = vunpack.c.h.b16 %v511
      %v720 = vunpack.c.l.b16 %v512
      %v721 = vunpack.c.h.b16 %v512
      %v722 = vunpack.c.l.b16 %v513
      %v723 = vunpack.c.h.b16 %v513
      %v724 = vunpack.c.l.b16 %v514
      %v725 = vunpack.c.h.b16 %v514
      %v726 = vunpack.c.l.b16 %v515
      %v727 = vunpack.c.h.b16 %v515
      %v728 = vunpack.c.l.b16 %v516
      %v729 = vunpack.c.h.b16 %v516
      %v730 = vunpack.c.l.b16 %v517
      %v731 = vunpack.c.h.b16 %v517
      %v732 = vunpack.c.l.b16 %v518
      %v733 = vunpack.c.h.b16 %v518
      %v734 = vunpack.c.l.b16 %v519
      %v735 = vunpack.c.h.b16 %v519
      %v736 = vunpack.c.l.b16 %v520
      %v737 = vunpack.c.h.b16 %v520
      %v738 = vunpack.c.l.b16 %v521
      %v739 = vunpack.c.h.b16 %v521
      %v740 = vunpack.c.l.b16 %v522
      %v741 = vunpack.c.h.b16 %v522
      %v742 = vunpack.c.l.b16 %v523
      %v743 = vunpack.c.h.b16 %v523
      %v744 = vunpack.c.l.b16 %v524
      %v745 = vunpack.c.h.b16 %v524
      %v746 = vunpack.c.l.b16 %v525
      %v747 = vunpack.c.h.b16 %v525
      %v748 = vunpack.c.l.b16 %v526
      %v749 = vunpack.c.h.b16 %v526
      %v750 = vunpack.c.l.b16 %v527
      %v751 = vunpack.c.h.b16 %v527
      %v752 = vunpack.c.l.b16 %v528
      %v753 = vunpack.c.h.b16 %v528
      %v754 = vunpack.c.l.b16 %v529
      %v755 = vunpack.c.h.b16 %v529
      %v756 = vunpack.c.l.b16 %v530
      %v757 = vunpack.c.h.b16 %v530
      %v758 = vunpack.c.l.b16 %v531
      %v759 = vunpack.c.h.b16 %v531
      %v760 = vunpack.c.l.b16 %v532
      %v761 = vunpack.c.h.b16 %v532
      %v762 = vunpack.c.l.b16 %v533
      %v763 = vunpack.c.h.b16 %v533
      %v764 = vunpack.c.l.b16 %v534
      %v765 = vunpack.c.h.b16 %v534
      %v766 = vunpack.c.l.b16 %v535
      %v767 = vunpack.c.h.b16 %v535
      %v768 = vunpack.c.l.b16 %v536
      %v769 = vunpack.c.h.b16 %v536
      %v770 = vunpack.c.l.b16 %v537
      %v771 = vunpack.c.h.b16 %v537
      %v772 = vunpack.c.l.b16 %v538
      %v773 = vunpack.c.h.b16 %v538
      %v774 = vunpack.c.l.b16 %v539
      %v775 = vunpack.c.h.b16 %v539
      %v776 = vunpack.c.l.b16 %v540
      %v777 = vunpack.c.h.b16 %v540
      %v778 = vunpack.c.l.b16 %v541
      %v779 = vunpack.c.h.b16 %v541
      %v780 = vunpack.c.l.b16 %v542
      %v781 = vunpack.c.h.b16 %v542
      %v782 = vunpack.c.l.b16 %v543
      %v783 = vunpack.c.h.b16 %v543
      %v784 = vunpack.c.l.b16 %v544
      %v785 = vunpack.c.h.b16 %v544
      %v786 = vunpack.c.l.b16 %v545
      %v787 = vunpack.c.h.b16 %v545
      %v788 = vunpack.c.l.b16 %v546
      %v789 = vunpack.c.h.b16 %v546
      %v790 = vunpack.c.l.b16 %v547
      %v791 = vunpack.c.h.b16 %v547
      %v792 = vunpack.c.l.b16 %v548
      %v793 = vunpack.c.h.b16 %v548
      %v794 = vunpack.c.l.b16 %v549
      %v795 = vunpack.c.h.b16 %v549
      %v796 = vunpack.c.l.b16 %v550
      %v797 = vunpack.c.h.b16 %v550
      %v798 = vunpack.c.l.b16 %v551
      %v799 = vunpack.c.h.b16 %v551
      %v800 = vunpack.c.l.b16 %v552
      %v801 = vunpack.c.h.b16 %v552
      %v802 = vunpack.c.l.b16 %v553
      %v803 = vunpack.c.h.b16 %v553
      %v804 = vunpack.c.l.b16 %v554
      %v805 = vunpack.c.h.b16 %v554
      %v806 = vunpack.c.l.b16 %v555
      %v807 = vunpack.c.h.b16 %v555
      %v808 = vunpack.c.l.b16 %v556
      %v809 = vunpack.c.h.b16 %v556
      %v810 = vunpack.c.l.b16 %v557
      %v811 = vunpack.c.h.b16 %v557
      %v812 = vunpack.c.l.b16 %v558
      %v813 = vunpack.c.h.b16 %v558
      %v814 = vunpack.c.l.b16 %v559
      %v815 = vunpack.c.h.b16 %v559
      %v816 = vpack.c.b16 %v692, %v688
      %v817 = vpack.c.b16 %v693, %v689
      %v818 = vpack.c.b16 %v694, %v690
      %v819 = vpack.c.b16 %v695, %v691
      %v820 = vpack.c.b16 %v700, %v696
      %v821 = vpack.c.b16 %v701, %v697
      %v822 = vpack.c.b16 %v702, %v698
      %v823 = vpack.c.b16 %v703, %v699
      %v824 = vpack.c.b16 %v708, %v704
      %v825 = vpack.c.b16 %v709, %v705
      %v826 = vpack.c.b16 %v710, %v706
      %v827 = vpack.c.b16 %v711, %v707
      %v828 = vpack.c.b16 %v716, %v712
      %v829 = vpack.c.b16 %v717, %v713
      %v830 = vpack.c.b16 %v718, %v714
      %v831 = vpack.c.b16 %v719, %v715
      %v832 = vpack.c.b16 %v724, %v720
      %v833 = vpack.c.b16 %v725, %v721
      %v834 = vpack.c.b16 %v726, %v722
      %v835 = vpack.c.b16 %v727, %v723
      %v836 = vpack.c.b16 %v732, %v728
      %v837 = vpack.c.b16 %v733, %v729
      %v838 = vpack.c.b16 %v734, %v730
      %v839 = vpack.c.b16 %v735, %v731
      %v840 = vpack.c.b16 %v740, %v736
      %v841 = vpack.c.b16 %v741, %v737
      %v842 = vpack.c.b16 %v742, %v738
      %v843 = vpack.c.b16 %v743, %v739
      %v844 = vpack.c.b16 %v748, %v744
      %v845 = vpack.c.b16 %v749, %v745
      %v846 = vpack.c.b16 %v750, %v746
      %v847 = vpack.c.b16 %v751, %v747
      %v848 = vpack.c.b16 %v756, %v752
      %v849 = vpack.c.b16 %v757, %v753
      %v850 = vpack.c.b16 %v758, %v754
      %v851 = vpack.c.b16 %v759, %v755
      %v852 = vpack.c.b16 %v764, %v760
      %v853 = vpack.c.b16 %v765, %v761
      %v854 = vpack.c.b16 %v766, %v762
      %v855 = vpack.c.b16 %v767, %v763
      %v856 = vpack.c.b16 %v772, %v768
      %v857 = vpack.c.b16 %v773, %v769
      %v858 = vpack.c.b16 %v774, %v770
      %v859 = vpack.c.b16 %v775, %v771
      %v860 = vpack.c.b16 %v780, %v776
      %v861 = vpack.c.b16 %v781, %v777
      %v862 = vpack.c.b16 %v782, %v778
      %v863 = vpack.c.b16 %v783, %v779
      %v864 = vpack.c.b16 %v788, %v784
      %v865 = vpack.c.b16 %v789, %v785
      %v866 = vpack.c.b16 %v790, %v786
      %v867 = vpack.c.b16 %v791, %v787
      %v868 = vpack.c.b16 %v796, %v792
      %v869 = vpack.c.b16 %v797, %v793
      %v870 = vpack.c.b16 %v798, %v794
      %v871 = vpack.c.b16 %v799, %v795
      %v872 = vpack.c.b16 %v804, %v800
      %v873 = vpack.c.b16 %v805, %v801
      %v874 = vpack.c.b16 %v806, %v802
      %v875 = vpack.c.b16 %v807, %v803
      %v876 = vpack.c.b16 %v812, %v808
      %v877 = vpack.c.b16 %v813, %v809
      %v878 = vpack.c.b16 %v814, %v810
      %v879 = vpack.c.b16 %v815, %v811
      %v1008 = vunpack.c.l.b16 %v560
      %v1009 = vunpack.c.h.b16 %v560
      %v1010 = vunpack.c.l.b16 %v561
      %v1011 = vunpack.c.h.b16 %v561
      %v1012 = vunpack.c.l.b16 %v562
      %v1013 = vunpack.c.h.b16 %v562
      %v1014 = vunpack.c.l.b16 %v563
      %v1015 = vunpack.c.h.b16 %v563
      %v1016 = vunpack.c.l.b16 %v564
      %v1017 = vunpack.c.h.b16 %v564
      %v1018 = vunpack.c.l.b16 %v565
      %v1019 = vunpack.c.h.b16 %v565
      %v1020 = vunpack.c.l.b16 %v566
      %v1021 = vunpack.c.h.b16 %v566
      %v1022 = vunpack.c.l.b16 %v567
      %v1023 = vunpack.c.h.b16 %v567
      %v1024 = vunpack.c.l.b16 %v568
      %v1025 = vunpack.c.h.b16 %v568
      %v1026 = vunpack.c.l.b16 %v569
      %v1027 = vunpack.c.h.b16 %v569
      %v1028 = vunpack.c.l.b16 %v570
      %v1029 = vunpack.c.h.b16 %v570
      %v1030 = vunpack.c.l.b16 %v571
      %v1031 = vunpack.c.h.b16 %v571
      %v1032 = vunpack.c.l.b16 %v572
      %v1033 = vunpack.c.h.b16 %v572
      %v1034 = vunpack.c.l.b16 %v573
      %v1035 = vunpack.c.h.b16 %v573
      %v1036 = vunpack.c.l.b16 %v574
      %v1037 = vunpack.c.h.b16 %v574
      %v1038 = vunpack.c.l.b16 %v575
      %v1039 = vunpack.c.h.b16 %v575
      %v1040 = vunpack.c.l.b16 %v576
      %v1041 = vunpack.c.h.b16 %v576
      %v1042 = vunpack.c.l.b16 %v577
      %v1043 = vunpack.c.h.b16 %v577
      %v1044 = vunpack.c.l.b16 %v578
      %v1045 = vunpack.c.h.b16 %v578
      %v1046 = vunpack.c.l.b16 %v579
      %v1047 = vunpack.c.h.b16 %v579
      %v1048 = vunpack.c.l.b16 %v580
      %v1049 = vunpack.c.h.b16 %v580
      %v1050 = vunpack.c.l.b16 %v581
      %v1051 = vunpack.c.h.b16 %v581
      %v1052 = vunpack.c.l.b16 %v582
      %v1053 = vunpack.c.h.b16 %v582
      %v1054 = vunpack.c.l.b16 %v583
      %v1055 = vunpack.c.h.b16 %v583
      %v1056 = vunpack.c.l.b16 %v584
      %v1057 = vunpack.c.h.b16 %v584
      %v1058 = vunpack.c.l.b16 %v585
      %v1059 = vunpack.c.h.b16 %v585
      %v1060 = vunpack.c.l.b16 %v586
      %v1061 = vunpack.c.h.b16 %v586
      %v1062 = vunpack.c.l.b16 %v587
      %v1063 = vunpack.c.h.b16 %v587
      %v1064 = vunpack.c.l.b16 %v588
      %v1065 = vunpack.c.h.b16 %v588
      %v1066 = vunpack.c.l.b16 %v589
      %v1067 = vunpack.c.h.b16 %v589
      %v1068 = vunpack.c.l.b16 %v590
      %v1069 = vunpack.c.h.b16 %v590
      %v1070 = vunpack.c.l.b16 %v591
      %v1071 = vunpack.c.h.b16 %v591
      %v1072 = vunpack.c.l.b16 %v592
      %v1073 = vunpack.c.h.b16 %v592
      %v1074 = vunpack.c.l.b16 %v593
      %v1075 = vunpack.c.h.b16 %v593
      %v1076 = vunpack.c.l.b16 %v594
      %v1077 = vunpack.c.h.b16 %v594
      %v1078 = vunpack.c.l.b16 %v595
      %v1079 = vunpack.c.h.b16 %v595
      %v1080 = vunpack.c.l.b16 %v596
      %v1081 = vunpack.c.h.b16 %v596
      %v1082 = vunpack.c.l.b16 %v597
      %v1083 = vunpack.c.h.b16 %v597
      %v1084 = vunpack.c.l.b16 %v598
      %v1085 = vunpack.c.h.b16 %v598
      %v1086 = vunpack.c.l.b16 %v599
      %v1087 = vunpack.c.h.b16 %v599
      %v1088 = vunpack.c.l.b16 %v600
      %v1089 = vunpack.c.h.b16 %v600
      %v1090 = vunpack.c.l.b16 %v601
      %v1091 = vunpack.c.h.b16 %v601
      %v1092 = vunpack.c.l.b16 %v602
      %v1093 = vunpack.c.h.b16 %v602
      %v1094 = vunpack.c.l.b16 %v603
      %v1095 = vunpack.c.h.b16 %v603
      %v1096 = vunpack.c.l.b16 %v604
      %v1097 = vunpack.c.h.b16 %v604
      %v1098 = vunpack.c.l.b16 %v605
      %v1099 = vunpack.c.h.b16 %v605
      %v1100 = vunpack.c.l.b16 %v606
      %v1101 = vunpack.c.h.b16 %v606
      %v1102 = vunpack.c.l.b16 %v607
      %v1103 = vunpack.c.h.b16 %v607
      %v1104 = vunpack.c.l.b16 %v608
      %v1105 = vunpack.c.h.b16 %v608
      %v1106 = vunpack.c.l.b16 %v609
      %v1107 = vunpack.c.h.b16 %v609
      %v1108 = vunpack.c.l.b16 %v610
      %v1109 = vunpack.c.h.b16 %v610
      %v1110 = vunpack.c.l.b16 %v611
      %v1111 = vunpack.c.h.b16 %v611
      %v1112 = vunpack.c.l.b16 %v612
      %v1113 = vunpack.c.h.b16 %v612
      %v1114 = vunpack.c.l.b16 %v613
      %v1115 = vunpack.c.h.b16 %v613
      %v1116 = vunpack.c.l.b16 %v614
      %v1117 = vunpack.c.h.b16 %v614
      %v1118 = vunpack.c.l.b16 %v615
      %v1119 = vunpack.c.h.b16 %v615
      %v1120 = vunpack.c.l.b16 %v616
      %v1121 = vunpack.c.h.b16 %v616
      %v1122 = vunpack.c.l.b16 %v617
      %v1123 = vunpack.c.h.b16 %v617
      %v1124 = vunpack.c.l.b16 %v618
      %v1125 = vunpack.c.h.b16 %v618
      %v1126 = vunpack.c.l.b16 %v619
      %v1127 = vunpack.c.h.b16 %v619
      %v1128 = vunpack.c.l.b16 %v620
      %v1129 = vunpack.c.h.b16 %v620
      %v1130 = vunpack.c.l.b16 %v621
      %v1131 = vunpack.c.h.b16 %v621
      %v1132 = vunpack.c.l.b16 %v622
      %v1133 = vunpack.c.h.b16 %v622
      %v1134 = vunpack.c.l.b16 %v623
      %v1135 = vunpack.c.h.b16 %v623
      %v1136 = vpack.c.b16 %v1010, %v1008
      %v1137 = vpack.c.b16 %v1011, %v1009
      %v1138 = vpack.c.b16 %v1014, %v1012
      %v1139 = vpack.c.b16 %v1015, %v1013
      %v1140 = vpack.c.b16 %v1018, %v1016
      %v1141 = vpack.c.b16 %v1019, %v1017
      %v1142 = vpack.c.b16 %v1022, %v1020
      %v1143 = vpack.c.b16 %v1023, %v1021
      %v1144 = vpack.c.b16 %v1026, %v1024
      %v1145 = vpack.c.b16 %v1027, %v1025
      %v1146 = vpack.c.b16 %v1030, %v1028
      %v1147 = vpack.c.b16 %v1031, %v1029
      %v1148 = vpack.c.b16 %v1034, %v1032
      %v1149 = vpack.c.b16 %v1035, %v1033
      %v1150 = vpack.c.b16 %v1038, %v1036
      %v1151 = vpack.c.b16 %v1039, %v1037
      %v1152 = vpack.c.b16 %v1042, %v1040
      %v1153 = vpack.c.b16 %v1043, %v1041
      %v1154 = vpack.c.b16 %v1046, %v1044
      %v1155 = vpack.c.b16 %v1047, %v1045
      %v1156 = vpack.c.b16 %v1050, %v1048
      %v1157 = vpack.c.b16 %v1051, %v1049
      %v1158 = vpack.c.b16 %v1054, %v1052
      %v1159 = vpack.c.b16 %v1055, %v1053
      %v1160 = vpack.c.b16 %v1058, %v1056
      %v1161 = vpack.c.b16 %v1059, %v1057
      %v1162 = vpack.c.b16 %v1062, %v1060
      %v1163 = vpack.c.b16 %v1063, %v1061
      %v1164 = vpack.c.b16 %v1066, %v1064
      %v1165 = vpack.c.b16 %v1067, %v1065
      %v1166 = vpack.c.b16 %v1070, %v1068
      %v1167 = vpack.c.b16 %v1071, %v1069
      %v1168 = vpack.c.b16 %v1074, %v1072
      %v1169 = vpack.c.b16 %v1075, %v1073
      %v1170 = vpack.c.b16 %v1078, %v1076
      %v1171 = vpack.c.b16 %v1079, %v1077
      %v1172 = vpack.c.b16 %v1082, %v1080
      %v1173 = vpack.c.b16 %v1083, %v1081
      %v1174 = vpack.c.b16 %v1086, %v1084
      %v1175 = vpack.c.b16 %v1087, %v1085
      %v1176 = vpack.c.b16 %v1090, %v1088
      %v1177 = vpack.c.b16 %v1091, %v1089
      %v1178 = vpack.c.b16 %v1094, %v1092
      %v1179 = vpack.c.b16 %v1095, %v1093
      %v1180 = vpack.c.b16 %v1098, %v1096
      %v1181 = vpack.c.b16 %v1099, %v1097
      %v1182 = vpack.c.b16 %v1102, %v1100
      %v1183 = vpack.c.b16 %v1103, %v1101
      %v1184 = vpack.c.b16 %v1106, %v1104
      %v1185 = vpack.c.b16 %v1107, %v1105
      %v1186 = vpack.c.b16 %v1110, %v1108
      %v1187 = vpack.c.b16 %v1111, %v1109
      %v1188 = vpack.c.b16 %v1114, %v1112
      %v1189 = vpack.c.b16 %v1115, %v1113
      %v1190 = vpack.c.b16 %v1118, %v1116
      %v1191 = vpack.c.b16 %v1119, %v1117
      %v1192 = vpack.c.b16 %v1122, %v1120
      %v1193 = vpack.c.b16 %v1123, %v1121
      %v1194 = vpack.c.b16 %v1126, %v1124
      %v1195 = vpack.c.b16 %v1127, %v1125
      %v1196 = vpack.c.b16 %v1130, %v1128
      %v1197 = vpack.c.b16 %v1131, %v1129
      %v1198 = vpack.c.b16 %v1134, %v1132
      %v1199 = vpack.c.b16 %v1135, %v1133
      %1264 = vmatprep.subr.bf16.mxu0 %v1137
      %1265 = vmatpush1.bf16.msra.mxu0 %v1136
      %1266 = vmatprep.subr.bf16.mxu0 %v1139
      %1267 = vmatpush1.bf16.msra.mxu0 %v1138
      %1268 = vmatprep.subr.bf16.mxu0 %v1141
      %1269 = vmatpush1.bf16.msra.mxu0 %v1140
      %1270 = vmatprep.subr.bf16.mxu0 %v1143
      %1271 = vmatpush1.bf16.msra.mxu0 %v1142
      %1272 = vmatprep.subr.bf16.mxu0 %v1145
      %1273 = vmatpush1.bf16.msra.mxu0 %v1144
      %1274 = vmatprep.subr.bf16.mxu0 %v1147
      %1275 = vmatpush1.bf16.msra.mxu0 %v1146
      %1276 = vmatprep.subr.bf16.mxu0 %v1149
      %1277 = vmatpush1.bf16.msra.mxu0 %v1148
      %1278 = vmatprep.subr.bf16.mxu0 %v1151
      %1279 = vmatpush1.bf16.msra.mxu0 %v1150
      %1280 = vmatprep.subr.bf16.mxu0 %v1153
      %1281 = vmatpush1.bf16.msra.mxu0 %v1152
      %1282 = vmatprep.subr.bf16.mxu0 %v1155
      %1283 = vmatpush1.bf16.msra.mxu0 %v1154
      %1284 = vmatprep.subr.bf16.mxu0 %v1157
      %1285 = vmatpush1.bf16.msra.mxu0 %v1156
      %1286 = vmatprep.subr.bf16.mxu0 %v1159
      %1287 = vmatpush1.bf16.msra.mxu0 %v1158
      %1288 = vmatprep.subr.bf16.mxu0 %v1161
      %1289 = vmatpush1.bf16.msra.mxu0 %v1160
      %1290 = vmatprep.subr.bf16.mxu0 %v1163
      %1291 = vmatpush1.bf16.msra.mxu0 %v1162
      %1292 = vmatprep.subr.bf16.mxu0 %v1165
      %1293 = vmatpush1.bf16.msra.mxu0 %v1164
      %1294 = vmatprep.subr.bf16.mxu0 %v1167
      %1295 = vmatpush1.bf16.msra.mxu0 %v1166
      %1296 = vmatprep.mubr.bf16.mxu0 %v817
      %1297 = vmatmul.mubr.bf16.gmra.mrb[0].mxu0 %v816
      %v1298 = vpop.f32.mrb[0].mxu0
      %v1299 = vadd.f32 0.0, %v1298
      %v1300 = vpop.f32.mrb[0].mxu0
      %v1301 = vadd.f32 0.0, %v1300
      %v1302 = vpop.f32.mrb[0].mxu0
      %v1303 = vadd.f32 0.0, %v1302
      %v1304 = vpop.f32.mrb[0].mxu0
      %v1305 = vadd.f32 0.0, %v1304
      %1306 = vmatprep.mubr.bf16.mxu0 %v821
      %1307 = vmatmul.mubr.bf16.gmra.mrb[0].mxu0 %v820
      %v1308 = vpop.f32.mrb[0].mxu0
      %v1309 = vadd.f32 0.0, %v1308
      %v1310 = vpop.f32.mrb[0].mxu0
      %v1311 = vadd.f32 0.0, %v1310
      %v1312 = vpop.f32.mrb[0].mxu0
      %v1313 = vadd.f32 0.0, %v1312
      %v1314 = vpop.f32.mrb[0].mxu0
      %v1315 = vadd.f32 0.0, %v1314
      %1316 = vmatprep.mubr.bf16.mxu0 %v825
      %1317 = vmatmul.mubr.bf16.gmra.mrb[0].mxu0 %v824
      %v1318 = vpop.f32.mrb[0].mxu0
      %v1319 = vadd.f32 0.0, %v1318
      %v1320 = vpop.f32.mrb[0].mxu0
      %v1321 = vadd.f32 0.0, %v1320
      %v1322 = vpop.f32.mrb[0].mxu0
      %v1323 = vadd.f32 0.0, %v1322
      %v1324 = vpop.f32.mrb[0].mxu0
      %v1325 = vadd.f32 0.0, %v1324
      %1326 = vmatprep.mubr.bf16.mxu0 %v829
      %1327 = vmatmul.mubr.bf16.gmra.mrb[0].mxu0 %v828
      %v1328 = vpop.f32.mrb[0].mxu0
      %v1329 = vadd.f32 0.0, %v1328
      %v1330 = vpop.f32.mrb[0].mxu0
      %v1331 = vadd.f32 0.0, %v1330
      %v1332 = vpop.f32.mrb[0].mxu0
      %v1333 = vadd.f32 0.0, %v1332
      %v1334 = vpop.f32.mrb[0].mxu0
      %v1335 = vadd.f32 0.0, %v1334
      %1336 = vmatprep.mubr.bf16.mxu0 %v833
      %1337 = vmatmul.mubr.bf16.gmra.mrb[0].mxu0 %v832
      %v1338 = vpop.f32.mrb[0].mxu0
      %v1339 = vadd.f32 0.0, %v1338
      %v1340 = vpop.f32.mrb[0].mxu0
      %v1341 = vadd.f32 0.0, %v1340
      %v1342 = vpop.f32.mrb[0].mxu0
      %v1343 = vadd.f32 0.0, %v1342
      %v1344 = vpop.f32.mrb[0].mxu0
      %v1345 = vadd.f32 0.0, %v1344
      %1346 = vmatprep.mubr.bf16.mxu0 %v837
      %1347 = vmatmul.mubr.bf16.gmra.mrb[0].mxu0 %v836
      %v1348 = vpop.f32.mrb[0].mxu0
      %v1349 = vadd.f32 0.0, %v1348
      %v1350 = vpop.f32.mrb[0].mxu0
      %v1351 = vadd.f32 0.0, %v1350
      %v1352 = vpop.f32.mrb[0].mxu0
      %v1353 = vadd.f32 0.0, %v1352
      %v1354 = vpop.f32.mrb[0].mxu0
      %v1355 = vadd.f32 0.0, %v1354
      %1356 = vmatprep.mubr.bf16.mxu0 %v841
      %1357 = vmatmul.mubr.bf16.gmra.mrb[0].mxu0 %v840
      %v1358 = vpop.f32.mrb[0].mxu0
      %v1359 = vadd.f32 0.0, %v1358
      %v1360 = vpop.f32.mrb[0].mxu0
      %v1361 = vadd.f32 0.0, %v1360
      %v1362 = vpop.f32.mrb[0].mxu0
      %v1363 = vadd.f32 0.0, %v1362
      %v1364 = vpop.f32.mrb[0].mxu0
      %v1365 = vadd.f32 0.0, %v1364
      %1366 = vmatprep.mubr.bf16.mxu0 %v845
      %1367 = vmatmul.mubr.bf16.gmra.mrb[0].mxu0 %v844
      %v1368 = vpop.f32.mrb[0].mxu0
      %v1369 = vadd.f32 0.0, %v1368
      %v1370 = vpop.f32.mrb[0].mxu0
      %v1371 = vadd.f32 0.0, %v1370
      %v1372 = vpop.f32.mrb[0].mxu0
      %v1373 = vadd.f32 0.0, %v1372
      %v1374 = vpop.f32.mrb[0].mxu0
      %v1375 = vadd.f32 0.0, %v1374
      %1376 = vmatprep.mubr.bf16.mxu0 %v849
      %1377 = vmatmul.mubr.bf16.gmra.mrb[0].mxu0 %v848
      %v1378 = vpop.f32.mrb[0].mxu0
      %v1379 = vadd.f32 0.0, %v1378
      %v1380 = vpop.f32.mrb[0].mxu0
      %v1381 = vadd.f32 0.0, %v1380
      %v1382 = vpop.f32.mrb[0].mxu0
      %v1383 = vadd.f32 0.0, %v1382
      %v1384 = vpop.f32.mrb[0].mxu0
      %v1385 = vadd.f32 0.0, %v1384
      %1386 = vmatprep.mubr.bf16.mxu0 %v853
      %1387 = vmatmul.mubr.bf16.gmra.mrb[0].mxu0 %v852
      %v1388 = vpop.f32.mrb[0].mxu0
      %v1389 = vadd.f32 0.0, %v1388
      %v1390 = vpop.f32.mrb[0].mxu0
      %v1391 = vadd.f32 0.0, %v1390
      %v1392 = vpop.f32.mrb[0].mxu0
      %v1393 = vadd.f32 0.0, %v1392
      %v1394 = vpop.f32.mrb[0].mxu0
      %v1395 = vadd.f32 0.0, %v1394
      %1396 = vmatprep.mubr.bf16.mxu0 %v857
      %1397 = vmatmul.mubr.bf16.gmra.mrb[0].mxu0 %v856
      %v1398 = vpop.f32.mrb[0].mxu0
      %v1399 = vadd.f32 0.0, %v1398
      %v1400 = vpop.f32.mrb[0].mxu0
      %v1401 = vadd.f32 0.0, %v1400
      %v1402 = vpop.f32.mrb[0].mxu0
      %v1403 = vadd.f32 0.0, %v1402
      %v1404 = vpop.f32.mrb[0].mxu0
      %v1405 = vadd.f32 0.0, %v1404
      %1406 = vmatprep.mubr.bf16.mxu0 %v861
      %1407 = vmatmul.mubr.bf16.gmra.mrb[0].mxu0 %v860
      %v1408 = vpop.f32.mrb[0].mxu0
      %v1409 = vadd.f32 0.0, %v1408
      %v1410 = vpop.f32.mrb[0].mxu0
      %v1411 = vadd.f32 0.0, %v1410
      %v1412 = vpop.f32.mrb[0].mxu0
      %v1413 = vadd.f32 0.0, %v1412
      %v1414 = vpop.f32.mrb[0].mxu0
      %v1415 = vadd.f32 0.0, %v1414
      %1416 = vmatprep.mubr.bf16.mxu0 %v865
      %1417 = vmatmul.mubr.bf16.gmra.mrb[0].mxu0 %v864
      %v1418 = vpop.f32.mrb[0].mxu0
      %v1419 = vadd.f32 0.0, %v1418
      %v1420 = vpop.f32.mrb[0].mxu0
      %v1421 = vadd.f32 0.0, %v1420
      %v1422 = vpop.f32.mrb[0].mxu0
      %v1423 = vadd.f32 0.0, %v1422
      %v1424 = vpop.f32.mrb[0].mxu0
      %v1425 = vadd.f32 0.0, %v1424
      %1426 = vmatprep.mubr.bf16.mxu0 %v869
      %1427 = vmatmul.mubr.bf16.gmra.mrb[0].mxu0 %v868
      %v1428 = vpop.f32.mrb[0].mxu0
      %v1429 = vadd.f32 0.0, %v1428
      %v1430 = vpop.f32.mrb[0].mxu0
      %v1431 = vadd.f32 0.0, %v1430
      %v1432 = vpop.f32.mrb[0].mxu0
      %v1433 = vadd.f32 0.0, %v1432
      %v1434 = vpop.f32.mrb[0].mxu0
      %v1435 = vadd.f32 0.0, %v1434
      %1436 = vmatprep.mubr.bf16.mxu0 %v873
      %1437 = vmatmul.mubr.bf16.gmra.mrb[0].mxu0 %v872
      %v1438 = vpop.f32.mrb[0].mxu0
      %v1439 = vadd.f32 0.0, %v1438
      %v1440 = vpop.f32.mrb[0].mxu0
      %v1441 = vadd.f32 0.0, %v1440
      %v1442 = vpop.f32.mrb[0].mxu0
      %v1443 = vadd.f32 0.0, %v1442
      %v1444 = vpop.f32.mrb[0].mxu0
      %v1445 = vadd.f32 0.0, %v1444
      %1446 = vmatprep.mubr.bf16.mxu0 %v877
      %1447 = vmatmul.mubr.bf16.gmra.mrb[0].mxu0 %v876
      %v1448 = vpop.f32.mrb[0].mxu0
      %v1449 = vadd.f32 0.0, %v1448
      %v1450 = vpop.f32.mrb[0].mxu0
      %v1451 = vadd.f32 0.0, %v1450
      %v1452 = vpop.f32.mrb[0].mxu0
      %v1453 = vadd.f32 0.0, %v1452
      %v1454 = vpop.f32.mrb[0].mxu0
      %v1455 = vadd.f32 0.0, %v1454
      %1456 = vdwg.mxu0
      %1457 = vmatprep.subr.bf16.mxu0 %v1169
      %1458 = vmatpush1.bf16.msra.mxu0 %v1168
      %1459 = vmatprep.subr.bf16.mxu0 %v1171
      %1460 = vmatpush1.bf16.msra.mxu0 %v1170
      %1461 = vmatprep.subr.bf16.mxu0 %v1173
      %1462 = vmatpush1.bf16.msra.mxu0 %v1172
      %1463 = vmatprep.subr.bf16.mxu0 %v1175
      %1464 = vmatpush1.bf16.msra.mxu0 %v1174
      %1465 = vmatprep.subr.bf16.mxu0 %v1177
      %1466 = vmatpush1.bf16.msra.mxu0 %v1176
      %1467 = vmatprep.subr.bf16.mxu0 %v1179
      %1468 = vmatpush1.bf16.msra.mxu0 %v1178
      %1469 = vmatprep.subr.bf16.mxu0 %v1181
      %1470 = vmatpush1.bf16.msra.mxu0 %v1180
      %1471 = vmatprep.subr.bf16.mxu0 %v1183
      %1472 = vmatpush1.bf16.msra.mxu0 %v1182
      %1473 = vmatprep.subr.bf16.mxu0 %v1185
      %1474 = vmatpush1.bf16.msra.mxu0 %v1184
      %1475 = vmatprep.subr.bf16.mxu0 %v1187
      %1476 = vmatpush1.bf16.msra.mxu0 %v1186
      %1477 = vmatprep.subr.bf16.mxu0 %v1189
      %1478 = vmatpush1.bf16.msra.mxu0 %v1188
      %1479 = vmatprep.subr.bf16.mxu0 %v1191
      %1480 = vmatpush1.bf16.msra.mxu0 %v1190
      %1481 = vmatprep.subr.bf16.mxu0 %v1193
      %1482 = vmatpush1.bf16.msra.mxu0 %v1192
      %1483 = vmatprep.subr.bf16.mxu0 %v1195
      %1484 = vmatpush1.bf16.msra.mxu0 %v1194
      %1485 = vmatprep.subr.bf16.mxu0 %v1197
      %1486 = vmatpush1.bf16.msra.mxu0 %v1196
      %1487 = vmatprep.subr.bf16.mxu0 %v1199
      %1488 = vmatpush1.bf16.msra.mxu0 %v1198
      %1489 = vmatprep.mubr.bf16.mxu0 %v819
      %1490 = vmatmul.mubr.bf16.gmra.mrb[0].mxu0 %v818
      %v1491 = vpop.f32.mrb[0].mxu0
      %v1492 = vadd.f32 %v1299, %v1491
      %v1493 = vpop.f32.mrb[0].mxu0
      %v1494 = vadd.f32 %v1301, %v1493
      %v1495 = vpop.f32.mrb[0].mxu0
      %v1496 = vadd.f32 %v1303, %v1495
      %v1497 = vpop.f32.mrb[0].mxu0
      %v1498 = vadd.f32 %v1305, %v1497
      %1499 = vmatprep.mubr.bf16.mxu0 %v823
      %1500 = vmatmul.mubr.bf16.gmra.mrb[0].mxu0 %v822
      %v1501 = vpop.f32.mrb[0].mxu0
      %v1502 = vadd.f32 %v1309, %v1501
      %v1503 = vpop.f32.mrb[0].mxu0
      %v1504 = vadd.f32 %v1311, %v1503
      %v1505 = vpop.f32.mrb[0].mxu0
      %v1506 = vadd.f32 %v1313, %v1505
      %v1507 = vpop.f32.mrb[0].mxu0
      %v1508 = vadd.f32 %v1315, %v1507
      %1509 = vmatprep.mubr.bf16.mxu0 %v827
      %1510 = vmatmul.mubr.bf16.gmra.mrb[0].mxu0 %v826
      %v1511 = vpop.f32.mrb[0].mxu0
      %v1512 = vadd.f32 %v1319, %v1511
      %v1513 = vpop.f32.mrb[0].mxu0
      %v1514 = vadd.f32 %v1321, %v1513
      %v1515 = vpop.f32.mrb[0].mxu0
      %v1516 = vadd.f32 %v1323, %v1515
      %v1517 = vpop.f32.mrb[0].mxu0
      %v1518 = vadd.f32 %v1325, %v1517
      %1519 = vmatprep.mubr.bf16.mxu0 %v831
      %1520 = vmatmul.mubr.bf16.gmra.mrb[0].mxu0 %v830
      %v1521 = vpop.f32.mrb[0].mxu0
      %v1522 = vadd.f32 %v1329, %v1521
      %v1523 = vpop.f32.mrb[0].mxu0
      %v1524 = vadd.f32 %v1331, %v1523
      %v1525 = vpop.f32.mrb[0].mxu0
      %v1526 = vadd.f32 %v1333, %v1525
      %v1527 = vpop.f32.mrb[0].mxu0
      %v1528 = vadd.f32 %v1335, %v1527
      %1529 = vmatprep.mubr.bf16.mxu0 %v835
      %1530 = vmatmul.mubr.bf16.gmra.mrb[0].mxu0 %v834
      %v1531 = vpop.f32.mrb[0].mxu0
      %v1532 = vadd.f32 %v1339, %v1531
      %v1533 = vpop.f32.mrb[0].mxu0
      %v1534 = vadd.f32 %v1341, %v1533
      %v1535 = vpop.f32.mrb[0].mxu0
      %v1536 = vadd.f32 %v1343, %v1535
      %v1537 = vpop.f32.mrb[0].mxu0
      %v1538 = vadd.f32 %v1345, %v1537
      %1539 = vmatprep.mubr.bf16.mxu0 %v839
      %1540 = vmatmul.mubr.bf16.gmra.mrb[0].mxu0 %v838
      %v1541 = vpop.f32.mrb[0].mxu0
      %v1542 = vadd.f32 %v1349, %v1541
      %v1543 = vpop.f32.mrb[0].mxu0
      %v1544 = vadd.f32 %v1351, %v1543
      %v1545 = vpop.f32.mrb[0].mxu0
      %v1546 = vadd.f32 %v1353, %v1545
      %v1547 = vpop.f32.mrb[0].mxu0
      %v1548 = vadd.f32 %v1355, %v1547
      %1549 = vmatprep.mubr.bf16.mxu0 %v843
      %1550 = vmatmul.mubr.bf16.gmra.mrb[0].mxu0 %v842
      %v1551 = vpop.f32.mrb[0].mxu0
      %v1552 = vadd.f32 %v1359, %v1551
      %v1553 = vpop.f32.mrb[0].mxu0
      %v1554 = vadd.f32 %v1361, %v1553
      %v1555 = vpop.f32.mrb[0].mxu0
      %v1556 = vadd.f32 %v1363, %v1555
      %v1557 = vpop.f32.mrb[0].mxu0
      %v1558 = vadd.f32 %v1365, %v1557
      %1559 = vmatprep.mubr.bf16.mxu0 %v847
      %1560 = vmatmul.mubr.bf16.gmra.mrb[0].mxu0 %v846
      %v1561 = vpop.f32.mrb[0].mxu0
      %v1562 = vadd.f32 %v1369, %v1561
      %v1563 = vpop.f32.mrb[0].mxu0
      %v1564 = vadd.f32 %v1371, %v1563
      %v1565 = vpop.f32.mrb[0].mxu0
      %v1566 = vadd.f32 %v1373, %v1565
      %v1567 = vpop.f32.mrb[0].mxu0
      %v1568 = vadd.f32 %v1375, %v1567
      %1569 = vmatprep.mubr.bf16.mxu0 %v851
      %1570 = vmatmul.mubr.bf16.gmra.mrb[0].mxu0 %v850
      %v1571 = vpop.f32.mrb[0].mxu0
      %v1572 = vadd.f32 %v1379, %v1571
      %v1573 = vpop.f32.mrb[0].mxu0
      %v1574 = vadd.f32 %v1381, %v1573
      %v1575 = vpop.f32.mrb[0].mxu0
      %v1576 = vadd.f32 %v1383, %v1575
      %v1577 = vpop.f32.mrb[0].mxu0
      %v1578 = vadd.f32 %v1385, %v1577
      %1579 = vmatprep.mubr.bf16.mxu0 %v855
      %1580 = vmatmul.mubr.bf16.gmra.mrb[0].mxu0 %v854
      %v1581 = vpop.f32.mrb[0].mxu0
      %v1582 = vadd.f32 %v1389, %v1581
      %v1583 = vpop.f32.mrb[0].mxu0
      %v1584 = vadd.f32 %v1391, %v1583
      %v1585 = vpop.f32.mrb[0].mxu0
      %v1586 = vadd.f32 %v1393, %v1585
      %v1587 = vpop.f32.mrb[0].mxu0
      %v1588 = vadd.f32 %v1395, %v1587
      %1589 = vmatprep.mubr.bf16.mxu0 %v859
      %1590 = vmatmul.mubr.bf16.gmra.mrb[0].mxu0 %v858
      %v1591 = vpop.f32.mrb[0].mxu0
      %v1592 = vadd.f32 %v1399, %v1591
      %v1593 = vpop.f32.mrb[0].mxu0
      %v1594 = vadd.f32 %v1401, %v1593
      %v1595 = vpop.f32.mrb[0].mxu0
      %v1596 = vadd.f32 %v1403, %v1595
      %v1597 = vpop.f32.mrb[0].mxu0
      %v1598 = vadd.f32 %v1405, %v1597
      %1599 = vmatprep.mubr.bf16.mxu0 %v863
      %1600 = vmatmul.mubr.bf16.gmra.mrb[0].mxu0 %v862
      %v1601 = vpop.f32.mrb[0].mxu0
      %v1602 = vadd.f32 %v1409, %v1601
      %v1603 = vpop.f32.mrb[0].mxu0
      %v1604 = vadd.f32 %v1411, %v1603
      %v1605 = vpop.f32.mrb[0].mxu0
      %v1606 = vadd.f32 %v1413, %v1605
      %v1607 = vpop.f32.mrb[0].mxu0
      %v1608 = vadd.f32 %v1415, %v1607
      %1609 = vmatprep.mubr.bf16.mxu0 %v867
      %1610 = vmatmul.mubr.bf16.gmra.mrb[0].mxu0 %v866
      %v1611 = vpop.f32.mrb[0].mxu0
      %v1612 = vadd.f32 %v1419, %v1611
      %v1613 = vpop.f32.mrb[0].mxu0
      %v1614 = vadd.f32 %v1421, %v1613
      %v1615 = vpop.f32.mrb[0].mxu0
      %v1616 = vadd.f32 %v1423, %v1615
      %v1617 = vpop.f32.mrb[0].mxu0
      %v1618 = vadd.f32 %v1425, %v1617
      %1619 = vmatprep.mubr.bf16.mxu0 %v871
      %1620 = vmatmul.mubr.bf16.gmra.mrb[0].mxu0 %v870
      %v1621 = vpop.f32.mrb[0].mxu0
      %v1622 = vadd.f32 %v1429, %v1621
      %v1623 = vpop.f32.mrb[0].mxu0
      %v1624 = vadd.f32 %v1431, %v1623
      %v1625 = vpop.f32.mrb[0].mxu0
      %v1626 = vadd.f32 %v1433, %v1625
      %v1627 = vpop.f32.mrb[0].mxu0
      %v1628 = vadd.f32 %v1435, %v1627
      %1629 = vmatprep.mubr.bf16.mxu0 %v875
      %1630 = vmatmul.mubr.bf16.gmra.mrb[0].mxu0 %v874
      %v1631 = vpop.f32.mrb[0].mxu0
      %v1632 = vadd.f32 %v1439, %v1631
      %v1633 = vpop.f32.mrb[0].mxu0
      %v1634 = vadd.f32 %v1441, %v1633
      %v1635 = vpop.f32.mrb[0].mxu0
      %v1636 = vadd.f32 %v1443, %v1635
      %v1637 = vpop.f32.mrb[0].mxu0
      %v1638 = vadd.f32 %v1445, %v1637
      %1639 = vmatprep.mubr.bf16.mxu0 %v879
      %1640 = vmatmul.mubr.bf16.gmra.mrb[0].mxu0 %v878
      %v1641 = vpop.f32.mrb[0].mxu0
      %v1642 = vadd.f32 %v1449, %v1641
      %v1643 = vpop.f32.mrb[0].mxu0
      %v1644 = vadd.f32 %v1451, %v1643
      %v1645 = vpop.f32.mrb[0].mxu0
      %v1646 = vadd.f32 %v1453, %v1645
      %v1647 = vpop.f32.mrb[0].mxu0
      %v1648 = vadd.f32 %v1455, %v1647
      %1649 = vdwg.mxu0
      %v1650 = vadd.f32 %v432, %v1492
      %v1651 = vadd.f32 %v433, %v1494
      %v1652 = vadd.f32 %v434, %v1496
      %v1653 = vadd.f32 %v435, %v1498
      %v1654 = vadd.f32 %v436, %v1502
      %v1655 = vadd.f32 %v437, %v1504
      %v1656 = vadd.f32 %v438, %v1506
      %v1657 = vadd.f32 %v439, %v1508
      %v1658 = vadd.f32 %v440, %v1512
      %v1659 = vadd.f32 %v441, %v1514
      %v1660 = vadd.f32 %v442, %v1516
      %v1661 = vadd.f32 %v443, %v1518
      %v1662 = vadd.f32 %v444, %v1522
      %v1663 = vadd.f32 %v445, %v1524
      %v1664 = vadd.f32 %v446, %v1526
      %v1665 = vadd.f32 %v447, %v1528
      %v1666 = vadd.f32 %v448, %v1532
      %v1667 = vadd.f32 %v449, %v1534
      %v1668 = vadd.f32 %v450, %v1536
      %v1669 = vadd.f32 %v451, %v1538
      %v1670 = vadd.f32 %v452, %v1542
      %v1671 = vadd.f32 %v453, %v1544
      %v1672 = vadd.f32 %v454, %v1546
      %v1673 = vadd.f32 %v455, %v1548
      %v1674 = vadd.f32 %v456, %v1552
      %v1675 = vadd.f32 %v457, %v1554
      %v1676 = vadd.f32 %v458, %v1556
      %v1677 = vadd.f32 %v459, %v1558
      %v1678 = vadd.f32 %v460, %v1562
      %v1679 = vadd.f32 %v461, %v1564
      %v1680 = vadd.f32 %v462, %v1566
      %v1681 = vadd.f32 %v463, %v1568
      %v1682 = vadd.f32 %v464, %v1572
      %v1683 = vadd.f32 %v465, %v1574
      %v1684 = vadd.f32 %v466, %v1576
      %v1685 = vadd.f32 %v467, %v1578
      %v1686 = vadd.f32 %v468, %v1582
      %v1687 = vadd.f32 %v469, %v1584
      %v1688 = vadd.f32 %v470, %v1586
      %v1689 = vadd.f32 %v471, %v1588
      %v1690 = vadd.f32 %v472, %v1592
      %v1691 = vadd.f32 %v473, %v1594
      %v1692 = vadd.f32 %v474, %v1596
      %v1693 = vadd.f32 %v475, %v1598
      %v1694 = vadd.f32 %v476, %v1602
      %v1695 = vadd.f32 %v477, %v1604
      %v1696 = vadd.f32 %v478, %v1606
      %v1697 = vadd.f32 %v479, %v1608
      %v1698 = vadd.f32 %v480, %v1612
      %v1699 = vadd.f32 %v481, %v1614
      %v1700 = vadd.f32 %v482, %v1616
      %v1701 = vadd.f32 %v483, %v1618
      %v1702 = vadd.f32 %v484, %v1622
      %v1703 = vadd.f32 %v485, %v1624
      %v1704 = vadd.f32 %v486, %v1626
      %v1705 = vadd.f32 %v487, %v1628
      %v1706 = vadd.f32 %v488, %v1632
      %v1707 = vadd.f32 %v489, %v1634
      %v1708 = vadd.f32 %v490, %v1636
      %v1709 = vadd.f32 %v491, %v1638
      %v1710 = vadd.f32 %v492, %v1642
      %v1711 = vadd.f32 %v493, %v1644
      %v1712 = vadd.f32 %v494, %v1646
      %v1713 = vadd.f32 %v495, %v1648
      %1714 = vst [vmem:[#allocation2] sm:$0xff] %v1650
      %1715 = vst [vmem:[#allocation2 + $0x8] sm:$0xff] %v1651
      %1716 = vst [vmem:[#allocation2 + $0x10] sm:$0xff] %v1652
      %1717 = vst [vmem:[#allocation2 + $0x18] sm:$0xff] %v1653
      %1718 = vst [vmem:[#allocation2 + $0x20] sm:$0xff] %v1654
      %1719 = vst [vmem:[#allocation2 + $0x28] sm:$0xff] %v1655
      %1720 = vst [vmem:[#allocation2 + $0x30] sm:$0xff] %v1656
      %1721 = vst [vmem:[#allocation2 + $0x38] sm:$0xff] %v1657
      %1722 = vst [vmem:[#allocation2 + $0x40] sm:$0xff] %v1658
      %1723 = vst [vmem:[#allocation2 + $0x48] sm:$0xff] %v1659
      %1724 = vst [vmem:[#allocation2 + $0x50] sm:$0xff] %v1660
      %1725 = vst [vmem:[#allocation2 + $0x58] sm:$0xff] %v1661
      %1726 = vst [vmem:[#allocation2 + $0x60] sm:$0xff] %v1662
      %1727 = vst [vmem:[#allocation2 + $0x68] sm:$0xff] %v1663
      %1728 = vst [vmem:[#allocation2 + $0x70] sm:$0xff] %v1664
      %1729 = vst [vmem:[#allocation2 + $0x78] sm:$0xff] %v1665
      %1730 = vst [vmem:[#allocation2 + $0x80] sm:$0xff] %v1666
      %1731 = vst [vmem:[#allocation2 + $0x88] sm:$0xff] %v1667
      %1732 = vst [vmem:[#allocation2 + $0x90] sm:$0xff] %v1668
      %1733 = vst [vmem:[#allocation2 + $0x98] sm:$0xff] %v1669
      %1734 = vst [vmem:[#allocation2 + $0xa0] sm:$0xff] %v1670
      %1735 = vst [vmem:[#allocation2 + $0xa8] sm:$0xff] %v1671
      %1736 = vst [vmem:[#allocation2 + $0xb0] sm:$0xff] %v1672
      %1737 = vst [vmem:[#allocation2 + $0xb8] sm:$0xff] %v1673
      %1738 = vst [vmem:[#allocation2 + $0xc0] sm:$0xff] %v1674
      %1739 = vst [vmem:[#allocation2 + $0xc8] sm:$0xff] %v1675
      %1740 = vst [vmem:[#allocation2 + $0xd0] sm:$0xff] %v1676
      %1741 = vst [vmem:[#allocation2 + $0xd8] sm:$0xff] %v1677
      %1742 = vst [vmem:[#allocation2 + $0xe0] sm:$0xff] %v1678
      %1743 = vst [vmem:[#allocation2 + $0xe8] sm:$0xff] %v1679
      %1744 = vst [vmem:[#allocation2 + $0xf0] sm:$0xff] %v1680
      %1745 = vst [vmem:[#allocation2 + $0xf8] sm:$0xff] %v1681
      %1746 = vst [vmem:[#allocation2 + $0x100] sm:$0xff] %v1682
      %1747 = vst [vmem:[#allocation2 + $0x108] sm:$0xff] %v1683
      %1748 = vst [vmem:[#allocation2 + $0x110] sm:$0xff] %v1684
      %1749 = vst [vmem:[#allocation2 + $0x118] sm:$0xff] %v1685
      %1750 = vst [vmem:[#allocation2 + $0x120] sm:$0xff] %v1686
      %1751 = vst [vmem:[#allocation2 + $0x128] sm:$0xff] %v1687
      %1752 = vst [vmem:[#allocation2 + $0x130] sm:$0xff] %v1688
      %1753 = vst [vmem:[#allocation2 + $0x138] sm:$0xff] %v1689
      %1754 = vst [vmem:[#allocation2 + $0x140] sm:$0xff] %v1690
      %1755 = vst [vmem:[#allocation2 + $0x148] sm:$0xff] %v1691
      %1756 = vst [vmem:[#allocation2 + $0x150] sm:$0xff] %v1692
      %1757 = vst [vmem:[#allocation2 + $0x158] sm:$0xff] %v1693
      %1758 = vst [vmem:[#allocation2 + $0x160] sm:$0xff] %v1694
      %1759 = vst [vmem:[#allocation2 + $0x168] sm:$0xff] %v1695
      %1760 = vst [vmem:[#allocation2 + $0x170] sm:$0xff] %v1696
      %1761 = vst [vmem:[#allocation2 + $0x178] sm:$0xff] %v1697
      %1762 = vst [vmem:[#allocation2 + $0x180] sm:$0xff] %v1698
      %1763 = vst [vmem:[#allocation2 + $0x188] sm:$0xff] %v1699
      %1764 = vst [vmem:[#allocation2 + $0x190] sm:$0xff] %v1700
      %1765 = vst [vmem:[#allocation2 + $0x198] sm:$0xff] %v1701
      %1766 = vst [vmem:[#allocation2 + $0x1a0] sm:$0xff] %v1702
      %1767 = vst [vmem:[#allocation2 + $0x1a8] sm:$0xff] %v1703
      %1768 = vst [vmem:[#allocation2 + $0x1b0] sm:$0xff] %v1704
      %1769 = vst [vmem:[#allocation2 + $0x1b8] sm:$0xff] %v1705
      %1770 = vst [vmem:[#allocation2 + $0x1c0] sm:$0xff] %v1706
      %1771 = vst [vmem:[#allocation2 + $0x1c8] sm:$0xff] %v1707
      %1772 = vst [vmem:[#allocation2 + $0x1d0] sm:$0xff] %v1708
      %1773 = vst [vmem:[#allocation2 + $0x1d8] sm:$0xff] %v1709
      %1774 = vst [vmem:[#allocation2 + $0x1e0] sm:$0xff] %v1710
      %1775 = vst [vmem:[#allocation2 + $0x1e8] sm:$0xff] %v1711
      %1776 = vst [vmem:[#allocation2 + $0x1f0] sm:$0xff] %v1712
      %1777 = vst [vmem:[#allocation2 + $0x1f8] sm:$0xff] %v1713
      // Predicated region
      $region53: #{gin_forward.4} parent=47 // pred_check
        %p1778 = pneg %p364
      $region54: #{gin_forward.4} parent=47 // pred_check_branch
        %1780 = sbr.rel (%p1778) target = $region56
      $region55: #{gin_forward.4} parent=47 // pred_region
        %v1781 = vld [vmem:[#allocation2] sm:$0xff]
        %v1782 = vld [vmem:[#allocation2 + $0x8] sm:$0xff]
        %v1783 = vld [vmem:[#allocation2 + $0x10] sm:$0xff]
        %v1784 = vld [vmem:[#allocation2 + $0x18] sm:$0xff]
        %v1785 = vld [vmem:[#allocation2 + $0x20] sm:$0xff]
        %v1786 = vld [vmem:[#allocation2 + $0x28] sm:$0xff]
        %v1787 = vld [vmem:[#allocation2 + $0x30] sm:$0xff]
        %v1788 = vld [vmem:[#allocation2 + $0x38] sm:$0xff]
        %v1789 = vld [vmem:[#allocation2 + $0x40] sm:$0xff]
        %v1790 = vld [vmem:[#allocation2 + $0x48] sm:$0xff]
        %v1791 = vld [vmem:[#allocation2 + $0x50] sm:$0xff]
        %v1792 = vld [vmem:[#allocation2 + $0x58] sm:$0xff]
        %v1793 = vld [vmem:[#allocation2 + $0x60] sm:$0xff]
        %v1794 = vld [vmem:[#allocation2 + $0x68] sm:$0xff]
        %v1795 = vld [vmem:[#allocation2 + $0x70] sm:$0xff]
        %v1796 = vld [vmem:[#allocation2 + $0x78] sm:$0xff]
        %v1797 = vld [vmem:[#allocation2 + $0x80] sm:$0xff]
        %v1798 = vld [vmem:[#allocation2 + $0x88] sm:$0xff]
        %v1799 = vld [vmem:[#allocation2 + $0x90] sm:$0xff]
        %v1800 = vld [vmem:[#allocation2 + $0x98] sm:$0xff]
        %v1801 = vld [vmem:[#allocation2 + $0xa0] sm:$0xff]
        %v1802 = vld [vmem:[#allocation2 + $0xa8] sm:$0xff]
        %v1803 = vld [vmem:[#allocation2 + $0xb0] sm:$0xff]
        %v1804 = vld [vmem:[#allocation2 + $0xb8] sm:$0xff]
        %v1805 = vld [vmem:[#allocation2 + $0xc0] sm:$0xff]
        %v1806 = vld [vmem:[#allocation2 + $0xc8] sm:$0xff]
        %v1807 = vld [vmem:[#allocation2 + $0xd0] sm:$0xff]
        %v1808 = vld [vmem:[#allocation2 + $0xd8] sm:$0xff]
        %v1809 = vld [vmem:[#allocation2 + $0xe0] sm:$0xff]
        %v1810 = vld [vmem:[#allocation2 + $0xe8] sm:$0xff]
        %v1811 = vld [vmem:[#allocation2 + $0xf0] sm:$0xff]
        %v1812 = vld [vmem:[#allocation2 + $0xf8] sm:$0xff]
        %v1813 = vld [vmem:[#allocation2 + $0x100] sm:$0xff]
        %v1814 = vld [vmem:[#allocation2 + $0x108] sm:$0xff]
        %v1815 = vld [vmem:[#allocation2 + $0x110] sm:$0xff]
        %v1816 = vld [vmem:[#allocation2 + $0x118] sm:$0xff]
        %v1817 = vld [vmem:[#allocation2 + $0x120] sm:$0xff]
        %v1818 = vld [vmem:[#allocation2 + $0x128] sm:$0xff]
        %v1819 = vld [vmem:[#allocation2 + $0x130] sm:$0xff]
        %v1820 = vld [vmem:[#allocation2 + $0x138] sm:$0xff]
        %v1821 = vld [vmem:[#allocation2 + $0x140] sm:$0xff]
        %v1822 = vld [vmem:[#allocation2 + $0x148] sm:$0xff]
        %v1823 = vld [vmem:[#allocation2 + $0x150] sm:$0xff]
        %v1824 = vld [vmem:[#allocation2 + $0x158] sm:$0xff]
        %v1825 = vld [vmem:[#allocation2 + $0x160] sm:$0xff]
        %v1826 = vld [vmem:[#allocation2 + $0x168] sm:$0xff]
        %v1827 = vld [vmem:[#allocation2 + $0x170] sm:$0xff]
        %v1828 = vld [vmem:[#allocation2 + $0x178] sm:$0xff]
        %v1829 = vld [vmem:[#allocation2 + $0x180] sm:$0xff]
        %v1830 = vld [vmem:[#allocation2 + $0x188] sm:$0xff]
        %v1831 = vld [vmem:[#allocation2 + $0x190] sm:$0xff]
        %v1832 = vld [vmem:[#allocation2 + $0x198] sm:$0xff]
        %v1833 = vld [vmem:[#allocation2 + $0x1a0] sm:$0xff]
        %v1834 = vld [vmem:[#allocation2 + $0x1a8] sm:$0xff]
        %v1835 = vld [vmem:[#allocation2 + $0x1b0] sm:$0xff]
        %v1836 = vld [vmem:[#allocation2 + $0x1b8] sm:$0xff]
        %v1837 = vld [vmem:[#allocation2 + $0x1c0] sm:$0xff]
        %v1838 = vld [vmem:[#allocation2 + $0x1c8] sm:$0xff]
        %v1839 = vld [vmem:[#allocation2 + $0x1d0] sm:$0xff]
        %v1840 = vld [vmem:[#allocation2 + $0x1d8] sm:$0xff]
        %v1841 = vld [vmem:[#allocation2 + $0x1e0] sm:$0xff]
        %v1842 = vld [vmem:[#allocation2 + $0x1e8] sm:$0xff]
        %v1843 = vld [vmem:[#allocation2 + $0x1f0] sm:$0xff]
        %v1844 = vld [vmem:[#allocation2 + $0x1f8] sm:$0xff]
        %v1845 = vld [vmem:[%s355] sm:$0xff]
        %v1846 = vld [vmem:[%s355 + $0x8] sm:$0xff]
        %v1847 = vld [vmem:[%s355 + $0x10] sm:$0xff]
        %v1848 = vld [vmem:[%s355 + $0x18] sm:$0xff]
        %v1849 = vld [vmem:[%s355 + $0x20] sm:$0xff]
        %v1850 = vld [vmem:[%s355 + $0x28] sm:$0xff]
        %v1851 = vld [vmem:[%s355 + $0x30] sm:$0xff]
        %v1852 = vld [vmem:[%s355 + $0x38] sm:$0xff]
        %v1853 = vld [vmem:[%s355 + $0x40] sm:$0xff]
        %v1854 = vld [vmem:[%s355 + $0x48] sm:$0xff]
        %v1855 = vld [vmem:[%s355 + $0x50] sm:$0xff]
        %v1856 = vld [vmem:[%s355 + $0x58] sm:$0xff]
        %v1857 = vld [vmem:[%s355 + $0x60] sm:$0xff]
        %v1858 = vld [vmem:[%s355 + $0x68] sm:$0xff]
        %v1859 = vld [vmem:[%s355 + $0x70] sm:$0xff]
        %v1860 = vld [vmem:[%s355 + $0x78] sm:$0xff]
        %v1861 = vld [vmem:[%s355 + $0x80] sm:$0xff]
        %v1862 = vld [vmem:[%s355 + $0x88] sm:$0xff]
        %v1863 = vld [vmem:[%s355 + $0x90] sm:$0xff]
        %v1864 = vld [vmem:[%s355 + $0x98] sm:$0xff]
        %v1865 = vld [vmem:[%s355 + $0xa0] sm:$0xff]
        %v1866 = vld [vmem:[%s355 + $0xa8] sm:$0xff]
        %v1867 = vld [vmem:[%s355 + $0xb0] sm:$0xff]
        %v1868 = vld [vmem:[%s355 + $0xb8] sm:$0xff]
        %v1869 = vld [vmem:[%s355 + $0xc0] sm:$0xff]
        %v1870 = vld [vmem:[%s355 + $0xc8] sm:$0xff]
        %v1871 = vld [vmem:[%s355 + $0xd0] sm:$0xff]
        %v1872 = vld [vmem:[%s355 + $0xd8] sm:$0xff]
        %v1873 = vld [vmem:[%s355 + $0xe0] sm:$0xff]
        %v1874 = vld [vmem:[%s355 + $0xe8] sm:$0xff]
        %v1875 = vld [vmem:[%s355 + $0xf0] sm:$0xff]
        %v1876 = vld [vmem:[%s355 + $0xf8] sm:$0xff]
        %v1877 = vunpack.c.l.bf16 %v1845
        %v1878 = vunpack.c.h.bf16 %v1845
        %v1879 = vunpack.c.l.bf16 %v1846
        %v1880 = vunpack.c.h.bf16 %v1846
        %v1881 = vunpack.c.l.bf16 %v1847
        %v1882 = vunpack.c.h.bf16 %v1847
        %v1883 = vunpack.c.l.bf16 %v1848
        %v1884 = vunpack.c.h.bf16 %v1848
        %v1885 = vunpack.c.l.bf16 %v1849
        %v1886 = vunpack.c.h.bf16 %v1849
        %v1887 = vunpack.c.l.bf16 %v1850
        %v1888 = vunpack.c.h.bf16 %v1850
        %v1889 = vunpack.c.l.bf16 %v1851
        %v1890 = vunpack.c.h.bf16 %v1851
        %v1891 = vunpack.c.l.bf16 %v1852
        %v1892 = vunpack.c.h.bf16 %v1852
        %v1893 = vunpack.c.l.bf16 %v1853
        %v1894 = vunpack.c.h.bf16 %v1853
        %v1895 = vunpack.c.l.bf16 %v1854
        %v1896 = vunpack.c.h.bf16 %v1854
        %v1897 = vunpack.c.l.bf16 %v1855
        %v1898 = vunpack.c.h.bf16 %v1855
        %v1899 = vunpack.c.l.bf16 %v1856
        %v1900 = vunpack.c.h.bf16 %v1856
        %v1901 = vunpack.c.l.bf16 %v1857
        %v1902 = vunpack.c.h.bf16 %v1857
        %v1903 = vunpack.c.l.bf16 %v1858
        %v1904 = vunpack.c.h.bf16 %v1858
        %v1905 = vunpack.c.l.bf16 %v1859
        %v1906 = vunpack.c.h.bf16 %v1859
        %v1907 = vunpack.c.l.bf16 %v1860
        %v1908 = vunpack.c.h.bf16 %v1860
        %v1909 = vunpack.c.l.bf16 %v1861
        %v1910 = vunpack.c.h.bf16 %v1861
        %v1911 = vunpack.c.l.bf16 %v1862
        %v1912 = vunpack.c.h.bf16 %v1862
        %v1913 = vunpack.c.l.bf16 %v1863
        %v1914 = vunpack.c.h.bf16 %v1863
        %v1915 = vunpack.c.l.bf16 %v1864
        %v1916 = vunpack.c.h.bf16 %v1864
        %v1917 = vunpack.c.l.bf16 %v1865
        %v1918 = vunpack.c.h.bf16 %v1865
        %v1919 = vunpack.c.l.bf16 %v1866
        %v1920 = vunpack.c.h.bf16 %v1866
        %v1921 = vunpack.c.l.bf16 %v1867
        %v1922 = vunpack.c.h.bf16 %v1867
        %v1923 = vunpack.c.l.bf16 %v1868
        %v1924 = vunpack.c.h.bf16 %v1868
        %v1925 = vunpack.c.l.bf16 %v1869
        %v1926 = vunpack.c.h.bf16 %v1869
        %v1927 = vunpack.c.l.bf16 %v1870
        %v1928 = vunpack.c.h.bf16 %v1870
        %v1929 = vunpack.c.l.bf16 %v1871
        %v1930 = vunpack.c.h.bf16 %v1871
        %v1931 = vunpack.c.l.bf16 %v1872
        %v1932 = vunpack.c.h.bf16 %v1872
        %v1933 = vunpack.c.l.bf16 %v1873
        %v1934 = vunpack.c.h.bf16 %v1873
        %v1935 = vunpack.c.l.bf16 %v1874
        %v1936 = vunpack.c.h.bf16 %v1874
        %v1937 = vunpack.c.l.bf16 %v1875
        %v1938 = vunpack.c.h.bf16 %v1875
        %v1939 = vunpack.c.l.bf16 %v1876
        %v1940 = vunpack.c.h.bf16 %v1876
        %v1941 = vpack.c.bf16 %v1783, %v1781
        %v1942 = vpack.c.bf16 %v1787, %v1785
        %v1943 = vpack.c.bf16 %v1791, %v1789
        %v1944 = vpack.c.bf16 %v1795, %v1793
        %v1945 = vpack.c.bf16 %v1799, %v1797
        %v1946 = vpack.c.bf16 %v1803, %v1801
        %v1947 = vpack.c.bf16 %v1807, %v1805
        %v1948 = vpack.c.bf16 %v1811, %v1809
        %v1949 = vpack.c.bf16 %v1815, %v1813
        %v1950 = vpack.c.bf16 %v1819, %v1817
        %v1951 = vpack.c.bf16 %v1823, %v1821
        %v1952 = vpack.c.bf16 %v1827, %v1825
        %v1953 = vpack.c.bf16 %v1831, %v1829
        %v1954 = vpack.c.bf16 %v1835, %v1833
        %v1955 = vpack.c.bf16 %v1839, %v1837
        %v1956 = vpack.c.bf16 %v1843, %v1841
        %v1957 = vld [vmem:[%s3] sm:$0xf]
        %v1958 = vld [vmem:[%s3 + $0x4] sm:$0xf]
        %v1959 = vld [vmem:[%s3 + $0x8] sm:$0xf]
        %v1960 = vld [vmem:[%s3 + $0xc] sm:$0xf]
        %v1961 = vld [vmem:[%s3 + $0x10] sm:$0xf]
        %v1962 = vld [vmem:[%s3 + $0x14] sm:$0xf]
        %v1963 = vld [vmem:[%s3 + $0x18] sm:$0xf]
        %v1964 = vld [vmem:[%s3 + $0x1c] sm:$0xf]
        %v1965 = vld [vmem:[%s3 + $0x20] sm:$0xf]
        %v1966 = vld [vmem:[%s3 + $0x24] sm:$0xf]
        %v1967 = vld [vmem:[%s3 + $0x28] sm:$0xf]
        %v1968 = vld [vmem:[%s3 + $0x2c] sm:$0xf]
        %v1969 = vld [vmem:[%s3 + $0x30] sm:$0xf]
        %v1970 = vld [vmem:[%s3 + $0x34] sm:$0xf]
        %v1971 = vld [vmem:[%s3 + $0x38] sm:$0xf]
        %v1972 = vld [vmem:[%s3 + $0x3c] sm:$0xf]
        %v1973 = vld [vmem:[%s4] sm:$0x1]
        %v1975 = vlaneseq
        %v1976 = vshrl.u32 %v1975, 7
        %v1977 = vsub.s32 0, %v1976
        %v1978 = vrot.slane %v1973, %v1977
        %v1996 = vunpack.c.l.b16 %v1957
        %v1997 = vunpack.c.l.b16 %v1958
        %v1998 = vunpack.c.l.b16 %v1959
        %v1999 = vunpack.c.l.b16 %v1960
        %v2000 = vunpack.c.l.b16 %v1961
        %v2001 = vunpack.c.l.b16 %v1962
        %v2002 = vunpack.c.l.b16 %v1963
        %v2003 = vunpack.c.l.b16 %v1964
        %v2004 = vunpack.c.l.b16 %v1965
        %v2005 = vunpack.c.l.b16 %v1966
        %v2006 = vunpack.c.l.b16 %v1967
        %v2007 = vunpack.c.l.b16 %v1968
        %v2008 = vunpack.c.l.b16 %v1969
        %v2009 = vunpack.c.l.b16 %v1970
        %v2010 = vunpack.c.l.b16 %v1971
        %v2011 = vunpack.c.l.b16 %v1972
        %v2012 = vpack.c.b16 %v1997, %v1996
        %v2013 = vpack.c.b16 %v1999, %v1998
        %v2014 = vpack.c.b16 %v2001, %v2000
        %v2015 = vpack.c.b16 %v2003, %v2002
        %v2016 = vpack.c.b16 %v2005, %v2004
        %v2017 = vpack.c.b16 %v2007, %v2006
        %v2018 = vpack.c.b16 %v2009, %v2008
        %v2019 = vpack.c.b16 %v2011, %v2010
        %2028 = vmatprep.subr.bf16.mxu0 0
        %2029 = vmatpush1.bf16.msra.mxu0 %v2012
        %2030 = vmatprep.subr.bf16.mxu0 0
        %2031 = vmatpush1.bf16.msra.mxu0 %v2013
        %2032 = vmatprep.subr.bf16.mxu0 0
        %2033 = vmatpush1.bf16.msra.mxu0 %v2014
        %2034 = vmatprep.subr.bf16.mxu0 0
        %2035 = vmatpush1.bf16.msra.mxu0 %v2015
        %2036 = vmatprep.subr.bf16.mxu0 0
        %2037 = vmatpush1.bf16.msra.mxu0 %v2016
        %2038 = vmatprep.subr.bf16.mxu0 0
        %2039 = vmatpush1.bf16.msra.mxu0 %v2017
        %2040 = vmatprep.subr.bf16.mxu0 0
        %2041 = vmatpush1.bf16.msra.mxu0 %v2018
        %2042 = vmatprep.subr.bf16.mxu0 0
        %2043 = vmatpush1.bf16.msra.mxu0 %v2019
        %2044 = vmatprep.subr.bf16.mxu0 0
        %2045 = vmatpush1.bf16.msra.mxu0 0
        %2046 = vmatprep.subr.bf16.mxu0 0
        %2047 = vmatpush1.bf16.msra.mxu0 0
        %2048 = vmatprep.subr.bf16.mxu0 0
        %2049 = vmatpush1.bf16.msra.mxu0 0
        %2050 = vmatprep.subr.bf16.mxu0 0
        %2051 = vmatpush1.bf16.msra.mxu0 0
        %2052 = vmatprep.subr.bf16.mxu0 0
        %2053 = vmatpush1.bf16.msra.mxu0 0
        %2054 = vmatprep.subr.bf16.mxu0 0
        %2055 = vmatpush1.bf16.msra.mxu0 0
        %2056 = vmatprep.subr.bf16.mxu0 0
        %2057 = vmatpush1.bf16.msra.mxu0 0
        %2058 = vmatprep.subr.bf16.mxu0 0
        %2059 = vmatpush1.bf16.msra.mxu0 0
        %2060 = vmatprep.mubr.bf16.mxu0 0
        %2061 = vmatmul.mubr.bf16.gmra.mrb[0].mxu0 %v1941
        %v2062 = vpop.f32.mrb[0].mxu0
        %v2063 = vadd.f32 %v1978, %v2062
        %v2064 = vpop.f32.mrb[0].mxu0
        %v2065 = vpop.f32.mrb[0].mxu0
        %v2066 = vadd.f32 %v1978, %v2065
        %v2067 = vpop.f32.mrb[0].mxu0
        %2068 = vmatprep.mubr.bf16.mxu0 0
        %2069 = vmatmul.mubr.bf16.gmra.mrb[0].mxu0 %v1942
        %v2070 = vpop.f32.mrb[0].mxu0
        %v2071 = vadd.f32 %v1978, %v2070
        %v2072 = vpop.f32.mrb[0].mxu0
        %v2073 = vpop.f32.mrb[0].mxu0
        %v2074 = vadd.f32 %v1978, %v2073
        %v2075 = vpop.f32.mrb[0].mxu0
        %2076 = vmatprep.mubr.bf16.mxu0 0
        %2077 = vmatmul.mubr.bf16.gmra.mrb[0].mxu0 %v1943
        %v2078 = vpop.f32.mrb[0].mxu0
        %v2079 = vadd.f32 %v1978, %v2078
        %v2080 = vpop.f32.mrb[0].mxu0
        %v2081 = vpop.f32.mrb[0].mxu0
        %v2082 = vadd.f32 %v1978, %v2081
        %v2083 = vpop.f32.mrb[0].mxu0
        %2084 = vmatprep.mubr.bf16.mxu0 0
        %2085 = vmatmul.mubr.bf16.gmra.mrb[0].mxu0 %v1944
        %v2086 = vpop.f32.mrb[0].mxu0
        %v2087 = vadd.f32 %v1978, %v2086
        %v2088 = vpop.f32.mrb[0].mxu0
        %v2089 = vpop.f32.mrb[0].mxu0
        %v2090 = vadd.f32 %v1978, %v2089
        %v2091 = vpop.f32.mrb[0].mxu0
        %2092 = vmatprep.mubr.bf16.mxu0 0
        %2093 = vmatmul.mubr.bf16.gmra.mrb[0].mxu0 %v1945
        %v2094 = vpop.f32.mrb[0].mxu0
        %v2095 = vadd.f32 %v1978, %v2094
        %v2096 = vpop.f32.mrb[0].mxu0
        %v2097 = vpop.f32.mrb[0].mxu0
        %v2098 = vadd.f32 %v1978, %v2097
        %v2099 = vpop.f32.mrb[0].mxu0
        %2100 = vmatprep.mubr.bf16.mxu0 0
        %2101 = vmatmul.mubr.bf16.gmra.mrb[0].mxu0 %v1946
        %v2102 = vpop.f32.mrb[0].mxu0
        %v2103 = vadd.f32 %v1978, %v2102
        %v2104 = vpop.f32.mrb[0].mxu0
        %v2105 = vpop.f32.mrb[0].mxu0
        %v2106 = vadd.f32 %v1978, %v2105
        %v2107 = vpop.f32.mrb[0].mxu0
        %2108 = vmatprep.mubr.bf16.mxu0 0
        %2109 = vmatmul.mubr.bf16.gmra.mrb[0].mxu0 %v1947
        %v2110 = vpop.f32.mrb[0].mxu0
        %v2111 = vadd.f32 %v1978, %v2110
        %v2112 = vpop.f32.mrb[0].mxu0
        %v2113 = vpop.f32.mrb[0].mxu0
        %v2114 = vadd.f32 %v1978, %v2113
        %v2115 = vpop.f32.mrb[0].mxu0
        %2116 = vmatprep.mubr.bf16.mxu0 0
        %2117 = vmatmul.mubr.bf16.gmra.mrb[0].mxu0 %v1948
        %v2118 = vpop.f32.mrb[0].mxu0
        %v2119 = vadd.f32 %v1978, %v2118
        %v2120 = vpop.f32.mrb[0].mxu0
        %v2121 = vpop.f32.mrb[0].mxu0
        %v2122 = vadd.f32 %v1978, %v2121
        %v2123 = vpop.f32.mrb[0].mxu0
        %2124 = vmatprep.mubr.bf16.mxu0 0
        %2125 = vmatmul.mubr.bf16.gmra.mrb[0].mxu0 %v1949
        %v2126 = vpop.f32.mrb[0].mxu0
        %v2127 = vadd.f32 %v1978, %v2126
        %v2128 = vpop.f32.mrb[0].mxu0
        %v2129 = vpop.f32.mrb[0].mxu0
        %v2130 = vadd.f32 %v1978, %v2129
        %v2131 = vpop.f32.mrb[0].mxu0
        %2132 = vmatprep.mubr.bf16.mxu0 0
        %2133 = vmatmul.mubr.bf16.gmra.mrb[0].mxu0 %v1950
        %v2134 = vpop.f32.mrb[0].mxu0
        %v2135 = vadd.f32 %v1978, %v2134
        %v2136 = vpop.f32.mrb[0].mxu0
        %v2137 = vpop.f32.mrb[0].mxu0
        %v2138 = vadd.f32 %v1978, %v2137
        %v2139 = vpop.f32.mrb[0].mxu0
        %2140 = vmatprep.mubr.bf16.mxu0 0
        %2141 = vmatmul.mubr.bf16.gmra.mrb[0].mxu0 %v1951
        %v2142 = vpop.f32.mrb[0].mxu0
        %v2143 = vadd.f32 %v1978, %v2142
        %v2144 = vpop.f32.mrb[0].mxu0
        %v2145 = vpop.f32.mrb[0].mxu0
        %v2146 = vadd.f32 %v1978, %v2145
        %v2147 = vpop.f32.mrb[0].mxu0
        %2148 = vmatprep.mubr.bf16.mxu0 0
        %2149 = vmatmul.mubr.bf16.gmra.mrb[0].mxu0 %v1952
        %v2150 = vpop.f32.mrb[0].mxu0
        %v2151 = vadd.f32 %v1978, %v2150
        %v2152 = vpop.f32.mrb[0].mxu0
        %v2153 = vpop.f32.mrb[0].mxu0
        %v2154 = vadd.f32 %v1978, %v2153
        %v2155 = vpop.f32.mrb[0].mxu0
        %2156 = vmatprep.mubr.bf16.mxu0 0
        %2157 = vmatmul.mubr.bf16.gmra.mrb[0].mxu0 %v1953
        %v2158 = vpop.f32.mrb[0].mxu0
        %v2159 = vadd.f32 %v1978, %v2158
        %v2160 = vpop.f32.mrb[0].mxu0
        %v2161 = vpop.f32.mrb[0].mxu0
        %v2162 = vadd.f32 %v1978, %v2161
        %v2163 = vpop.f32.mrb[0].mxu0
        %2164 = vmatprep.mubr.bf16.mxu0 0
        %2165 = vmatmul.mubr.bf16.gmra.mrb[0].mxu0 %v1954
        %v2166 = vpop.f32.mrb[0].mxu0
        %v2167 = vadd.f32 %v1978, %v2166
        %v2168 = vpop.f32.mrb[0].mxu0
        %v2169 = vpop.f32.mrb[0].mxu0
        %v2170 = vadd.f32 %v1978, %v2169
        %v2171 = vpop.f32.mrb[0].mxu0
        %2172 = vmatprep.mubr.bf16.mxu0 0
        %2173 = vmatmul.mubr.bf16.gmra.mrb[0].mxu0 %v1955
        %v2174 = vpop.f32.mrb[0].mxu0
        %v2175 = vadd.f32 %v1978, %v2174
        %v2176 = vpop.f32.mrb[0].mxu0
        %v2177 = vpop.f32.mrb[0].mxu0
        %v2178 = vadd.f32 %v1978, %v2177
        %v2179 = vpop.f32.mrb[0].mxu0
        %2180 = vmatprep.mubr.bf16.mxu0 0
        %2181 = vmatmul.mubr.bf16.gmra.mrb[0].mxu0 %v1956
        %v2182 = vpop.f32.mrb[0].mxu0
        %v2183 = vadd.f32 %v1978, %v2182
        %v2184 = vpop.f32.mrb[0].mxu0
        %v2185 = vpop.f32.mrb[0].mxu0
        %v2186 = vadd.f32 %v1978, %v2185
        %v2187 = vpop.f32.mrb[0].mxu0
        %2188 = vdwg.mxu0
        %v2189 = vmax.f32 %v2063, 0.0
        %v2190 = vmax.f32 %v2066, 0.0
        %v2191 = vmax.f32 %v2071, 0.0
        %v2192 = vmax.f32 %v2074, 0.0
        %v2193 = vmax.f32 %v2079, 0.0
        %v2194 = vmax.f32 %v2082, 0.0
        %v2195 = vmax.f32 %v2087, 0.0
        %v2196 = vmax.f32 %v2090, 0.0
        %v2197 = vmax.f32 %v2095, 0.0
        %v2198 = vmax.f32 %v2098, 0.0
        %v2199 = vmax.f32 %v2103, 0.0
        %v2200 = vmax.f32 %v2106, 0.0
        %v2201 = vmax.f32 %v2111, 0.0
        %v2202 = vmax.f32 %v2114, 0.0
        %v2203 = vmax.f32 %v2119, 0.0
        %v2204 = vmax.f32 %v2122, 0.0
        %v2205 = vmax.f32 %v2127, 0.0
        %v2206 = vmax.f32 %v2130, 0.0
        %v2207 = vmax.f32 %v2135, 0.0
        %v2208 = vmax.f32 %v2138, 0.0
        %v2209 = vmax.f32 %v2143, 0.0
        %v2210 = vmax.f32 %v2146, 0.0
        %v2211 = vmax.f32 %v2151, 0.0
        %v2212 = vmax.f32 %v2154, 0.0
        %v2213 = vmax.f32 %v2159, 0.0
        %v2214 = vmax.f32 %v2162, 0.0
        %v2215 = vmax.f32 %v2167, 0.0
        %v2216 = vmax.f32 %v2170, 0.0
        %v2217 = vmax.f32 %v2175, 0.0
        %v2218 = vmax.f32 %v2178, 0.0
        %v2219 = vmax.f32 %v2183, 0.0
        %v2220 = vmax.f32 %v2186, 0.0
        %v2221 = vadd.f32 %v2189, %v1877
        %v2222 = vadd.f32 %v2190, %v1879
        %v2223 = vadd.f32 %v2191, %v1881
        %v2224 = vadd.f32 %v2192, %v1883
        %v2225 = vadd.f32 %v2193, %v1885
        %v2226 = vadd.f32 %v2194, %v1887
        %v2227 = vadd.f32 %v2195, %v1889
        %v2228 = vadd.f32 %v2196, %v1891
        %v2229 = vadd.f32 %v2197, %v1893
        %v2230 = vadd.f32 %v2198, %v1895
        %v2231 = vadd.f32 %v2199, %v1897
        %v2232 = vadd.f32 %v2200, %v1899
        %v2233 = vadd.f32 %v2201, %v1901
        %v2234 = vadd.f32 %v2202, %v1903
        %v2235 = vadd.f32 %v2203, %v1905
        %v2236 = vadd.f32 %v2204, %v1907
        %v2237 = vadd.f32 %v2205, %v1909
        %v2238 = vadd.f32 %v2206, %v1911
        %v2239 = vadd.f32 %v2207, %v1913
        %v2240 = vadd.f32 %v2208, %v1915
        %v2241 = vadd.f32 %v2209, %v1917
        %v2242 = vadd.f32 %v2210, %v1919
        %v2243 = vadd.f32 %v2211, %v1921
        %v2244 = vadd.f32 %v2212, %v1923
        %v2245 = vadd.f32 %v2213, %v1925
        %v2246 = vadd.f32 %v2214, %v1927
        %v2247 = vadd.f32 %v2215, %v1929
        %v2248 = vadd.f32 %v2216, %v1931
        %v2249 = vadd.f32 %v2217, %v1933
        %v2250 = vadd.f32 %v2218, %v1935
        %v2251 = vadd.f32 %v2219, %v1937
        %v2252 = vadd.f32 %v2220, %v1939
        %v2253 = vpack.c.bf16 %v1784, %v1782
        %v2254 = vpack.c.bf16 %v1788, %v1786
        %v2255 = vpack.c.bf16 %v1792, %v1790
        %v2256 = vpack.c.bf16 %v1796, %v1794
        %v2257 = vpack.c.bf16 %v1800, %v1798
        %v2258 = vpack.c.bf16 %v1804, %v1802
        %v2259 = vpack.c.bf16 %v1808, %v1806
        %v2260 = vpack.c.bf16 %v1812, %v1810
        %v2261 = vpack.c.bf16 %v1816, %v1814
        %v2262 = vpack.c.bf16 %v1820, %v1818
        %v2263 = vpack.c.bf16 %v1824, %v1822
        %v2264 = vpack.c.bf16 %v1828, %v1826
        %v2265 = vpack.c.bf16 %v1832, %v1830
        %v2266 = vpack.c.bf16 %v1836, %v1834
        %v2267 = vpack.c.bf16 %v1840, %v1838
        %v2268 = vpack.c.bf16 %v1844, %v1842
        %v2269 = vld [vmem:[%s5] sm:$0xf]
        %v2270 = vld [vmem:[%s5 + $0x4] sm:$0xf]
        %v2271 = vld [vmem:[%s5 + $0x8] sm:$0xf]
        %v2272 = vld [vmem:[%s5 + $0xc] sm:$0xf]
        %v2273 = vld [vmem:[%s5 + $0x10] sm:$0xf]
        %v2274 = vld [vmem:[%s5 + $0x14] sm:$0xf]
        %v2275 = vld [vmem:[%s5 + $0x18] sm:$0xf]
        %v2276 = vld [vmem:[%s5 + $0x1c] sm:$0xf]
        %v2277 = vld [vmem:[%s5 + $0x20] sm:$0xf]
        %v2278 = vld [vmem:[%s5 + $0x24] sm:$0xf]
        %v2279 = vld [vmem:[%s5 + $0x28] sm:$0xf]
        %v2280 = vld [vmem:[%s5 + $0x2c] sm:$0xf]
        %v2281 = vld [vmem:[%s5 + $0x30] sm:$0xf]
        %v2282 = vld [vmem:[%s5 + $0x34] sm:$0xf]
        %v2283 = vld [vmem:[%s5 + $0x38] sm:$0xf]
        %v2284 = vld [vmem:[%s5 + $0x3c] sm:$0xf]
        %v2285 = vld [vmem:[%s6] sm:$0x1]
        %v2287 = vlaneseq
        %v2288 = vshrl.u32 %v2287, 7
        %v2289 = vsub.s32 0, %v2288
        %v2290 = vrot.slane %v2285, %v2289
        %v2308 = vunpack.c.l.b16 %v2269
        %v2309 = vunpack.c.l.b16 %v2270
        %v2310 = vunpack.c.l.b16 %v2271
        %v2311 = vunpack.c.l.b16 %v2272
        %v2312 = vunpack.c.l.b16 %v2273
        %v2313 = vunpack.c.l.b16 %v2274
        %v2314 = vunpack.c.l.b16 %v2275
        %v2315 = vunpack.c.l.b16 %v2276
        %v2316 = vunpack.c.l.b16 %v2277
        %v2317 = vunpack.c.l.b16 %v2278
        %v2318 = vunpack.c.l.b16 %v2279
        %v2319 = vunpack.c.l.b16 %v2280
        %v2320 = vunpack.c.l.b16 %v2281
        %v2321 = vunpack.c.l.b16 %v2282
        %v2322 = vunpack.c.l.b16 %v2283
        %v2323 = vunpack.c.l.b16 %v2284
        %v2324 = vpack.c.b16 %v2309, %v2308
        %v2325 = vpack.c.b16 %v2311, %v2310
        %v2326 = vpack.c.b16 %v2313, %v2312
        %v2327 = vpack.c.b16 %v2315, %v2314
        %v2328 = vpack.c.b16 %v2317, %v2316
        %v2329 = vpack.c.b16 %v2319, %v2318
        %v2330 = vpack.c.b16 %v2321, %v2320
        %v2331 = vpack.c.b16 %v2323, %v2322
        %2340 = vmatprep.subr.bf16.mxu0 0
        %2341 = vmatpush1.bf16.msra.mxu0 %v2324
        %2342 = vmatprep.subr.bf16.mxu0 0
        %2343 = vmatpush1.bf16.msra.mxu0 %v2325
        %2344 = vmatprep.subr.bf16.mxu0 0
        %2345 = vmatpush1.bf16.msra.mxu0 %v2326
        %2346 = vmatprep.subr.bf16.mxu0 0
        %2347 = vmatpush1.bf16.msra.mxu0 %v2327
        %2348 = vmatprep.subr.bf16.mxu0 0
        %2349 = vmatpush1.bf16.msra.mxu0 %v2328
        %2350 = vmatprep.subr.bf16.mxu0 0
        %2351 = vmatpush1.bf16.msra.mxu0 %v2329
        %2352 = vmatprep.subr.bf16.mxu0 0
        %2353 = vmatpush1.bf16.msra.mxu0 %v2330
        %2354 = vmatprep.subr.bf16.mxu0 0
        %2355 = vmatpush1.bf16.msra.mxu0 %v2331
        %2356 = vmatprep.subr.bf16.mxu0 0
        %2357 = vmatpush1.bf16.msra.mxu0 0
        %2358 = vmatprep.subr.bf16.mxu0 0
        %2359 = vmatpush1.bf16.msra.mxu0 0
        %2360 = vmatprep.subr.bf16.mxu0 0
        %2361 = vmatpush1.bf16.msra.mxu0 0
        %2362 = vmatprep.subr.bf16.mxu0 0
        %2363 = vmatpush1.bf16.msra.mxu0 0
        %2364 = vmatprep.subr.bf16.mxu0 0
        %2365 = vmatpush1.bf16.msra.mxu0 0
        %2366 = vmatprep.subr.bf16.mxu0 0
        %2367 = vmatpush1.bf16.msra.mxu0 0
        %2368 = vmatprep.subr.bf16.mxu0 0
        %2369 = vmatpush1.bf16.msra.mxu0 0
        %2370 = vmatprep.subr.bf16.mxu0 0
        %2371 = vmatpush1.bf16.msra.mxu0 0
        %2372 = vmatprep.mubr.bf16.mxu0 0
        %2373 = vmatmul.mubr.bf16.gmra.mrb[0].mxu0 %v2253
        %v2374 = vpop.f32.mrb[0].mxu0
        %v2375 = vadd.f32 %v2290, %v2374
        %v2376 = vpop.f32.mrb[0].mxu0
        %v2377 = vpop.f32.mrb[0].mxu0
        %v2378 = vadd.f32 %v2290, %v2377
        %v2379 = vpop.f32.mrb[0].mxu0
        %2380 = vmatprep.mubr.bf16.mxu0 0
        %2381 = vmatmul.mubr.bf16.gmra.mrb[0].mxu0 %v2254
        %v2382 = vpop.f32.mrb[0].mxu0
        %v2383 = vadd.f32 %v2290, %v2382
        %v2384 = vpop.f32.mrb[0].mxu0
        %v2385 = vpop.f32.mrb[0].mxu0
        %v2386 = vadd.f32 %v2290, %v2385
        %v2387 = vpop.f32.mrb[0].mxu0
        %2388 = vmatprep.mubr.bf16.mxu0 0
        %2389 = vmatmul.mubr.bf16.gmra.mrb[0].mxu0 %v2255
        %v2390 = vpop.f32.mrb[0].mxu0
        %v2391 = vadd.f32 %v2290, %v2390
        %v2392 = vpop.f32.mrb[0].mxu0
        %v2393 = vpop.f32.mrb[0].mxu0
        %v2394 = vadd.f32 %v2290, %v2393
        %v2395 = vpop.f32.mrb[0].mxu0
        %2396 = vmatprep.mubr.bf16.mxu0 0
        %2397 = vmatmul.mubr.bf16.gmra.mrb[0].mxu0 %v2256
        %v2398 = vpop.f32.mrb[0].mxu0
        %v2399 = vadd.f32 %v2290, %v2398
        %v2400 = vpop.f32.mrb[0].mxu0
        %v2401 = vpop.f32.mrb[0].mxu0
        %v2402 = vadd.f32 %v2290, %v2401
        %v2403 = vpop.f32.mrb[0].mxu0
        %2404 = vmatprep.mubr.bf16.mxu0 0
        %2405 = vmatmul.mubr.bf16.gmra.mrb[0].mxu0 %v2257
        %v2406 = vpop.f32.mrb[0].mxu0
        %v2407 = vadd.f32 %v2290, %v2406
        %v2408 = vpop.f32.mrb[0].mxu0
        %v2409 = vpop.f32.mrb[0].mxu0
        %v2410 = vadd.f32 %v2290, %v2409
        %v2411 = vpop.f32.mrb[0].mxu0
        %2412 = vmatprep.mubr.bf16.mxu0 0
        %2413 = vmatmul.mubr.bf16.gmra.mrb[0].mxu0 %v2258
        %v2414 = vpop.f32.mrb[0].mxu0
        %v2415 = vadd.f32 %v2290, %v2414
        %v2416 = vpop.f32.mrb[0].mxu0
        %v2417 = vpop.f32.mrb[0].mxu0
        %v2418 = vadd.f32 %v2290, %v2417
        %v2419 = vpop.f32.mrb[0].mxu0
        %2420 = vmatprep.mubr.bf16.mxu0 0
        %2421 = vmatmul.mubr.bf16.gmra.mrb[0].mxu0 %v2259
        %v2422 = vpop.f32.mrb[0].mxu0
        %v2423 = vadd.f32 %v2290, %v2422
        %v2424 = vpop.f32.mrb[0].mxu0
        %v2425 = vpop.f32.mrb[0].mxu0
        %v2426 = vadd.f32 %v2290, %v2425
        %v2427 = vpop.f32.mrb[0].mxu0
        %2428 = vmatprep.mubr.bf16.mxu0 0
        %2429 = vmatmul.mubr.bf16.gmra.mrb[0].mxu0 %v2260
        %v2430 = vpop.f32.mrb[0].mxu0
        %v2431 = vadd.f32 %v2290, %v2430
        %v2432 = vpop.f32.mrb[0].mxu0
        %v2433 = vpop.f32.mrb[0].mxu0
        %v2434 = vadd.f32 %v2290, %v2433
        %v2435 = vpop.f32.mrb[0].mxu0
        %2436 = vmatprep.mubr.bf16.mxu0 0
        %2437 = vmatmul.mubr.bf16.gmra.mrb[0].mxu0 %v2261
        %v2438 = vpop.f32.mrb[0].mxu0
        %v2439 = vadd.f32 %v2290, %v2438
        %v2440 = vpop.f32.mrb[0].mxu0
        %v2441 = vpop.f32.mrb[0].mxu0
        %v2442 = vadd.f32 %v2290, %v2441
        %v2443 = vpop.f32.mrb[0].mxu0
        %2444 = vmatprep.mubr.bf16.mxu0 0
        %2445 = vmatmul.mubr.bf16.gmra.mrb[0].mxu0 %v2262
        %v2446 = vpop.f32.mrb[0].mxu0
        %v2447 = vadd.f32 %v2290, %v2446
        %v2448 = vpop.f32.mrb[0].mxu0
        %v2449 = vpop.f32.mrb[0].mxu0
        %v2450 = vadd.f32 %v2290, %v2449
        %v2451 = vpop.f32.mrb[0].mxu0
        %2452 = vmatprep.mubr.bf16.mxu0 0
        %2453 = vmatmul.mubr.bf16.gmra.mrb[0].mxu0 %v2263
        %v2454 = vpop.f32.mrb[0].mxu0
        %v2455 = vadd.f32 %v2290, %v2454
        %v2456 = vpop.f32.mrb[0].mxu0
        %v2457 = vpop.f32.mrb[0].mxu0
        %v2458 = vadd.f32 %v2290, %v2457
        %v2459 = vpop.f32.mrb[0].mxu0
        %2460 = vmatprep.mubr.bf16.mxu0 0
        %2461 = vmatmul.mubr.bf16.gmra.mrb[0].mxu0 %v2264
        %v2462 = vpop.f32.mrb[0].mxu0
        %v2463 = vadd.f32 %v2290, %v2462
        %v2464 = vpop.f32.mrb[0].mxu0
        %v2465 = vpop.f32.mrb[0].mxu0
        %v2466 = vadd.f32 %v2290, %v2465
        %v2467 = vpop.f32.mrb[0].mxu0
        %2468 = vmatprep.mubr.bf16.mxu0 0
        %2469 = vmatmul.mubr.bf16.gmra.mrb[0].mxu0 %v2265
        %v2470 = vpop.f32.mrb[0].mxu0
        %v2471 = vadd.f32 %v2290, %v2470
        %v2472 = vpop.f32.mrb[0].mxu0
        %v2473 = vpop.f32.mrb[0].mxu0
        %v2474 = vadd.f32 %v2290, %v2473
        %v2475 = vpop.f32.mrb[0].mxu0
        %2476 = vmatprep.mubr.bf16.mxu0 0
        %2477 = vmatmul.mubr.bf16.gmra.mrb[0].mxu0 %v2266
        %v2478 = vpop.f32.mrb[0].mxu0
        %v2479 = vadd.f32 %v2290, %v2478
        %v2480 = vpop.f32.mrb[0].mxu0
        %v2481 = vpop.f32.mrb[0].mxu0
        %v2482 = vadd.f32 %v2290, %v2481
        %v2483 = vpop.f32.mrb[0].mxu0
        %2484 = vmatprep.mubr.bf16.mxu0 0
        %2485 = vmatmul.mubr.bf16.gmra.mrb[0].mxu0 %v2267
        %v2486 = vpop.f32.mrb[0].mxu0
        %v2487 = vadd.f32 %v2290, %v2486
        %v2488 = vpop.f32.mrb[0].mxu0
        %v2489 = vpop.f32.mrb[0].mxu0
        %v2490 = vadd.f32 %v2290, %v2489
        %v2491 = vpop.f32.mrb[0].mxu0
        %2492 = vmatprep.mubr.bf16.mxu0 0
        %2493 = vmatmul.mubr.bf16.gmra.mrb[0].mxu0 %v2268
        %v2494 = vpop.f32.mrb[0].mxu0
        %v2495 = vadd.f32 %v2290, %v2494
        %v2496 = vpop.f32.mrb[0].mxu0
        %v2497 = vpop.f32.mrb[0].mxu0
        %v2498 = vadd.f32 %v2290, %v2497
        %v2499 = vpop.f32.mrb[0].mxu0
        %2500 = vdwg.mxu0
        %v2501 = vmax.f32 %v2375, 0.0
        %v2502 = vmax.f32 %v2378, 0.0
        %v2503 = vmax.f32 %v2383, 0.0
        %v2504 = vmax.f32 %v2386, 0.0
        %v2505 = vmax.f32 %v2391, 0.0
        %v2506 = vmax.f32 %v2394, 0.0
        %v2507 = vmax.f32 %v2399, 0.0
        %v2508 = vmax.f32 %v2402, 0.0
        %v2509 = vmax.f32 %v2407, 0.0
        %v2510 = vmax.f32 %v2410, 0.0
        %v2511 = vmax.f32 %v2415, 0.0
        %v2512 = vmax.f32 %v2418, 0.0
        %v2513 = vmax.f32 %v2423, 0.0
        %v2514 = vmax.f32 %v2426, 0.0
        %v2515 = vmax.f32 %v2431, 0.0
        %v2516 = vmax.f32 %v2434, 0.0
        %v2517 = vmax.f32 %v2439, 0.0
        %v2518 = vmax.f32 %v2442, 0.0
        %v2519 = vmax.f32 %v2447, 0.0
        %v2520 = vmax.f32 %v2450, 0.0
        %v2521 = vmax.f32 %v2455, 0.0
        %v2522 = vmax.f32 %v2458, 0.0
        %v2523 = vmax.f32 %v2463, 0.0
        %v2524 = vmax.f32 %v2466, 0.0
        %v2525 = vmax.f32 %v2471, 0.0
        %v2526 = vmax.f32 %v2474, 0.0
        %v2527 = vmax.f32 %v2479, 0.0
        %v2528 = vmax.f32 %v2482, 0.0
        %v2529 = vmax.f32 %v2487, 0.0
        %v2530 = vmax.f32 %v2490, 0.0
        %v2531 = vmax.f32 %v2495, 0.0
        %v2532 = vmax.f32 %v2498, 0.0
        %v2533 = vadd.f32 %v2501, %v1878
        %v2534 = vadd.f32 %v2502, %v1880
        %v2535 = vadd.f32 %v2503, %v1882
        %v2536 = vadd.f32 %v2504, %v1884
        %v2537 = vadd.f32 %v2505, %v1886
        %v2538 = vadd.f32 %v2506, %v1888
        %v2539 = vadd.f32 %v2507, %v1890
        %v2540 = vadd.f32 %v2508, %v1892
        %v2541 = vadd.f32 %v2509, %v1894
        %v2542 = vadd.f32 %v2510, %v1896
        %v2543 = vadd.f32 %v2511, %v1898
        %v2544 = vadd.f32 %v2512, %v1900
        %v2545 = vadd.f32 %v2513, %v1902
        %v2546 = vadd.f32 %v2514, %v1904
        %v2547 = vadd.f32 %v2515, %v1906
        %v2548 = vadd.f32 %v2516, %v1908
        %v2549 = vadd.f32 %v2517, %v1910
        %v2550 = vadd.f32 %v2518, %v1912
        %v2551 = vadd.f32 %v2519, %v1914
        %v2552 = vadd.f32 %v2520, %v1916
        %v2553 = vadd.f32 %v2521, %v1918
        %v2554 = vadd.f32 %v2522, %v1920
        %v2555 = vadd.f32 %v2523, %v1922
        %v2556 = vadd.f32 %v2524, %v1924
        %v2557 = vadd.f32 %v2525, %v1926
        %v2558 = vadd.f32 %v2526, %v1928
        %v2559 = vadd.f32 %v2527, %v1930
        %v2560 = vadd.f32 %v2528, %v1932
        %v2561 = vadd.f32 %v2529, %v1934
        %v2562 = vadd.f32 %v2530, %v1936
        %v2563 = vadd.f32 %v2531, %v1938
        %v2564 = vadd.f32 %v2532, %v1940
        %v2565 = vadd.f32 %v2221, %v2533
        %v2566 = vadd.f32 %v2222, %v2534
        %v2567 = vadd.f32 %v2223, %v2535
        %v2568 = vadd.f32 %v2224, %v2536
        %v2569 = vadd.f32 %v2225, %v2537
        %v2570 = vadd.f32 %v2226, %v2538
        %v2571 = vadd.f32 %v2227, %v2539
        %v2572 = vadd.f32 %v2228, %v2540
        %v2573 = vadd.f32 %v2229, %v2541
        %v2574 = vadd.f32 %v2230, %v2542
        %v2575 = vadd.f32 %v2231, %v2543
        %v2576 = vadd.f32 %v2232, %v2544
        %v2577 = vadd.f32 %v2233, %v2545
        %v2578 = vadd.f32 %v2234, %v2546
        %v2579 = vadd.f32 %v2235, %v2547
        %v2580 = vadd.f32 %v2236, %v2548
        %v2581 = vadd.f32 %v2237, %v2549
        %v2582 = vadd.f32 %v2238, %v2550
        %v2583 = vadd.f32 %v2239, %v2551
        %v2584 = vadd.f32 %v2240, %v2552
        %v2585 = vadd.f32 %v2241, %v2553
        %v2586 = vadd.f32 %v2242, %v2554
        %v2587 = vadd.f32 %v2243, %v2555
        %v2588 = vadd.f32 %v2244, %v2556
        %v2589 = vadd.f32 %v2245, %v2557
        %v2590 = vadd.f32 %v2246, %v2558
        %v2591 = vadd.f32 %v2247, %v2559
        %v2592 = vadd.f32 %v2248, %v2560
        %v2593 = vadd.f32 %v2249, %v2561
        %v2594 = vadd.f32 %v2250, %v2562
        %v2595 = vadd.f32 %v2251, %v2563
        %v2596 = vadd.f32 %v2252, %v2564
        %v2597 = vpack.c.bf16 %v2566, %v2565
        %v2598 = vpack.c.bf16 %v2568, %v2567
        %v2599 = vpack.c.bf16 %v2570, %v2569
        %v2600 = vpack.c.bf16 %v2572, %v2571
        %v2601 = vpack.c.bf16 %v2574, %v2573
        %v2602 = vpack.c.bf16 %v2576, %v2575
        %v2603 = vpack.c.bf16 %v2578, %v2577
        %v2604 = vpack.c.bf16 %v2580, %v2579
        %v2605 = vpack.c.bf16 %v2582, %v2581
        %v2606 = vpack.c.bf16 %v2584, %v2583
        %v2607 = vpack.c.bf16 %v2586, %v2585
        %v2608 = vpack.c.bf16 %v2588, %v2587
        %v2609 = vpack.c.bf16 %v2590, %v2589
        %v2610 = vpack.c.bf16 %v2592, %v2591
        %v2611 = vpack.c.bf16 %v2594, %v2593
        %v2612 = vpack.c.bf16 %v2596, %v2595
        %v2629 = vunpack.c.l.b16 %v2597
        %v2630 = vunpack.c.h.b16 %v2597
        %v2631 = vunpack.c.l.b16 %v2598
        %v2632 = vunpack.c.h.b16 %v2598
        %v2633 = vunpack.c.l.b16 %v2599
        %v2634 = vunpack.c.h.b16 %v2599
        %v2635 = vunpack.c.l.b16 %v2600
        %v2636 = vunpack.c.h.b16 %v2600
        %v2637 = vunpack.c.l.b16 %v2601
        %v2638 = vunpack.c.h.b16 %v2601
        %v2639 = vunpack.c.l.b16 %v2602
        %v2640 = vunpack.c.h.b16 %v2602
        %v2641 = vunpack.c.l.b16 %v2603
        %v2642 = vunpack.c.h.b16 %v2603
        %v2643 = vunpack.c.l.b16 %v2604
        %v2644 = vunpack.c.h.b16 %v2604
        %v2645 = vunpack.c.l.b16 %v2605
        %v2646 = vunpack.c.h.b16 %v2605
        %v2647 = vunpack.c.l.b16 %v2606
        %v2648 = vunpack.c.h.b16 %v2606
        %v2649 = vunpack.c.l.b16 %v2607
        %v2650 = vunpack.c.h.b16 %v2607
        %v2651 = vunpack.c.l.b16 %v2608
        %v2652 = vunpack.c.h.b16 %v2608
        %v2653 = vunpack.c.l.b16 %v2609
        %v2654 = vunpack.c.h.b16 %v2609
        %v2655 = vunpack.c.l.b16 %v2610
        %v2656 = vunpack.c.h.b16 %v2610
        %v2657 = vunpack.c.l.b16 %v2611
        %v2658 = vunpack.c.h.b16 %v2611
        %v2659 = vunpack.c.l.b16 %v2612
        %v2660 = vunpack.c.h.b16 %v2612
        %v2661 = vpack.c.b16 %v2629, %v2629
        %v2662 = vpack.c.b16 %v2630, %v2630
        %v2663 = vpack.c.b16 %v2631, %v2631
        %v2664 = vpack.c.b16 %v2632, %v2632
        %v2665 = vpack.c.b16 %v2633, %v2633
        %v2666 = vpack.c.b16 %v2634, %v2634
        %v2667 = vpack.c.b16 %v2635, %v2635
        %v2668 = vpack.c.b16 %v2636, %v2636
        %v2669 = vpack.c.b16 %v2637, %v2637
        %v2670 = vpack.c.b16 %v2638, %v2638
        %v2671 = vpack.c.b16 %v2639, %v2639
        %v2672 = vpack.c.b16 %v2640, %v2640
        %v2673 = vpack.c.b16 %v2641, %v2641
        %v2674 = vpack.c.b16 %v2642, %v2642
        %v2675 = vpack.c.b16 %v2643, %v2643
        %v2676 = vpack.c.b16 %v2644, %v2644
        %v2677 = vpack.c.b16 %v2645, %v2645
        %v2678 = vpack.c.b16 %v2646, %v2646
        %v2679 = vpack.c.b16 %v2647, %v2647
        %v2680 = vpack.c.b16 %v2648, %v2648
        %v2681 = vpack.c.b16 %v2649, %v2649
        %v2682 = vpack.c.b16 %v2650, %v2650
        %v2683 = vpack.c.b16 %v2651, %v2651
        %v2684 = vpack.c.b16 %v2652, %v2652
        %v2685 = vpack.c.b16 %v2653, %v2653
        %v2686 = vpack.c.b16 %v2654, %v2654
        %v2687 = vpack.c.b16 %v2655, %v2655
        %v2688 = vpack.c.b16 %v2656, %v2656
        %v2689 = vpack.c.b16 %v2657, %v2657
        %v2690 = vpack.c.b16 %v2658, %v2658
        %v2691 = vpack.c.b16 %v2659, %v2659
        %v2692 = vpack.c.b16 %v2660, %v2660
        %2725 = vst [vmem:[%s361] sm:$0xf] %v2661
        %2726 = vst [vmem:[%s361 + $0x4] sm:$0xf] %v2662
        %2727 = vst [vmem:[%s361 + $0x8] sm:$0xf] %v2663
        %2728 = vst [vmem:[%s361 + $0xc] sm:$0xf] %v2664
        %2729 = vst [vmem:[%s361 + $0x10] sm:$0xf] %v2665
        %2730 = vst [vmem:[%s361 + $0x14] sm:$0xf] %v2666
        %2731 = vst [vmem:[%s361 + $0x18] sm:$0xf] %v2667
        %2732 = vst [vmem:[%s361 + $0x1c] sm:$0xf] %v2668
        %2733 = vst [vmem:[%s361 + $0x20] sm:$0xf] %v2669
        %2734 = vst [vmem:[%s361 + $0x24] sm:$0xf] %v2670
        %2735 = vst [vmem:[%s361 + $0x28] sm:$0xf] %v2671
        %2736 = vst [vmem:[%s361 + $0x2c] sm:$0xf] %v2672
        %2737 = vst [vmem:[%s361 + $0x30] sm:$0xf] %v2673
        %2738 = vst [vmem:[%s361 + $0x34] sm:$0xf] %v2674
        %2739 = vst [vmem:[%s361 + $0x38] sm:$0xf] %v2675
        %2740 = vst [vmem:[%s361 + $0x3c] sm:$0xf] %v2676
        %2741 = vst [vmem:[%s361 + $0x40] sm:$0xf] %v2677
        %2742 = vst [vmem:[%s361 + $0x44] sm:$0xf] %v2678
        %2743 = vst [vmem:[%s361 + $0x48] sm:$0xf] %v2679
        %2744 = vst [vmem:[%s361 + $0x4c] sm:$0xf] %v2680
        %2745 = vst [vmem:[%s361 + $0x50] sm:$0xf] %v2681
        %2746 = vst [vmem:[%s361 + $0x54] sm:$0xf] %v2682
        %2747 = vst [vmem:[%s361 + $0x58] sm:$0xf] %v2683
        %2748 = vst [vmem:[%s361 + $0x5c] sm:$0xf] %v2684
        %2749 = vst [vmem:[%s361 + $0x60] sm:$0xf] %v2685
        %2750 = vst [vmem:[%s361 + $0x64] sm:$0xf] %v2686
        %2751 = vst [vmem:[%s361 + $0x68] sm:$0xf] %v2687
        %2752 = vst [vmem:[%s361 + $0x6c] sm:$0xf] %v2688
        %2753 = vst [vmem:[%s361 + $0x70] sm:$0xf] %v2689
        %2754 = vst [vmem:[%s361 + $0x74] sm:$0xf] %v2690
        %2755 = vst [vmem:[%s361 + $0x78] sm:$0xf] %v2691
        %2756 = vst [vmem:[%s361 + $0x7c] sm:$0xf] %v2692
      $region56: #{gin_forward.4} parent=47 // pred_fallthru
        _
      %s2757 = smul.u32 32, %s22
      %p2758 = scmp.lt.s32.totalorder %s2757, 63
      %s2759 = scalar_select %p2758, %s2757, 63
      %s2760 = smul.addr %s2759, 4
      %s2761 = scalar_lea.vmem %s7, %s2760
      // Predicated region
      $region57: #{gin_forward.4} parent=47 // pred_check
        %p2762 = pneg %p212
      $region58: #{gin_forward.4} parent=47 // pred_check_branch
        %2764 = sbr.rel (%p2762) target = $region60
      $region59: #{gin_forward.4} parent=47 // pred_region
        %s2765 = smul.u32 32, %s22
      $region60: #{gin_forward.4} parent=47 // pred_fallthru
        _
    $region48: #{gin_forward.4} parent=5 // pred_fallthru
      _
    %p2766 = scmp.le.s32.totalorder 2, %s13
    // Predicated region
    $region61: #{gin_forward.4} parent=5 // pred_check
      %p2767 = pneg %p2766
    $region62: #{gin_forward.4} parent=5 // pred_check_branch
      %2769 = sbr.rel (%p2767) target = $region64
    $region63: #{gin_forward.4} parent=5 // pred_region
      %s2770 = ssub.s32 %s13, 2
      // Predicated region
      $region65: #{gin_forward.4} parent=63 // pred_check
        %p2771 = pneg %p218
      $region66: #{gin_forward.4} parent=63 // pred_check_branch
        %2773 = sbr.rel (%p2771) target = $region68
      $region67: #{gin_forward.4} parent=63 // pred_region
        %s2774 = smul.u32 32, %s24
        %p2775 = scmp.lt.s32.totalorder %s2774, 63
        %s2776 = scalar_select %p2775, %s2774, 63
        %s2777 = smul.addr %s2776, 4
        %s2778 = scalar_lea.vmem %s7, %s2777
      $region68: #{gin_forward.4} parent=63 // pred_fallthru
        _
    $region64: #{gin_forward.4} parent=5 // pred_fallthru
      _
  $region6: #{gin_forward.4} parent=0 // loop_footer
    %s17 = sadd.s32 1, %s13
  $region7: #{gin_forward.4} parent=0 // loop_footer_branch
    %12 = sbr.rel target = $region3
  $region8: #{gin_forward.4} parent=0 // loop_exit
    _

// kernel: gin_forward.3
$region0: #{gin_forward.3}
  #allocation0 [shape = 'u32[]', space=smem, size = 0x4, offset = 0x4, fixed_abs, tag = 'smem constant byte address 0x4 - core index']
  #allocation1 [shape = 'u32[144,128]{1,0:T(1,128)}', space=vmem, size = 0x12000, scoped, tag = 'internal scratch']
  #allocation2 [shape = 'f32[256,256]{1,0:T(8,128)}', space=vmem, size = 0x40000, scoped, tag = 'scratch operand']
  %s0 = inlined_call_operand.vmem [shape: bf16[512,512], index: 0, kind: input, shape index: {}]
  %s1 = inlined_call_operand.vmem [shape: bf16[512,256], index: 1, kind: input, shape index: {}, may-alias: {1,2}]
  %s2 = inlined_call_operand.vmem [shape: bf16[512,256], index: 2, kind: input, shape index: {}, may-alias: {1,2}]
  %s3 = inlined_call_operand.vmem [shape: bf16[128,128], index: 3, kind: input, shape index: {}]
  %s4 = inlined_call_operand.vmem [shape: f32[1,128], index: 4, kind: input, shape index: {}]
  %s5 = inlined_call_operand.vmem [shape: bf16[128,128], index: 5, kind: input, shape index: {}]
  %s6 = inlined_call_operand.vmem [shape: f32[1,128], index: 6, kind: input, shape index: {}]
  %s7 = inlined_call_operand.vmem [shape: bf16[128,128], index: 7, kind: input, shape index: {}]
  %s8 = inlined_call_operand.vmem [shape: f32[1,128], index: 8, kind: input, shape index: {}]
  %s9 = inlined_call_operand.vmem [shape: bf16[128,128], index: 9, kind: input, shape index: {}]
  %s10 = inlined_call_operand.vmem [shape: f32[1,128], index: 10, kind: input, shape index: {}]
  %s11 = inlined_call_operand.vmem [shape: bf16[512,256], index: 11, kind: output, shape index: {}]
  %s12 = sld [smem:[#allocation0]]
  $region85: #{gin_forward.3} parent=0
    _
  %s14 = ssub.s32 1, %s12
  %s15 = scalar_select 0, %s14, %s12
  loop: start=0, step=1, limit=4
  $region2: #{gin_forward.3} parent=0 // loop_pre_header
    _
  $region3: #{gin_forward.3} parent=0 // loop_header
    %s17 = sphi 0, %s21
    %p18 = scmp.ge.s32.totalorder %s17, 4
    %s24 = sphi 0, %s36
    %s25 = sphi 0, %s32
    %s26 = sphi 0, %s24
    %s27 = sphi 0, %s25
    %s28 = sphi 0, %s26
    %s29 = sphi 0, %s27
    %s41 = sphi 0, %s43
    %s44 = sphi 0, %s41
    %s45 = sphi 0, %s44
    %s61 = sphi 0, %s45
    %s67 = sphi 0, %s69
    %s70 = sphi 0, %s67
    %s71 = sphi 0, %s70
    %s87 = sphi 0, %s71
    %s93 = sphi 0, %s95
    %s96 = sphi 0, %s93
    %s97 = sphi 0, %s96
    %s113 = sphi 0, %s97
    %s117 = sphi 0, %s117
    %s119 = sphi 0, %s117
    %s120 = sphi 0, %s119
    %s134 = sphi 0, %s120
    %s138 = sphi 0, %s138
    %s140 = sphi 0, %s138
    %s141 = sphi 0, %s140
    %s155 = sphi 0, %s141
    %s159 = sphi 0, %s159
    %s161 = sphi 0, %s159
    %s162 = sphi 0, %s161
    %s176 = sphi 0, %s162
    %s180 = sphi 0, %s180
    %s182 = sphi 0, %s180
    %s183 = sphi 0, %s182
    %s197 = sphi 0, %s183
    %s201 = sphi 0, %s201
    %s203 = sphi 0, %s201
    %s204 = sphi 0, %s203
    %s218 = sphi 0, %s204
    %s222 = sphi 0, %s222
    %s224 = sphi 0, %s222
    %s225 = sphi 0, %s224
    %s239 = sphi 0, %s225
    %s243 = sphi 0, %s243
    %s245 = sphi 0, %s243
    %s246 = sphi 0, %s245
    %s260 = sphi 0, %s246
    %s264 = sphi 0, %s264
    %s266 = sphi 0, %s264
    %s267 = sphi 0, %s266
    %s281 = sphi 0, %s267
    %s287 = sphi 0, %s289
    %s290 = sphi 0, %s287
    %s291 = sphi 0, %s290
    %s307 = sphi 0, %s291
  $region4: #{gin_forward.3} parent=0 // loop_header_branch
    %20 = sbr.rel (%p18) target = $region8
  $region5: #{gin_forward.3} parent=0 // loop_body
    %s22 = ssub.s32 %s17, 1
    %s23 = ssub.s32 %s17, 2
    %s30 = sadd.s32 1, %s25
    %p31 = scmp.ge.s32.totalorder %s30, 1
    %s32 = scalar_select %p31, 0, %s30
    %s33 = sadd.s32 1, %s24
    %s34 = scalar_select %p31, %s33, %s24
    %p35 = scmp.ge.s32.totalorder %s34, 2
    %s36 = scalar_select %p35, 0, %s34
    %s37 = ssub.s32 %s24, %s36
    %s38 = ssub.s32 %s25, %s32
    %s39 = sor.u32 %s37, %s38
    %p40 = scmp.eq.s32.totalorder %s39, 0
    %s42 = sadd.s32 %s41, 1
    %s43 = scalar_select %p40, %s41, %s42
    %p46 = pneg %p40
    %p47 = scmp.eq.s32.totalorder %s17, 1
    %p48 = por %p46, %p47
    %p49 = scmp.ne.s32.totalorder %s41, %s44
    %p50 = scmp.eq.s32.totalorder %s17, 0
    %p51 = por %p49, %p50
    %p52 = scmp.ne.s32.totalorder %s41, %s44
    %p53 = scmp.eq.s32.totalorder %s22, 1
    %p54 = por %p52, %p53
    %p55 = scmp.ne.s32.totalorder %s44, %s45
    %p56 = scmp.eq.s32.totalorder %s22, 0
    %p57 = por %p55, %p56
    %p58 = scmp.ne.s32.totalorder %s44, %s45
    %p59 = scmp.eq.s32.totalorder %s23, 1
    %p60 = por %p58, %p59
    %p62 = scmp.ne.s32.totalorder %s45, %s61
    %p63 = scmp.eq.s32.totalorder %s23, 0
    %p64 = por %p62, %p63
    %s65 = ssub.s32 %s25, %s32
    %p66 = scmp.eq.s32.totalorder %s65, 0
    %s68 = sadd.s32 %s67, 1
    %s69 = scalar_select %p66, %s67, %s68
    %p72 = pneg %p66
    %p73 = scmp.eq.s32.totalorder %s17, 1
    %p74 = por %p72, %p73
    %p75 = scmp.ne.s32.totalorder %s67, %s70
    %p76 = scmp.eq.s32.totalorder %s17, 0
    %p77 = por %p75, %p76
    %p78 = scmp.ne.s32.totalorder %s67, %s70
    %p79 = scmp.eq.s32.totalorder %s22, 1
    %p80 = por %p78, %p79
    %p81 = scmp.ne.s32.totalorder %s70, %s71
    %p82 = scmp.eq.s32.totalorder %s22, 0
    %p83 = por %p81, %p82
    %p84 = scmp.ne.s32.totalorder %s70, %s71
    %p85 = scmp.eq.s32.totalorder %s23, 1
    %p86 = por %p84, %p85
    %p88 = scmp.ne.s32.totalorder %s71, %s87
    %p89 = scmp.eq.s32.totalorder %s23, 0
    %p90 = por %p88, %p89
    %s91 = ssub.s32 %s24, %s36
    %p92 = scmp.eq.s32.totalorder %s91, 0
    %s94 = sadd.s32 %s93, 1
    %s95 = scalar_select %p92, %s93, %s94
    %p98 = pneg %p92
    %p99 = scmp.eq.s32.totalorder %s17, 1
    %p100 = por %p98, %p99
    %p101 = scmp.ne.s32.totalorder %s93, %s96
    %p102 = scmp.eq.s32.totalorder %s17, 0
    %p103 = por %p101, %p102
    %p104 = scmp.ne.s32.totalorder %s93, %s96
    %p105 = scmp.eq.s32.totalorder %s22, 1
    %p106 = por %p104, %p105
    %p107 = scmp.ne.s32.totalorder %s96, %s97
    %p108 = scmp.eq.s32.totalorder %s22, 0
    %p109 = por %p107, %p108
    %p110 = scmp.ne.s32.totalorder %s96, %s97
    %p111 = scmp.eq.s32.totalorder %s23, 1
    %p112 = por %p110, %p111
    %p114 = scmp.ne.s32.totalorder %s97, %s113
    %p115 = scmp.eq.s32.totalorder %s23, 0
    %p116 = por %p114, %p115
    %s118 = sadd.s32 %s117, 1
    %p121 = scmp.eq.s32.totalorder %s17, 1
    %p122 = scmp.ne.s32.totalorder %s117, %s119
    %p123 = scmp.eq.s32.totalorder %s17, 0
    %p124 = por %p122, %p123
    %p125 = scmp.ne.s32.totalorder %s117, %s119
    %p126 = scmp.eq.s32.totalorder %s22, 1
    %p127 = por %p125, %p126
    %p128 = scmp.ne.s32.totalorder %s119, %s120
    %p129 = scmp.eq.s32.totalorder %s22, 0
    %p130 = por %p128, %p129
    %p131 = scmp.ne.s32.totalorder %s119, %s120
    %p132 = scmp.eq.s32.totalorder %s23, 1
    %p133 = por %p131, %p132
    %p135 = scmp.ne.s32.totalorder %s120, %s134
    %p136 = scmp.eq.s32.totalorder %s23, 0
    %p137 = por %p135, %p136
    %s139 = sadd.s32 %s138, 1
    %p142 = scmp.eq.s32.totalorder %s17, 1
    %p143 = scmp.ne.s32.totalorder %s138, %s140
    %p144 = scmp.eq.s32.totalorder %s17, 0
    %p145 = por %p143, %p144
    %p146 = scmp.ne.s32.totalorder %s138, %s140
    %p147 = scmp.eq.s32.totalorder %s22, 1
    %p148 = por %p146, %p147
    %p149 = scmp.ne.s32.totalorder %s140, %s141
    %p150 = scmp.eq.s32.totalorder %s22, 0
    %p151 = por %p149, %p150
    %p152 = scmp.ne.s32.totalorder %s140, %s141
    %p153 = scmp.eq.s32.totalorder %s23, 1
    %p154 = por %p152, %p153
    %p156 = scmp.ne.s32.totalorder %s141, %s155
    %p157 = scmp.eq.s32.totalorder %s23, 0
    %p158 = por %p156, %p157
    %s160 = sadd.s32 %s159, 1
    %p163 = scmp.eq.s32.totalorder %s17, 1
    %p164 = scmp.ne.s32.totalorder %s159, %s161
    %p165 = scmp.eq.s32.totalorder %s17, 0
    %p166 = por %p164, %p165
    %p167 = scmp.ne.s32.totalorder %s159, %s161
    %p168 = scmp.eq.s32.totalorder %s22, 1
    %p169 = por %p167, %p168
    %p170 = scmp.ne.s32.totalorder %s161, %s162
    %p171 = scmp.eq.s32.totalorder %s22, 0
    %p172 = por %p170, %p171
    %p173 = scmp.ne.s32.totalorder %s161, %s162
    %p174 = scmp.eq.s32.totalorder %s23, 1
    %p175 = por %p173, %p174
    %p177 = scmp.ne.s32.totalorder %s162, %s176
    %p178 = scmp.eq.s32.totalorder %s23, 0
    %p179 = por %p177, %p178
    %s181 = sadd.s32 %s180, 1
    %p184 = scmp.eq.s32.totalorder %s17, 1
    %p185 = scmp.ne.s32.totalorder %s180, %s182
    %p186 = scmp.eq.s32.totalorder %s17, 0
    %p187 = por %p185, %p186
    %p188 = scmp.ne.s32.totalorder %s180, %s182
    %p189 = scmp.eq.s32.totalorder %s22, 1
    %p190 = por %p188, %p189
    %p191 = scmp.ne.s32.totalorder %s182, %s183
    %p192 = scmp.eq.s32.totalorder %s22, 0
    %p193 = por %p191, %p192
    %p194 = scmp.ne.s32.totalorder %s182, %s183
    %p195 = scmp.eq.s32.totalorder %s23, 1
    %p196 = por %p194, %p195
    %p198 = scmp.ne.s32.totalorder %s183, %s197
    %p199 = scmp.eq.s32.totalorder %s23, 0
    %p200 = por %p198, %p199
    %s202 = sadd.s32 %s201, 1
    %p205 = scmp.eq.s32.totalorder %s17, 1
    %p206 = scmp.ne.s32.totalorder %s201, %s203
    %p207 = scmp.eq.s32.totalorder %s17, 0
    %p208 = por %p206, %p207
    %p209 = scmp.ne.s32.totalorder %s201, %s203
    %p210 = scmp.eq.s32.totalorder %s22, 1
    %p211 = por %p209, %p210
    %p212 = scmp.ne.s32.totalorder %s203, %s204
    %p213 = scmp.eq.s32.totalorder %s22, 0
    %p214 = por %p212, %p213
    %p215 = scmp.ne.s32.totalorder %s203, %s204
    %p216 = scmp.eq.s32.totalorder %s23, 1
    %p217 = por %p215, %p216
    %p219 = scmp.ne.s32.totalorder %s204, %s218
    %p220 = scmp.eq.s32.totalorder %s23, 0
    %p221 = por %p219, %p220
    %s223 = sadd.s32 %s222, 1
    %p226 = scmp.eq.s32.totalorder %s17, 1
    %p227 = scmp.ne.s32.totalorder %s222, %s224
    %p228 = scmp.eq.s32.totalorder %s17, 0
    %p229 = por %p227, %p228
    %p230 = scmp.ne.s32.totalorder %s222, %s224
    %p231 = scmp.eq.s32.totalorder %s22, 1
    %p232 = por %p230, %p231
    %p233 = scmp.ne.s32.totalorder %s224, %s225
    %p234 = scmp.eq.s32.totalorder %s22, 0
    %p235 = por %p233, %p234
    %p236 = scmp.ne.s32.totalorder %s224, %s225
    %p237 = scmp.eq.s32.totalorder %s23, 1
    %p238 = por %p236, %p237
    %p240 = scmp.ne.s32.totalorder %s225, %s239
    %p241 = scmp.eq.s32.totalorder %s23, 0
    %p242 = por %p240, %p241
    %s244 = sadd.s32 %s243, 1
    %p247 = scmp.eq.s32.totalorder %s17, 1
    %p248 = scmp.ne.s32.totalorder %s243, %s245
    %p249 = scmp.eq.s32.totalorder %s17, 0
    %p250 = por %p248, %p249
    %p251 = scmp.ne.s32.totalorder %s243, %s245
    %p252 = scmp.eq.s32.totalorder %s22, 1
    %p253 = por %p251, %p252
    %p254 = scmp.ne.s32.totalorder %s245, %s246
    %p255 = scmp.eq.s32.totalorder %s22, 0
    %p256 = por %p254, %p255
    %p257 = scmp.ne.s32.totalorder %s245, %s246
    %p258 = scmp.eq.s32.totalorder %s23, 1
    %p259 = por %p257, %p258
    %p261 = scmp.ne.s32.totalorder %s246, %s260
    %p262 = scmp.eq.s32.totalorder %s23, 0
    %p263 = por %p261, %p262
    %s265 = sadd.s32 %s264, 1
    %p268 = scmp.eq.s32.totalorder %s17, 1
    %p269 = scmp.ne.s32.totalorder %s264, %s266
    %p270 = scmp.eq.s32.totalorder %s17, 0
    %p271 = por %p269, %p270
    %p272 = scmp.ne.s32.totalorder %s264, %s266
    %p273 = scmp.eq.s32.totalorder %s22, 1
    %p274 = por %p272, %p273
    %p275 = scmp.ne.s32.totalorder %s266, %s267
    %p276 = scmp.eq.s32.totalorder %s22, 0
    %p277 = por %p275, %p276
    %p278 = scmp.ne.s32.totalorder %s266, %s267
    %p279 = scmp.eq.s32.totalorder %s23, 1
    %p280 = por %p278, %p279
    %p282 = scmp.ne.s32.totalorder %s267, %s281
    %p283 = scmp.eq.s32.totalorder %s23, 0
    %p284 = por %p282, %p283
    %s285 = ssub.s32 %s24, %s36
    %p286 = scmp.eq.s32.totalorder %s285, 0
    %s288 = sadd.s32 %s287, 1
    %s289 = scalar_select %p286, %s287, %s288
    %p292 = pneg %p286
    %p293 = scmp.eq.s32.totalorder %s17, 1
    %p294 = por %p292, %p293
    %p295 = scmp.ne.s32.totalorder %s287, %s290
    %p296 = scmp.eq.s32.totalorder %s17, 0
    %p297 = por %p295, %p296
    %p298 = scmp.ne.s32.totalorder %s287, %s290
    %p299 = scmp.eq.s32.totalorder %s22, 1
    %p300 = por %p298, %p299
    %p301 = scmp.ne.s32.totalorder %s290, %s291
    %p302 = scmp.eq.s32.totalorder %s22, 0
    %p303 = por %p301, %p302
    %p304 = scmp.ne.s32.totalorder %s290, %s291
    %p305 = scmp.eq.s32.totalorder %s23, 1
    %p306 = por %p304, %p305
    %p308 = scmp.ne.s32.totalorder %s291, %s307
    %p309 = scmp.eq.s32.totalorder %s23, 0
    %p310 = por %p308, %p309
    %p311 = scmp.le.s32.totalorder 1, %s17
    %p312 = scmp.lt.s32.totalorder %s17, 3
    %p313 = pnand %p311, %p312
    %p314 = pneg %p313
    // Predicated region
    $region9: #{gin_forward.3} parent=5 // pred_check
      _
    $region10: #{gin_forward.3} parent=5 // pred_check_branch
      %316 = sbr.rel (%p313) target = $region12
    $region11: #{gin_forward.3} parent=5 // pred_region
      %s317 = ssub.s32 %s17, 1
      // Predicated region
      $region13: #{gin_forward.3} parent=11 // pred_check
        %p318 = pneg %p83
      $region14: #{gin_forward.3} parent=11 // pred_check_branch
        %320 = sbr.rel (%p318) target = $region16
      $region15: #{gin_forward.3} parent=11 // pred_region
        %s321 = smul.u32 64, %s27
        %p322 = scmp.lt.s32.totalorder %s321, 63
        %s323 = scalar_select %p322, %s321, 63
        %s324 = smul.addr %s323, 2
        %s325 = smul.addr %s324, 4
        %s326 = scalar_lea.vmem %s1, %s325
        %s327 = smul.u32 64, %s27
      $region16: #{gin_forward.3} parent=11 // pred_fallthru
        _
      // Predicated region
      $region17: #{gin_forward.3} parent=11 // pred_check
        %p328 = pneg %p130
      $region18: #{gin_forward.3} parent=11 // pred_check_branch
        %330 = sbr.rel (%p328) target = $region20
      $region19: #{gin_forward.3} parent=11 // pred_region
        _
      $region20: #{gin_forward.3} parent=11 // pred_fallthru
        _
      // Predicated region
      $region21: #{gin_forward.3} parent=11 // pred_check
        %p331 = pneg %p151
      $region22: #{gin_forward.3} parent=11 // pred_check_branch
        %333 = sbr.rel (%p331) target = $region24
      $region23: #{gin_forward.3} parent=11 // pred_region
        _
      $region24: #{gin_forward.3} parent=11 // pred_fallthru
        _
      // Predicated region
      $region25: #{gin_forward.3} parent=11 // pred_check
        %p334 = pneg %p172
      $region26: #{gin_forward.3} parent=11 // pred_check_branch
        %336 = sbr.rel (%p334) target = $region28
      $region27: #{gin_forward.3} parent=11 // pred_region
        _
      $region28: #{gin_forward.3} parent=11 // pred_fallthru
        _
      // Predicated region
      $region29: #{gin_forward.3} parent=11 // pred_check
        %p337 = pneg %p193
      $region30: #{gin_forward.3} parent=11 // pred_check_branch
        %339 = sbr.rel (%p337) target = $region32
      $region31: #{gin_forward.3} parent=11 // pred_region
        _
      $region32: #{gin_forward.3} parent=11 // pred_fallthru
        _
      // Predicated region
      $region33: #{gin_forward.3} parent=11 // pred_check
        %p340 = pneg %p214
      $region34: #{gin_forward.3} parent=11 // pred_check_branch
        %342 = sbr.rel (%p340) target = $region36
      $region35: #{gin_forward.3} parent=11 // pred_region
        _
      $region36: #{gin_forward.3} parent=11 // pred_fallthru
        _
      // Predicated region
      $region37: #{gin_forward.3} parent=11 // pred_check
        %p343 = pneg %p235
      $region38: #{gin_forward.3} parent=11 // pred_check_branch
        %345 = sbr.rel (%p343) target = $region40
      $region39: #{gin_forward.3} parent=11 // pred_region
        _
      $region40: #{gin_forward.3} parent=11 // pred_fallthru
        _
      // Predicated region
      $region41: #{gin_forward.3} parent=11 // pred_check
        %p346 = pneg %p256
      $region42: #{gin_forward.3} parent=11 // pred_check_branch
        %348 = sbr.rel (%p346) target = $region44
      $region43: #{gin_forward.3} parent=11 // pred_region
        _
      $region44: #{gin_forward.3} parent=11 // pred_fallthru
        _
      // Predicated region
      $region45: #{gin_forward.3} parent=11 // pred_check
        %p349 = pneg %p277
      $region46: #{gin_forward.3} parent=11 // pred_check_branch
        %351 = sbr.rel (%p349) target = $region48
      $region47: #{gin_forward.3} parent=11 // pred_region
        _
      $region48: #{gin_forward.3} parent=11 // pred_fallthru
        _
    $region12: #{gin_forward.3} parent=5 // pred_fallthru
      _
    %p352 = scmp.lt.s32.totalorder %s17, 2
    // Predicated region
    $region49: #{gin_forward.3} parent=5 // pred_check
      %p353 = pneg %p352
    $region50: #{gin_forward.3} parent=5 // pred_check_branch
      %355 = sbr.rel (%p353) target = $region52
    $region51: #{gin_forward.3} parent=5 // pred_region
      // Predicated region
      $region53: #{gin_forward.3} parent=51 // pred_check
        %p356 = pneg %p51
      $region54: #{gin_forward.3} parent=51 // pred_check_branch
        %358 = sbr.rel (%p356) target = $region56
      $region55: #{gin_forward.3} parent=51 // pred_region
        %s359 = smul.u32 32, %s24
        %s360 = smul.u32 4, %s25
        %p361 = scmp.lt.s32.totalorder %s359, 63
        %s362 = scalar_select %p361, %s359, 63
        %p363 = scmp.lt.s32.totalorder %s360, 3
        %s364 = scalar_select %p363, %s360, 3
        %s365 = smul.addr %s362, 4
        %s366 = sadd.s32 %s364, %s365
        %s367 = smul.addr %s366, 4
        %s368 = scalar_lea.vmem %s0, %s367
        %s369 = smul.u32 32, %s24
        %s370 = smul.u32 4, %s25
      $region56: #{gin_forward.3} parent=51 // pred_fallthru
        _
      // Predicated region
      $region57: #{gin_forward.3} parent=51 // pred_check
        %p371 = pneg %p103
      $region58: #{gin_forward.3} parent=51 // pred_check_branch
        %373 = sbr.rel (%p371) target = $region60
      $region59: #{gin_forward.3} parent=51 // pred_region
        %s374 = smul.u32 32, %s24
        %p375 = scmp.lt.s32.totalorder %s374, 63
        %s376 = scalar_select %p375, %s374, 63
        %s377 = smul.addr %s376, 2
        %s378 = smul.addr %s377, 4
        %s379 = scalar_lea.vmem %s2, %s378
        %s380 = smul.u32 32, %s24
      $region60: #{gin_forward.3} parent=51 // pred_fallthru
        _
    $region52: #{gin_forward.3} parent=5 // pred_fallthru
      _
    %p381 = scmp.le.s32.totalorder 1, %s17
    %p382 = scmp.lt.s32.totalorder %s17, 3
    %p383 = pnand %p381, %p382
    %p384 = pneg %p383
    // Predicated region
    $region61: #{gin_forward.3} parent=5 // pred_check
      _
    $region62: #{gin_forward.3} parent=5 // pred_check_branch
      %386 = sbr.rel (%p383) target = $region64
    $region63: #{gin_forward.3} parent=5 // pred_region
      %s387 = ssub.s32 %s17, 1
      %s388 = smul.u32 32, %s26
      %s389 = smul.u32 4, %s27
      %p390 = scmp.lt.s32.totalorder %s388, 63
      %s391 = scalar_select %p390, %s388, 63
      %p392 = scmp.lt.s32.totalorder %s389, 3
      %s393 = scalar_select %p392, %s389, 3
      %s394 = smul.addr %s391, 4
      %s395 = sadd.s32 %s393, %s394
      %s396 = smul.addr %s395, 4
      %s397 = scalar_lea.vmem %s0, %s396
      %p398 = pneg %p57
      %p399 = pneg %p54
      %s400 = smul.u32 64, %s27
      %p401 = scmp.lt.s32.totalorder %s400, 63
      %s402 = scalar_select %p401, %s400, 63
      %s403 = smul.addr %s402, 2
      %s404 = smul.addr %s403, 4
      %s405 = scalar_lea.vmem %s1, %s404
      %p406 = pneg %p83
      %p407 = pneg %p80
      %s408 = smul.u32 32, %s26
      %p409 = scmp.lt.s32.totalorder %s408, 63
      %s410 = scalar_select %p409, %s408, 63
      %s411 = smul.addr %s410, 2
      %s412 = smul.addr %s411, 4
      %s413 = scalar_lea.vmem %s2, %s412
      %p414 = pneg %p109
      %p415 = pneg %p106
      %p416 = pneg %p130
      %p417 = pneg %p127
      %p418 = pneg %p151
      %p419 = pneg %p148
      %p420 = pneg %p172
      %p421 = pneg %p169
      %p422 = pneg %p193
      %p423 = pneg %p190
      %p424 = pneg %p214
      %p425 = pneg %p211
      %p426 = pneg %p235
      %p427 = pneg %p232
      %p428 = pneg %p256
      %p429 = pneg %p253
      %p430 = pneg %p277
      %p431 = pneg %p274
      %p432 = pneg %p303
      %p433 = pneg %p300
      %s434 = smul.u32 32, %s26
      %p435 = scmp.lt.s32.totalorder %s434, 63
      %s436 = scalar_select %p435, %s434, 63
      %s437 = smul.addr %s436, 2
      %s438 = smul.addr %s437, 4
      %s439 = scalar_lea.vmem %s11, %s438
      %s440 = smul.u32 32, %s26
      %s441 = smul.u32 4, %s27
      %p442 = scmp.lt.s32.totalorder %s440, 63
      %s443 = scalar_select %p442, %s440, 63
      %p444 = scmp.lt.s32.totalorder %s441, 3
      %s445 = scalar_select %p444, %s441, 3
      %s446 = smul.addr %s443, 4
      %s447 = sadd.s32 %s445, %s446
      %s448 = smul.addr %s447, 4
      %s449 = scalar_lea.vmem %s0, %s448
      %s450 = smul.u32 32, %s26
      %s451 = smul.u32 4, %s27
      %s452 = smul.u32 64, %s27
      %p453 = scmp.lt.s32.totalorder %s452, 63
      %s454 = scalar_select %p453, %s452, 63
      %s455 = smul.addr %s454, 2
      %s456 = smul.addr %s455, 4
      %s457 = scalar_lea.vmem %s1, %s456
      %s458 = smul.u32 64, %s27
      %s459 = smul.u32 32, %s26
      %p460 = scmp.lt.s32.totalorder %s459, 63
      %s461 = scalar_select %p460, %s459, 63
      %s462 = smul.addr %s461, 2
      %s463 = smul.addr %s462, 4
      %s464 = scalar_lea.vmem %s2, %s463
      %s465 = smul.u32 32, %s26
      %s466 = smul.u32 32, %s26
      %p467 = scmp.lt.s32.totalorder %s466, 63
      %s468 = scalar_select %p467, %s466, 63
      %s469 = smul.addr %s468, 2
      %s470 = smul.addr %s469, 4
      %s471 = scalar_lea.vmem %s11, %s470
      %s472 = smul.u32 32, %s26
      %p474 = scmp.eq.s32.totalorder %s27, 0
      // Predicated region
      $region65: #{gin_forward.3} parent=63 // pred_check
        %p475 = pneg %p474
      $region66: #{gin_forward.3} parent=63 // pred_check_branch
        %477 = sbr.rel (%p475) target = $region68
      $region67: #{gin_forward.3} parent=63 // pred_region
        %478 = vst [vmem:[#allocation2] sm:$0xff] 0.0
        %479 = vst [vmem:[#allocation2 + $0x8] sm:$0xff] 0.0
        %480 = vst [vmem:[#allocation2 + $0x10] sm:$0xff] 0.0
        %481 = vst [vmem:[#allocation2 + $0x18] sm:$0xff] 0.0
        %482 = vst [vmem:[#allocation2 + $0x20] sm:$0xff] 0.0
        %483 = vst [vmem:[#allocation2 + $0x28] sm:$0xff] 0.0
        %484 = vst [vmem:[#allocation2 + $0x30] sm:$0xff] 0.0
        %485 = vst [vmem:[#allocation2 + $0x38] sm:$0xff] 0.0
        %486 = vst [vmem:[#allocation2 + $0x40] sm:$0xff] 0.0
        %487 = vst [vmem:[#allocation2 + $0x48] sm:$0xff] 0.0
        %488 = vst [vmem:[#allocation2 + $0x50] sm:$0xff] 0.0
        %489 = vst [vmem:[#allocation2 + $0x58] sm:$0xff] 0.0
        %490 = vst [vmem:[#allocation2 + $0x60] sm:$0xff] 0.0
        %491 = vst [vmem:[#allocation2 + $0x68] sm:$0xff] 0.0
        %492 = vst [vmem:[#allocation2 + $0x70] sm:$0xff] 0.0
        %493 = vst [vmem:[#allocation2 + $0x78] sm:$0xff] 0.0
        %494 = vst [vmem:[#allocation2 + $0x80] sm:$0xff] 0.0
        %495 = vst [vmem:[#allocation2 + $0x88] sm:$0xff] 0.0
        %496 = vst [vmem:[#allocation2 + $0x90] sm:$0xff] 0.0
        %497 = vst [vmem:[#allocation2 + $0x98] sm:$0xff] 0.0
        %498 = vst [vmem:[#allocation2 + $0xa0] sm:$0xff] 0.0
        %499 = vst [vmem:[#allocation2 + $0xa8] sm:$0xff] 0.0
        %500 = vst [vmem:[#allocation2 + $0xb0] sm:$0xff] 0.0
        %501 = vst [vmem:[#allocation2 + $0xb8] sm:$0xff] 0.0
        %502 = vst [vmem:[#allocation2 + $0xc0] sm:$0xff] 0.0
        %503 = vst [vmem:[#allocation2 + $0xc8] sm:$0xff] 0.0
        %504 = vst [vmem:[#allocation2 + $0xd0] sm:$0xff] 0.0
        %505 = vst [vmem:[#allocation2 + $0xd8] sm:$0xff] 0.0
        %506 = vst [vmem:[#allocation2 + $0xe0] sm:$0xff] 0.0
        %507 = vst [vmem:[#allocation2 + $0xe8] sm:$0xff] 0.0
        %508 = vst [vmem:[#allocation2 + $0xf0] sm:$0xff] 0.0
        %509 = vst [vmem:[#allocation2 + $0xf8] sm:$0xff] 0.0
        %510 = vst [vmem:[#allocation2 + $0x100] sm:$0xff] 0.0
        %511 = vst [vmem:[#allocation2 + $0x108] sm:$0xff] 0.0
        %512 = vst [vmem:[#allocation2 + $0x110] sm:$0xff] 0.0
        %513 = vst [vmem:[#allocation2 + $0x118] sm:$0xff] 0.0
        %514 = vst [vmem:[#allocation2 + $0x120] sm:$0xff] 0.0
        %515 = vst [vmem:[#allocation2 + $0x128] sm:$0xff] 0.0
        %516 = vst [vmem:[#allocation2 + $0x130] sm:$0xff] 0.0
        %517 = vst [vmem:[#allocation2 + $0x138] sm:$0xff] 0.0
        %518 = vst [vmem:[#allocation2 + $0x140] sm:$0xff] 0.0
        %519 = vst [vmem:[#allocation2 + $0x148] sm:$0xff] 0.0
        %520 = vst [vmem:[#allocation2 + $0x150] sm:$0xff] 0.0
        %521 = vst [vmem:[#allocation2 + $0x158] sm:$0xff] 0.0
        %522 = vst [vmem:[#allocation2 + $0x160] sm:$0xff] 0.0
        %523 = vst [vmem:[#allocation2 + $0x168] sm:$0xff] 0.0
        %524 = vst [vmem:[#allocation2 + $0x170] sm:$0xff] 0.0
        %525 = vst [vmem:[#allocation2 + $0x178] sm:$0xff] 0.0
        %526 = vst [vmem:[#allocation2 + $0x180] sm:$0xff] 0.0
        %527 = vst [vmem:[#allocation2 + $0x188] sm:$0xff] 0.0
        %528 = vst [vmem:[#allocation2 + $0x190] sm:$0xff] 0.0
        %529 = vst [vmem:[#allocation2 + $0x198] sm:$0xff] 0.0
        %530 = vst [vmem:[#allocation2 + $0x1a0] sm:$0xff] 0.0
        %531 = vst [vmem:[#allocation2 + $0x1a8] sm:$0xff] 0.0
        %532 = vst [vmem:[#allocation2 + $0x1b0] sm:$0xff] 0.0
        %533 = vst [vmem:[#allocation2 + $0x1b8] sm:$0xff] 0.0
        %534 = vst [vmem:[#allocation2 + $0x1c0] sm:$0xff] 0.0
        %535 = vst [vmem:[#allocation2 + $0x1c8] sm:$0xff] 0.0
        %536 = vst [vmem:[#allocation2 + $0x1d0] sm:$0xff] 0.0
        %537 = vst [vmem:[#allocation2 + $0x1d8] sm:$0xff] 0.0
        %538 = vst [vmem:[#allocation2 + $0x1e0] sm:$0xff] 0.0
        %539 = vst [vmem:[#allocation2 + $0x1e8] sm:$0xff] 0.0
        %540 = vst [vmem:[#allocation2 + $0x1f0] sm:$0xff] 0.0
        %541 = vst [vmem:[#allocation2 + $0x1f8] sm:$0xff] 0.0
      $region68: #{gin_forward.3} parent=63 // pred_fallthru
        _
      %v542 = vld [vmem:[#allocation2] sm:$0xff]
      %v543 = vld [vmem:[#allocation2 + $0x8] sm:$0xff]
      %v544 = vld [vmem:[#allocation2 + $0x10] sm:$0xff]
      %v545 = vld [vmem:[#allocation2 + $0x18] sm:$0xff]
      %v546 = vld [vmem:[#allocation2 + $0x20] sm:$0xff]
      %v547 = vld [vmem:[#allocation2 + $0x28] sm:$0xff]
      %v548 = vld [vmem:[#allocation2 + $0x30] sm:$0xff]
      %v549 = vld [vmem:[#allocation2 + $0x38] sm:$0xff]
      %v550 = vld [vmem:[#allocation2 + $0x40] sm:$0xff]
      %v551 = vld [vmem:[#allocation2 + $0x48] sm:$0xff]
      %v552 = vld [vmem:[#allocation2 + $0x50] sm:$0xff]
      %v553 = vld [vmem:[#allocation2 + $0x58] sm:$0xff]
      %v554 = vld [vmem:[#allocation2 + $0x60] sm:$0xff]
      %v555 = vld [vmem:[#allocation2 + $0x68] sm:$0xff]
      %v556 = vld [vmem:[#allocation2 + $0x70] sm:$0xff]
      %v557 = vld [vmem:[#allocation2 + $0x78] sm:$0xff]
      %v558 = vld [vmem:[#allocation2 + $0x80] sm:$0xff]
      %v559 = vld [vmem:[#allocation2 + $0x88] sm:$0xff]
      %v560 = vld [vmem:[#allocation2 + $0x90] sm:$0xff]
      %v561 = vld [vmem:[#allocation2 + $0x98] sm:$0xff]
      %v562 = vld [vmem:[#allocation2 + $0xa0] sm:$0xff]
      %v563 = vld [vmem:[#allocation2 + $0xa8] sm:$0xff]
      %v564 = vld [vmem:[#allocation2 + $0xb0] sm:$0xff]
      %v565 = vld [vmem:[#allocation2 + $0xb8] sm:$0xff]
      %v566 = vld [vmem:[#allocation2 + $0xc0] sm:$0xff]
      %v567 = vld [vmem:[#allocation2 + $0xc8] sm:$0xff]
      %v568 = vld [vmem:[#allocation2 + $0xd0] sm:$0xff]
      %v569 = vld [vmem:[#allocation2 + $0xd8] sm:$0xff]
      %v570 = vld [vmem:[#allocation2 + $0xe0] sm:$0xff]
      %v571 = vld [vmem:[#allocation2 + $0xe8] sm:$0xff]
      %v572 = vld [vmem:[#allocation2 + $0xf0] sm:$0xff]
      %v573 = vld [vmem:[#allocation2 + $0xf8] sm:$0xff]
      %v574 = vld [vmem:[#allocation2 + $0x100] sm:$0xff]
      %v575 = vld [vmem:[#allocation2 + $0x108] sm:$0xff]
      %v576 = vld [vmem:[#allocation2 + $0x110] sm:$0xff]
      %v577 = vld [vmem:[#allocation2 + $0x118] sm:$0xff]
      %v578 = vld [vmem:[#allocation2 + $0x120] sm:$0xff]
      %v579 = vld [vmem:[#allocation2 + $0x128] sm:$0xff]
      %v580 = vld [vmem:[#allocation2 + $0x130] sm:$0xff]
      %v581 = vld [vmem:[#allocation2 + $0x138] sm:$0xff]
      %v582 = vld [vmem:[#allocation2 + $0x140] sm:$0xff]
      %v583 = vld [vmem:[#allocation2 + $0x148] sm:$0xff]
      %v584 = vld [vmem:[#allocation2 + $0x150] sm:$0xff]
      %v585 = vld [vmem:[#allocation2 + $0x158] sm:$0xff]
      %v586 = vld [vmem:[#allocation2 + $0x160] sm:$0xff]
      %v587 = vld [vmem:[#allocation2 + $0x168] sm:$0xff]
      %v588 = vld [vmem:[#allocation2 + $0x170] sm:$0xff]
      %v589 = vld [vmem:[#allocation2 + $0x178] sm:$0xff]
      %v590 = vld [vmem:[#allocation2 + $0x180] sm:$0xff]
      %v591 = vld [vmem:[#allocation2 + $0x188] sm:$0xff]
      %v592 = vld [vmem:[#allocation2 + $0x190] sm:$0xff]
      %v593 = vld [vmem:[#allocation2 + $0x198] sm:$0xff]
      %v594 = vld [vmem:[#allocation2 + $0x1a0] sm:$0xff]
      %v595 = vld [vmem:[#allocation2 + $0x1a8] sm:$0xff]
      %v596 = vld [vmem:[#allocation2 + $0x1b0] sm:$0xff]
      %v597 = vld [vmem:[#allocation2 + $0x1b8] sm:$0xff]
      %v598 = vld [vmem:[#allocation2 + $0x1c0] sm:$0xff]
      %v599 = vld [vmem:[#allocation2 + $0x1c8] sm:$0xff]
      %v600 = vld [vmem:[#allocation2 + $0x1d0] sm:$0xff]
      %v601 = vld [vmem:[#allocation2 + $0x1d8] sm:$0xff]
      %v602 = vld [vmem:[#allocation2 + $0x1e0] sm:$0xff]
      %v603 = vld [vmem:[#allocation2 + $0x1e8] sm:$0xff]
      %v604 = vld [vmem:[#allocation2 + $0x1f0] sm:$0xff]
      %v605 = vld [vmem:[#allocation2 + $0x1f8] sm:$0xff]
      %v606 = vld [vmem:[%s449] sm:$0xff]
      %v607 = vld [vmem:[%s449 + $0x8] sm:$0xff]
      %v608 = vld [vmem:[%s449 + $0x10] sm:$0xff]
      %v609 = vld [vmem:[%s449 + $0x18] sm:$0xff]
      %v610 = vld [vmem:[%s449 + $0x20] sm:$0xff]
      %v611 = vld [vmem:[%s449 + $0x28] sm:$0xff]
      %v612 = vld [vmem:[%s449 + $0x30] sm:$0xff]
      %v613 = vld [vmem:[%s449 + $0x38] sm:$0xff]
      %v614 = vld [vmem:[%s449 + $0x40] sm:$0xff]
      %v615 = vld [vmem:[%s449 + $0x48] sm:$0xff]
      %v616 = vld [vmem:[%s449 + $0x50] sm:$0xff]
      %v617 = vld [vmem:[%s449 + $0x58] sm:$0xff]
      %v618 = vld [vmem:[%s449 + $0x60] sm:$0xff]
      %v619 = vld [vmem:[%s449 + $0x68] sm:$0xff]
      %v620 = vld [vmem:[%s449 + $0x70] sm:$0xff]
      %v621 = vld [vmem:[%s449 + $0x78] sm:$0xff]
      %v622 = vld [vmem:[%s449 + $0x80] sm:$0xff]
      %v623 = vld [vmem:[%s449 + $0x88] sm:$0xff]
      %v624 = vld [vmem:[%s449 + $0x90] sm:$0xff]
      %v625 = vld [vmem:[%s449 + $0x98] sm:$0xff]
      %v626 = vld [vmem:[%s449 + $0xa0] sm:$0xff]
      %v627 = vld [vmem:[%s449 + $0xa8] sm:$0xff]
      %v628 = vld [vmem:[%s449 + $0xb0] sm:$0xff]
      %v629 = vld [vmem:[%s449 + $0xb8] sm:$0xff]
      %v630 = vld [vmem:[%s449 + $0xc0] sm:$0xff]
      %v631 = vld [vmem:[%s449 + $0xc8] sm:$0xff]
      %v632 = vld [vmem:[%s449 + $0xd0] sm:$0xff]
      %v633 = vld [vmem:[%s449 + $0xd8] sm:$0xff]
      %v634 = vld [vmem:[%s449 + $0xe0] sm:$0xff]
      %v635 = vld [vmem:[%s449 + $0xe8] sm:$0xff]
      %v636 = vld [vmem:[%s449 + $0xf0] sm:$0xff]
      %v637 = vld [vmem:[%s449 + $0xf8] sm:$0xff]
      %v638 = vld [vmem:[%s449 + $0x100] sm:$0xff]
      %v639 = vld [vmem:[%s449 + $0x108] sm:$0xff]
      %v640 = vld [vmem:[%s449 + $0x110] sm:$0xff]
      %v641 = vld [vmem:[%s449 + $0x118] sm:$0xff]
      %v642 = vld [vmem:[%s449 + $0x120] sm:$0xff]
      %v643 = vld [vmem:[%s449 + $0x128] sm:$0xff]
      %v644 = vld [vmem:[%s449 + $0x130] sm:$0xff]
      %v645 = vld [vmem:[%s449 + $0x138] sm:$0xff]
      %v646 = vld [vmem:[%s449 + $0x140] sm:$0xff]
      %v647 = vld [vmem:[%s449 + $0x148] sm:$0xff]
      %v648 = vld [vmem:[%s449 + $0x150] sm:$0xff]
      %v649 = vld [vmem:[%s449 + $0x158] sm:$0xff]
      %v650 = vld [vmem:[%s449 + $0x160] sm:$0xff]
      %v651 = vld [vmem:[%s449 + $0x168] sm:$0xff]
      %v652 = vld [vmem:[%s449 + $0x170] sm:$0xff]
      %v653 = vld [vmem:[%s449 + $0x178] sm:$0xff]
      %v654 = vld [vmem:[%s449 + $0x180] sm:$0xff]
      %v655 = vld [vmem:[%s449 + $0x188] sm:$0xff]
      %v656 = vld [vmem:[%s449 + $0x190] sm:$0xff]
      %v657 = vld [vmem:[%s449 + $0x198] sm:$0xff]
      %v658 = vld [vmem:[%s449 + $0x1a0] sm:$0xff]
      %v659 = vld [vmem:[%s449 + $0x1a8] sm:$0xff]
      %v660 = vld [vmem:[%s449 + $0x1b0] sm:$0xff]
      %v661 = vld [vmem:[%s449 + $0x1b8] sm:$0xff]
      %v662 = vld [vmem:[%s449 + $0x1c0] sm:$0xff]
      %v663 = vld [vmem:[%s449 + $0x1c8] sm:$0xff]
      %v664 = vld [vmem:[%s449 + $0x1d0] sm:$0xff]
      %v665 = vld [vmem:[%s449 + $0x1d8] sm:$0xff]
      %v666 = vld [vmem:[%s449 + $0x1e0] sm:$0xff]
      %v667 = vld [vmem:[%s449 + $0x1e8] sm:$0xff]
      %v668 = vld [vmem:[%s449 + $0x1f0] sm:$0xff]
      %v669 = vld [vmem:[%s449 + $0x1f8] sm:$0xff]
      %v670 = vld [vmem:[%s457] sm:$0xff]
      %v671 = vld [vmem:[%s457 + $0x8] sm:$0xff]
      %v672 = vld [vmem:[%s457 + $0x10] sm:$0xff]
      %v673 = vld [vmem:[%s457 + $0x18] sm:$0xff]
      %v674 = vld [vmem:[%s457 + $0x20] sm:$0xff]
      %v675 = vld [vmem:[%s457 + $0x28] sm:$0xff]
      %v676 = vld [vmem:[%s457 + $0x30] sm:$0xff]
      %v677 = vld [vmem:[%s457 + $0x38] sm:$0xff]
      %v678 = vld [vmem:[%s457 + $0x40] sm:$0xff]
      %v679 = vld [vmem:[%s457 + $0x48] sm:$0xff]
      %v680 = vld [vmem:[%s457 + $0x50] sm:$0xff]
      %v681 = vld [vmem:[%s457 + $0x58] sm:$0xff]
      %v682 = vld [vmem:[%s457 + $0x60] sm:$0xff]
      %v683 = vld [vmem:[%s457 + $0x68] sm:$0xff]
      %v684 = vld [vmem:[%s457 + $0x70] sm:$0xff]
      %v685 = vld [vmem:[%s457 + $0x78] sm:$0xff]
      %v686 = vld [vmem:[%s457 + $0x80] sm:$0xff]
      %v687 = vld [vmem:[%s457 + $0x88] sm:$0xff]
      %v688 = vld [vmem:[%s457 + $0x90] sm:$0xff]
      %v689 = vld [vmem:[%s457 + $0x98] sm:$0xff]
      %v690 = vld [vmem:[%s457 + $0xa0] sm:$0xff]
      %v691 = vld [vmem:[%s457 + $0xa8] sm:$0xff]
      %v692 = vld [vmem:[%s457 + $0xb0] sm:$0xff]
      %v693 = vld [vmem:[%s457 + $0xb8] sm:$0xff]
      %v694 = vld [vmem:[%s457 + $0xc0] sm:$0xff]
      %v695 = vld [vmem:[%s457 + $0xc8] sm:$0xff]
      %v696 = vld [vmem:[%s457 + $0xd0] sm:$0xff]
      %v697 = vld [vmem:[%s457 + $0xd8] sm:$0xff]
      %v698 = vld [vmem:[%s457 + $0xe0] sm:$0xff]
      %v699 = vld [vmem:[%s457 + $0xe8] sm:$0xff]
      %v700 = vld [vmem:[%s457 + $0xf0] sm:$0xff]
      %v701 = vld [vmem:[%s457 + $0xf8] sm:$0xff]
      %v702 = vld [vmem:[%s457 + $0x100] sm:$0xff]
      %v703 = vld [vmem:[%s457 + $0x108] sm:$0xff]
      %v704 = vld [vmem:[%s457 + $0x110] sm:$0xff]
      %v705 = vld [vmem:[%s457 + $0x118] sm:$0xff]
      %v706 = vld [vmem:[%s457 + $0x120] sm:$0xff]
      %v707 = vld [vmem:[%s457 + $0x128] sm:$0xff]
      %v708 = vld [vmem:[%s457 + $0x130] sm:$0xff]
      %v709 = vld [vmem:[%s457 + $0x138] sm:$0xff]
      %v710 = vld [vmem:[%s457 + $0x140] sm:$0xff]
      %v711 = vld [vmem:[%s457 + $0x148] sm:$0xff]
      %v712 = vld [vmem:[%s457 + $0x150] sm:$0xff]
      %v713 = vld [vmem:[%s457 + $0x158] sm:$0xff]
      %v714 = vld [vmem:[%s457 + $0x160] sm:$0xff]
      %v715 = vld [vmem:[%s457 + $0x168] sm:$0xff]
      %v716 = vld [vmem:[%s457 + $0x170] sm:$0xff]
      %v717 = vld [vmem:[%s457 + $0x178] sm:$0xff]
      %v718 = vld [vmem:[%s457 + $0x180] sm:$0xff]
      %v719 = vld [vmem:[%s457 + $0x188] sm:$0xff]
      %v720 = vld [vmem:[%s457 + $0x190] sm:$0xff]
      %v721 = vld [vmem:[%s457 + $0x198] sm:$0xff]
      %v722 = vld [vmem:[%s457 + $0x1a0] sm:$0xff]
      %v723 = vld [vmem:[%s457 + $0x1a8] sm:$0xff]
      %v724 = vld [vmem:[%s457 + $0x1b0] sm:$0xff]
      %v725 = vld [vmem:[%s457 + $0x1b8] sm:$0xff]
      %v726 = vld [vmem:[%s457 + $0x1c0] sm:$0xff]
      %v727 = vld [vmem:[%s457 + $0x1c8] sm:$0xff]
      %v728 = vld [vmem:[%s457 + $0x1d0] sm:$0xff]
      %v729 = vld [vmem:[%s457 + $0x1d8] sm:$0xff]
      %v730 = vld [vmem:[%s457 + $0x1e0] sm:$0xff]
      %v731 = vld [vmem:[%s457 + $0x1e8] sm:$0xff]
      %v732 = vld [vmem:[%s457 + $0x1f0] sm:$0xff]
      %v733 = vld [vmem:[%s457 + $0x1f8] sm:$0xff]
      %v798 = vunpack.c.l.b16 %v606
      %v799 = vunpack.c.h.b16 %v606
      %v800 = vunpack.c.l.b16 %v607
      %v801 = vunpack.c.h.b16 %v607
      %v802 = vunpack.c.l.b16 %v608
      %v803 = vunpack.c.h.b16 %v608
      %v804 = vunpack.c.l.b16 %v609
      %v805 = vunpack.c.h.b16 %v609
      %v806 = vunpack.c.l.b16 %v610
      %v807 = vunpack.c.h.b16 %v610
      %v808 = vunpack.c.l.b16 %v611
      %v809 = vunpack.c.h.b16 %v611
      %v810 = vunpack.c.l.b16 %v612
      %v811 = vunpack.c.h.b16 %v612
      %v812 = vunpack.c.l.b16 %v613
      %v813 = vunpack.c.h.b16 %v613
      %v814 = vunpack.c.l.b16 %v614
      %v815 = vunpack.c.h.b16 %v614
      %v816 = vunpack.c.l.b16 %v615
      %v817 = vunpack.c.h.b16 %v615
      %v818 = vunpack.c.l.b16 %v616
      %v819 = vunpack.c.h.b16 %v616
      %v820 = vunpack.c.l.b16 %v617
      %v821 = vunpack.c.h.b16 %v617
      %v822 = vunpack.c.l.b16 %v618
      %v823 = vunpack.c.h.b16 %v618
      %v824 = vunpack.c.l.b16 %v619
      %v825 = vunpack.c.h.b16 %v619
      %v826 = vunpack.c.l.b16 %v620
      %v827 = vunpack.c.h.b16 %v620
      %v828 = vunpack.c.l.b16 %v621
      %v829 = vunpack.c.h.b16 %v621
      %v830 = vunpack.c.l.b16 %v622
      %v831 = vunpack.c.h.b16 %v622
      %v832 = vunpack.c.l.b16 %v623
      %v833 = vunpack.c.h.b16 %v623
      %v834 = vunpack.c.l.b16 %v624
      %v835 = vunpack.c.h.b16 %v624
      %v836 = vunpack.c.l.b16 %v625
      %v837 = vunpack.c.h.b16 %v625
      %v838 = vunpack.c.l.b16 %v626
      %v839 = vunpack.c.h.b16 %v626
      %v840 = vunpack.c.l.b16 %v627
      %v841 = vunpack.c.h.b16 %v627
      %v842 = vunpack.c.l.b16 %v628
      %v843 = vunpack.c.h.b16 %v628
      %v844 = vunpack.c.l.b16 %v629
      %v845 = vunpack.c.h.b16 %v629
      %v846 = vunpack.c.l.b16 %v630
      %v847 = vunpack.c.h.b16 %v630
      %v848 = vunpack.c.l.b16 %v631
      %v849 = vunpack.c.h.b16 %v631
      %v850 = vunpack.c.l.b16 %v632
      %v851 = vunpack.c.h.b16 %v632
      %v852 = vunpack.c.l.b16 %v633
      %v853 = vunpack.c.h.b16 %v633
      %v854 = vunpack.c.l.b16 %v634
      %v855 = vunpack.c.h.b16 %v634
      %v856 = vunpack.c.l.b16 %v635
      %v857 = vunpack.c.h.b16 %v635
      %v858 = vunpack.c.l.b16 %v636
      %v859 = vunpack.c.h.b16 %v636
      %v860 = vunpack.c.l.b16 %v637
      %v861 = vunpack.c.h.b16 %v637
      %v862 = vunpack.c.l.b16 %v638
      %v863 = vunpack.c.h.b16 %v638
      %v864 = vunpack.c.l.b16 %v639
      %v865 = vunpack.c.h.b16 %v639
      %v866 = vunpack.c.l.b16 %v640
      %v867 = vunpack.c.h.b16 %v640
      %v868 = vunpack.c.l.b16 %v641
      %v869 = vunpack.c.h.b16 %v641
      %v870 = vunpack.c.l.b16 %v642
      %v871 = vunpack.c.h.b16 %v642
      %v872 = vunpack.c.l.b16 %v643
      %v873 = vunpack.c.h.b16 %v643
      %v874 = vunpack.c.l.b16 %v644
      %v875 = vunpack.c.h.b16 %v644
      %v876 = vunpack.c.l.b16 %v645
      %v877 = vunpack.c.h.b16 %v645
      %v878 = vunpack.c.l.b16 %v646
      %v879 = vunpack.c.h.b16 %v646
      %v880 = vunpack.c.l.b16 %v647
      %v881 = vunpack.c.h.b16 %v647
      %v882 = vunpack.c.l.b16 %v648
      %v883 = vunpack.c.h.b16 %v648
      %v884 = vunpack.c.l.b16 %v649
      %v885 = vunpack.c.h.b16 %v649
      %v886 = vunpack.c.l.b16 %v650
      %v887 = vunpack.c.h.b16 %v650
      %v888 = vunpack.c.l.b16 %v651
      %v889 = vunpack.c.h.b16 %v651
      %v890 = vunpack.c.l.b16 %v652
      %v891 = vunpack.c.h.b16 %v652
      %v892 = vunpack.c.l.b16 %v653
      %v893 = vunpack.c.h.b16 %v653
      %v894 = vunpack.c.l.b16 %v654
      %v895 = vunpack.c.h.b16 %v654
      %v896 = vunpack.c.l.b16 %v655
      %v897 = vunpack.c.h.b16 %v655
      %v898 = vunpack.c.l.b16 %v656
      %v899 = vunpack.c.h.b16 %v656
      %v900 = vunpack.c.l.b16 %v657
      %v901 = vunpack.c.h.b16 %v657
      %v902 = vunpack.c.l.b16 %v658
      %v903 = vunpack.c.h.b16 %v658
      %v904 = vunpack.c.l.b16 %v659
      %v905 = vunpack.c.h.b16 %v659
      %v906 = vunpack.c.l.b16 %v660
      %v907 = vunpack.c.h.b16 %v660
      %v908 = vunpack.c.l.b16 %v661
      %v909 = vunpack.c.h.b16 %v661
      %v910 = vunpack.c.l.b16 %v662
      %v911 = vunpack.c.h.b16 %v662
      %v912 = vunpack.c.l.b16 %v663
      %v913 = vunpack.c.h.b16 %v663
      %v914 = vunpack.c.l.b16 %v664
      %v915 = vunpack.c.h.b16 %v664
      %v916 = vunpack.c.l.b16 %v665
      %v917 = vunpack.c.h.b16 %v665
      %v918 = vunpack.c.l.b16 %v666
      %v919 = vunpack.c.h.b16 %v666
      %v920 = vunpack.c.l.b16 %v667
      %v921 = vunpack.c.h.b16 %v667
      %v922 = vunpack.c.l.b16 %v668
      %v923 = vunpack.c.h.b16 %v668
      %v924 = vunpack.c.l.b16 %v669
      %v925 = vunpack.c.h.b16 %v669
      %v926 = vpack.c.b16 %v802, %v798
      %v927 = vpack.c.b16 %v803, %v799
      %v928 = vpack.c.b16 %v804, %v800
      %v929 = vpack.c.b16 %v805, %v801
      %v930 = vpack.c.b16 %v810, %v806
      %v931 = vpack.c.b16 %v811, %v807
      %v932 = vpack.c.b16 %v812, %v808
      %v933 = vpack.c.b16 %v813, %v809
      %v934 = vpack.c.b16 %v818, %v814
      %v935 = vpack.c.b16 %v819, %v815
      %v936 = vpack.c.b16 %v820, %v816
      %v937 = vpack.c.b16 %v821, %v817
      %v938 = vpack.c.b16 %v826, %v822
      %v939 = vpack.c.b16 %v827, %v823
      %v940 = vpack.c.b16 %v828, %v824
      %v941 = vpack.c.b16 %v829, %v825
      %v942 = vpack.c.b16 %v834, %v830
      %v943 = vpack.c.b16 %v835, %v831
      %v944 = vpack.c.b16 %v836, %v832
      %v945 = vpack.c.b16 %v837, %v833
      %v946 = vpack.c.b16 %v842, %v838
      %v947 = vpack.c.b16 %v843, %v839
      %v948 = vpack.c.b16 %v844, %v840
      %v949 = vpack.c.b16 %v845, %v841
      %v950 = vpack.c.b16 %v850, %v846
      %v951 = vpack.c.b16 %v851, %v847
      %v952 = vpack.c.b16 %v852, %v848
      %v953 = vpack.c.b16 %v853, %v849
      %v954 = vpack.c.b16 %v858, %v854
      %v955 = vpack.c.b16 %v859, %v855
      %v956 = vpack.c.b16 %v860, %v856
      %v957 = vpack.c.b16 %v861, %v857
      %v958 = vpack.c.b16 %v866, %v862
      %v959 = vpack.c.b16 %v867, %v863
      %v960 = vpack.c.b16 %v868, %v864
      %v961 = vpack.c.b16 %v869, %v865
      %v962 = vpack.c.b16 %v874, %v870
      %v963 = vpack.c.b16 %v875, %v871
      %v964 = vpack.c.b16 %v876, %v872
      %v965 = vpack.c.b16 %v877, %v873
      %v966 = vpack.c.b16 %v882, %v878
      %v967 = vpack.c.b16 %v883, %v879
      %v968 = vpack.c.b16 %v884, %v880
      %v969 = vpack.c.b16 %v885, %v881
      %v970 = vpack.c.b16 %v890, %v886
      %v971 = vpack.c.b16 %v891, %v887
      %v972 = vpack.c.b16 %v892, %v888
      %v973 = vpack.c.b16 %v893, %v889
      %v974 = vpack.c.b16 %v898, %v894
      %v975 = vpack.c.b16 %v899, %v895
      %v976 = vpack.c.b16 %v900, %v896
      %v977 = vpack.c.b16 %v901, %v897
      %v978 = vpack.c.b16 %v906, %v902
      %v979 = vpack.c.b16 %v907, %v903
      %v980 = vpack.c.b16 %v908, %v904
      %v981 = vpack.c.b16 %v909, %v905
      %v982 = vpack.c.b16 %v914, %v910
      %v983 = vpack.c.b16 %v915, %v911
      %v984 = vpack.c.b16 %v916, %v912
      %v985 = vpack.c.b16 %v917, %v913
      %v986 = vpack.c.b16 %v922, %v918
      %v987 = vpack.c.b16 %v923, %v919
      %v988 = vpack.c.b16 %v924, %v920
      %v989 = vpack.c.b16 %v925, %v921
      %v1118 = vunpack.c.l.b16 %v670
      %v1119 = vunpack.c.h.b16 %v670
      %v1120 = vunpack.c.l.b16 %v671
      %v1121 = vunpack.c.h.b16 %v671
      %v1122 = vunpack.c.l.b16 %v672
      %v1123 = vunpack.c.h.b16 %v672
      %v1124 = vunpack.c.l.b16 %v673
      %v1125 = vunpack.c.h.b16 %v673
      %v1126 = vunpack.c.l.b16 %v674
      %v1127 = vunpack.c.h.b16 %v674
      %v1128 = vunpack.c.l.b16 %v675
      %v1129 = vunpack.c.h.b16 %v675
      %v1130 = vunpack.c.l.b16 %v676
      %v1131 = vunpack.c.h.b16 %v676
      %v1132 = vunpack.c.l.b16 %v677
      %v1133 = vunpack.c.h.b16 %v677
      %v1134 = vunpack.c.l.b16 %v678
      %v1135 = vunpack.c.h.b16 %v678
      %v1136 = vunpack.c.l.b16 %v679
      %v1137 = vunpack.c.h.b16 %v679
      %v1138 = vunpack.c.l.b16 %v680
      %v1139 = vunpack.c.h.b16 %v680
      %v1140 = vunpack.c.l.b16 %v681
      %v1141 = vunpack.c.h.b16 %v681
      %v1142 = vunpack.c.l.b16 %v682
      %v1143 = vunpack.c.h.b16 %v682
      %v1144 = vunpack.c.l.b16 %v683
      %v1145 = vunpack.c.h.b16 %v683
      %v1146 = vunpack.c.l.b16 %v684
      %v1147 = vunpack.c.h.b16 %v684
      %v1148 = vunpack.c.l.b16 %v685
      %v1149 = vunpack.c.h.b16 %v685
      %v1150 = vunpack.c.l.b16 %v686
      %v1151 = vunpack.c.h.b16 %v686
      %v1152 = vunpack.c.l.b16 %v687
      %v1153 = vunpack.c.h.b16 %v687
      %v1154 = vunpack.c.l.b16 %v688
      %v1155 = vunpack.c.h.b16 %v688
      %v1156 = vunpack.c.l.b16 %v689
      %v1157 = vunpack.c.h.b16 %v689
      %v1158 = vunpack.c.l.b16 %v690
      %v1159 = vunpack.c.h.b16 %v690
      %v1160 = vunpack.c.l.b16 %v691
      %v1161 = vunpack.c.h.b16 %v691
      %v1162 = vunpack.c.l.b16 %v692
      %v1163 = vunpack.c.h.b16 %v692
      %v1164 = vunpack.c.l.b16 %v693
      %v1165 = vunpack.c.h.b16 %v693
      %v1166 = vunpack.c.l.b16 %v694
      %v1167 = vunpack.c.h.b16 %v694
      %v1168 = vunpack.c.l.b16 %v695
      %v1169 = vunpack.c.h.b16 %v695
      %v1170 = vunpack.c.l.b16 %v696
      %v1171 = vunpack.c.h.b16 %v696
      %v1172 = vunpack.c.l.b16 %v697
      %v1173 = vunpack.c.h.b16 %v697
      %v1174 = vunpack.c.l.b16 %v698
      %v1175 = vunpack.c.h.b16 %v698
      %v1176 = vunpack.c.l.b16 %v699
      %v1177 = vunpack.c.h.b16 %v699
      %v1178 = vunpack.c.l.b16 %v700
      %v1179 = vunpack.c.h.b16 %v700
      %v1180 = vunpack.c.l.b16 %v701
      %v1181 = vunpack.c.h.b16 %v701
      %v1182 = vunpack.c.l.b16 %v702
      %v1183 = vunpack.c.h.b16 %v702
      %v1184 = vunpack.c.l.b16 %v703
      %v1185 = vunpack.c.h.b16 %v703
      %v1186 = vunpack.c.l.b16 %v704
      %v1187 = vunpack.c.h.b16 %v704
      %v1188 = vunpack.c.l.b16 %v705
      %v1189 = vunpack.c.h.b16 %v705
      %v1190 = vunpack.c.l.b16 %v706
      %v1191 = vunpack.c.h.b16 %v706
      %v1192 = vunpack.c.l.b16 %v707
      %v1193 = vunpack.c.h.b16 %v707
      %v1194 = vunpack.c.l.b16 %v708
      %v1195 = vunpack.c.h.b16 %v708
      %v1196 = vunpack.c.l.b16 %v709
      %v1197 = vunpack.c.h.b16 %v709
      %v1198 = vunpack.c.l.b16 %v710
      %v1199 = vunpack.c.h.b16 %v710
      %v1200 = vunpack.c.l.b16 %v711
      %v1201 = vunpack.c.h.b16 %v711
      %v1202 = vunpack.c.l.b16 %v712
      %v1203 = vunpack.c.h.b16 %v712
      %v1204 = vunpack.c.l.b16 %v713
      %v1205 = vunpack.c.h.b16 %v713
      %v1206 = vunpack.c.l.b16 %v714
      %v1207 = vunpack.c.h.b16 %v714
      %v1208 = vunpack.c.l.b16 %v715
      %v1209 = vunpack.c.h.b16 %v715
      %v1210 = vunpack.c.l.b16 %v716
      %v1211 = vunpack.c.h.b16 %v716
      %v1212 = vunpack.c.l.b16 %v717
      %v1213 = vunpack.c.h.b16 %v717
      %v1214 = vunpack.c.l.b16 %v718
      %v1215 = vunpack.c.h.b16 %v718
      %v1216 = vunpack.c.l.b16 %v719
      %v1217 = vunpack.c.h.b16 %v719
      %v1218 = vunpack.c.l.b16 %v720
      %v1219 = vunpack.c.h.b16 %v720
      %v1220 = vunpack.c.l.b16 %v721
      %v1221 = vunpack.c.h.b16 %v721
      %v1222 = vunpack.c.l.b16 %v722
      %v1223 = vunpack.c.h.b16 %v722
      %v1224 = vunpack.c.l.b16 %v723
      %v1225 = vunpack.c.h.b16 %v723
      %v1226 = vunpack.c.l.b16 %v724
      %v1227 = vunpack.c.h.b16 %v724
      %v1228 = vunpack.c.l.b16 %v725
      %v1229 = vunpack.c.h.b16 %v725
      %v1230 = vunpack.c.l.b16 %v726
      %v1231 = vunpack.c.h.b16 %v726
      %v1232 = vunpack.c.l.b16 %v727
      %v1233 = vunpack.c.h.b16 %v727
      %v1234 = vunpack.c.l.b16 %v728
      %v1235 = vunpack.c.h.b16 %v728
      %v1236 = vunpack.c.l.b16 %v729
      %v1237 = vunpack.c.h.b16 %v729
      %v1238 = vunpack.c.l.b16 %v730
      %v1239 = vunpack.c.h.b16 %v730
      %v1240 = vunpack.c.l.b16 %v731
      %v1241 = vunpack.c.h.b16 %v731
      %v1242 = vunpack.c.l.b16 %v732
      %v1243 = vunpack.c.h.b16 %v732
      %v1244 = vunpack.c.l.b16 %v733
      %v1245 = vunpack.c.h.b16 %v733
      %v1246 = vpack.c.b16 %v1120, %v1118
      %v1247 = vpack.c.b16 %v1121, %v1119
      %v1248 = vpack.c.b16 %v1124, %v1122
      %v1249 = vpack.c.b16 %v1125, %v1123
      %v1250 = vpack.c.b16 %v1128, %v1126
      %v1251 = vpack.c.b16 %v1129, %v1127
      %v1252 = vpack.c.b16 %v1132, %v1130
      %v1253 = vpack.c.b16 %v1133, %v1131
      %v1254 = vpack.c.b16 %v1136, %v1134
      %v1255 = vpack.c.b16 %v1137, %v1135
      %v1256 = vpack.c.b16 %v1140, %v1138
      %v1257 = vpack.c.b16 %v1141, %v1139
      %v1258 = vpack.c.b16 %v1144, %v1142
      %v1259 = vpack.c.b16 %v1145, %v1143
      %v1260 = vpack.c.b16 %v1148, %v1146
      %v1261 = vpack.c.b16 %v1149, %v1147
      %v1262 = vpack.c.b16 %v1152, %v1150
      %v1263 = vpack.c.b16 %v1153, %v1151
      %v1264 = vpack.c.b16 %v1156, %v1154
      %v1265 = vpack.c.b16 %v1157, %v1155
      %v1266 = vpack.c.b16 %v1160, %v1158
      %v1267 = vpack.c.b16 %v1161, %v1159
      %v1268 = vpack.c.b16 %v1164, %v1162
      %v1269 = vpack.c.b16 %v1165, %v1163
      %v1270 = vpack.c.b16 %v1168, %v1166
      %v1271 = vpack.c.b16 %v1169, %v1167
      %v1272 = vpack.c.b16 %v1172, %v1170
      %v1273 = vpack.c.b16 %v1173, %v1171
      %v1274 = vpack.c.b16 %v1176, %v1174
      %v1275 = vpack.c.b16 %v1177, %v1175
      %v1276 = vpack.c.b16 %v1180, %v1178
      %v1277 = vpack.c.b16 %v1181, %v1179
      %v1278 = vpack.c.b16 %v1184, %v1182
      %v1279 = vpack.c.b16 %v1185, %v1183
      %v1280 = vpack.c.b16 %v1188, %v1186
      %v1281 = vpack.c.b16 %v1189, %v1187
      %v1282 = vpack.c.b16 %v1192, %v1190
      %v1283 = vpack.c.b16 %v1193, %v1191
      %v1284 = vpack.c.b16 %v1196, %v1194
      %v1285 = vpack.c.b16 %v1197, %v1195
      %v1286 = vpack.c.b16 %v1200, %v1198
      %v1287 = vpack.c.b16 %v1201, %v1199
      %v1288 = vpack.c.b16 %v1204, %v1202
      %v1289 = vpack.c.b16 %v1205, %v1203
      %v1290 = vpack.c.b16 %v1208, %v1206
      %v1291 = vpack.c.b16 %v1209, %v1207
      %v1292 = vpack.c.b16 %v1212, %v1210
      %v1293 = vpack.c.b16 %v1213, %v1211
      %v1294 = vpack.c.b16 %v1216, %v1214
      %v1295 = vpack.c.b16 %v1217, %v1215
      %v1296 = vpack.c.b16 %v1220, %v1218
      %v1297 = vpack.c.b16 %v1221, %v1219
      %v1298 = vpack.c.b16 %v1224, %v1222
      %v1299 = vpack.c.b16 %v1225, %v1223
      %v1300 = vpack.c.b16 %v1228, %v1226
      %v1301 = vpack.c.b16 %v1229, %v1227
      %v1302 = vpack.c.b16 %v1232, %v1230
      %v1303 = vpack.c.b16 %v1233, %v1231
      %v1304 = vpack.c.b16 %v1236, %v1234
      %v1305 = vpack.c.b16 %v1237, %v1235
      %v1306 = vpack.c.b16 %v1240, %v1238
      %v1307 = vpack.c.b16 %v1241, %v1239
      %v1308 = vpack.c.b16 %v1244, %v1242
      %v1309 = vpack.c.b16 %v1245, %v1243
      %1374 = vmatprep.subr.bf16.mxu0 %v1247
      %1375 = vmatpush1.bf16.msra.mxu0 %v1246
      %1376 = vmatprep.subr.bf16.mxu0 %v1249
      %1377 = vmatpush1.bf16.msra.mxu0 %v1248
      %1378 = vmatprep.subr.bf16.mxu0 %v1251
      %1379 = vmatpush1.bf16.msra.mxu0 %v1250
      %1380 = vmatprep.subr.bf16.mxu0 %v1253
      %1381 = vmatpush1.bf16.msra.mxu0 %v1252
      %1382 = vmatprep.subr.bf16.mxu0 %v1255
      %1383 = vmatpush1.bf16.msra.mxu0 %v1254
      %1384 = vmatprep.subr.bf16.mxu0 %v1257
      %1385 = vmatpush1.bf16.msra.mxu0 %v1256
      %1386 = vmatprep.subr.bf16.mxu0 %v1259
      %1387 = vmatpush1.bf16.msra.mxu0 %v1258
      %1388 = vmatprep.subr.bf16.mxu0 %v1261
      %1389 = vmatpush1.bf16.msra.mxu0 %v1260
      %1390 = vmatprep.subr.bf16.mxu0 %v1263
      %1391 = vmatpush1.bf16.msra.mxu0 %v1262
      %1392 = vmatprep.subr.bf16.mxu0 %v1265
      %1393 = vmatpush1.bf16.msra.mxu0 %v1264
      %1394 = vmatprep.subr.bf16.mxu0 %v1267
      %1395 = vmatpush1.bf16.msra.mxu0 %v1266
      %1396 = vmatprep.subr.bf16.mxu0 %v1269
      %1397 = vmatpush1.bf16.msra.mxu0 %v1268
      %1398 = vmatprep.subr.bf16.mxu0 %v1271
      %1399 = vmatpush1.bf16.msra.mxu0 %v1270
      %1400 = vmatprep.subr.bf16.mxu0 %v1273
      %1401 = vmatpush1.bf16.msra.mxu0 %v1272
      %1402 = vmatprep.subr.bf16.mxu0 %v1275
      %1403 = vmatpush1.bf16.msra.mxu0 %v1274
      %1404 = vmatprep.subr.bf16.mxu0 %v1277
      %1405 = vmatpush1.bf16.msra.mxu0 %v1276
      %1406 = vmatprep.mubr.bf16.mxu0 %v927
      %1407 = vmatmul.mubr.bf16.gmra.mrb[0].mxu0 %v926
      %v1408 = vpop.f32.mrb[0].mxu0
      %v1409 = vadd.f32 0.0, %v1408
      %v1410 = vpop.f32.mrb[0].mxu0
      %v1411 = vadd.f32 0.0, %v1410
      %v1412 = vpop.f32.mrb[0].mxu0
      %v1413 = vadd.f32 0.0, %v1412
      %v1414 = vpop.f32.mrb[0].mxu0
      %v1415 = vadd.f32 0.0, %v1414
      %1416 = vmatprep.mubr.bf16.mxu0 %v931
      %1417 = vmatmul.mubr.bf16.gmra.mrb[0].mxu0 %v930
      %v1418 = vpop.f32.mrb[0].mxu0
      %v1419 = vadd.f32 0.0, %v1418
      %v1420 = vpop.f32.mrb[0].mxu0
      %v1421 = vadd.f32 0.0, %v1420
      %v1422 = vpop.f32.mrb[0].mxu0
      %v1423 = vadd.f32 0.0, %v1422
      %v1424 = vpop.f32.mrb[0].mxu0
      %v1425 = vadd.f32 0.0, %v1424
      %1426 = vmatprep.mubr.bf16.mxu0 %v935
      %1427 = vmatmul.mubr.bf16.gmra.mrb[0].mxu0 %v934
      %v1428 = vpop.f32.mrb[0].mxu0
      %v1429 = vadd.f32 0.0, %v1428
      %v1430 = vpop.f32.mrb[0].mxu0
      %v1431 = vadd.f32 0.0, %v1430
      %v1432 = vpop.f32.mrb[0].mxu0
      %v1433 = vadd.f32 0.0, %v1432
      %v1434 = vpop.f32.mrb[0].mxu0
      %v1435 = vadd.f32 0.0, %v1434
      %1436 = vmatprep.mubr.bf16.mxu0 %v939
      %1437 = vmatmul.mubr.bf16.gmra.mrb[0].mxu0 %v938
      %v1438 = vpop.f32.mrb[0].mxu0
      %v1439 = vadd.f32 0.0, %v1438
      %v1440 = vpop.f32.mrb[0].mxu0
      %v1441 = vadd.f32 0.0, %v1440
      %v1442 = vpop.f32.mrb[0].mxu0
      %v1443 = vadd.f32 0.0, %v1442
      %v1444 = vpop.f32.mrb[0].mxu0
      %v1445 = vadd.f32 0.0, %v1444
      %1446 = vmatprep.mubr.bf16.mxu0 %v943
      %1447 = vmatmul.mubr.bf16.gmra.mrb[0].mxu0 %v942
      %v1448 = vpop.f32.mrb[0].mxu0
      %v1449 = vadd.f32 0.0, %v1448
      %v1450 = vpop.f32.mrb[0].mxu0
      %v1451 = vadd.f32 0.0, %v1450
      %v1452 = vpop.f32.mrb[0].mxu0
      %v1453 = vadd.f32 0.0, %v1452
      %v1454 = vpop.f32.mrb[0].mxu0
      %v1455 = vadd.f32 0.0, %v1454
      %1456 = vmatprep.mubr.bf16.mxu0 %v947
      %1457 = vmatmul.mubr.bf16.gmra.mrb[0].mxu0 %v946
      %v1458 = vpop.f32.mrb[0].mxu0
      %v1459 = vadd.f32 0.0, %v1458
      %v1460 = vpop.f32.mrb[0].mxu0
      %v1461 = vadd.f32 0.0, %v1460
      %v1462 = vpop.f32.mrb[0].mxu0
      %v1463 = vadd.f32 0.0, %v1462
      %v1464 = vpop.f32.mrb[0].mxu0
      %v1465 = vadd.f32 0.0, %v1464
      %1466 = vmatprep.mubr.bf16.mxu0 %v951
      %1467 = vmatmul.mubr.bf16.gmra.mrb[0].mxu0 %v950
      %v1468 = vpop.f32.mrb[0].mxu0
      %v1469 = vadd.f32 0.0, %v1468
      %v1470 = vpop.f32.mrb[0].mxu0
      %v1471 = vadd.f32 0.0, %v1470
      %v1472 = vpop.f32.mrb[0].mxu0
      %v1473 = vadd.f32 0.0, %v1472
      %v1474 = vpop.f32.mrb[0].mxu0
      %v1475 = vadd.f32 0.0, %v1474
      %1476 = vmatprep.mubr.bf16.mxu0 %v955
      %1477 = vmatmul.mubr.bf16.gmra.mrb[0].mxu0 %v954
      %v1478 = vpop.f32.mrb[0].mxu0
      %v1479 = vadd.f32 0.0, %v1478
      %v1480 = vpop.f32.mrb[0].mxu0
      %v1481 = vadd.f32 0.0, %v1480
      %v1482 = vpop.f32.mrb[0].mxu0
      %v1483 = vadd.f32 0.0, %v1482
      %v1484 = vpop.f32.mrb[0].mxu0
      %v1485 = vadd.f32 0.0, %v1484
      %1486 = vmatprep.mubr.bf16.mxu0 %v959
      %1487 = vmatmul.mubr.bf16.gmra.mrb[0].mxu0 %v958
      %v1488 = vpop.f32.mrb[0].mxu0
      %v1489 = vadd.f32 0.0, %v1488
      %v1490 = vpop.f32.mrb[0].mxu0
      %v1491 = vadd.f32 0.0, %v1490
      %v1492 = vpop.f32.mrb[0].mxu0
      %v1493 = vadd.f32 0.0, %v1492
      %v1494 = vpop.f32.mrb[0].mxu0
      %v1495 = vadd.f32 0.0, %v1494
      %1496 = vmatprep.mubr.bf16.mxu0 %v963
      %1497 = vmatmul.mubr.bf16.gmra.mrb[0].mxu0 %v962
      %v1498 = vpop.f32.mrb[0].mxu0
      %v1499 = vadd.f32 0.0, %v1498
      %v1500 = vpop.f32.mrb[0].mxu0
      %v1501 = vadd.f32 0.0, %v1500
      %v1502 = vpop.f32.mrb[0].mxu0
      %v1503 = vadd.f32 0.0, %v1502
      %v1504 = vpop.f32.mrb[0].mxu0
      %v1505 = vadd.f32 0.0, %v1504
      %1506 = vmatprep.mubr.bf16.mxu0 %v967
      %1507 = vmatmul.mubr.bf16.gmra.mrb[0].mxu0 %v966
      %v1508 = vpop.f32.mrb[0].mxu0
      %v1509 = vadd.f32 0.0, %v1508
      %v1510 = vpop.f32.mrb[0].mxu0
      %v1511 = vadd.f32 0.0, %v1510
      %v1512 = vpop.f32.mrb[0].mxu0
      %v1513 = vadd.f32 0.0, %v1512
      %v1514 = vpop.f32.mrb[0].mxu0
      %v1515 = vadd.f32 0.0, %v1514
      %1516 = vmatprep.mubr.bf16.mxu0 %v971
      %1517 = vmatmul.mubr.bf16.gmra.mrb[0].mxu0 %v970
      %v1518 = vpop.f32.mrb[0].mxu0
      %v1519 = vadd.f32 0.0, %v1518
      %v1520 = vpop.f32.mrb[0].mxu0
      %v1521 = vadd.f32 0.0, %v1520
      %v1522 = vpop.f32.mrb[0].mxu0
      %v1523 = vadd.f32 0.0, %v1522
      %v1524 = vpop.f32.mrb[0].mxu0
      %v1525 = vadd.f32 0.0, %v1524
      %1526 = vmatprep.mubr.bf16.mxu0 %v975
      %1527 = vmatmul.mubr.bf16.gmra.mrb[0].mxu0 %v974
      %v1528 = vpop.f32.mrb[0].mxu0
      %v1529 = vadd.f32 0.0, %v1528
      %v1530 = vpop.f32.mrb[0].mxu0
      %v1531 = vadd.f32 0.0, %v1530
      %v1532 = vpop.f32.mrb[0].mxu0
      %v1533 = vadd.f32 0.0, %v1532
      %v1534 = vpop.f32.mrb[0].mxu0
      %v1535 = vadd.f32 0.0, %v1534
      %1536 = vmatprep.mubr.bf16.mxu0 %v979
      %1537 = vmatmul.mubr.bf16.gmra.mrb[0].mxu0 %v978
      %v1538 = vpop.f32.mrb[0].mxu0
      %v1539 = vadd.f32 0.0, %v1538
      %v1540 = vpop.f32.mrb[0].mxu0
      %v1541 = vadd.f32 0.0, %v1540
      %v1542 = vpop.f32.mrb[0].mxu0
      %v1543 = vadd.f32 0.0, %v1542
      %v1544 = vpop.f32.mrb[0].mxu0
      %v1545 = vadd.f32 0.0, %v1544
      %1546 = vmatprep.mubr.bf16.mxu0 %v983
      %1547 = vmatmul.mubr.bf16.gmra.mrb[0].mxu0 %v982
      %v1548 = vpop.f32.mrb[0].mxu0
      %v1549 = vadd.f32 0.0, %v1548
      %v1550 = vpop.f32.mrb[0].mxu0
      %v1551 = vadd.f32 0.0, %v1550
      %v1552 = vpop.f32.mrb[0].mxu0
      %v1553 = vadd.f32 0.0, %v1552
      %v1554 = vpop.f32.mrb[0].mxu0
      %v1555 = vadd.f32 0.0, %v1554
      %1556 = vmatprep.mubr.bf16.mxu0 %v987
      %1557 = vmatmul.mubr.bf16.gmra.mrb[0].mxu0 %v986
      %v1558 = vpop.f32.mrb[0].mxu0
      %v1559 = vadd.f32 0.0, %v1558
      %v1560 = vpop.f32.mrb[0].mxu0
      %v1561 = vadd.f32 0.0, %v1560
      %v1562 = vpop.f32.mrb[0].mxu0
      %v1563 = vadd.f32 0.0, %v1562
      %v1564 = vpop.f32.mrb[0].mxu0
      %v1565 = vadd.f32 0.0, %v1564
      %1566 = vdwg.mxu0
      %1567 = vmatprep.subr.bf16.mxu0 %v1279
      %1568 = vmatpush1.bf16.msra.mxu0 %v1278
      %1569 = vmatprep.subr.bf16.mxu0 %v1281
      %1570 = vmatpush1.bf16.msra.mxu0 %v1280
      %1571 = vmatprep.subr.bf16.mxu0 %v1283
      %1572 = vmatpush1.bf16.msra.mxu0 %v1282
      %1573 = vmatprep.subr.bf16.mxu0 %v1285
      %1574 = vmatpush1.bf16.msra.mxu0 %v1284
      %1575 = vmatprep.subr.bf16.mxu0 %v1287
      %1576 = vmatpush1.bf16.msra.mxu0 %v1286
      %1577 = vmatprep.subr.bf16.mxu0 %v1289
      %1578 = vmatpush1.bf16.msra.mxu0 %v1288
      %1579 = vmatprep.subr.bf16.mxu0 %v1291
      %1580 = vmatpush1.bf16.msra.mxu0 %v1290
      %1581 = vmatprep.subr.bf16.mxu0 %v1293
      %1582 = vmatpush1.bf16.msra.mxu0 %v1292
      %1583 = vmatprep.subr.bf16.mxu0 %v1295
      %1584 = vmatpush1.bf16.msra.mxu0 %v1294
      %1585 = vmatprep.subr.bf16.mxu0 %v1297
      %1586 = vmatpush1.bf16.msra.mxu0 %v1296
      %1587 = vmatprep.subr.bf16.mxu0 %v1299
      %1588 = vmatpush1.bf16.msra.mxu0 %v1298
      %1589 = vmatprep.subr.bf16.mxu0 %v1301
      %1590 = vmatpush1.bf16.msra.mxu0 %v1300
      %1591 = vmatprep.subr.bf16.mxu0 %v1303
      %1592 = vmatpush1.bf16.msra.mxu0 %v1302
      %1593 = vmatprep.subr.bf16.mxu0 %v1305
      %1594 = vmatpush1.bf16.msra.mxu0 %v1304
      %1595 = vmatprep.subr.bf16.mxu0 %v1307
      %1596 = vmatpush1.bf16.msra.mxu0 %v1306
      %1597 = vmatprep.subr.bf16.mxu0 %v1309
      %1598 = vmatpush1.bf16.msra.mxu0 %v1308
      %1599 = vmatprep.mubr.bf16.mxu0 %v929
      %1600 = vmatmul.mubr.bf16.gmra.mrb[0].mxu0 %v928
      %v1601 = vpop.f32.mrb[0].mxu0
      %v1602 = vadd.f32 %v1409, %v1601
      %v1603 = vpop.f32.mrb[0].mxu0
      %v1604 = vadd.f32 %v1411, %v1603
      %v1605 = vpop.f32.mrb[0].mxu0
      %v1606 = vadd.f32 %v1413, %v1605
      %v1607 = vpop.f32.mrb[0].mxu0
      %v1608 = vadd.f32 %v1415, %v1607
      %1609 = vmatprep.mubr.bf16.mxu0 %v933
      %1610 = vmatmul.mubr.bf16.gmra.mrb[0].mxu0 %v932
      %v1611 = vpop.f32.mrb[0].mxu0
      %v1612 = vadd.f32 %v1419, %v1611
      %v1613 = vpop.f32.mrb[0].mxu0
      %v1614 = vadd.f32 %v1421, %v1613
      %v1615 = vpop.f32.mrb[0].mxu0
      %v1616 = vadd.f32 %v1423, %v1615
      %v1617 = vpop.f32.mrb[0].mxu0
      %v1618 = vadd.f32 %v1425, %v1617
      %1619 = vmatprep.mubr.bf16.mxu0 %v937
      %1620 = vmatmul.mubr.bf16.gmra.mrb[0].mxu0 %v936
      %v1621 = vpop.f32.mrb[0].mxu0
      %v1622 = vadd.f32 %v1429, %v1621
      %v1623 = vpop.f32.mrb[0].mxu0
      %v1624 = vadd.f32 %v1431, %v1623
      %v1625 = vpop.f32.mrb[0].mxu0
      %v1626 = vadd.f32 %v1433, %v1625
      %v1627 = vpop.f32.mrb[0].mxu0
      %v1628 = vadd.f32 %v1435, %v1627
      %1629 = vmatprep.mubr.bf16.mxu0 %v941
      %1630 = vmatmul.mubr.bf16.gmra.mrb[0].mxu0 %v940
      %v1631 = vpop.f32.mrb[0].mxu0
      %v1632 = vadd.f32 %v1439, %v1631
      %v1633 = vpop.f32.mrb[0].mxu0
      %v1634 = vadd.f32 %v1441, %v1633
      %v1635 = vpop.f32.mrb[0].mxu0
      %v1636 = vadd.f32 %v1443, %v1635
      %v1637 = vpop.f32.mrb[0].mxu0
      %v1638 = vadd.f32 %v1445, %v1637
      %1639 = vmatprep.mubr.bf16.mxu0 %v945
      %1640 = vmatmul.mubr.bf16.gmra.mrb[0].mxu0 %v944
      %v1641 = vpop.f32.mrb[0].mxu0
      %v1642 = vadd.f32 %v1449, %v1641
      %v1643 = vpop.f32.mrb[0].mxu0
      %v1644 = vadd.f32 %v1451, %v1643
      %v1645 = vpop.f32.mrb[0].mxu0
      %v1646 = vadd.f32 %v1453, %v1645
      %v1647 = vpop.f32.mrb[0].mxu0
      %v1648 = vadd.f32 %v1455, %v1647
      %1649 = vmatprep.mubr.bf16.mxu0 %v949
      %1650 = vmatmul.mubr.bf16.gmra.mrb[0].mxu0 %v948
      %v1651 = vpop.f32.mrb[0].mxu0
      %v1652 = vadd.f32 %v1459, %v1651
      %v1653 = vpop.f32.mrb[0].mxu0
      %v1654 = vadd.f32 %v1461, %v1653
      %v1655 = vpop.f32.mrb[0].mxu0
      %v1656 = vadd.f32 %v1463, %v1655
      %v1657 = vpop.f32.mrb[0].mxu0
      %v1658 = vadd.f32 %v1465, %v1657
      %1659 = vmatprep.mubr.bf16.mxu0 %v953
      %1660 = vmatmul.mubr.bf16.gmra.mrb[0].mxu0 %v952
      %v1661 = vpop.f32.mrb[0].mxu0
      %v1662 = vadd.f32 %v1469, %v1661
      %v1663 = vpop.f32.mrb[0].mxu0
      %v1664 = vadd.f32 %v1471, %v1663
      %v1665 = vpop.f32.mrb[0].mxu0
      %v1666 = vadd.f32 %v1473, %v1665
      %v1667 = vpop.f32.mrb[0].mxu0
      %v1668 = vadd.f32 %v1475, %v1667
      %1669 = vmatprep.mubr.bf16.mxu0 %v957
      %1670 = vmatmul.mubr.bf16.gmra.mrb[0].mxu0 %v956
      %v1671 = vpop.f32.mrb[0].mxu0
      %v1672 = vadd.f32 %v1479, %v1671
      %v1673 = vpop.f32.mrb[0].mxu0
      %v1674 = vadd.f32 %v1481, %v1673
      %v1675 = vpop.f32.mrb[0].mxu0
      %v1676 = vadd.f32 %v1483, %v1675
      %v1677 = vpop.f32.mrb[0].mxu0
      %v1678 = vadd.f32 %v1485, %v1677
      %1679 = vmatprep.mubr.bf16.mxu0 %v961
      %1680 = vmatmul.mubr.bf16.gmra.mrb[0].mxu0 %v960
      %v1681 = vpop.f32.mrb[0].mxu0
      %v1682 = vadd.f32 %v1489, %v1681
      %v1683 = vpop.f32.mrb[0].mxu0
      %v1684 = vadd.f32 %v1491, %v1683
      %v1685 = vpop.f32.mrb[0].mxu0
      %v1686 = vadd.f32 %v1493, %v1685
      %v1687 = vpop.f32.mrb[0].mxu0
      %v1688 = vadd.f32 %v1495, %v1687
      %1689 = vmatprep.mubr.bf16.mxu0 %v965
      %1690 = vmatmul.mubr.bf16.gmra.mrb[0].mxu0 %v964
      %v1691 = vpop.f32.mrb[0].mxu0
      %v1692 = vadd.f32 %v1499, %v1691
      %v1693 = vpop.f32.mrb[0].mxu0
      %v1694 = vadd.f32 %v1501, %v1693
      %v1695 = vpop.f32.mrb[0].mxu0
      %v1696 = vadd.f32 %v1503, %v1695
      %v1697 = vpop.f32.mrb[0].mxu0
      %v1698 = vadd.f32 %v1505, %v1697
      %1699 = vmatprep.mubr.bf16.mxu0 %v969
      %1700 = vmatmul.mubr.bf16.gmra.mrb[0].mxu0 %v968
      %v1701 = vpop.f32.mrb[0].mxu0
      %v1702 = vadd.f32 %v1509, %v1701
      %v1703 = vpop.f32.mrb[0].mxu0
      %v1704 = vadd.f32 %v1511, %v1703
      %v1705 = vpop.f32.mrb[0].mxu0
      %v1706 = vadd.f32 %v1513, %v1705
      %v1707 = vpop.f32.mrb[0].mxu0
      %v1708 = vadd.f32 %v1515, %v1707
      %1709 = vmatprep.mubr.bf16.mxu0 %v973
      %1710 = vmatmul.mubr.bf16.gmra.mrb[0].mxu0 %v972
      %v1711 = vpop.f32.mrb[0].mxu0
      %v1712 = vadd.f32 %v1519, %v1711
      %v1713 = vpop.f32.mrb[0].mxu0
      %v1714 = vadd.f32 %v1521, %v1713
      %v1715 = vpop.f32.mrb[0].mxu0
      %v1716 = vadd.f32 %v1523, %v1715
      %v1717 = vpop.f32.mrb[0].mxu0
      %v1718 = vadd.f32 %v1525, %v1717
      %1719 = vmatprep.mubr.bf16.mxu0 %v977
      %1720 = vmatmul.mubr.bf16.gmra.mrb[0].mxu0 %v976
      %v1721 = vpop.f32.mrb[0].mxu0
      %v1722 = vadd.f32 %v1529, %v1721
      %v1723 = vpop.f32.mrb[0].mxu0
      %v1724 = vadd.f32 %v1531, %v1723
      %v1725 = vpop.f32.mrb[0].mxu0
      %v1726 = vadd.f32 %v1533, %v1725
      %v1727 = vpop.f32.mrb[0].mxu0
      %v1728 = vadd.f32 %v1535, %v1727
      %1729 = vmatprep.mubr.bf16.mxu0 %v981
      %1730 = vmatmul.mubr.bf16.gmra.mrb[0].mxu0 %v980
      %v1731 = vpop.f32.mrb[0].mxu0
      %v1732 = vadd.f32 %v1539, %v1731
      %v1733 = vpop.f32.mrb[0].mxu0
      %v1734 = vadd.f32 %v1541, %v1733
      %v1735 = vpop.f32.mrb[0].mxu0
      %v1736 = vadd.f32 %v1543, %v1735
      %v1737 = vpop.f32.mrb[0].mxu0
      %v1738 = vadd.f32 %v1545, %v1737
      %1739 = vmatprep.mubr.bf16.mxu0 %v985
      %1740 = vmatmul.mubr.bf16.gmra.mrb[0].mxu0 %v984
      %v1741 = vpop.f32.mrb[0].mxu0
      %v1742 = vadd.f32 %v1549, %v1741
      %v1743 = vpop.f32.mrb[0].mxu0
      %v1744 = vadd.f32 %v1551, %v1743
      %v1745 = vpop.f32.mrb[0].mxu0
      %v1746 = vadd.f32 %v1553, %v1745
      %v1747 = vpop.f32.mrb[0].mxu0
      %v1748 = vadd.f32 %v1555, %v1747
      %1749 = vmatprep.mubr.bf16.mxu0 %v989
      %1750 = vmatmul.mubr.bf16.gmra.mrb[0].mxu0 %v988
      %v1751 = vpop.f32.mrb[0].mxu0
      %v1752 = vadd.f32 %v1559, %v1751
      %v1753 = vpop.f32.mrb[0].mxu0
      %v1754 = vadd.f32 %v1561, %v1753
      %v1755 = vpop.f32.mrb[0].mxu0
      %v1756 = vadd.f32 %v1563, %v1755
      %v1757 = vpop.f32.mrb[0].mxu0
      %v1758 = vadd.f32 %v1565, %v1757
      %1759 = vdwg.mxu0
      %v1760 = vadd.f32 %v542, %v1602
      %v1761 = vadd.f32 %v543, %v1604
      %v1762 = vadd.f32 %v544, %v1606
      %v1763 = vadd.f32 %v545, %v1608
      %v1764 = vadd.f32 %v546, %v1612
      %v1765 = vadd.f32 %v547, %v1614
      %v1766 = vadd.f32 %v548, %v1616
      %v1767 = vadd.f32 %v549, %v1618
      %v1768 = vadd.f32 %v550, %v1622
      %v1769 = vadd.f32 %v551, %v1624
      %v1770 = vadd.f32 %v552, %v1626
      %v1771 = vadd.f32 %v553, %v1628
      %v1772 = vadd.f32 %v554, %v1632
      %v1773 = vadd.f32 %v555, %v1634
      %v1774 = vadd.f32 %v556, %v1636
      %v1775 = vadd.f32 %v557, %v1638
      %v1776 = vadd.f32 %v558, %v1642
      %v1777 = vadd.f32 %v559, %v1644
      %v1778 = vadd.f32 %v560, %v1646
      %v1779 = vadd.f32 %v561, %v1648
      %v1780 = vadd.f32 %v562, %v1652
      %v1781 = vadd.f32 %v563, %v1654
      %v1782 = vadd.f32 %v564, %v1656
      %v1783 = vadd.f32 %v565, %v1658
      %v1784 = vadd.f32 %v566, %v1662
      %v1785 = vadd.f32 %v567, %v1664
      %v1786 = vadd.f32 %v568, %v1666
      %v1787 = vadd.f32 %v569, %v1668
      %v1788 = vadd.f32 %v570, %v1672
      %v1789 = vadd.f32 %v571, %v1674
      %v1790 = vadd.f32 %v572, %v1676
      %v1791 = vadd.f32 %v573, %v1678
      %v1792 = vadd.f32 %v574, %v1682
      %v1793 = vadd.f32 %v575, %v1684
      %v1794 = vadd.f32 %v576, %v1686
      %v1795 = vadd.f32 %v577, %v1688
      %v1796 = vadd.f32 %v578, %v1692
      %v1797 = vadd.f32 %v579, %v1694
      %v1798 = vadd.f32 %v580, %v1696
      %v1799 = vadd.f32 %v581, %v1698
      %v1800 = vadd.f32 %v582, %v1702
      %v1801 = vadd.f32 %v583, %v1704
      %v1802 = vadd.f32 %v584, %v1706
      %v1803 = vadd.f32 %v585, %v1708
      %v1804 = vadd.f32 %v586, %v1712
      %v1805 = vadd.f32 %v587, %v1714
      %v1806 = vadd.f32 %v588, %v1716
      %v1807 = vadd.f32 %v589, %v1718
      %v1808 = vadd.f32 %v590, %v1722
      %v1809 = vadd.f32 %v591, %v1724
      %v1810 = vadd.f32 %v592, %v1726
      %v1811 = vadd.f32 %v593, %v1728
      %v1812 = vadd.f32 %v594, %v1732
      %v1813 = vadd.f32 %v595, %v1734
      %v1814 = vadd.f32 %v596, %v1736
      %v1815 = vadd.f32 %v597, %v1738
      %v1816 = vadd.f32 %v598, %v1742
      %v1817 = vadd.f32 %v599, %v1744
      %v1818 = vadd.f32 %v600, %v1746
      %v1819 = vadd.f32 %v601, %v1748
      %v1820 = vadd.f32 %v602, %v1752
      %v1821 = vadd.f32 %v603, %v1754
      %v1822 = vadd.f32 %v604, %v1756
      %v1823 = vadd.f32 %v605, %v1758
      %1824 = vst [vmem:[#allocation2] sm:$0xff] %v1760
      %1825 = vst [vmem:[#allocation2 + $0x8] sm:$0xff] %v1761
      %1826 = vst [vmem:[#allocation2 + $0x10] sm:$0xff] %v1762
      %1827 = vst [vmem:[#allocation2 + $0x18] sm:$0xff] %v1763
      %1828 = vst [vmem:[#allocation2 + $0x20] sm:$0xff] %v1764
      %1829 = vst [vmem:[#allocation2 + $0x28] sm:$0xff] %v1765
      %1830 = vst [vmem:[#allocation2 + $0x30] sm:$0xff] %v1766
      %1831 = vst [vmem:[#allocation2 + $0x38] sm:$0xff] %v1767
      %1832 = vst [vmem:[#allocation2 + $0x40] sm:$0xff] %v1768
      %1833 = vst [vmem:[#allocation2 + $0x48] sm:$0xff] %v1769
      %1834 = vst [vmem:[#allocation2 + $0x50] sm:$0xff] %v1770
      %1835 = vst [vmem:[#allocation2 + $0x58] sm:$0xff] %v1771
      %1836 = vst [vmem:[#allocation2 + $0x60] sm:$0xff] %v1772
      %1837 = vst [vmem:[#allocation2 + $0x68] sm:$0xff] %v1773
      %1838 = vst [vmem:[#allocation2 + $0x70] sm:$0xff] %v1774
      %1839 = vst [vmem:[#allocation2 + $0x78] sm:$0xff] %v1775
      %1840 = vst [vmem:[#allocation2 + $0x80] sm:$0xff] %v1776
      %1841 = vst [vmem:[#allocation2 + $0x88] sm:$0xff] %v1777
      %1842 = vst [vmem:[#allocation2 + $0x90] sm:$0xff] %v1778
      %1843 = vst [vmem:[#allocation2 + $0x98] sm:$0xff] %v1779
      %1844 = vst [vmem:[#allocation2 + $0xa0] sm:$0xff] %v1780
      %1845 = vst [vmem:[#allocation2 + $0xa8] sm:$0xff] %v1781
      %1846 = vst [vmem:[#allocation2 + $0xb0] sm:$0xff] %v1782
      %1847 = vst [vmem:[#allocation2 + $0xb8] sm:$0xff] %v1783
      %1848 = vst [vmem:[#allocation2 + $0xc0] sm:$0xff] %v1784
      %1849 = vst [vmem:[#allocation2 + $0xc8] sm:$0xff] %v1785
      %1850 = vst [vmem:[#allocation2 + $0xd0] sm:$0xff] %v1786
      %1851 = vst [vmem:[#allocation2 + $0xd8] sm:$0xff] %v1787
      %1852 = vst [vmem:[#allocation2 + $0xe0] sm:$0xff] %v1788
      %1853 = vst [vmem:[#allocation2 + $0xe8] sm:$0xff] %v1789
      %1854 = vst [vmem:[#allocation2 + $0xf0] sm:$0xff] %v1790
      %1855 = vst [vmem:[#allocation2 + $0xf8] sm:$0xff] %v1791
      %1856 = vst [vmem:[#allocation2 + $0x100] sm:$0xff] %v1792
      %1857 = vst [vmem:[#allocation2 + $0x108] sm:$0xff] %v1793
      %1858 = vst [vmem:[#allocation2 + $0x110] sm:$0xff] %v1794
      %1859 = vst [vmem:[#allocation2 + $0x118] sm:$0xff] %v1795
      %1860 = vst [vmem:[#allocation2 + $0x120] sm:$0xff] %v1796
      %1861 = vst [vmem:[#allocation2 + $0x128] sm:$0xff] %v1797
      %1862 = vst [vmem:[#allocation2 + $0x130] sm:$0xff] %v1798
      %1863 = vst [vmem:[#allocation2 + $0x138] sm:$0xff] %v1799
      %1864 = vst [vmem:[#allocation2 + $0x140] sm:$0xff] %v1800
      %1865 = vst [vmem:[#allocation2 + $0x148] sm:$0xff] %v1801
      %1866 = vst [vmem:[#allocation2 + $0x150] sm:$0xff] %v1802
      %1867 = vst [vmem:[#allocation2 + $0x158] sm:$0xff] %v1803
      %1868 = vst [vmem:[#allocation2 + $0x160] sm:$0xff] %v1804
      %1869 = vst [vmem:[#allocation2 + $0x168] sm:$0xff] %v1805
      %1870 = vst [vmem:[#allocation2 + $0x170] sm:$0xff] %v1806
      %1871 = vst [vmem:[#allocation2 + $0x178] sm:$0xff] %v1807
      %1872 = vst [vmem:[#allocation2 + $0x180] sm:$0xff] %v1808
      %1873 = vst [vmem:[#allocation2 + $0x188] sm:$0xff] %v1809
      %1874 = vst [vmem:[#allocation2 + $0x190] sm:$0xff] %v1810
      %1875 = vst [vmem:[#allocation2 + $0x198] sm:$0xff] %v1811
      %1876 = vst [vmem:[#allocation2 + $0x1a0] sm:$0xff] %v1812
      %1877 = vst [vmem:[#allocation2 + $0x1a8] sm:$0xff] %v1813
      %1878 = vst [vmem:[#allocation2 + $0x1b0] sm:$0xff] %v1814
      %1879 = vst [vmem:[#allocation2 + $0x1b8] sm:$0xff] %v1815
      %1880 = vst [vmem:[#allocation2 + $0x1c0] sm:$0xff] %v1816
      %1881 = vst [vmem:[#allocation2 + $0x1c8] sm:$0xff] %v1817
      %1882 = vst [vmem:[#allocation2 + $0x1d0] sm:$0xff] %v1818
      %1883 = vst [vmem:[#allocation2 + $0x1d8] sm:$0xff] %v1819
      %1884 = vst [vmem:[#allocation2 + $0x1e0] sm:$0xff] %v1820
      %1885 = vst [vmem:[#allocation2 + $0x1e8] sm:$0xff] %v1821
      %1886 = vst [vmem:[#allocation2 + $0x1f0] sm:$0xff] %v1822
      %1887 = vst [vmem:[#allocation2 + $0x1f8] sm:$0xff] %v1823
      // Predicated region
      $region69: #{gin_forward.3} parent=63 // pred_check
        %p1888 = pneg %p474
      $region70: #{gin_forward.3} parent=63 // pred_check_branch
        %1890 = sbr.rel (%p1888) target = $region72
      $region71: #{gin_forward.3} parent=63 // pred_region
        %v1891 = vld [vmem:[#allocation2] sm:$0xff]
        %v1892 = vld [vmem:[#allocation2 + $0x8] sm:$0xff]
        %v1893 = vld [vmem:[#allocation2 + $0x10] sm:$0xff]
        %v1894 = vld [vmem:[#allocation2 + $0x18] sm:$0xff]
        %v1895 = vld [vmem:[#allocation2 + $0x20] sm:$0xff]
        %v1896 = vld [vmem:[#allocation2 + $0x28] sm:$0xff]
        %v1897 = vld [vmem:[#allocation2 + $0x30] sm:$0xff]
        %v1898 = vld [vmem:[#allocation2 + $0x38] sm:$0xff]
        %v1899 = vld [vmem:[#allocation2 + $0x40] sm:$0xff]
        %v1900 = vld [vmem:[#allocation2 + $0x48] sm:$0xff]
        %v1901 = vld [vmem:[#allocation2 + $0x50] sm:$0xff]
        %v1902 = vld [vmem:[#allocation2 + $0x58] sm:$0xff]
        %v1903 = vld [vmem:[#allocation2 + $0x60] sm:$0xff]
        %v1904 = vld [vmem:[#allocation2 + $0x68] sm:$0xff]
        %v1905 = vld [vmem:[#allocation2 + $0x70] sm:$0xff]
        %v1906 = vld [vmem:[#allocation2 + $0x78] sm:$0xff]
        %v1907 = vld [vmem:[#allocation2 + $0x80] sm:$0xff]
        %v1908 = vld [vmem:[#allocation2 + $0x88] sm:$0xff]
        %v1909 = vld [vmem:[#allocation2 + $0x90] sm:$0xff]
        %v1910 = vld [vmem:[#allocation2 + $0x98] sm:$0xff]
        %v1911 = vld [vmem:[#allocation2 + $0xa0] sm:$0xff]
        %v1912 = vld [vmem:[#allocation2 + $0xa8] sm:$0xff]
        %v1913 = vld [vmem:[#allocation2 + $0xb0] sm:$0xff]
        %v1914 = vld [vmem:[#allocation2 + $0xb8] sm:$0xff]
        %v1915 = vld [vmem:[#allocation2 + $0xc0] sm:$0xff]
        %v1916 = vld [vmem:[#allocation2 + $0xc8] sm:$0xff]
        %v1917 = vld [vmem:[#allocation2 + $0xd0] sm:$0xff]
        %v1918 = vld [vmem:[#allocation2 + $0xd8] sm:$0xff]
        %v1919 = vld [vmem:[#allocation2 + $0xe0] sm:$0xff]
        %v1920 = vld [vmem:[#allocation2 + $0xe8] sm:$0xff]
        %v1921 = vld [vmem:[#allocation2 + $0xf0] sm:$0xff]
        %v1922 = vld [vmem:[#allocation2 + $0xf8] sm:$0xff]
        %v1923 = vld [vmem:[#allocation2 + $0x100] sm:$0xff]
        %v1924 = vld [vmem:[#allocation2 + $0x108] sm:$0xff]
        %v1925 = vld [vmem:[#allocation2 + $0x110] sm:$0xff]
        %v1926 = vld [vmem:[#allocation2 + $0x118] sm:$0xff]
        %v1927 = vld [vmem:[#allocation2 + $0x120] sm:$0xff]
        %v1928 = vld [vmem:[#allocation2 + $0x128] sm:$0xff]
        %v1929 = vld [vmem:[#allocation2 + $0x130] sm:$0xff]
        %v1930 = vld [vmem:[#allocation2 + $0x138] sm:$0xff]
        %v1931 = vld [vmem:[#allocation2 + $0x140] sm:$0xff]
        %v1932 = vld [vmem:[#allocation2 + $0x148] sm:$0xff]
        %v1933 = vld [vmem:[#allocation2 + $0x150] sm:$0xff]
        %v1934 = vld [vmem:[#allocation2 + $0x158] sm:$0xff]
        %v1935 = vld [vmem:[#allocation2 + $0x160] sm:$0xff]
        %v1936 = vld [vmem:[#allocation2 + $0x168] sm:$0xff]
        %v1937 = vld [vmem:[#allocation2 + $0x170] sm:$0xff]
        %v1938 = vld [vmem:[#allocation2 + $0x178] sm:$0xff]
        %v1939 = vld [vmem:[#allocation2 + $0x180] sm:$0xff]
        %v1940 = vld [vmem:[#allocation2 + $0x188] sm:$0xff]
        %v1941 = vld [vmem:[#allocation2 + $0x190] sm:$0xff]
        %v1942 = vld [vmem:[#allocation2 + $0x198] sm:$0xff]
        %v1943 = vld [vmem:[#allocation2 + $0x1a0] sm:$0xff]
        %v1944 = vld [vmem:[#allocation2 + $0x1a8] sm:$0xff]
        %v1945 = vld [vmem:[#allocation2 + $0x1b0] sm:$0xff]
        %v1946 = vld [vmem:[#allocation2 + $0x1b8] sm:$0xff]
        %v1947 = vld [vmem:[#allocation2 + $0x1c0] sm:$0xff]
        %v1948 = vld [vmem:[#allocation2 + $0x1c8] sm:$0xff]
        %v1949 = vld [vmem:[#allocation2 + $0x1d0] sm:$0xff]
        %v1950 = vld [vmem:[#allocation2 + $0x1d8] sm:$0xff]
        %v1951 = vld [vmem:[#allocation2 + $0x1e0] sm:$0xff]
        %v1952 = vld [vmem:[#allocation2 + $0x1e8] sm:$0xff]
        %v1953 = vld [vmem:[#allocation2 + $0x1f0] sm:$0xff]
        %v1954 = vld [vmem:[#allocation2 + $0x1f8] sm:$0xff]
        %v1955 = vld [vmem:[%s464] sm:$0xff]
        %v1956 = vld [vmem:[%s464 + $0x8] sm:$0xff]
        %v1957 = vld [vmem:[%s464 + $0x10] sm:$0xff]
        %v1958 = vld [vmem:[%s464 + $0x18] sm:$0xff]
        %v1959 = vld [vmem:[%s464 + $0x20] sm:$0xff]
        %v1960 = vld [vmem:[%s464 + $0x28] sm:$0xff]
        %v1961 = vld [vmem:[%s464 + $0x30] sm:$0xff]
        %v1962 = vld [vmem:[%s464 + $0x38] sm:$0xff]
        %v1963 = vld [vmem:[%s464 + $0x40] sm:$0xff]
        %v1964 = vld [vmem:[%s464 + $0x48] sm:$0xff]
        %v1965 = vld [vmem:[%s464 + $0x50] sm:$0xff]
        %v1966 = vld [vmem:[%s464 + $0x58] sm:$0xff]
        %v1967 = vld [vmem:[%s464 + $0x60] sm:$0xff]
        %v1968 = vld [vmem:[%s464 + $0x68] sm:$0xff]
        %v1969 = vld [vmem:[%s464 + $0x70] sm:$0xff]
        %v1970 = vld [vmem:[%s464 + $0x78] sm:$0xff]
        %v1971 = vld [vmem:[%s464 + $0x80] sm:$0xff]
        %v1972 = vld [vmem:[%s464 + $0x88] sm:$0xff]
        %v1973 = vld [vmem:[%s464 + $0x90] sm:$0xff]
        %v1974 = vld [vmem:[%s464 + $0x98] sm:$0xff]
        %v1975 = vld [vmem:[%s464 + $0xa0] sm:$0xff]
        %v1976 = vld [vmem:[%s464 + $0xa8] sm:$0xff]
        %v1977 = vld [vmem:[%s464 + $0xb0] sm:$0xff]
        %v1978 = vld [vmem:[%s464 + $0xb8] sm:$0xff]
        %v1979 = vld [vmem:[%s464 + $0xc0] sm:$0xff]
        %v1980 = vld [vmem:[%s464 + $0xc8] sm:$0xff]
        %v1981 = vld [vmem:[%s464 + $0xd0] sm:$0xff]
        %v1982 = vld [vmem:[%s464 + $0xd8] sm:$0xff]
        %v1983 = vld [vmem:[%s464 + $0xe0] sm:$0xff]
        %v1984 = vld [vmem:[%s464 + $0xe8] sm:$0xff]
        %v1985 = vld [vmem:[%s464 + $0xf0] sm:$0xff]
        %v1986 = vld [vmem:[%s464 + $0xf8] sm:$0xff]
        %v1987 = vpack.c.bf16 %v1893, %v1891
        %v1988 = vpack.c.bf16 %v1897, %v1895
        %v1989 = vpack.c.bf16 %v1901, %v1899
        %v1990 = vpack.c.bf16 %v1905, %v1903
        %v1991 = vpack.c.bf16 %v1909, %v1907
        %v1992 = vpack.c.bf16 %v1913, %v1911
        %v1993 = vpack.c.bf16 %v1917, %v1915
        %v1994 = vpack.c.bf16 %v1921, %v1919
        %v1995 = vpack.c.bf16 %v1925, %v1923
        %v1996 = vpack.c.bf16 %v1929, %v1927
        %v1997 = vpack.c.bf16 %v1933, %v1931
        %v1998 = vpack.c.bf16 %v1937, %v1935
        %v1999 = vpack.c.bf16 %v1941, %v1939
        %v2000 = vpack.c.bf16 %v1945, %v1943
        %v2001 = vpack.c.bf16 %v1949, %v1947
        %v2002 = vpack.c.bf16 %v1953, %v1951
        %v2003 = vld [vmem:[%s3] sm:$0xf]
        %v2004 = vld [vmem:[%s3 + $0x4] sm:$0xf]
        %v2005 = vld [vmem:[%s3 + $0x8] sm:$0xf]
        %v2006 = vld [vmem:[%s3 + $0xc] sm:$0xf]
        %v2007 = vld [vmem:[%s3 + $0x10] sm:$0xf]
        %v2008 = vld [vmem:[%s3 + $0x14] sm:$0xf]
        %v2009 = vld [vmem:[%s3 + $0x18] sm:$0xf]
        %v2010 = vld [vmem:[%s3 + $0x1c] sm:$0xf]
        %v2011 = vld [vmem:[%s3 + $0x20] sm:$0xf]
        %v2012 = vld [vmem:[%s3 + $0x24] sm:$0xf]
        %v2013 = vld [vmem:[%s3 + $0x28] sm:$0xf]
        %v2014 = vld [vmem:[%s3 + $0x2c] sm:$0xf]
        %v2015 = vld [vmem:[%s3 + $0x30] sm:$0xf]
        %v2016 = vld [vmem:[%s3 + $0x34] sm:$0xf]
        %v2017 = vld [vmem:[%s3 + $0x38] sm:$0xf]
        %v2018 = vld [vmem:[%s3 + $0x3c] sm:$0xf]
        %v2019 = vld [vmem:[%s4] sm:$0x1]
        %v2021 = vlaneseq
        %v2022 = vshrl.u32 %v2021, 7
        %v2023 = vsub.s32 0, %v2022
        %v2024 = vrot.slane %v2019, %v2023
        %v2042 = vunpack.c.l.b16 %v2003
        %v2043 = vunpack.c.l.b16 %v2004
        %v2044 = vunpack.c.l.b16 %v2005
        %v2045 = vunpack.c.l.b16 %v2006
        %v2046 = vunpack.c.l.b16 %v2007
        %v2047 = vunpack.c.l.b16 %v2008
        %v2048 = vunpack.c.l.b16 %v2009
        %v2049 = vunpack.c.l.b16 %v2010
        %v2050 = vunpack.c.l.b16 %v2011
        %v2051 = vunpack.c.l.b16 %v2012
        %v2052 = vunpack.c.l.b16 %v2013
        %v2053 = vunpack.c.l.b16 %v2014
        %v2054 = vunpack.c.l.b16 %v2015
        %v2055 = vunpack.c.l.b16 %v2016
        %v2056 = vunpack.c.l.b16 %v2017
        %v2057 = vunpack.c.l.b16 %v2018
        %v2058 = vpack.c.b16 %v2043, %v2042
        %v2059 = vpack.c.b16 %v2045, %v2044
        %v2060 = vpack.c.b16 %v2047, %v2046
        %v2061 = vpack.c.b16 %v2049, %v2048
        %v2062 = vpack.c.b16 %v2051, %v2050
        %v2063 = vpack.c.b16 %v2053, %v2052
        %v2064 = vpack.c.b16 %v2055, %v2054
        %v2065 = vpack.c.b16 %v2057, %v2056
        %2074 = vmatprep.subr.bf16.mxu0 0
        %2075 = vmatpush1.bf16.msra.mxu0 %v2058
        %2076 = vmatprep.subr.bf16.mxu0 0
        %2077 = vmatpush1.bf16.msra.mxu0 %v2059
        %2078 = vmatprep.subr.bf16.mxu0 0
        %2079 = vmatpush1.bf16.msra.mxu0 %v2060
        %2080 = vmatprep.subr.bf16.mxu0 0
        %2081 = vmatpush1.bf16.msra.mxu0 %v2061
        %2082 = vmatprep.subr.bf16.mxu0 0
        %2083 = vmatpush1.bf16.msra.mxu0 %v2062
        %2084 = vmatprep.subr.bf16.mxu0 0
        %2085 = vmatpush1.bf16.msra.mxu0 %v2063
        %2086 = vmatprep.subr.bf16.mxu0 0
        %2087 = vmatpush1.bf16.msra.mxu0 %v2064
        %2088 = vmatprep.subr.bf16.mxu0 0
        %2089 = vmatpush1.bf16.msra.mxu0 %v2065
        %2090 = vmatprep.subr.bf16.mxu0 0
        %2091 = vmatpush1.bf16.msra.mxu0 0
        %2092 = vmatprep.subr.bf16.mxu0 0
        %2093 = vmatpush1.bf16.msra.mxu0 0
        %2094 = vmatprep.subr.bf16.mxu0 0
        %2095 = vmatpush1.bf16.msra.mxu0 0
        %2096 = vmatprep.subr.bf16.mxu0 0
        %2097 = vmatpush1.bf16.msra.mxu0 0
        %2098 = vmatprep.subr.bf16.mxu0 0
        %2099 = vmatpush1.bf16.msra.mxu0 0
        %2100 = vmatprep.subr.bf16.mxu0 0
        %2101 = vmatpush1.bf16.msra.mxu0 0
        %2102 = vmatprep.subr.bf16.mxu0 0
        %2103 = vmatpush1.bf16.msra.mxu0 0
        %2104 = vmatprep.subr.bf16.mxu0 0
        %2105 = vmatpush1.bf16.msra.mxu0 0
        %2106 = vmatprep.mubr.bf16.mxu0 0
        %2107 = vmatmul.mubr.bf16.gmra.mrb[0].mxu0 %v1987
        %v2108 = vpop.f32.mrb[0].mxu0
        %v2109 = vadd.f32 %v2024, %v2108
        %v2110 = vpop.f32.mrb[0].mxu0
        %v2111 = vpop.f32.mrb[0].mxu0
        %v2112 = vadd.f32 %v2024, %v2111
        %v2113 = vpop.f32.mrb[0].mxu0
        %2114 = vmatprep.mubr.bf16.mxu0 0
        %2115 = vmatmul.mubr.bf16.gmra.mrb[0].mxu0 %v1988
        %v2116 = vpop.f32.mrb[0].mxu0
        %v2117 = vadd.f32 %v2024, %v2116
        %v2118 = vpop.f32.mrb[0].mxu0
        %v2119 = vpop.f32.mrb[0].mxu0
        %v2120 = vadd.f32 %v2024, %v2119
        %v2121 = vpop.f32.mrb[0].mxu0
        %2122 = vmatprep.mubr.bf16.mxu0 0
        %2123 = vmatmul.mubr.bf16.gmra.mrb[0].mxu0 %v1989
        %v2124 = vpop.f32.mrb[0].mxu0
        %v2125 = vadd.f32 %v2024, %v2124
        %v2126 = vpop.f32.mrb[0].mxu0
        %v2127 = vpop.f32.mrb[0].mxu0
        %v2128 = vadd.f32 %v2024, %v2127
        %v2129 = vpop.f32.mrb[0].mxu0
        %2130 = vmatprep.mubr.bf16.mxu0 0
        %2131 = vmatmul.mubr.bf16.gmra.mrb[0].mxu0 %v1990
        %v2132 = vpop.f32.mrb[0].mxu0
        %v2133 = vadd.f32 %v2024, %v2132
        %v2134 = vpop.f32.mrb[0].mxu0
        %v2135 = vpop.f32.mrb[0].mxu0
        %v2136 = vadd.f32 %v2024, %v2135
        %v2137 = vpop.f32.mrb[0].mxu0
        %2138 = vmatprep.mubr.bf16.mxu0 0
        %2139 = vmatmul.mubr.bf16.gmra.mrb[0].mxu0 %v1991
        %v2140 = vpop.f32.mrb[0].mxu0
        %v2141 = vadd.f32 %v2024, %v2140
        %v2142 = vpop.f32.mrb[0].mxu0
        %v2143 = vpop.f32.mrb[0].mxu0
        %v2144 = vadd.f32 %v2024, %v2143
        %v2145 = vpop.f32.mrb[0].mxu0
        %2146 = vmatprep.mubr.bf16.mxu0 0
        %2147 = vmatmul.mubr.bf16.gmra.mrb[0].mxu0 %v1992
        %v2148 = vpop.f32.mrb[0].mxu0
        %v2149 = vadd.f32 %v2024, %v2148
        %v2150 = vpop.f32.mrb[0].mxu0
        %v2151 = vpop.f32.mrb[0].mxu0
        %v2152 = vadd.f32 %v2024, %v2151
        %v2153 = vpop.f32.mrb[0].mxu0
        %2154 = vmatprep.mubr.bf16.mxu0 0
        %2155 = vmatmul.mubr.bf16.gmra.mrb[0].mxu0 %v1993
        %v2156 = vpop.f32.mrb[0].mxu0
        %v2157 = vadd.f32 %v2024, %v2156
        %v2158 = vpop.f32.mrb[0].mxu0
        %v2159 = vpop.f32.mrb[0].mxu0
        %v2160 = vadd.f32 %v2024, %v2159
        %v2161 = vpop.f32.mrb[0].mxu0
        %2162 = vmatprep.mubr.bf16.mxu0 0
        %2163 = vmatmul.mubr.bf16.gmra.mrb[0].mxu0 %v1994
        %v2164 = vpop.f32.mrb[0].mxu0
        %v2165 = vadd.f32 %v2024, %v2164
        %v2166 = vpop.f32.mrb[0].mxu0
        %v2167 = vpop.f32.mrb[0].mxu0
        %v2168 = vadd.f32 %v2024, %v2167
        %v2169 = vpop.f32.mrb[0].mxu0
        %2170 = vmatprep.mubr.bf16.mxu0 0
        %2171 = vmatmul.mubr.bf16.gmra.mrb[0].mxu0 %v1995
        %v2172 = vpop.f32.mrb[0].mxu0
        %v2173 = vadd.f32 %v2024, %v2172
        %v2174 = vpop.f32.mrb[0].mxu0
        %v2175 = vpop.f32.mrb[0].mxu0
        %v2176 = vadd.f32 %v2024, %v2175
        %v2177 = vpop.f32.mrb[0].mxu0
        %2178 = vmatprep.mubr.bf16.mxu0 0
        %2179 = vmatmul.mubr.bf16.gmra.mrb[0].mxu0 %v1996
        %v2180 = vpop.f32.mrb[0].mxu0
        %v2181 = vadd.f32 %v2024, %v2180
        %v2182 = vpop.f32.mrb[0].mxu0
        %v2183 = vpop.f32.mrb[0].mxu0
        %v2184 = vadd.f32 %v2024, %v2183
        %v2185 = vpop.f32.mrb[0].mxu0
        %2186 = vmatprep.mubr.bf16.mxu0 0
        %2187 = vmatmul.mubr.bf16.gmra.mrb[0].mxu0 %v1997
        %v2188 = vpop.f32.mrb[0].mxu0
        %v2189 = vadd.f32 %v2024, %v2188
        %v2190 = vpop.f32.mrb[0].mxu0
        %v2191 = vpop.f32.mrb[0].mxu0
        %v2192 = vadd.f32 %v2024, %v2191
        %v2193 = vpop.f32.mrb[0].mxu0
        %2194 = vmatprep.mubr.bf16.mxu0 0
        %2195 = vmatmul.mubr.bf16.gmra.mrb[0].mxu0 %v1998
        %v2196 = vpop.f32.mrb[0].mxu0
        %v2197 = vadd.f32 %v2024, %v2196
        %v2198 = vpop.f32.mrb[0].mxu0
        %v2199 = vpop.f32.mrb[0].mxu0
        %v2200 = vadd.f32 %v2024, %v2199
        %v2201 = vpop.f32.mrb[0].mxu0
        %2202 = vmatprep.mubr.bf16.mxu0 0
        %2203 = vmatmul.mubr.bf16.gmra.mrb[0].mxu0 %v1999
        %v2204 = vpop.f32.mrb[0].mxu0
        %v2205 = vadd.f32 %v2024, %v2204
        %v2206 = vpop.f32.mrb[0].mxu0
        %v2207 = vpop.f32.mrb[0].mxu0
        %v2208 = vadd.f32 %v2024, %v2207
        %v2209 = vpop.f32.mrb[0].mxu0
        %2210 = vmatprep.mubr.bf16.mxu0 0
        %2211 = vmatmul.mubr.bf16.gmra.mrb[0].mxu0 %v2000
        %v2212 = vpop.f32.mrb[0].mxu0
        %v2213 = vadd.f32 %v2024, %v2212
        %v2214 = vpop.f32.mrb[0].mxu0
        %v2215 = vpop.f32.mrb[0].mxu0
        %v2216 = vadd.f32 %v2024, %v2215
        %v2217 = vpop.f32.mrb[0].mxu0
        %2218 = vmatprep.mubr.bf16.mxu0 0
        %2219 = vmatmul.mubr.bf16.gmra.mrb[0].mxu0 %v2001
        %v2220 = vpop.f32.mrb[0].mxu0
        %v2221 = vadd.f32 %v2024, %v2220
        %v2222 = vpop.f32.mrb[0].mxu0
        %v2223 = vpop.f32.mrb[0].mxu0
        %v2224 = vadd.f32 %v2024, %v2223
        %v2225 = vpop.f32.mrb[0].mxu0
        %2226 = vmatprep.mubr.bf16.mxu0 0
        %2227 = vmatmul.mubr.bf16.gmra.mrb[0].mxu0 %v2002
        %v2228 = vpop.f32.mrb[0].mxu0
        %v2229 = vadd.f32 %v2024, %v2228
        %v2230 = vpop.f32.mrb[0].mxu0
        %v2231 = vpop.f32.mrb[0].mxu0
        %v2232 = vadd.f32 %v2024, %v2231
        %v2233 = vpop.f32.mrb[0].mxu0
        %2234 = vdwg.mxu0
        %v2235 = vmax.f32 %v2109, 0.0
        %v2236 = vmax.f32 %v2112, 0.0
        %v2237 = vmax.f32 %v2117, 0.0
        %v2238 = vmax.f32 %v2120, 0.0
        %v2239 = vmax.f32 %v2125, 0.0
        %v2240 = vmax.f32 %v2128, 0.0
        %v2241 = vmax.f32 %v2133, 0.0
        %v2242 = vmax.f32 %v2136, 0.0
        %v2243 = vmax.f32 %v2141, 0.0
        %v2244 = vmax.f32 %v2144, 0.0
        %v2245 = vmax.f32 %v2149, 0.0
        %v2246 = vmax.f32 %v2152, 0.0
        %v2247 = vmax.f32 %v2157, 0.0
        %v2248 = vmax.f32 %v2160, 0.0
        %v2249 = vmax.f32 %v2165, 0.0
        %v2250 = vmax.f32 %v2168, 0.0
        %v2251 = vmax.f32 %v2173, 0.0
        %v2252 = vmax.f32 %v2176, 0.0
        %v2253 = vmax.f32 %v2181, 0.0
        %v2254 = vmax.f32 %v2184, 0.0
        %v2255 = vmax.f32 %v2189, 0.0
        %v2256 = vmax.f32 %v2192, 0.0
        %v2257 = vmax.f32 %v2197, 0.0
        %v2258 = vmax.f32 %v2200, 0.0
        %v2259 = vmax.f32 %v2205, 0.0
        %v2260 = vmax.f32 %v2208, 0.0
        %v2261 = vmax.f32 %v2213, 0.0
        %v2262 = vmax.f32 %v2216, 0.0
        %v2263 = vmax.f32 %v2221, 0.0
        %v2264 = vmax.f32 %v2224, 0.0
        %v2265 = vmax.f32 %v2229, 0.0
        %v2266 = vmax.f32 %v2232, 0.0
        %v2267 = vld [vmem:[%s5] sm:$0xf]
        %v2268 = vld [vmem:[%s5 + $0x4] sm:$0xf]
        %v2269 = vld [vmem:[%s5 + $0x8] sm:$0xf]
        %v2270 = vld [vmem:[%s5 + $0xc] sm:$0xf]
        %v2271 = vld [vmem:[%s5 + $0x10] sm:$0xf]
        %v2272 = vld [vmem:[%s5 + $0x14] sm:$0xf]
        %v2273 = vld [vmem:[%s5 + $0x18] sm:$0xf]
        %v2274 = vld [vmem:[%s5 + $0x1c] sm:$0xf]
        %v2275 = vld [vmem:[%s5 + $0x20] sm:$0xf]
        %v2276 = vld [vmem:[%s5 + $0x24] sm:$0xf]
        %v2277 = vld [vmem:[%s5 + $0x28] sm:$0xf]
        %v2278 = vld [vmem:[%s5 + $0x2c] sm:$0xf]
        %v2279 = vld [vmem:[%s5 + $0x30] sm:$0xf]
        %v2280 = vld [vmem:[%s5 + $0x34] sm:$0xf]
        %v2281 = vld [vmem:[%s5 + $0x38] sm:$0xf]
        %v2282 = vld [vmem:[%s5 + $0x3c] sm:$0xf]
        %v2283 = vld [vmem:[%s6] sm:$0x1]
        %v2285 = vlaneseq
        %v2286 = vshrl.u32 %v2285, 7
        %v2287 = vsub.s32 0, %v2286
        %v2288 = vrot.slane %v2283, %v2287
        %v2322 = vunpack.c.l.b16 %v1955
        %v2323 = vunpack.c.l.b16 %v1956
        %v2324 = vunpack.c.l.b16 %v1957
        %v2325 = vunpack.c.l.b16 %v1958
        %v2326 = vunpack.c.l.b16 %v1959
        %v2327 = vunpack.c.l.b16 %v1960
        %v2328 = vunpack.c.l.b16 %v1961
        %v2329 = vunpack.c.l.b16 %v1962
        %v2330 = vunpack.c.l.b16 %v1963
        %v2331 = vunpack.c.l.b16 %v1964
        %v2332 = vunpack.c.l.b16 %v1965
        %v2333 = vunpack.c.l.b16 %v1966
        %v2334 = vunpack.c.l.b16 %v1967
        %v2335 = vunpack.c.l.b16 %v1968
        %v2336 = vunpack.c.l.b16 %v1969
        %v2337 = vunpack.c.l.b16 %v1970
        %v2338 = vunpack.c.l.b16 %v1971
        %v2339 = vunpack.c.l.b16 %v1972
        %v2340 = vunpack.c.l.b16 %v1973
        %v2341 = vunpack.c.l.b16 %v1974
        %v2342 = vunpack.c.l.b16 %v1975
        %v2343 = vunpack.c.l.b16 %v1976
        %v2344 = vunpack.c.l.b16 %v1977
        %v2345 = vunpack.c.l.b16 %v1978
        %v2346 = vunpack.c.l.b16 %v1979
        %v2347 = vunpack.c.l.b16 %v1980
        %v2348 = vunpack.c.l.b16 %v1981
        %v2349 = vunpack.c.l.b16 %v1982
        %v2350 = vunpack.c.l.b16 %v1983
        %v2351 = vunpack.c.l.b16 %v1984
        %v2352 = vunpack.c.l.b16 %v1985
        %v2353 = vunpack.c.l.b16 %v1986
        %v2354 = vpack.c.b16 %v2323, %v2322
        %v2355 = vpack.c.b16 %v2325, %v2324
        %v2356 = vpack.c.b16 %v2327, %v2326
        %v2357 = vpack.c.b16 %v2329, %v2328
        %v2358 = vpack.c.b16 %v2331, %v2330
        %v2359 = vpack.c.b16 %v2333, %v2332
        %v2360 = vpack.c.b16 %v2335, %v2334
        %v2361 = vpack.c.b16 %v2337, %v2336
        %v2362 = vpack.c.b16 %v2339, %v2338
        %v2363 = vpack.c.b16 %v2341, %v2340
        %v2364 = vpack.c.b16 %v2343, %v2342
        %v2365 = vpack.c.b16 %v2345, %v2344
        %v2366 = vpack.c.b16 %v2347, %v2346
        %v2367 = vpack.c.b16 %v2349, %v2348
        %v2368 = vpack.c.b16 %v2351, %v2350
        %v2369 = vpack.c.b16 %v2353, %v2352
        %v2402 = vunpack.c.l.b16 %v2267
        %v2403 = vunpack.c.l.b16 %v2268
        %v2404 = vunpack.c.l.b16 %v2269
        %v2405 = vunpack.c.l.b16 %v2270
        %v2406 = vunpack.c.l.b16 %v2271
        %v2407 = vunpack.c.l.b16 %v2272
        %v2408 = vunpack.c.l.b16 %v2273
        %v2409 = vunpack.c.l.b16 %v2274
        %v2410 = vunpack.c.l.b16 %v2275
        %v2411 = vunpack.c.l.b16 %v2276
        %v2412 = vunpack.c.l.b16 %v2277
        %v2413 = vunpack.c.l.b16 %v2278
        %v2414 = vunpack.c.l.b16 %v2279
        %v2415 = vunpack.c.l.b16 %v2280
        %v2416 = vunpack.c.l.b16 %v2281
        %v2417 = vunpack.c.l.b16 %v2282
        %v2418 = vpack.c.b16 %v2403, %v2402
        %v2419 = vpack.c.b16 %v2405, %v2404
        %v2420 = vpack.c.b16 %v2407, %v2406
        %v2421 = vpack.c.b16 %v2409, %v2408
        %v2422 = vpack.c.b16 %v2411, %v2410
        %v2423 = vpack.c.b16 %v2413, %v2412
        %v2424 = vpack.c.b16 %v2415, %v2414
        %v2425 = vpack.c.b16 %v2417, %v2416
        %2434 = vmatprep.subr.bf16.mxu0 0
        %2435 = vmatpush1.bf16.msra.mxu0 %v2418
        %2436 = vmatprep.subr.bf16.mxu0 0
        %2437 = vmatpush1.bf16.msra.mxu0 %v2419
        %2438 = vmatprep.subr.bf16.mxu0 0
        %2439 = vmatpush1.bf16.msra.mxu0 %v2420
        %2440 = vmatprep.subr.bf16.mxu0 0
        %2441 = vmatpush1.bf16.msra.mxu0 %v2421
        %2442 = vmatprep.subr.bf16.mxu0 0
        %2443 = vmatpush1.bf16.msra.mxu0 %v2422
        %2444 = vmatprep.subr.bf16.mxu0 0
        %2445 = vmatpush1.bf16.msra.mxu0 %v2423
        %2446 = vmatprep.subr.bf16.mxu0 0
        %2447 = vmatpush1.bf16.msra.mxu0 %v2424
        %2448 = vmatprep.subr.bf16.mxu0 0
        %2449 = vmatpush1.bf16.msra.mxu0 %v2425
        %2450 = vmatprep.subr.bf16.mxu0 0
        %2451 = vmatpush1.bf16.msra.mxu0 0
        %2452 = vmatprep.subr.bf16.mxu0 0
        %2453 = vmatpush1.bf16.msra.mxu0 0
        %2454 = vmatprep.subr.bf16.mxu0 0
        %2455 = vmatpush1.bf16.msra.mxu0 0
        %2456 = vmatprep.subr.bf16.mxu0 0
        %2457 = vmatpush1.bf16.msra.mxu0 0
        %2458 = vmatprep.subr.bf16.mxu0 0
        %2459 = vmatpush1.bf16.msra.mxu0 0
        %2460 = vmatprep.subr.bf16.mxu0 0
        %2461 = vmatpush1.bf16.msra.mxu0 0
        %2462 = vmatprep.subr.bf16.mxu0 0
        %2463 = vmatpush1.bf16.msra.mxu0 0
        %2464 = vmatprep.subr.bf16.mxu0 0
        %2465 = vmatpush1.bf16.msra.mxu0 0
        %2466 = vmatprep.mubr.bf16.mxu0 0
        %2467 = vmatmul.mubr.bf16.gmra.mrb[0].mxu0 %v2354
        %v2468 = vpop.f32.mrb[0].mxu0
        %v2469 = vadd.f32 %v2288, %v2468
        %v2470 = vpop.f32.mrb[0].mxu0
        %v2471 = vpop.f32.mrb[0].mxu0
        %v2472 = vadd.f32 %v2288, %v2471
        %v2473 = vpop.f32.mrb[0].mxu0
        %2474 = vmatprep.mubr.bf16.mxu0 0
        %2475 = vmatmul.mubr.bf16.gmra.mrb[0].mxu0 %v2355
        %v2476 = vpop.f32.mrb[0].mxu0
        %v2477 = vadd.f32 %v2288, %v2476
        %v2478 = vpop.f32.mrb[0].mxu0
        %v2479 = vpop.f32.mrb[0].mxu0
        %v2480 = vadd.f32 %v2288, %v2479
        %v2481 = vpop.f32.mrb[0].mxu0
        %2482 = vmatprep.mubr.bf16.mxu0 0
        %2483 = vmatmul.mubr.bf16.gmra.mrb[0].mxu0 %v2356
        %v2484 = vpop.f32.mrb[0].mxu0
        %v2485 = vadd.f32 %v2288, %v2484
        %v2486 = vpop.f32.mrb[0].mxu0
        %v2487 = vpop.f32.mrb[0].mxu0
        %v2488 = vadd.f32 %v2288, %v2487
        %v2489 = vpop.f32.mrb[0].mxu0
        %2490 = vmatprep.mubr.bf16.mxu0 0
        %2491 = vmatmul.mubr.bf16.gmra.mrb[0].mxu0 %v2357
        %v2492 = vpop.f32.mrb[0].mxu0
        %v2493 = vadd.f32 %v2288, %v2492
        %v2494 = vpop.f32.mrb[0].mxu0
        %v2495 = vpop.f32.mrb[0].mxu0
        %v2496 = vadd.f32 %v2288, %v2495
        %v2497 = vpop.f32.mrb[0].mxu0
        %2498 = vmatprep.mubr.bf16.mxu0 0
        %2499 = vmatmul.mubr.bf16.gmra.mrb[0].mxu0 %v2358
        %v2500 = vpop.f32.mrb[0].mxu0
        %v2501 = vadd.f32 %v2288, %v2500
        %v2502 = vpop.f32.mrb[0].mxu0
        %v2503 = vpop.f32.mrb[0].mxu0
        %v2504 = vadd.f32 %v2288, %v2503
        %v2505 = vpop.f32.mrb[0].mxu0
        %2506 = vmatprep.mubr.bf16.mxu0 0
        %2507 = vmatmul.mubr.bf16.gmra.mrb[0].mxu0 %v2359
        %v2508 = vpop.f32.mrb[0].mxu0
        %v2509 = vadd.f32 %v2288, %v2508
        %v2510 = vpop.f32.mrb[0].mxu0
        %v2511 = vpop.f32.mrb[0].mxu0
        %v2512 = vadd.f32 %v2288, %v2511
        %v2513 = vpop.f32.mrb[0].mxu0
        %2514 = vmatprep.mubr.bf16.mxu0 0
        %2515 = vmatmul.mubr.bf16.gmra.mrb[0].mxu0 %v2360
        %v2516 = vpop.f32.mrb[0].mxu0
        %v2517 = vadd.f32 %v2288, %v2516
        %v2518 = vpop.f32.mrb[0].mxu0
        %v2519 = vpop.f32.mrb[0].mxu0
        %v2520 = vadd.f32 %v2288, %v2519
        %v2521 = vpop.f32.mrb[0].mxu0
        %2522 = vmatprep.mubr.bf16.mxu0 0
        %2523 = vmatmul.mubr.bf16.gmra.mrb[0].mxu0 %v2361
        %v2524 = vpop.f32.mrb[0].mxu0
        %v2525 = vadd.f32 %v2288, %v2524
        %v2526 = vpop.f32.mrb[0].mxu0
        %v2527 = vpop.f32.mrb[0].mxu0
        %v2528 = vadd.f32 %v2288, %v2527
        %v2529 = vpop.f32.mrb[0].mxu0
        %2530 = vmatprep.mubr.bf16.mxu0 0
        %2531 = vmatmul.mubr.bf16.gmra.mrb[0].mxu0 %v2362
        %v2532 = vpop.f32.mrb[0].mxu0
        %v2533 = vadd.f32 %v2288, %v2532
        %v2534 = vpop.f32.mrb[0].mxu0
        %v2535 = vpop.f32.mrb[0].mxu0
        %v2536 = vadd.f32 %v2288, %v2535
        %v2537 = vpop.f32.mrb[0].mxu0
        %2538 = vmatprep.mubr.bf16.mxu0 0
        %2539 = vmatmul.mubr.bf16.gmra.mrb[0].mxu0 %v2363
        %v2540 = vpop.f32.mrb[0].mxu0
        %v2541 = vadd.f32 %v2288, %v2540
        %v2542 = vpop.f32.mrb[0].mxu0
        %v2543 = vpop.f32.mrb[0].mxu0
        %v2544 = vadd.f32 %v2288, %v2543
        %v2545 = vpop.f32.mrb[0].mxu0
        %2546 = vmatprep.mubr.bf16.mxu0 0
        %2547 = vmatmul.mubr.bf16.gmra.mrb[0].mxu0 %v2364
        %v2548 = vpop.f32.mrb[0].mxu0
        %v2549 = vadd.f32 %v2288, %v2548
        %v2550 = vpop.f32.mrb[0].mxu0
        %v2551 = vpop.f32.mrb[0].mxu0
        %v2552 = vadd.f32 %v2288, %v2551
        %v2553 = vpop.f32.mrb[0].mxu0
        %2554 = vmatprep.mubr.bf16.mxu0 0
        %2555 = vmatmul.mubr.bf16.gmra.mrb[0].mxu0 %v2365
        %v2556 = vpop.f32.mrb[0].mxu0
        %v2557 = vadd.f32 %v2288, %v2556
        %v2558 = vpop.f32.mrb[0].mxu0
        %v2559 = vpop.f32.mrb[0].mxu0
        %v2560 = vadd.f32 %v2288, %v2559
        %v2561 = vpop.f32.mrb[0].mxu0
        %2562 = vmatprep.mubr.bf16.mxu0 0
        %2563 = vmatmul.mubr.bf16.gmra.mrb[0].mxu0 %v2366
        %v2564 = vpop.f32.mrb[0].mxu0
        %v2565 = vadd.f32 %v2288, %v2564
        %v2566 = vpop.f32.mrb[0].mxu0
        %v2567 = vpop.f32.mrb[0].mxu0
        %v2568 = vadd.f32 %v2288, %v2567
        %v2569 = vpop.f32.mrb[0].mxu0
        %2570 = vmatprep.mubr.bf16.mxu0 0
        %2571 = vmatmul.mubr.bf16.gmra.mrb[0].mxu0 %v2367
        %v2572 = vpop.f32.mrb[0].mxu0
        %v2573 = vadd.f32 %v2288, %v2572
        %v2574 = vpop.f32.mrb[0].mxu0
        %v2575 = vpop.f32.mrb[0].mxu0
        %v2576 = vadd.f32 %v2288, %v2575
        %v2577 = vpop.f32.mrb[0].mxu0
        %2578 = vmatprep.mubr.bf16.mxu0 0
        %2579 = vmatmul.mubr.bf16.gmra.mrb[0].mxu0 %v2368
        %v2580 = vpop.f32.mrb[0].mxu0
        %v2581 = vadd.f32 %v2288, %v2580
        %v2582 = vpop.f32.mrb[0].mxu0
        %v2583 = vpop.f32.mrb[0].mxu0
        %v2584 = vadd.f32 %v2288, %v2583
        %v2585 = vpop.f32.mrb[0].mxu0
        %2586 = vmatprep.mubr.bf16.mxu0 0
        %2587 = vmatmul.mubr.bf16.gmra.mrb[0].mxu0 %v2369
        %v2588 = vpop.f32.mrb[0].mxu0
        %v2589 = vadd.f32 %v2288, %v2588
        %v2590 = vpop.f32.mrb[0].mxu0
        %v2591 = vpop.f32.mrb[0].mxu0
        %v2592 = vadd.f32 %v2288, %v2591
        %v2593 = vpop.f32.mrb[0].mxu0
        %2594 = vdwg.mxu0
        %v2595 = vmax.f32 %v2469, 0.0
        %v2596 = vmax.f32 %v2472, 0.0
        %v2597 = vmax.f32 %v2477, 0.0
        %v2598 = vmax.f32 %v2480, 0.0
        %v2599 = vmax.f32 %v2485, 0.0
        %v2600 = vmax.f32 %v2488, 0.0
        %v2601 = vmax.f32 %v2493, 0.0
        %v2602 = vmax.f32 %v2496, 0.0
        %v2603 = vmax.f32 %v2501, 0.0
        %v2604 = vmax.f32 %v2504, 0.0
        %v2605 = vmax.f32 %v2509, 0.0
        %v2606 = vmax.f32 %v2512, 0.0
        %v2607 = vmax.f32 %v2517, 0.0
        %v2608 = vmax.f32 %v2520, 0.0
        %v2609 = vmax.f32 %v2525, 0.0
        %v2610 = vmax.f32 %v2528, 0.0
        %v2611 = vmax.f32 %v2533, 0.0
        %v2612 = vmax.f32 %v2536, 0.0
        %v2613 = vmax.f32 %v2541, 0.0
        %v2614 = vmax.f32 %v2544, 0.0
        %v2615 = vmax.f32 %v2549, 0.0
        %v2616 = vmax.f32 %v2552, 0.0
        %v2617 = vmax.f32 %v2557, 0.0
        %v2618 = vmax.f32 %v2560, 0.0
        %v2619 = vmax.f32 %v2565, 0.0
        %v2620 = vmax.f32 %v2568, 0.0
        %v2621 = vmax.f32 %v2573, 0.0
        %v2622 = vmax.f32 %v2576, 0.0
        %v2623 = vmax.f32 %v2581, 0.0
        %v2624 = vmax.f32 %v2584, 0.0
        %v2625 = vmax.f32 %v2589, 0.0
        %v2626 = vmax.f32 %v2592, 0.0
        %v2627 = vadd.f32 %v2235, %v2595
        %v2628 = vadd.f32 %v2236, %v2596
        %v2629 = vadd.f32 %v2237, %v2597
        %v2630 = vadd.f32 %v2238, %v2598
        %v2631 = vadd.f32 %v2239, %v2599
        %v2632 = vadd.f32 %v2240, %v2600
        %v2633 = vadd.f32 %v2241, %v2601
        %v2634 = vadd.f32 %v2242, %v2602
        %v2635 = vadd.f32 %v2243, %v2603
        %v2636 = vadd.f32 %v2244, %v2604
        %v2637 = vadd.f32 %v2245, %v2605
        %v2638 = vadd.f32 %v2246, %v2606
        %v2639 = vadd.f32 %v2247, %v2607
        %v2640 = vadd.f32 %v2248, %v2608
        %v2641 = vadd.f32 %v2249, %v2609
        %v2642 = vadd.f32 %v2250, %v2610
        %v2643 = vadd.f32 %v2251, %v2611
        %v2644 = vadd.f32 %v2252, %v2612
        %v2645 = vadd.f32 %v2253, %v2613
        %v2646 = vadd.f32 %v2254, %v2614
        %v2647 = vadd.f32 %v2255, %v2615
        %v2648 = vadd.f32 %v2256, %v2616
        %v2649 = vadd.f32 %v2257, %v2617
        %v2650 = vadd.f32 %v2258, %v2618
        %v2651 = vadd.f32 %v2259, %v2619
        %v2652 = vadd.f32 %v2260, %v2620
        %v2653 = vadd.f32 %v2261, %v2621
        %v2654 = vadd.f32 %v2262, %v2622
        %v2655 = vadd.f32 %v2263, %v2623
        %v2656 = vadd.f32 %v2264, %v2624
        %v2657 = vadd.f32 %v2265, %v2625
        %v2658 = vadd.f32 %v2266, %v2626
        %v2659 = vpack.c.bf16 %v2628, %v2627
        %v2660 = vpack.c.bf16 %v2630, %v2629
        %v2661 = vpack.c.bf16 %v2632, %v2631
        %v2662 = vpack.c.bf16 %v2634, %v2633
        %v2663 = vpack.c.bf16 %v2636, %v2635
        %v2664 = vpack.c.bf16 %v2638, %v2637
        %v2665 = vpack.c.bf16 %v2640, %v2639
        %v2666 = vpack.c.bf16 %v2642, %v2641
        %v2667 = vpack.c.bf16 %v2644, %v2643
        %v2668 = vpack.c.bf16 %v2646, %v2645
        %v2669 = vpack.c.bf16 %v2648, %v2647
        %v2670 = vpack.c.bf16 %v2650, %v2649
        %v2671 = vpack.c.bf16 %v2652, %v2651
        %v2672 = vpack.c.bf16 %v2654, %v2653
        %v2673 = vpack.c.bf16 %v2656, %v2655
        %v2674 = vpack.c.bf16 %v2658, %v2657
        %v2691 = vunpack.c.l.b16 %v2659
        %v2692 = vunpack.c.h.b16 %v2659
        %v2693 = vunpack.c.l.b16 %v2660
        %v2694 = vunpack.c.h.b16 %v2660
        %v2695 = vunpack.c.l.b16 %v2661
        %v2696 = vunpack.c.h.b16 %v2661
        %v2697 = vunpack.c.l.b16 %v2662
        %v2698 = vunpack.c.h.b16 %v2662
        %v2699 = vunpack.c.l.b16 %v2663
        %v2700 = vunpack.c.h.b16 %v2663
        %v2701 = vunpack.c.l.b16 %v2664
        %v2702 = vunpack.c.h.b16 %v2664
        %v2703 = vunpack.c.l.b16 %v2665
        %v2704 = vunpack.c.h.b16 %v2665
        %v2705 = vunpack.c.l.b16 %v2666
        %v2706 = vunpack.c.h.b16 %v2666
        %v2707 = vunpack.c.l.b16 %v2667
        %v2708 = vunpack.c.h.b16 %v2667
        %v2709 = vunpack.c.l.b16 %v2668
        %v2710 = vunpack.c.h.b16 %v2668
        %v2711 = vunpack.c.l.b16 %v2669
        %v2712 = vunpack.c.h.b16 %v2669
        %v2713 = vunpack.c.l.b16 %v2670
        %v2714 = vunpack.c.h.b16 %v2670
        %v2715 = vunpack.c.l.b16 %v2671
        %v2716 = vunpack.c.h.b16 %v2671
        %v2717 = vunpack.c.l.b16 %v2672
        %v2718 = vunpack.c.h.b16 %v2672
        %v2719 = vunpack.c.l.b16 %v2673
        %v2720 = vunpack.c.h.b16 %v2673
        %v2721 = vunpack.c.l.b16 %v2674
        %v2722 = vunpack.c.h.b16 %v2674
        %v2723 = vpack.c.b16 %v2691, %v2691
        %v2724 = vpack.c.b16 %v2692, %v2692
        %v2725 = vpack.c.b16 %v2693, %v2693
        %v2726 = vpack.c.b16 %v2694, %v2694
        %v2727 = vpack.c.b16 %v2695, %v2695
        %v2728 = vpack.c.b16 %v2696, %v2696
        %v2729 = vpack.c.b16 %v2697, %v2697
        %v2730 = vpack.c.b16 %v2698, %v2698
        %v2731 = vpack.c.b16 %v2699, %v2699
        %v2732 = vpack.c.b16 %v2700, %v2700
        %v2733 = vpack.c.b16 %v2701, %v2701
        %v2734 = vpack.c.b16 %v2702, %v2702
        %v2735 = vpack.c.b16 %v2703, %v2703
        %v2736 = vpack.c.b16 %v2704, %v2704
        %v2737 = vpack.c.b16 %v2705, %v2705
        %v2738 = vpack.c.b16 %v2706, %v2706
        %v2739 = vpack.c.b16 %v2707, %v2707
        %v2740 = vpack.c.b16 %v2708, %v2708
        %v2741 = vpack.c.b16 %v2709, %v2709
        %v2742 = vpack.c.b16 %v2710, %v2710
        %v2743 = vpack.c.b16 %v2711, %v2711
        %v2744 = vpack.c.b16 %v2712, %v2712
        %v2745 = vpack.c.b16 %v2713, %v2713
        %v2746 = vpack.c.b16 %v2714, %v2714
        %v2747 = vpack.c.b16 %v2715, %v2715
        %v2748 = vpack.c.b16 %v2716, %v2716
        %v2749 = vpack.c.b16 %v2717, %v2717
        %v2750 = vpack.c.b16 %v2718, %v2718
        %v2751 = vpack.c.b16 %v2719, %v2719
        %v2752 = vpack.c.b16 %v2720, %v2720
        %v2753 = vpack.c.b16 %v2721, %v2721
        %v2754 = vpack.c.b16 %v2722, %v2722
        %2787 = vst [vmem:[%s471] sm:$0xf] %v2723
        %2788 = vst [vmem:[%s471 + $0x8] sm:$0xf] %v2724
        %2789 = vst [vmem:[%s471 + $0x10] sm:$0xf] %v2725
        %2790 = vst [vmem:[%s471 + $0x18] sm:$0xf] %v2726
        %2791 = vst [vmem:[%s471 + $0x20] sm:$0xf] %v2727
        %2792 = vst [vmem:[%s471 + $0x28] sm:$0xf] %v2728
        %2793 = vst [vmem:[%s471 + $0x30] sm:$0xf] %v2729
        %2794 = vst [vmem:[%s471 + $0x38] sm:$0xf] %v2730
        %2795 = vst [vmem:[%s471 + $0x40] sm:$0xf] %v2731
        %2796 = vst [vmem:[%s471 + $0x48] sm:$0xf] %v2732
        %2797 = vst [vmem:[%s471 + $0x50] sm:$0xf] %v2733
        %2798 = vst [vmem:[%s471 + $0x58] sm:$0xf] %v2734
        %2799 = vst [vmem:[%s471 + $0x60] sm:$0xf] %v2735
        %2800 = vst [vmem:[%s471 + $0x68] sm:$0xf] %v2736
        %2801 = vst [vmem:[%s471 + $0x70] sm:$0xf] %v2737
        %2802 = vst [vmem:[%s471 + $0x78] sm:$0xf] %v2738
        %2803 = vst [vmem:[%s471 + $0x80] sm:$0xf] %v2739
        %2804 = vst [vmem:[%s471 + $0x88] sm:$0xf] %v2740
        %2805 = vst [vmem:[%s471 + $0x90] sm:$0xf] %v2741
        %2806 = vst [vmem:[%s471 + $0x98] sm:$0xf] %v2742
        %2807 = vst [vmem:[%s471 + $0xa0] sm:$0xf] %v2743
        %2808 = vst [vmem:[%s471 + $0xa8] sm:$0xf] %v2744
        %2809 = vst [vmem:[%s471 + $0xb0] sm:$0xf] %v2745
        %2810 = vst [vmem:[%s471 + $0xb8] sm:$0xf] %v2746
        %2811 = vst [vmem:[%s471 + $0xc0] sm:$0xf] %v2747
        %2812 = vst [vmem:[%s471 + $0xc8] sm:$0xf] %v2748
        %2813 = vst [vmem:[%s471 + $0xd0] sm:$0xf] %v2749
        %2814 = vst [vmem:[%s471 + $0xd8] sm:$0xf] %v2750
        %2815 = vst [vmem:[%s471 + $0xe0] sm:$0xf] %v2751
        %2816 = vst [vmem:[%s471 + $0xe8] sm:$0xf] %v2752
        %2817 = vst [vmem:[%s471 + $0xf0] sm:$0xf] %v2753
        %2818 = vst [vmem:[%s471 + $0xf8] sm:$0xf] %v2754
        %v2819 = vpack.c.bf16 %v1894, %v1892
        %v2820 = vpack.c.bf16 %v1898, %v1896
        %v2821 = vpack.c.bf16 %v1902, %v1900
        %v2822 = vpack.c.bf16 %v1906, %v1904
        %v2823 = vpack.c.bf16 %v1910, %v1908
        %v2824 = vpack.c.bf16 %v1914, %v1912
        %v2825 = vpack.c.bf16 %v1918, %v1916
        %v2826 = vpack.c.bf16 %v1922, %v1920
        %v2827 = vpack.c.bf16 %v1926, %v1924
        %v2828 = vpack.c.bf16 %v1930, %v1928
        %v2829 = vpack.c.bf16 %v1934, %v1932
        %v2830 = vpack.c.bf16 %v1938, %v1936
        %v2831 = vpack.c.bf16 %v1942, %v1940
        %v2832 = vpack.c.bf16 %v1946, %v1944
        %v2833 = vpack.c.bf16 %v1950, %v1948
        %v2834 = vpack.c.bf16 %v1954, %v1952
        %v2835 = vld [vmem:[%s7] sm:$0xf]
        %v2836 = vld [vmem:[%s7 + $0x4] sm:$0xf]
        %v2837 = vld [vmem:[%s7 + $0x8] sm:$0xf]
        %v2838 = vld [vmem:[%s7 + $0xc] sm:$0xf]
        %v2839 = vld [vmem:[%s7 + $0x10] sm:$0xf]
        %v2840 = vld [vmem:[%s7 + $0x14] sm:$0xf]
        %v2841 = vld [vmem:[%s7 + $0x18] sm:$0xf]
        %v2842 = vld [vmem:[%s7 + $0x1c] sm:$0xf]
        %v2843 = vld [vmem:[%s7 + $0x20] sm:$0xf]
        %v2844 = vld [vmem:[%s7 + $0x24] sm:$0xf]
        %v2845 = vld [vmem:[%s7 + $0x28] sm:$0xf]
        %v2846 = vld [vmem:[%s7 + $0x2c] sm:$0xf]
        %v2847 = vld [vmem:[%s7 + $0x30] sm:$0xf]
        %v2848 = vld [vmem:[%s7 + $0x34] sm:$0xf]
        %v2849 = vld [vmem:[%s7 + $0x38] sm:$0xf]
        %v2850 = vld [vmem:[%s7 + $0x3c] sm:$0xf]
        %v2851 = vld [vmem:[%s8] sm:$0x1]
        %v2853 = vlaneseq
        %v2854 = vshrl.u32 %v2853, 7
        %v2855 = vsub.s32 0, %v2854
        %v2856 = vrot.slane %v2851, %v2855
        %v2874 = vunpack.c.l.b16 %v2835
        %v2875 = vunpack.c.l.b16 %v2836
        %v2876 = vunpack.c.l.b16 %v2837
        %v2877 = vunpack.c.l.b16 %v2838
        %v2878 = vunpack.c.l.b16 %v2839
        %v2879 = vunpack.c.l.b16 %v2840
        %v2880 = vunpack.c.l.b16 %v2841
        %v2881 = vunpack.c.l.b16 %v2842
        %v2882 = vunpack.c.l.b16 %v2843
        %v2883 = vunpack.c.l.b16 %v2844
        %v2884 = vunpack.c.l.b16 %v2845
        %v2885 = vunpack.c.l.b16 %v2846
        %v2886 = vunpack.c.l.b16 %v2847
        %v2887 = vunpack.c.l.b16 %v2848
        %v2888 = vunpack.c.l.b16 %v2849
        %v2889 = vunpack.c.l.b16 %v2850
        %v2890 = vpack.c.b16 %v2875, %v2874
        %v2891 = vpack.c.b16 %v2877, %v2876
        %v2892 = vpack.c.b16 %v2879, %v2878
        %v2893 = vpack.c.b16 %v2881, %v2880
        %v2894 = vpack.c.b16 %v2883, %v2882
        %v2895 = vpack.c.b16 %v2885, %v2884
        %v2896 = vpack.c.b16 %v2887, %v2886
        %v2897 = vpack.c.b16 %v2889, %v2888
        %2906 = vmatprep.subr.bf16.mxu0 0
        %2907 = vmatpush1.bf16.msra.mxu0 %v2890
        %2908 = vmatprep.subr.bf16.mxu0 0
        %2909 = vmatpush1.bf16.msra.mxu0 %v2891
        %2910 = vmatprep.subr.bf16.mxu0 0
        %2911 = vmatpush1.bf16.msra.mxu0 %v2892
        %2912 = vmatprep.subr.bf16.mxu0 0
        %2913 = vmatpush1.bf16.msra.mxu0 %v2893
        %2914 = vmatprep.subr.bf16.mxu0 0
        %2915 = vmatpush1.bf16.msra.mxu0 %v2894
        %2916 = vmatprep.subr.bf16.mxu0 0
        %2917 = vmatpush1.bf16.msra.mxu0 %v2895
        %2918 = vmatprep.subr.bf16.mxu0 0
        %2919 = vmatpush1.bf16.msra.mxu0 %v2896
        %2920 = vmatprep.subr.bf16.mxu0 0
        %2921 = vmatpush1.bf16.msra.mxu0 %v2897
        %2922 = vmatprep.subr.bf16.mxu0 0
        %2923 = vmatpush1.bf16.msra.mxu0 0
        %2924 = vmatprep.subr.bf16.mxu0 0
        %2925 = vmatpush1.bf16.msra.mxu0 0
        %2926 = vmatprep.subr.bf16.mxu0 0
        %2927 = vmatpush1.bf16.msra.mxu0 0
        %2928 = vmatprep.subr.bf16.mxu0 0
        %2929 = vmatpush1.bf16.msra.mxu0 0
        %2930 = vmatprep.subr.bf16.mxu0 0
        %2931 = vmatpush1.bf16.msra.mxu0 0
        %2932 = vmatprep.subr.bf16.mxu0 0
        %2933 = vmatpush1.bf16.msra.mxu0 0
        %2934 = vmatprep.subr.bf16.mxu0 0
        %2935 = vmatpush1.bf16.msra.mxu0 0
        %2936 = vmatprep.subr.bf16.mxu0 0
        %2937 = vmatpush1.bf16.msra.mxu0 0
        %2938 = vmatprep.mubr.bf16.mxu0 0
        %2939 = vmatmul.mubr.bf16.gmra.mrb[0].mxu0 %v2819
        %v2940 = vpop.f32.mrb[0].mxu0
        %v2941 = vadd.f32 %v2856, %v2940
        %v2942 = vpop.f32.mrb[0].mxu0
        %v2943 = vpop.f32.mrb[0].mxu0
        %v2944 = vadd.f32 %v2856, %v2943
        %v2945 = vpop.f32.mrb[0].mxu0
        %2946 = vmatprep.mubr.bf16.mxu0 0
        %2947 = vmatmul.mubr.bf16.gmra.mrb[0].mxu0 %v2820
        %v2948 = vpop.f32.mrb[0].mxu0
        %v2949 = vadd.f32 %v2856, %v2948
        %v2950 = vpop.f32.mrb[0].mxu0
        %v2951 = vpop.f32.mrb[0].mxu0
        %v2952 = vadd.f32 %v2856, %v2951
        %v2953 = vpop.f32.mrb[0].mxu0
        %2954 = vmatprep.mubr.bf16.mxu0 0
        %2955 = vmatmul.mubr.bf16.gmra.mrb[0].mxu0 %v2821
        %v2956 = vpop.f32.mrb[0].mxu0
        %v2957 = vadd.f32 %v2856, %v2956
        %v2958 = vpop.f32.mrb[0].mxu0
        %v2959 = vpop.f32.mrb[0].mxu0
        %v2960 = vadd.f32 %v2856, %v2959
        %v2961 = vpop.f32.mrb[0].mxu0
        %2962 = vmatprep.mubr.bf16.mxu0 0
        %2963 = vmatmul.mubr.bf16.gmra.mrb[0].mxu0 %v2822
        %v2964 = vpop.f32.mrb[0].mxu0
        %v2965 = vadd.f32 %v2856, %v2964
        %v2966 = vpop.f32.mrb[0].mxu0
        %v2967 = vpop.f32.mrb[0].mxu0
        %v2968 = vadd.f32 %v2856, %v2967
        %v2969 = vpop.f32.mrb[0].mxu0
        %2970 = vmatprep.mubr.bf16.mxu0 0
        %2971 = vmatmul.mubr.bf16.gmra.mrb[0].mxu0 %v2823
        %v2972 = vpop.f32.mrb[0].mxu0
        %v2973 = vadd.f32 %v2856, %v2972
        %v2974 = vpop.f32.mrb[0].mxu0
        %v2975 = vpop.f32.mrb[0].mxu0
        %v2976 = vadd.f32 %v2856, %v2975
        %v2977 = vpop.f32.mrb[0].mxu0
        %2978 = vmatprep.mubr.bf16.mxu0 0
        %2979 = vmatmul.mubr.bf16.gmra.mrb[0].mxu0 %v2824
        %v2980 = vpop.f32.mrb[0].mxu0
        %v2981 = vadd.f32 %v2856, %v2980
        %v2982 = vpop.f32.mrb[0].mxu0
        %v2983 = vpop.f32.mrb[0].mxu0
        %v2984 = vadd.f32 %v2856, %v2983
        %v2985 = vpop.f32.mrb[0].mxu0
        %2986 = vmatprep.mubr.bf16.mxu0 0
        %2987 = vmatmul.mubr.bf16.gmra.mrb[0].mxu0 %v2825
        %v2988 = vpop.f32.mrb[0].mxu0
        %v2989 = vadd.f32 %v2856, %v2988
        %v2990 = vpop.f32.mrb[0].mxu0
        %v2991 = vpop.f32.mrb[0].mxu0
        %v2992 = vadd.f32 %v2856, %v2991
        %v2993 = vpop.f32.mrb[0].mxu0
        %2994 = vmatprep.mubr.bf16.mxu0 0
        %2995 = vmatmul.mubr.bf16.gmra.mrb[0].mxu0 %v2826
        %v2996 = vpop.f32.mrb[0].mxu0
        %v2997 = vadd.f32 %v2856, %v2996
        %v2998 = vpop.f32.mrb[0].mxu0
        %v2999 = vpop.f32.mrb[0].mxu0
        %v3000 = vadd.f32 %v2856, %v2999
        %v3001 = vpop.f32.mrb[0].mxu0
        %3002 = vmatprep.mubr.bf16.mxu0 0
        %3003 = vmatmul.mubr.bf16.gmra.mrb[0].mxu0 %v2827
        %v3004 = vpop.f32.mrb[0].mxu0
        %v3005 = vadd.f32 %v2856, %v3004
        %v3006 = vpop.f32.mrb[0].mxu0
        %v3007 = vpop.f32.mrb[0].mxu0
        %v3008 = vadd.f32 %v2856, %v3007
        %v3009 = vpop.f32.mrb[0].mxu0
        %3010 = vmatprep.mubr.bf16.mxu0 0
        %3011 = vmatmul.mubr.bf16.gmra.mrb[0].mxu0 %v2828
        %v3012 = vpop.f32.mrb[0].mxu0
        %v3013 = vadd.f32 %v2856, %v3012
        %v3014 = vpop.f32.mrb[0].mxu0
        %v3015 = vpop.f32.mrb[0].mxu0
        %v3016 = vadd.f32 %v2856, %v3015
        %v3017 = vpop.f32.mrb[0].mxu0
        %3018 = vmatprep.mubr.bf16.mxu0 0
        %3019 = vmatmul.mubr.bf16.gmra.mrb[0].mxu0 %v2829
        %v3020 = vpop.f32.mrb[0].mxu0
        %v3021 = vadd.f32 %v2856, %v3020
        %v3022 = vpop.f32.mrb[0].mxu0
        %v3023 = vpop.f32.mrb[0].mxu0
        %v3024 = vadd.f32 %v2856, %v3023
        %v3025 = vpop.f32.mrb[0].mxu0
        %3026 = vmatprep.mubr.bf16.mxu0 0
        %3027 = vmatmul.mubr.bf16.gmra.mrb[0].mxu0 %v2830
        %v3028 = vpop.f32.mrb[0].mxu0
        %v3029 = vadd.f32 %v2856, %v3028
        %v3030 = vpop.f32.mrb[0].mxu0
        %v3031 = vpop.f32.mrb[0].mxu0
        %v3032 = vadd.f32 %v2856, %v3031
        %v3033 = vpop.f32.mrb[0].mxu0
        %3034 = vmatprep.mubr.bf16.mxu0 0
        %3035 = vmatmul.mubr.bf16.gmra.mrb[0].mxu0 %v2831
        %v3036 = vpop.f32.mrb[0].mxu0
        %v3037 = vadd.f32 %v2856, %v3036
        %v3038 = vpop.f32.mrb[0].mxu0
        %v3039 = vpop.f32.mrb[0].mxu0
        %v3040 = vadd.f32 %v2856, %v3039
        %v3041 = vpop.f32.mrb[0].mxu0
        %3042 = vmatprep.mubr.bf16.mxu0 0
        %3043 = vmatmul.mubr.bf16.gmra.mrb[0].mxu0 %v2832
        %v3044 = vpop.f32.mrb[0].mxu0
        %v3045 = vadd.f32 %v2856, %v3044
        %v3046 = vpop.f32.mrb[0].mxu0
        %v3047 = vpop.f32.mrb[0].mxu0
        %v3048 = vadd.f32 %v2856, %v3047
        %v3049 = vpop.f32.mrb[0].mxu0
        %3050 = vmatprep.mubr.bf16.mxu0 0
        %3051 = vmatmul.mubr.bf16.gmra.mrb[0].mxu0 %v2833
        %v3052 = vpop.f32.mrb[0].mxu0
        %v3053 = vadd.f32 %v2856, %v3052
        %v3054 = vpop.f32.mrb[0].mxu0
        %v3055 = vpop.f32.mrb[0].mxu0
        %v3056 = vadd.f32 %v2856, %v3055
        %v3057 = vpop.f32.mrb[0].mxu0
        %3058 = vmatprep.mubr.bf16.mxu0 0
        %3059 = vmatmul.mubr.bf16.gmra.mrb[0].mxu0 %v2834
        %v3060 = vpop.f32.mrb[0].mxu0
        %v3061 = vadd.f32 %v2856, %v3060
        %v3062 = vpop.f32.mrb[0].mxu0
        %v3063 = vpop.f32.mrb[0].mxu0
        %v3064 = vadd.f32 %v2856, %v3063
        %v3065 = vpop.f32.mrb[0].mxu0
        %3066 = vdwg.mxu0
        %v3067 = vmax.f32 %v2941, 0.0
        %v3068 = vmax.f32 %v2944, 0.0
        %v3069 = vmax.f32 %v2949, 0.0
        %v3070 = vmax.f32 %v2952, 0.0
        %v3071 = vmax.f32 %v2957, 0.0
        %v3072 = vmax.f32 %v2960, 0.0
        %v3073 = vmax.f32 %v2965, 0.0
        %v3074 = vmax.f32 %v2968, 0.0
        %v3075 = vmax.f32 %v2973, 0.0
        %v3076 = vmax.f32 %v2976, 0.0
        %v3077 = vmax.f32 %v2981, 0.0
        %v3078 = vmax.f32 %v2984, 0.0
        %v3079 = vmax.f32 %v2989, 0.0
        %v3080 = vmax.f32 %v2992, 0.0
        %v3081 = vmax.f32 %v2997, 0.0
        %v3082 = vmax.f32 %v3000, 0.0
        %v3083 = vmax.f32 %v3005, 0.0
        %v3084 = vmax.f32 %v3008, 0.0
        %v3085 = vmax.f32 %v3013, 0.0
        %v3086 = vmax.f32 %v3016, 0.0
        %v3087 = vmax.f32 %v3021, 0.0
        %v3088 = vmax.f32 %v3024, 0.0
        %v3089 = vmax.f32 %v3029, 0.0
        %v3090 = vmax.f32 %v3032, 0.0
        %v3091 = vmax.f32 %v3037, 0.0
        %v3092 = vmax.f32 %v3040, 0.0
        %v3093 = vmax.f32 %v3045, 0.0
        %v3094 = vmax.f32 %v3048, 0.0
        %v3095 = vmax.f32 %v3053, 0.0
        %v3096 = vmax.f32 %v3056, 0.0
        %v3097 = vmax.f32 %v3061, 0.0
        %v3098 = vmax.f32 %v3064, 0.0
        %v3099 = vld [vmem:[%s9] sm:$0xf]
        %v3100 = vld [vmem:[%s9 + $0x4] sm:$0xf]
        %v3101 = vld [vmem:[%s9 + $0x8] sm:$0xf]
        %v3102 = vld [vmem:[%s9 + $0xc] sm:$0xf]
        %v3103 = vld [vmem:[%s9 + $0x10] sm:$0xf]
        %v3104 = vld [vmem:[%s9 + $0x14] sm:$0xf]
        %v3105 = vld [vmem:[%s9 + $0x18] sm:$0xf]
        %v3106 = vld [vmem:[%s9 + $0x1c] sm:$0xf]
        %v3107 = vld [vmem:[%s9 + $0x20] sm:$0xf]
        %v3108 = vld [vmem:[%s9 + $0x24] sm:$0xf]
        %v3109 = vld [vmem:[%s9 + $0x28] sm:$0xf]
        %v3110 = vld [vmem:[%s9 + $0x2c] sm:$0xf]
        %v3111 = vld [vmem:[%s9 + $0x30] sm:$0xf]
        %v3112 = vld [vmem:[%s9 + $0x34] sm:$0xf]
        %v3113 = vld [vmem:[%s9 + $0x38] sm:$0xf]
        %v3114 = vld [vmem:[%s9 + $0x3c] sm:$0xf]
        %v3115 = vld [vmem:[%s10] sm:$0x1]
        %v3117 = vlaneseq
        %v3118 = vshrl.u32 %v3117, 7
        %v3119 = vsub.s32 0, %v3118
        %v3120 = vrot.slane %v3115, %v3119
        %v3122 = vunpack.c.h.b16 %v1955
        %v3123 = vunpack.c.h.b16 %v1956
        %v3124 = vunpack.c.h.b16 %v1957
        %v3125 = vunpack.c.h.b16 %v1958
        %v3126 = vunpack.c.h.b16 %v1959
        %v3127 = vunpack.c.h.b16 %v1960
        %v3128 = vunpack.c.h.b16 %v1961
        %v3129 = vunpack.c.h.b16 %v1962
        %v3130 = vunpack.c.h.b16 %v1963
        %v3131 = vunpack.c.h.b16 %v1964
        %v3132 = vunpack.c.h.b16 %v1965
        %v3133 = vunpack.c.h.b16 %v1966
        %v3134 = vunpack.c.h.b16 %v1967
        %v3135 = vunpack.c.h.b16 %v1968
        %v3136 = vunpack.c.h.b16 %v1969
        %v3137 = vunpack.c.h.b16 %v1970
        %v3138 = vunpack.c.h.b16 %v1971
        %v3139 = vunpack.c.h.b16 %v1972
        %v3140 = vunpack.c.h.b16 %v1973
        %v3141 = vunpack.c.h.b16 %v1974
        %v3142 = vunpack.c.h.b16 %v1975
        %v3143 = vunpack.c.h.b16 %v1976
        %v3144 = vunpack.c.h.b16 %v1977
        %v3145 = vunpack.c.h.b16 %v1978
        %v3146 = vunpack.c.h.b16 %v1979
        %v3147 = vunpack.c.h.b16 %v1980
        %v3148 = vunpack.c.h.b16 %v1981
        %v3149 = vunpack.c.h.b16 %v1982
        %v3150 = vunpack.c.h.b16 %v1983
        %v3151 = vunpack.c.h.b16 %v1984
        %v3152 = vunpack.c.h.b16 %v1985
        %v3153 = vunpack.c.h.b16 %v1986
        %v3154 = vpack.c.b16 %v3123, %v3122
        %v3155 = vpack.c.b16 %v3125, %v3124
        %v3156 = vpack.c.b16 %v3127, %v3126
        %v3157 = vpack.c.b16 %v3129, %v3128
        %v3158 = vpack.c.b16 %v3131, %v3130
        %v3159 = vpack.c.b16 %v3133, %v3132
        %v3160 = vpack.c.b16 %v3135, %v3134
        %v3161 = vpack.c.b16 %v3137, %v3136
        %v3162 = vpack.c.b16 %v3139, %v3138
        %v3163 = vpack.c.b16 %v3141, %v3140
        %v3164 = vpack.c.b16 %v3143, %v3142
        %v3165 = vpack.c.b16 %v3145, %v3144
        %v3166 = vpack.c.b16 %v3147, %v3146
        %v3167 = vpack.c.b16 %v3149, %v3148
        %v3168 = vpack.c.b16 %v3151, %v3150
        %v3169 = vpack.c.b16 %v3153, %v3152
        %v3202 = vunpack.c.l.b16 %v3099
        %v3203 = vunpack.c.l.b16 %v3100
        %v3204 = vunpack.c.l.b16 %v3101
        %v3205 = vunpack.c.l.b16 %v3102
        %v3206 = vunpack.c.l.b16 %v3103
        %v3207 = vunpack.c.l.b16 %v3104
        %v3208 = vunpack.c.l.b16 %v3105
        %v3209 = vunpack.c.l.b16 %v3106
        %v3210 = vunpack.c.l.b16 %v3107
        %v3211 = vunpack.c.l.b16 %v3108
        %v3212 = vunpack.c.l.b16 %v3109
        %v3213 = vunpack.c.l.b16 %v3110
        %v3214 = vunpack.c.l.b16 %v3111
        %v3215 = vunpack.c.l.b16 %v3112
        %v3216 = vunpack.c.l.b16 %v3113
        %v3217 = vunpack.c.l.b16 %v3114
        %v3218 = vpack.c.b16 %v3203, %v3202
        %v3219 = vpack.c.b16 %v3205, %v3204
        %v3220 = vpack.c.b16 %v3207, %v3206
        %v3221 = vpack.c.b16 %v3209, %v3208
        %v3222 = vpack.c.b16 %v3211, %v3210
        %v3223 = vpack.c.b16 %v3213, %v3212
        %v3224 = vpack.c.b16 %v3215, %v3214
        %v3225 = vpack.c.b16 %v3217, %v3216
        %3234 = vmatprep.subr.bf16.mxu0 0
        %3235 = vmatpush1.bf16.msra.mxu0 %v3218
        %3236 = vmatprep.subr.bf16.mxu0 0
        %3237 = vmatpush1.bf16.msra.mxu0 %v3219
        %3238 = vmatprep.subr.bf16.mxu0 0
        %3239 = vmatpush1.bf16.msra.mxu0 %v3220
        %3240 = vmatprep.subr.bf16.mxu0 0
        %3241 = vmatpush1.bf16.msra.mxu0 %v3221
        %3242 = vmatprep.subr.bf16.mxu0 0
        %3243 = vmatpush1.bf16.msra.mxu0 %v3222
        %3244 = vmatprep.subr.bf16.mxu0 0
        %3245 = vmatpush1.bf16.msra.mxu0 %v3223
        %3246 = vmatprep.subr.bf16.mxu0 0
        %3247 = vmatpush1.bf16.msra.mxu0 %v3224
        %3248 = vmatprep.subr.bf16.mxu0 0
        %3249 = vmatpush1.bf16.msra.mxu0 %v3225
        %3250 = vmatprep.subr.bf16.mxu0 0
        %3251 = vmatpush1.bf16.msra.mxu0 0
        %3252 = vmatprep.subr.bf16.mxu0 0
        %3253 = vmatpush1.bf16.msra.mxu0 0
        %3254 = vmatprep.subr.bf16.mxu0 0
        %3255 = vmatpush1.bf16.msra.mxu0 0
        %3256 = vmatprep.subr.bf16.mxu0 0
        %3257 = vmatpush1.bf16.msra.mxu0 0
        %3258 = vmatprep.subr.bf16.mxu0 0
        %3259 = vmatpush1.bf16.msra.mxu0 0
        %3260 = vmatprep.subr.bf16.mxu0 0
        %3261 = vmatpush1.bf16.msra.mxu0 0
        %3262 = vmatprep.subr.bf16.mxu0 0
        %3263 = vmatpush1.bf16.msra.mxu0 0
        %3264 = vmatprep.subr.bf16.mxu0 0
        %3265 = vmatpush1.bf16.msra.mxu0 0
        %3266 = vmatprep.mubr.bf16.mxu0 0
        %3267 = vmatmul.mubr.bf16.gmra.mrb[0].mxu0 %v3154
        %v3268 = vpop.f32.mrb[0].mxu0
        %v3269 = vadd.f32 %v3120, %v3268
        %v3270 = vpop.f32.mrb[0].mxu0
        %v3271 = vpop.f32.mrb[0].mxu0
        %v3272 = vadd.f32 %v3120, %v3271
        %v3273 = vpop.f32.mrb[0].mxu0
        %3274 = vmatprep.mubr.bf16.mxu0 0
        %3275 = vmatmul.mubr.bf16.gmra.mrb[0].mxu0 %v3155
        %v3276 = vpop.f32.mrb[0].mxu0
        %v3277 = vadd.f32 %v3120, %v3276
        %v3278 = vpop.f32.mrb[0].mxu0
        %v3279 = vpop.f32.mrb[0].mxu0
        %v3280 = vadd.f32 %v3120, %v3279
        %v3281 = vpop.f32.mrb[0].mxu0
        %3282 = vmatprep.mubr.bf16.mxu0 0
        %3283 = vmatmul.mubr.bf16.gmra.mrb[0].mxu0 %v3156
        %v3284 = vpop.f32.mrb[0].mxu0
        %v3285 = vadd.f32 %v3120, %v3284
        %v3286 = vpop.f32.mrb[0].mxu0
        %v3287 = vpop.f32.mrb[0].mxu0
        %v3288 = vadd.f32 %v3120, %v3287
        %v3289 = vpop.f32.mrb[0].mxu0
        %3290 = vmatprep.mubr.bf16.mxu0 0
        %3291 = vmatmul.mubr.bf16.gmra.mrb[0].mxu0 %v3157
        %v3292 = vpop.f32.mrb[0].mxu0
        %v3293 = vadd.f32 %v3120, %v3292
        %v3294 = vpop.f32.mrb[0].mxu0
        %v3295 = vpop.f32.mrb[0].mxu0
        %v3296 = vadd.f32 %v3120, %v3295
        %v3297 = vpop.f32.mrb[0].mxu0
        %3298 = vmatprep.mubr.bf16.mxu0 0
        %3299 = vmatmul.mubr.bf16.gmra.mrb[0].mxu0 %v3158
        %v3300 = vpop.f32.mrb[0].mxu0
        %v3301 = vadd.f32 %v3120, %v3300
        %v3302 = vpop.f32.mrb[0].mxu0
        %v3303 = vpop.f32.mrb[0].mxu0
        %v3304 = vadd.f32 %v3120, %v3303
        %v3305 = vpop.f32.mrb[0].mxu0
        %3306 = vmatprep.mubr.bf16.mxu0 0
        %3307 = vmatmul.mubr.bf16.gmra.mrb[0].mxu0 %v3159
        %v3308 = vpop.f32.mrb[0].mxu0
        %v3309 = vadd.f32 %v3120, %v3308
        %v3310 = vpop.f32.mrb[0].mxu0
        %v3311 = vpop.f32.mrb[0].mxu0
        %v3312 = vadd.f32 %v3120, %v3311
        %v3313 = vpop.f32.mrb[0].mxu0
        %3314 = vmatprep.mubr.bf16.mxu0 0
        %3315 = vmatmul.mubr.bf16.gmra.mrb[0].mxu0 %v3160
        %v3316 = vpop.f32.mrb[0].mxu0
        %v3317 = vadd.f32 %v3120, %v3316
        %v3318 = vpop.f32.mrb[0].mxu0
        %v3319 = vpop.f32.mrb[0].mxu0
        %v3320 = vadd.f32 %v3120, %v3319
        %v3321 = vpop.f32.mrb[0].mxu0
        %3322 = vmatprep.mubr.bf16.mxu0 0
        %3323 = vmatmul.mubr.bf16.gmra.mrb[0].mxu0 %v3161
        %v3324 = vpop.f32.mrb[0].mxu0
        %v3325 = vadd.f32 %v3120, %v3324
        %v3326 = vpop.f32.mrb[0].mxu0
        %v3327 = vpop.f32.mrb[0].mxu0
        %v3328 = vadd.f32 %v3120, %v3327
        %v3329 = vpop.f32.mrb[0].mxu0
        %3330 = vmatprep.mubr.bf16.mxu0 0
        %3331 = vmatmul.mubr.bf16.gmra.mrb[0].mxu0 %v3162
        %v3332 = vpop.f32.mrb[0].mxu0
        %v3333 = vadd.f32 %v3120, %v3332
        %v3334 = vpop.f32.mrb[0].mxu0
        %v3335 = vpop.f32.mrb[0].mxu0
        %v3336 = vadd.f32 %v3120, %v3335
        %v3337 = vpop.f32.mrb[0].mxu0
        %3338 = vmatprep.mubr.bf16.mxu0 0
        %3339 = vmatmul.mubr.bf16.gmra.mrb[0].mxu0 %v3163
        %v3340 = vpop.f32.mrb[0].mxu0
        %v3341 = vadd.f32 %v3120, %v3340
        %v3342 = vpop.f32.mrb[0].mxu0
        %v3343 = vpop.f32.mrb[0].mxu0
        %v3344 = vadd.f32 %v3120, %v3343
        %v3345 = vpop.f32.mrb[0].mxu0
        %3346 = vmatprep.mubr.bf16.mxu0 0
        %3347 = vmatmul.mubr.bf16.gmra.mrb[0].mxu0 %v3164
        %v3348 = vpop.f32.mrb[0].mxu0
        %v3349 = vadd.f32 %v3120, %v3348
        %v3350 = vpop.f32.mrb[0].mxu0
        %v3351 = vpop.f32.mrb[0].mxu0
        %v3352 = vadd.f32 %v3120, %v3351
        %v3353 = vpop.f32.mrb[0].mxu0
        %3354 = vmatprep.mubr.bf16.mxu0 0
        %3355 = vmatmul.mubr.bf16.gmra.mrb[0].mxu0 %v3165
        %v3356 = vpop.f32.mrb[0].mxu0
        %v3357 = vadd.f32 %v3120, %v3356
        %v3358 = vpop.f32.mrb[0].mxu0
        %v3359 = vpop.f32.mrb[0].mxu0
        %v3360 = vadd.f32 %v3120, %v3359
        %v3361 = vpop.f32.mrb[0].mxu0
        %3362 = vmatprep.mubr.bf16.mxu0 0
        %3363 = vmatmul.mubr.bf16.gmra.mrb[0].mxu0 %v3166
        %v3364 = vpop.f32.mrb[0].mxu0
        %v3365 = vadd.f32 %v3120, %v3364
        %v3366 = vpop.f32.mrb[0].mxu0
        %v3367 = vpop.f32.mrb[0].mxu0
        %v3368 = vadd.f32 %v3120, %v3367
        %v3369 = vpop.f32.mrb[0].mxu0
        %3370 = vmatprep.mubr.bf16.mxu0 0
        %3371 = vmatmul.mubr.bf16.gmra.mrb[0].mxu0 %v3167
        %v3372 = vpop.f32.mrb[0].mxu0
        %v3373 = vadd.f32 %v3120, %v3372
        %v3374 = vpop.f32.mrb[0].mxu0
        %v3375 = vpop.f32.mrb[0].mxu0
        %v3376 = vadd.f32 %v3120, %v3375
        %v3377 = vpop.f32.mrb[0].mxu0
        %3378 = vmatprep.mubr.bf16.mxu0 0
        %3379 = vmatmul.mubr.bf16.gmra.mrb[0].mxu0 %v3168
        %v3380 = vpop.f32.mrb[0].mxu0
        %v3381 = vadd.f32 %v3120, %v3380
        %v3382 = vpop.f32.mrb[0].mxu0
        %v3383 = vpop.f32.mrb[0].mxu0
        %v3384 = vadd.f32 %v3120, %v3383
        %v3385 = vpop.f32.mrb[0].mxu0
        %3386 = vmatprep.mubr.bf16.mxu0 0
        %3387 = vmatmul.mubr.bf16.gmra.mrb[0].mxu0 %v3169
        %v3388 = vpop.f32.mrb[0].mxu0
        %v3389 = vadd.f32 %v3120, %v3388
        %v3390 = vpop.f32.mrb[0].mxu0
        %v3391 = vpop.f32.mrb[0].mxu0
        %v3392 = vadd.f32 %v3120, %v3391
        %v3393 = vpop.f32.mrb[0].mxu0
        %3394 = vdwg.mxu0
        %v3395 = vmax.f32 %v3269, 0.0
        %v3396 = vmax.f32 %v3272, 0.0
        %v3397 = vmax.f32 %v3277, 0.0
        %v3398 = vmax.f32 %v3280, 0.0
        %v3399 = vmax.f32 %v3285, 0.0
        %v3400 = vmax.f32 %v3288, 0.0
        %v3401 = vmax.f32 %v3293, 0.0
        %v3402 = vmax.f32 %v3296, 0.0
        %v3403 = vmax.f32 %v3301, 0.0
        %v3404 = vmax.f32 %v3304, 0.0
        %v3405 = vmax.f32 %v3309, 0.0
        %v3406 = vmax.f32 %v3312, 0.0
        %v3407 = vmax.f32 %v3317, 0.0
        %v3408 = vmax.f32 %v3320, 0.0
        %v3409 = vmax.f32 %v3325, 0.0
        %v3410 = vmax.f32 %v3328, 0.0
        %v3411 = vmax.f32 %v3333, 0.0
        %v3412 = vmax.f32 %v3336, 0.0
        %v3413 = vmax.f32 %v3341, 0.0
        %v3414 = vmax.f32 %v3344, 0.0
        %v3415 = vmax.f32 %v3349, 0.0
        %v3416 = vmax.f32 %v3352, 0.0
        %v3417 = vmax.f32 %v3357, 0.0
        %v3418 = vmax.f32 %v3360, 0.0
        %v3419 = vmax.f32 %v3365, 0.0
        %v3420 = vmax.f32 %v3368, 0.0
        %v3421 = vmax.f32 %v3373, 0.0
        %v3422 = vmax.f32 %v3376, 0.0
        %v3423 = vmax.f32 %v3381, 0.0
        %v3424 = vmax.f32 %v3384, 0.0
        %v3425 = vmax.f32 %v3389, 0.0
        %v3426 = vmax.f32 %v3392, 0.0
        %v3427 = vadd.f32 %v3067, %v3395
        %v3428 = vadd.f32 %v3068, %v3396
        %v3429 = vadd.f32 %v3069, %v3397
        %v3430 = vadd.f32 %v3070, %v3398
        %v3431 = vadd.f32 %v3071, %v3399
        %v3432 = vadd.f32 %v3072, %v3400
        %v3433 = vadd.f32 %v3073, %v3401
        %v3434 = vadd.f32 %v3074, %v3402
        %v3435 = vadd.f32 %v3075, %v3403
        %v3436 = vadd.f32 %v3076, %v3404
        %v3437 = vadd.f32 %v3077, %v3405
        %v3438 = vadd.f32 %v3078, %v3406
        %v3439 = vadd.f32 %v3079, %v3407
        %v3440 = vadd.f32 %v3080, %v3408
        %v3441 = vadd.f32 %v3081, %v3409
        %v3442 = vadd.f32 %v3082, %v3410
        %v3443 = vadd.f32 %v3083, %v3411
        %v3444 = vadd.f32 %v3084, %v3412
        %v3445 = vadd.f32 %v3085, %v3413
        %v3446 = vadd.f32 %v3086, %v3414
        %v3447 = vadd.f32 %v3087, %v3415
        %v3448 = vadd.f32 %v3088, %v3416
        %v3449 = vadd.f32 %v3089, %v3417
        %v3450 = vadd.f32 %v3090, %v3418
        %v3451 = vadd.f32 %v3091, %v3419
        %v3452 = vadd.f32 %v3092, %v3420
        %v3453 = vadd.f32 %v3093, %v3421
        %v3454 = vadd.f32 %v3094, %v3422
        %v3455 = vadd.f32 %v3095, %v3423
        %v3456 = vadd.f32 %v3096, %v3424
        %v3457 = vadd.f32 %v3097, %v3425
        %v3458 = vadd.f32 %v3098, %v3426
        %v3459 = vpack.c.bf16 %v3428, %v3427
        %v3460 = vpack.c.bf16 %v3430, %v3429
        %v3461 = vpack.c.bf16 %v3432, %v3431
        %v3462 = vpack.c.bf16 %v3434, %v3433
        %v3463 = vpack.c.bf16 %v3436, %v3435
        %v3464 = vpack.c.bf16 %v3438, %v3437
        %v3465 = vpack.c.bf16 %v3440, %v3439
        %v3466 = vpack.c.bf16 %v3442, %v3441
        %v3467 = vpack.c.bf16 %v3444, %v3443
        %v3468 = vpack.c.bf16 %v3446, %v3445
        %v3469 = vpack.c.bf16 %v3448, %v3447
        %v3470 = vpack.c.bf16 %v3450, %v3449
        %v3471 = vpack.c.bf16 %v3452, %v3451
        %v3472 = vpack.c.bf16 %v3454, %v3453
        %v3473 = vpack.c.bf16 %v3456, %v3455
        %v3474 = vpack.c.bf16 %v3458, %v3457
        %v3491 = vunpack.c.l.b16 %v3459
        %v3492 = vunpack.c.h.b16 %v3459
        %v3493 = vunpack.c.l.b16 %v3460
        %v3494 = vunpack.c.h.b16 %v3460
        %v3495 = vunpack.c.l.b16 %v3461
        %v3496 = vunpack.c.h.b16 %v3461
        %v3497 = vunpack.c.l.b16 %v3462
        %v3498 = vunpack.c.h.b16 %v3462
        %v3499 = vunpack.c.l.b16 %v3463
        %v3500 = vunpack.c.h.b16 %v3463
        %v3501 = vunpack.c.l.b16 %v3464
        %v3502 = vunpack.c.h.b16 %v3464
        %v3503 = vunpack.c.l.b16 %v3465
        %v3504 = vunpack.c.h.b16 %v3465
        %v3505 = vunpack.c.l.b16 %v3466
        %v3506 = vunpack.c.h.b16 %v3466
        %v3507 = vunpack.c.l.b16 %v3467
        %v3508 = vunpack.c.h.b16 %v3467
        %v3509 = vunpack.c.l.b16 %v3468
        %v3510 = vunpack.c.h.b16 %v3468
        %v3511 = vunpack.c.l.b16 %v3469
        %v3512 = vunpack.c.h.b16 %v3469
        %v3513 = vunpack.c.l.b16 %v3470
        %v3514 = vunpack.c.h.b16 %v3470
        %v3515 = vunpack.c.l.b16 %v3471
        %v3516 = vunpack.c.h.b16 %v3471
        %v3517 = vunpack.c.l.b16 %v3472
        %v3518 = vunpack.c.h.b16 %v3472
        %v3519 = vunpack.c.l.b16 %v3473
        %v3520 = vunpack.c.h.b16 %v3473
        %v3521 = vunpack.c.l.b16 %v3474
        %v3522 = vunpack.c.h.b16 %v3474
        %v3523 = vpack.c.b16 %v3491, %v3491
        %v3524 = vpack.c.b16 %v3492, %v3492
        %v3525 = vpack.c.b16 %v3493, %v3493
        %v3526 = vpack.c.b16 %v3494, %v3494
        %v3527 = vpack.c.b16 %v3495, %v3495
        %v3528 = vpack.c.b16 %v3496, %v3496
        %v3529 = vpack.c.b16 %v3497, %v3497
        %v3530 = vpack.c.b16 %v3498, %v3498
        %v3531 = vpack.c.b16 %v3499, %v3499
        %v3532 = vpack.c.b16 %v3500, %v3500
        %v3533 = vpack.c.b16 %v3501, %v3501
        %v3534 = vpack.c.b16 %v3502, %v3502
        %v3535 = vpack.c.b16 %v3503, %v3503
        %v3536 = vpack.c.b16 %v3504, %v3504
        %v3537 = vpack.c.b16 %v3505, %v3505
        %v3538 = vpack.c.b16 %v3506, %v3506
        %v3539 = vpack.c.b16 %v3507, %v3507
        %v3540 = vpack.c.b16 %v3508, %v3508
        %v3541 = vpack.c.b16 %v3509, %v3509
        %v3542 = vpack.c.b16 %v3510, %v3510
        %v3543 = vpack.c.b16 %v3511, %v3511
        %v3544 = vpack.c.b16 %v3512, %v3512
        %v3545 = vpack.c.b16 %v3513, %v3513
        %v3546 = vpack.c.b16 %v3514, %v3514
        %v3547 = vpack.c.b16 %v3515, %v3515
        %v3548 = vpack.c.b16 %v3516, %v3516
        %v3549 = vpack.c.b16 %v3517, %v3517
        %v3550 = vpack.c.b16 %v3518, %v3518
        %v3551 = vpack.c.b16 %v3519, %v3519
        %v3552 = vpack.c.b16 %v3520, %v3520
        %v3553 = vpack.c.b16 %v3521, %v3521
        %v3554 = vpack.c.b16 %v3522, %v3522
        %3587 = vst [vmem:[%s471 + $0x4] sm:$0xf] %v3523
        %3588 = vst [vmem:[%s471 + $0xc] sm:$0xf] %v3524
        %3589 = vst [vmem:[%s471 + $0x14] sm:$0xf] %v3525
        %3590 = vst [vmem:[%s471 + $0x1c] sm:$0xf] %v3526
        %3591 = vst [vmem:[%s471 + $0x24] sm:$0xf] %v3527
        %3592 = vst [vmem:[%s471 + $0x2c] sm:$0xf] %v3528
        %3593 = vst [vmem:[%s471 + $0x34] sm:$0xf] %v3529
        %3594 = vst [vmem:[%s471 + $0x3c] sm:$0xf] %v3530
        %3595 = vst [vmem:[%s471 + $0x44] sm:$0xf] %v3531
        %3596 = vst [vmem:[%s471 + $0x4c] sm:$0xf] %v3532
        %3597 = vst [vmem:[%s471 + $0x54] sm:$0xf] %v3533
        %3598 = vst [vmem:[%s471 + $0x5c] sm:$0xf] %v3534
        %3599 = vst [vmem:[%s471 + $0x64] sm:$0xf] %v3535
        %3600 = vst [vmem:[%s471 + $0x6c] sm:$0xf] %v3536
        %3601 = vst [vmem:[%s471 + $0x74] sm:$0xf] %v3537
        %3602 = vst [vmem:[%s471 + $0x7c] sm:$0xf] %v3538
        %3603 = vst [vmem:[%s471 + $0x84] sm:$0xf] %v3539
        %3604 = vst [vmem:[%s471 + $0x8c] sm:$0xf] %v3540
        %3605 = vst [vmem:[%s471 + $0x94] sm:$0xf] %v3541
        %3606 = vst [vmem:[%s471 + $0x9c] sm:$0xf] %v3542
        %3607 = vst [vmem:[%s471 + $0xa4] sm:$0xf] %v3543
        %3608 = vst [vmem:[%s471 + $0xac] sm:$0xf] %v3544
        %3609 = vst [vmem:[%s471 + $0xb4] sm:$0xf] %v3545
        %3610 = vst [vmem:[%s471 + $0xbc] sm:$0xf] %v3546
        %3611 = vst [vmem:[%s471 + $0xc4] sm:$0xf] %v3547
        %3612 = vst [vmem:[%s471 + $0xcc] sm:$0xf] %v3548
        %3613 = vst [vmem:[%s471 + $0xd4] sm:$0xf] %v3549
        %3614 = vst [vmem:[%s471 + $0xdc] sm:$0xf] %v3550
        %3615 = vst [vmem:[%s471 + $0xe4] sm:$0xf] %v3551
        %3616 = vst [vmem:[%s471 + $0xec] sm:$0xf] %v3552
        %3617 = vst [vmem:[%s471 + $0xf4] sm:$0xf] %v3553
        %3618 = vst [vmem:[%s471 + $0xfc] sm:$0xf] %v3554
      $region72: #{gin_forward.3} parent=63 // pred_fallthru
        _
      %s3619 = smul.u32 32, %s26
      %p3620 = scmp.lt.s32.totalorder %s3619, 63
      %s3621 = scalar_select %p3620, %s3619, 63
      %s3622 = smul.addr %s3621, 2
      %s3623 = smul.addr %s3622, 4
      %s3624 = scalar_lea.vmem %s11, %s3623
      // Predicated region
      $region73: #{gin_forward.3} parent=63 // pred_check
        %p3625 = pneg %p300
      $region74: #{gin_forward.3} parent=63 // pred_check_branch
        %3627 = sbr.rel (%p3625) target = $region76
      $region75: #{gin_forward.3} parent=63 // pred_region
        %s3628 = smul.u32 32, %s26
      $region76: #{gin_forward.3} parent=63 // pred_fallthru
        _
    $region64: #{gin_forward.3} parent=5 // pred_fallthru
      _
    %p3629 = scmp.le.s32.totalorder 2, %s17
    // Predicated region
    $region77: #{gin_forward.3} parent=5 // pred_check
      %p3630 = pneg %p3629
    $region78: #{gin_forward.3} parent=5 // pred_check_branch
      %3632 = sbr.rel (%p3630) target = $region80
    $region79: #{gin_forward.3} parent=5 // pred_region
      %s3633 = ssub.s32 %s17, 2
      // Predicated region
      $region81: #{gin_forward.3} parent=79 // pred_check
        %p3634 = pneg %p306
      $region82: #{gin_forward.3} parent=79 // pred_check_branch
        %3636 = sbr.rel (%p3634) target = $region84
      $region83: #{gin_forward.3} parent=79 // pred_region
        %s3637 = smul.u32 32, %s28
        %p3638 = scmp.lt.s32.totalorder %s3637, 63
        %s3639 = scalar_select %p3638, %s3637, 63
        %s3640 = smul.addr %s3639, 2
        %s3641 = smul.addr %s3640, 4
        %s3642 = scalar_lea.vmem %s11, %s3641
      $region84: #{gin_forward.3} parent=79 // pred_fallthru
        _
    $region80: #{gin_forward.3} parent=5 // pred_fallthru
      _
  $region6: #{gin_forward.3} parent=0 // loop_footer
    %s21 = sadd.s32 1, %s17
  $region7: #{gin_forward.3} parent=0 // loop_footer_branch
    %16 = sbr.rel target = $region3
  $region8: #{gin_forward.3} parent=0 // loop_exit
    _

</llo_original>
